<compile_context>
chip_gen: v6e
topology: v6e:2x2x1
jax: 0.10.0
libtpu: 0.0.40
codegen_flags: <defaults>
</compile_context>

<pallas_src>
import math

import jax
import jax.numpy as jnp
from jax.experimental import pallas as pl
from jax.experimental.pallas import tpu as pltpu

# ----- native problem sizes (consistent with the module's forward) -----
B, T, S = 2, 8, 16           # batch, trg_len, src_len
V, E, H, A = 32, 16, 32, 32  # vocab, embed dim, hidden dim (== enc feature), attn dim
PAD = 0                      # padTokenIdx
TEACHER_FORCING_RATIO = 0.3

NEG = -1e9
LOG_V = math.log(V)          # CE of the all-zero t=0 logits row over V classes


# ---------------------------------------------------------------------------
# Fused rollout kernel: grid = (1,), whole rollout unrolled inside the body.
# ---------------------------------------------------------------------------
def fused_rollout_kernel(tf_ref,                                    # SMEM [T] int32 (scalar prefetch)
                         trg_oh_ref,                                # [T,B,V] one-hot targets
                         enc_ref,                                   # [B,S,H] encoder outputs
                         mbias_ref,                                 # [B,S]   0 / NEG source-mask bias
                         h0_ref, c0_ref,                            # [B,H]
                         wa_e_ref, wa_h_ref, va_ref,                # [H,A],[H,A],[1,A]
                         emb_wx_ref, wx_c_ref, wh_ref, bx_ref,      # [V,4H],[H,4H],[H,4H],[1,4H]
                         emb_wo_ref, wo_c_ref, wo_h_ref, bo_ref,    # [V,V],[H,V],[H,V],[1,V]
                         loss_ref,                                  # [1,1] mean loss output
                         proj_e_s):                                 # VMEM scratch [B,S,A]
    # ---- loop-invariant encoder projection for additive attention (once) ----
    wa_e = wa_e_ref[...]
    for b in range(B):
        proj_e_s[b] = jnp.dot(enc_ref[b], wa_e, preferred_element_type=jnp.float32)

    # ---- t = 0 loss term: reference keeps outputs[:, 0] == zeros over V
    # classes, so each non-PAD trg[:, 0] contributes exactly log(V).
    valid0 = 1.0 - trg_oh_ref[0][:, PAD:PAD + 1]                       # [B,1]
    loss_sum = jnp.sum(valid0, axis=0, keepdims=True) * LOG_V          # [1,1]
    cnt = jnp.sum(valid0, axis=0, keepdims=True)                       # [1,1]

    h = h0_ref[...]                                                    # [B,H]
    c = c0_ref[...]                                                    # [B,H]
    greedy_oh = jnp.zeros((B, V), jnp.float32)                         # unused at step 0
    col = jax.lax.broadcasted_iota(jnp.int32, (B, V), 1)               # hoisted iota

    # ---- fully-unrolled T-1 step rollout; all carries live in vregs ----
    # (static-index equivalent of lax.fori_loop(0, T-1, ..., unroll=True))
    for i in range(T - 1):
        # -- input token one-hot: teacher forcing (trg[:, i]) vs prev greedy --
        if i == 0:
            inp_oh = trg_oh_ref[0]
        else:
            w_tf = jnp.where(tf_ref[i] != 0, 1.0, 0.0)
            inp_oh = w_tf * trg_oh_ref[i] + (1.0 - w_tf) * greedy_oh    # [B,V]

        # -- additive (Bahdanau) attention; enc@Wa_e and mask select hoisted --
        proj_h = jnp.dot(h, wa_h_ref[...], preferred_element_type=jnp.float32)   # [B,A]
        energy = jnp.tanh(proj_e_s[...] + proj_h[:, None, :])                     # [B,S,A]
        scores = jnp.sum(energy * va_ref[...][None], axis=-1) + mbias_ref[...]    # [B,S]
        mmax = jnp.max(scores, axis=-1, keepdims=True)
        pexp = jnp.exp(scores - mmax)
        attn = pexp / jnp.sum(pexp, axis=-1, keepdims=True)                       # [B,S]
        ctx = jnp.sum(attn[:, :, None] * enc_ref[...], axis=1)                    # [B,H]

        # -- LSTM cell: embedding folded into gate weights, native 4H columns --
        gates = (jnp.dot(inp_oh, emb_wx_ref[...], preferred_element_type=jnp.float32)
                 + jnp.dot(ctx, wx_c_ref[...], preferred_element_type=jnp.float32)
                 + jnp.dot(h, wh_ref[...], preferred_element_type=jnp.float32)
                 + bx_ref[...])                                                    # [B,4H]
        sg = jax.nn.sigmoid(gates)          # one EUP pass over all 4 gates
        th = jnp.tanh(gates)                # one EUP pass over all 4 gates
        i_g = sg[:, 0 * H:1 * H]
        f_g = sg[:, 1 * H:2 * H]
        g_g = th[:, 2 * H:3 * H]
        o_g = sg[:, 3 * H:4 * H]
        c = f_g * c + i_g * g_g
        h = o_g * jnp.tanh(c)

        # -- vocab projection over the native V classes (embedding folded in) --
        logits = (jnp.dot(inp_oh, emb_wo_ref[...], preferred_element_type=jnp.float32)
                  + jnp.dot(ctx, wo_c_ref[...], preferred_element_type=jnp.float32)
                  + jnp.dot(h, wo_h_ref[...], preferred_element_type=jnp.float32)
                  + bo_ref[...])                                                   # [B,V]

        # -- greedy next-token one-hot (argmax, lowest-index tie-break) --
        mx = jnp.max(logits, axis=-1, keepdims=True)                               # [B,1]
        top1 = jnp.min(jnp.where(logits == mx, col, V), axis=-1, keepdims=True)
        greedy_oh = (col == top1).astype(jnp.float32)                              # [B,V]

        # -- fused masked cross-entropy against trg[:, i + 1] --
        tgt_oh = trg_oh_ref[i + 1]                                                 # [B,V]
        lse = mx + jnp.log(jnp.sum(jnp.exp(logits - mx), axis=-1, keepdims=True))  # [B,1]
        picked = jnp.sum(logits * tgt_oh, axis=-1, keepdims=True)                  # [B,1]
        valid = 1.0 - tgt_oh[:, PAD:PAD + 1]                                       # [B,1]
        loss_sum = loss_sum + jnp.sum((lse - picked) * valid, axis=0, keepdims=True)
        cnt = cnt + jnp.sum(valid, axis=0, keepdims=True)

    # mean over non-PAD targets (NaN if every target is PAD — matches torch CE)
    loss_ref[...] = loss_sum / cnt


# ---------------------------------------------------------------------------
# Wrapper: fold the embedding into the weights, hoist the mask select, launch.
# ---------------------------------------------------------------------------
def seq2seq_forward(trg, encoder_outputs, hidden, cell, mask, params, tf_key,
                    teacher_forcing_ratio=TEACHER_FORCING_RATIO):
    # TODO(synk): python random.random() teacher forcing replaced with
    # deterministic per-timestep flags (one flag per step, shared across the
    # batch, like the reference) drawn from a JAX PRNG key.
    tf_flags = (jax.random.uniform(tf_key, (T,)) < teacher_forcing_ratio).astype(jnp.int32)

    # one-hot targets, [T, B, V], so the kernel indexes one step at a time
    trg_oh = (trg.T[:, :, None] ==
              jnp.arange(V, dtype=jnp.int32)[None, None, :]).astype(jnp.float32)

    # hoisted source-mask select: 0 for valid source positions, NEG otherwise
    mask_bias = jnp.where(mask > 0.0, 0.0, NEG).astype(jnp.float32)

    # Fold the embedding lookup into the LSTM-gate / output-projection weights:
    # one_hot @ (emb_table @ W) == embed(token) @ W.  Done once per call on
    # weight-sized tensors, so the kernel needs no lane packing / concatenation
    # and every per-step matmul stays at native K/N sizes.
    emb_wx = jnp.dot(params["emb_table"], params["wx_e"])   # [V, 4H]
    emb_wo = jnp.dot(params["emb_table"], params["wo_e"])   # [V, V]

    grid_spec = pltpu.PrefetchScalarGridSpec(
        num_scalar_prefetch=1,            # tf_flags -> SMEM
        grid=(1,),                        # single grid step; rollout is in-kernel
        in_specs=[
            pl.BlockSpec((T, B, V), lambda i, tf: (0, 0, 0)),      # one-hot targets
            pl.BlockSpec((B, S, H), lambda i, tf: (0, 0, 0)),      # encoder outputs
            pl.BlockSpec((B, S), lambda i, tf: (0, 0)),            # mask bias
            pl.BlockSpec((B, H), lambda i, tf: (0, 0)),            # initial hidden
            pl.BlockSpec((B, H), lambda i, tf: (0, 0)),            # initial cell
            pl.BlockSpec((H, A), lambda i, tf: (0, 0)),            # Wa_enc
            pl.BlockSpec((H, A), lambda i, tf: (0, 0)),            # Wa_hid
            pl.BlockSpec((1, A), lambda i, tf: (0, 0)),            # v_attn
            pl.BlockSpec((V, 4 * H), lambda i, tf: (0, 0)),        # emb_table @ Wx_emb
            pl.BlockSpec((H, 4 * H), lambda i, tf: (0, 0)),        # Wx_ctx
            pl.BlockSpec((H, 4 * H), lambda i, tf: (0, 0)),        # Wh
            pl.BlockSpec((1, 4 * H), lambda i, tf: (0, 0)),        # LSTM bias
            pl.BlockSpec((V, V), lambda i, tf: (0, 0)),            # emb_table @ Wo_emb
            pl.BlockSpec((H, V), lambda i, tf: (0, 0)),            # Wo_ctx
            pl.BlockSpec((H, V), lambda i, tf: (0, 0)),            # Wo_hid
            pl.BlockSpec((1, V), lambda i, tf: (0, 0)),            # output bias
        ],
        out_specs=pl.BlockSpec((1, 1), lambda i, tf: (0, 0)),
        scratch_shapes=[
            pltpu.VMEM((B, S, A), jnp.float32),   # hoisted enc @ Wa_enc
        ],
    )

    loss = pl.pallas_call(
        fused_rollout_kernel,
        out_shape=jax.ShapeDtypeStruct((1, 1), jnp.float32),
        grid_spec=grid_spec,
        compiler_params=pltpu.CompilerParams(dimension_semantics=("arbitrary",)),
    )(tf_flags, trg_oh, encoder_outputs, mask_bias, hidden, cell,
      params["wa_e"], params["wa_h"], params["va"],
      emb_wx, params["wx_c"], params["wh"], params["b"],
      emb_wo, params["wo_c"], params["wo_h"], params["bo"])
    return loss[0, 0]


if __name__ == "__main__":
    key = jax.random.PRNGKey(0)
    k = jax.random.split(key, 16)

    params = {
        "emb_table": 0.1 * jax.random.normal(k[0], (V, E), jnp.float32),
        "wa_e": 0.1 * jax.random.normal(k[1], (H, A), jnp.float32),
        "wa_h": 0.1 * jax.random.normal(k[2], (H, A), jnp.float32),
        "va":   0.1 * jax.random.normal(k[3], (1, A), jnp.float32),
        "wx_e": 0.1 * jax.random.normal(k[4], (E, 4 * H), jnp.float32),
        "wx_c": 0.1 * jax.random.normal(k[5], (H, 4 * H), jnp.float32),
        "wh":   0.1 * jax.random.normal(k[6], (H, 4 * H), jnp.float32),
        "b":    jnp.zeros((1, 4 * H), jnp.float32),
        "wo_h": 0.1 * jax.random.normal(k[7], (H, V), jnp.float32),
        "wo_c": 0.1 * jax.random.normal(k[8], (H, V), jnp.float32),
        "wo_e": 0.1 * jax.random.normal(k[9], (E, V), jnp.float32),
        "bo":   jnp.zeros((1, V), jnp.float32),
    }

    trg = jax.random.randint(k[10], (B, T), 0, V, dtype=jnp.int32)
    encoder_outputs = jax.random.normal(k[11], (B, S, H), jnp.float32)
    hidden = jax.random.normal(k[12], (B, H), jnp.float32)
    cell = jax.random.normal(k[13], (B, H), jnp.float32)
    src_lens = jnp.array([S, S // 2], dtype=jnp.int32)
    mask = (jnp.arange(S)[None, :] < src_lens[:, None]).astype(jnp.float32)

    forward = jax.jit(seq2seq_forward)
    loss = forward(trg, encoder_outputs, hidden, cell, mask, params, k[14])
    loss = jax.block_until_ready(loss)
    assert loss.shape == ()
    assert bool(jnp.isfinite(loss))
    print("KERNEL_OK")
</pallas_src>

<mosaic_0001>
module attributes {stable_mosaic.version = 11 : i64} {
  func.func @fused_rollout_kernel(%arg0: i32, %arg1: memref<8xi32, #tpu.memory_space<smem>>, %arg2: memref<8x2x32xf32, #tpu.memory_space<vmem>>, %arg3: memref<2x16x32xf32, #tpu.memory_space<vmem>>, %arg4: memref<2x16xf32, #tpu.memory_space<vmem>>, %arg5: memref<2x32xf32, #tpu.memory_space<vmem>>, %arg6: memref<2x32xf32, #tpu.memory_space<vmem>>, %arg7: memref<32x32xf32, #tpu.memory_space<vmem>>, %arg8: memref<32x32xf32, #tpu.memory_space<vmem>>, %arg9: memref<1x32xf32, #tpu.memory_space<vmem>>, %arg10: memref<32x128xf32, #tpu.memory_space<vmem>>, %arg11: memref<32x128xf32, #tpu.memory_space<vmem>>, %arg12: memref<32x128xf32, #tpu.memory_space<vmem>>, %arg13: memref<1x128xf32, #tpu.memory_space<vmem>>, %arg14: memref<32x32xf32, #tpu.memory_space<vmem>>, %arg15: memref<32x32xf32, #tpu.memory_space<vmem>>, %arg16: memref<32x32xf32, #tpu.memory_space<vmem>>, %arg17: memref<1x32xf32, #tpu.memory_space<vmem>>, %arg18: memref<1x1xf32, #tpu.memory_space<vmem>>, %arg19: memref<2x16x32xf32, #tpu.memory_space<vmem>>) attributes {dimension_semantics = [#tpu.dimension_semantics<arbitrary>], iteration_bounds = array<i64: 1>, scalar_prefetch = 1 : i64, scratch_operands = 1 : i64, tpu.core_type = #tpu.core_type<tc>, window_params = [{pipeline_mode = #tpu.pipeline_mode<synchronous>, transform_indices = @transform_0, window_bounds = array<i64: 8, 2, 32>}, {pipeline_mode = #tpu.pipeline_mode<synchronous>, transform_indices = @transform_1, window_bounds = array<i64: 2, 16, 32>}, {pipeline_mode = #tpu.pipeline_mode<synchronous>, transform_indices = @transform_2, window_bounds = array<i64: 2, 16>}, {pipeline_mode = #tpu.pipeline_mode<synchronous>, transform_indices = @transform_3, window_bounds = array<i64: 2, 32>}, {pipeline_mode = #tpu.pipeline_mode<synchronous>, transform_indices = @transform_4, window_bounds = array<i64: 2, 32>}, {pipeline_mode = #tpu.pipeline_mode<synchronous>, transform_indices = @transform_5, window_bounds = array<i64: 32, 32>}, {pipeline_mode = #tpu.pipeline_mode<synchronous>, transform_indices = @transform_6, window_bounds = array<i64: 32, 32>}, {pipeline_mode = #tpu.pipeline_mode<synchronous>, transform_indices = @transform_7, window_bounds = array<i64: 1, 32>}, {pipeline_mode = #tpu.pipeline_mode<synchronous>, transform_indices = @transform_8, window_bounds = array<i64: 32, 128>}, {pipeline_mode = #tpu.pipeline_mode<synchronous>, transform_indices = @transform_9, window_bounds = array<i64: 32, 128>}, {pipeline_mode = #tpu.pipeline_mode<synchronous>, transform_indices = @transform_10, window_bounds = array<i64: 32, 128>}, {pipeline_mode = #tpu.pipeline_mode<synchronous>, transform_indices = @transform_11, window_bounds = array<i64: 1, 128>}, {pipeline_mode = #tpu.pipeline_mode<synchronous>, transform_indices = @transform_12, window_bounds = array<i64: 32, 32>}, {pipeline_mode = #tpu.pipeline_mode<synchronous>, transform_indices = @transform_13, window_bounds = array<i64: 32, 32>}, {pipeline_mode = #tpu.pipeline_mode<synchronous>, transform_indices = @transform_14, window_bounds = array<i64: 32, 32>}, {pipeline_mode = #tpu.pipeline_mode<synchronous>, transform_indices = @transform_15, window_bounds = array<i64: 1, 32>}, {pipeline_mode = #tpu.pipeline_mode<synchronous>, transform_indices = @transform_16, window_bounds = array<i64: 1, 1>}]} {
    %c0 = arith.constant 0 : index
    %c0_0 = arith.constant 0 : index
    %0 = vector.load %arg7[%c0, %c0_0] : memref<32x32xf32, #tpu.memory_space<vmem>>, vector<32x32xf32>
    %c0_1 = arith.constant 0 : index
    %c0_2 = arith.constant 0 : index
    %c0_3 = arith.constant 0 : index
    %1 = vector.load %arg3[%c0_1, %c0_2, %c0_3] : memref<2x16x32xf32, #tpu.memory_space<vmem>>, vector<1x16x32xf32>
    %2 = vector.shape_cast %1 : vector<1x16x32xf32> to vector<16x32xf32>
    %cst = arith.constant dense<0.000000e+00> : vector<16x32xf32>
    %3 = tpu.matmul %2, %0, %cst {dimension_numbers = #tpu.dot_dimension_numbers<[1], [0], [0], [1], [0, 0, 1, 1], [], []>} : vector<16x32xf32>, vector<32x32xf32>, vector<16x32xf32> -> vector<16x32xf32>
    %c0_4 = arith.constant 0 : index
    %c0_5 = arith.constant 0 : index
    %c0_6 = arith.constant 0 : index
    %4 = vector.load %arg19[%c0_4, %c0_5, %c0_6] : memref<2x16x32xf32, #tpu.memory_space<vmem>>, vector<1x16x32xf32>
    %5 = vector.shape_cast %4 : vector<1x16x32xf32> to vector<16x32xf32>
    %6 = vector.shape_cast %3 : vector<16x32xf32> to vector<1x16x32xf32>
    tpu.vector_store %arg19[%c0_4, %c0_5, %c0_6], %6 {strides = array<i32>} : memref<2x16x32xf32, #tpu.memory_space<vmem>>, vector<1x16x32xf32>,
    %c1 = arith.constant 1 : index
    %c0_7 = arith.constant 0 : index
    %c0_8 = arith.constant 0 : index
    %7 = vector.load %arg3[%c1, %c0_7, %c0_8] : memref<2x16x32xf32, #tpu.memory_space<vmem>>, vector<1x16x32xf32>
    %8 = vector.shape_cast %7 : vector<1x16x32xf32> to vector<16x32xf32>
    %cst_9 = arith.constant dense<0.000000e+00> : vector<16x32xf32>
    %9 = tpu.matmul %8, %0, %cst_9 {dimension_numbers = #tpu.dot_dimension_numbers<[1], [0], [0], [1], [0, 0, 1, 1], [], []>} : vector<16x32xf32>, vector<32x32xf32>, vector<16x32xf32> -> vector<16x32xf32>
    %c1_10 = arith.constant 1 : index
    %c0_11 = arith.constant 0 : index
    %c0_12 = arith.constant 0 : index
    %10 = vector.load %arg19[%c1_10, %c0_11, %c0_12] : memref<2x16x32xf32, #tpu.memory_space<vmem>>, vector<1x16x32xf32>
    %11 = vector.shape_cast %10 : vector<1x16x32xf32> to vector<16x32xf32>
    %12 = vector.shape_cast %9 : vector<16x32xf32> to vector<1x16x32xf32>
    tpu.vector_store %arg19[%c1_10, %c0_11, %c0_12], %12 {strides = array<i32>} : memref<2x16x32xf32, #tpu.memory_space<vmem>>, vector<1x16x32xf32>,
    %c0_13 = arith.constant 0 : index
    %c0_14 = arith.constant 0 : index
    %c0_15 = arith.constant 0 : index
    %13 = vector.load %arg2[%c0_13, %c0_14, %c0_15] : memref<8x2x32xf32, #tpu.memory_space<vmem>>, vector<1x2x32xf32>
    %14 = vector.shape_cast %13 : vector<1x2x32xf32> to vector<2x32xf32>
    %15 = vector.extract_strided_slice %14 {offsets = [0, 0], sizes = [2, 1], strides = [1, 1]} : vector<2x32xf32> to vector<2x1xf32>
    %cst_16 = arith.constant 1.000000e+00 : f32
    %16 = vector.broadcast %cst_16 : f32 to vector<2x1xf32>
    %17 = arith.subf %16, %15 : vector<2x1xf32>
    %cst_17 = arith.constant dense<0.000000e+00> : vector<1xf32>
    %18 = vector.multi_reduction <add>, %17, %cst_17 [0] : vector<2x1xf32> to vector<1xf32>
    %19 = vector.shape_cast %18 : vector<1xf32> to vector<1x1xf32>
    %cst_18 = arith.constant 3.46573591 : f32
    %20 = vector.broadcast %cst_18 : f32 to vector<1x1xf32>
    %21 = arith.mulf %19, %20 : vector<1x1xf32>
    %cst_19 = arith.constant dense<0.000000e+00> : vector<1xf32>
    %22 = vector.multi_reduction <add>, %17, %cst_19 [0] : vector<2x1xf32> to vector<1xf32>
    %23 = vector.shape_cast %22 : vector<1xf32> to vector<1x1xf32>
    %c0_20 = arith.constant 0 : index
    %c0_21 = arith.constant 0 : index
    %24 = vector.load %arg5[%c0_20, %c0_21] : memref<2x32xf32, #tpu.memory_space<vmem>>, vector<2x32xf32>
    %c0_22 = arith.constant 0 : index
    %c0_23 = arith.constant 0 : index
    %25 = vector.load %arg6[%c0_22, %c0_23] : memref<2x32xf32, #tpu.memory_space<vmem>>, vector<2x32xf32>
    %26 = tpu.iota {dimensions = array<i32: 1>} : vector<2x32xi32>
    %c0_24 = arith.constant 0 : index
    %c0_25 = arith.constant 0 : index
    %c0_26 = arith.constant 0 : index
    %27 = vector.load %arg2[%c0_24, %c0_25, %c0_26] : memref<8x2x32xf32, #tpu.memory_space<vmem>>, vector<1x2x32xf32>
    %28 = vector.shape_cast %27 : vector<1x2x32xf32> to vector<2x32xf32>
    %c0_27 = arith.constant 0 : index
    %c0_28 = arith.constant 0 : index
    %29 = vector.load %arg8[%c0_27, %c0_28] : memref<32x32xf32, #tpu.memory_space<vmem>>, vector<32x32xf32>
    %cst_29 = arith.constant dense<0.000000e+00> : vector<2x32xf32>
    %30 = tpu.matmul %24, %29, %cst_29 {dimension_numbers = #tpu.dot_dimension_numbers<[1], [0], [0], [1], [0, 0, 1, 1], [], []>} : vector<2x32xf32>, vector<32x32xf32>, vector<2x32xf32> -> vector<2x32xf32>
    %c0_30 = arith.constant 0 : index
    %c0_31 = arith.constant 0 : index
    %c0_32 = arith.constant 0 : index
    %31 = vector.load %arg19[%c0_30, %c0_31, %c0_32] : memref<2x16x32xf32, #tpu.memory_space<vmem>>, vector<2x16x32xf32>
    %32 = vector.shape_cast %30 : vector<2x32xf32> to vector<2x1x32xf32>
    %33 = vector.broadcast %32 : vector<2x1x32xf32> to vector<2x16x32xf32>
    %34 = arith.addf %31, %33 : vector<2x16x32xf32>
    %35 = math.tanh %34 : vector<2x16x32xf32>
    %c0_33 = arith.constant 0 : index
    %c0_34 = arith.constant 0 : index
    %36 = vector.load %arg9[%c0_33, %c0_34] : memref<1x32xf32, #tpu.memory_space<vmem>>, vector<1x32xf32>
    %37 = vector.shape_cast %36 : vector<1x32xf32> to vector<1x1x32xf32>
    %38 = vector.broadcast %37 : vector<1x1x32xf32> to vector<2x16x32xf32>
    %39 = arith.mulf %35, %38 : vector<2x16x32xf32>
    %cst_35 = arith.constant dense<0.000000e+00> : vector<2x16xf32>
    %40 = vector.multi_reduction <add>, %39, %cst_35 [2] : vector<2x16x32xf32> to vector<2x16xf32>
    %c0_36 = arith.constant 0 : index
    %c0_37 = arith.constant 0 : index
    %41 = vector.load %arg4[%c0_36, %c0_37] : memref<2x16xf32, #tpu.memory_space<vmem>>, vector<2x16xf32>
    %42 = arith.addf %40, %41 : vector<2x16xf32>
    %cst_38 = arith.constant dense<0xFF800000> : vector<2xf32>
    %43 = vector.multi_reduction <maximumf>, %42, %cst_38 [1] : vector<2x16xf32> to vector<2xf32>
    %44 = vector.shape_cast %43 : vector<2xf32> to vector<2x1xf32>
    %45 = vector.broadcast %44 : vector<2x1xf32> to vector<2x16xf32>
    %46 = arith.subf %42, %45 : vector<2x16xf32>
    %47 = math.exp %46 : vector<2x16xf32>
    %cst_39 = arith.constant dense<0.000000e+00> : vector<2xf32>
    %48 = vector.multi_reduction <add>, %47, %cst_39 [1] : vector<2x16xf32> to vector<2xf32>
    %49 = vector.shape_cast %48 : vector<2xf32> to vector<2x1xf32>
    %50 = vector.broadcast %49 : vector<2x1xf32> to vector<2x16xf32>
    %51 = arith.divf %47, %50 : vector<2x16xf32>
    %52 = vector.shape_cast %51 : vector<2x16xf32> to vector<2x16x1xf32>
    %c0_40 = arith.constant 0 : index
    %c0_41 = arith.constant 0 : index
    %c0_42 = arith.constant 0 : index
    %53 = vector.load %arg3[%c0_40, %c0_41, %c0_42] : memref<2x16x32xf32, #tpu.memory_space<vmem>>, vector<2x16x32xf32>
    %54 = vector.broadcast %52 : vector<2x16x1xf32> to vector<2x16x32xf32>
    %55 = arith.mulf %54, %53 : vector<2x16x32xf32>
    %cst_43 = arith.constant dense<0.000000e+00> : vector<2x32xf32>
    %56 = vector.multi_reduction <add>, %55, %cst_43 [1] : vector<2x16x32xf32> to vector<2x32xf32>
    %c0_44 = arith.constant 0 : index
    %c0_45 = arith.constant 0 : index
    %57 = vector.load %arg10[%c0_44, %c0_45] : memref<32x128xf32, #tpu.memory_space<vmem>>, vector<32x128xf32>
    %cst_46 = arith.constant dense<0.000000e+00> : vector<2x128xf32>
    %58 = tpu.matmul %28, %57, %cst_46 {dimension_numbers = #tpu.dot_dimension_numbers<[1], [0], [0], [1], [0, 0, 1, 1], [], []>} : vector<2x32xf32>, vector<32x128xf32>, vector<2x128xf32> -> vector<2x128xf32>
    %c0_47 = arith.constant 0 : index
    %c0_48 = arith.constant 0 : index
    %59 = vector.load %arg11[%c0_47, %c0_48] : memref<32x128xf32, #tpu.memory_space<vmem>>, vector<32x128xf32>
    %cst_49 = arith.constant dense<0.000000e+00> : vector<2x128xf32>
    %60 = tpu.matmul %56, %59, %cst_49 {dimension_numbers = #tpu.dot_dimension_numbers<[1], [0], [0], [1], [0, 0, 1, 1], [], []>} : vector<2x32xf32>, vector<32x128xf32>, vector<2x128xf32> -> vector<2x128xf32>
    %61 = arith.addf %58, %60 : vector<2x128xf32>
    %c0_50 = arith.constant 0 : index
    %c0_51 = arith.constant 0 : index
    %62 = vector.load %arg12[%c0_50, %c0_51] : memref<32x128xf32, #tpu.memory_space<vmem>>, vector<32x128xf32>
    %cst_52 = arith.constant dense<0.000000e+00> : vector<2x128xf32>
    %63 = tpu.matmul %24, %62, %cst_52 {dimension_numbers = #tpu.dot_dimension_numbers<[1], [0], [0], [1], [0, 0, 1, 1], [], []>} : vector<2x32xf32>, vector<32x128xf32>, vector<2x128xf32> -> vector<2x128xf32>
    %64 = arith.addf %61, %63 : vector<2x128xf32>
    %c0_53 = arith.constant 0 : index
    %c0_54 = arith.constant 0 : index
    %65 = vector.load %arg13[%c0_53, %c0_54] : memref<1x128xf32, #tpu.memory_space<vmem>>, vector<1x128xf32>
    %66 = vector.broadcast %65 : vector<1x128xf32> to vector<2x128xf32>
    %67 = arith.addf %64, %66 : vector<2x128xf32>
    %68 = arith.negf %67 : vector<2x128xf32>
    %69 = math.exp %68 : vector<2x128xf32>
    %cst_55 = arith.constant 1.000000e+00 : f32
    %70 = vector.broadcast %cst_55 : f32 to vector<2x128xf32>
    %71 = arith.addf %70, %69 : vector<2x128xf32>
    %72 = arith.divf %70, %71 : vector<2x128xf32>
    %73 = math.tanh %67 : vector<2x128xf32>
    %74 = vector.extract_strided_slice %72 {offsets = [0, 0], sizes = [2, 32], strides = [1, 1]} : vector<2x128xf32> to vector<2x32xf32>
    %75 = vector.extract_strided_slice %72 {offsets = [0, 32], sizes = [2, 32], strides = [1, 1]} : vector<2x128xf32> to vector<2x32xf32>
    %76 = vector.extract_strided_slice %73 {offsets = [0, 64], sizes = [2, 32], strides = [1, 1]} : vector<2x128xf32> to vector<2x32xf32>
    %77 = vector.extract_strided_slice %72 {offsets = [0, 96], sizes = [2, 32], strides = [1, 1]} : vector<2x128xf32> to vector<2x32xf32>
    %78 = arith.mulf %75, %25 : vector<2x32xf32>
    %79 = arith.mulf %74, %76 : vector<2x32xf32>
    %80 = arith.addf %78, %79 : vector<2x32xf32>
    %81 = math.tanh %80 : vector<2x32xf32>
    %82 = arith.mulf %77, %81 : vector<2x32xf32>
    %c0_56 = arith.constant 0 : index
    %c0_57 = arith.constant 0 : index
    %83 = vector.load %arg14[%c0_56, %c0_57] : memref<32x32xf32, #tpu.memory_space<vmem>>, vector<32x32xf32>
    %cst_58 = arith.constant dense<0.000000e+00> : vector<2x32xf32>
    %84 = tpu.matmul %28, %83, %cst_58 {dimension_numbers = #tpu.dot_dimension_numbers<[1], [0], [0], [1], [0, 0, 1, 1], [], []>} : vector<2x32xf32>, vector<32x32xf32>, vector<2x32xf32> -> vector<2x32xf32>
    %c0_59 = arith.constant 0 : index
    %c0_60 = arith.constant 0 : index
    %85 = vector.load %arg15[%c0_59, %c0_60] : memref<32x32xf32, #tpu.memory_space<vmem>>, vector<32x32xf32>
    %cst_61 = arith.constant dense<0.000000e+00> : vector<2x32xf32>
    %86 = tpu.matmul %56, %85, %cst_61 {dimension_numbers = #tpu.dot_dimension_numbers<[1], [0], [0], [1], [0, 0, 1, 1], [], []>} : vector<2x32xf32>, vector<32x32xf32>, vector<2x32xf32> -> vector<2x32xf32>
    %87 = arith.addf %84, %86 : vector<2x32xf32>
    %c0_62 = arith.constant 0 : index
    %c0_63 = arith.constant 0 : index
    %88 = vector.load %arg16[%c0_62, %c0_63] : memref<32x32xf32, #tpu.memory_space<vmem>>, vector<32x32xf32>
    %cst_64 = arith.constant dense<0.000000e+00> : vector<2x32xf32>
    %89 = tpu.matmul %82, %88, %cst_64 {dimension_numbers = #tpu.dot_dimension_numbers<[1], [0], [0], [1], [0, 0, 1, 1], [], []>} : vector<2x32xf32>, vector<32x32xf32>, vector<2x32xf32> -> vector<2x32xf32>
    %90 = arith.addf %87, %89 : vector<2x32xf32>
    %c0_65 = arith.constant 0 : index
    %c0_66 = arith.constant 0 : index
    %91 = vector.load %arg17[%c0_65, %c0_66] : memref<1x32xf32, #tpu.memory_space<vmem>>, vector<1x32xf32>
    %92 = vector.broadcast %91 : vector<1x32xf32> to vector<2x32xf32>
    %93 = arith.addf %90, %92 : vector<2x32xf32>
    %cst_67 = arith.constant dense<0xFF800000> : vector<2xf32>
    %94 = vector.multi_reduction <maximumf>, %93, %cst_67 [1] : vector<2x32xf32> to vector<2xf32>
    %95 = vector.shape_cast %94 : vector<2xf32> to vector<2x1xf32>
    %96 = vector.broadcast %95 : vector<2x1xf32> to vector<2x32xf32>
    %97 = arith.cmpf oeq, %93, %96 : vector<2x32xf32>
    %c32_i32 = arith.constant 32 : i32
    %98 = vector.broadcast %c32_i32 : i32 to vector<2x32xi32>
    %99 = arith.select %97, %26, %98 : vector<2x32xi1>, vector<2x32xi32>
    %cst_68 = arith.constant dense<2147483647> : vector<2xi32>
    %100 = vector.multi_reduction <minsi>, %99, %cst_68 [1] : vector<2x32xi32> to vector<2xi32>
    %101 = vector.shape_cast %100 : vector<2xi32> to vector<2x1xi32>
    %102 = vector.broadcast %101 : vector<2x1xi32> to vector<2x32xi32>
    %103 = arith.cmpi eq, %26, %102 : vector<2x32xi32>
    %104 = arith.extui %103 : vector<2x32xi1> to vector<2x32xi32>
    %105 = arith.sitofp %104 : vector<2x32xi32> to vector<2x32xf32>
    %c1_69 = arith.constant 1 : index
    %c0_70 = arith.constant 0 : index
    %c0_71 = arith.constant 0 : index
    %106 = vector.load %arg2[%c1_69, %c0_70, %c0_71] : memref<8x2x32xf32, #tpu.memory_space<vmem>>, vector<1x2x32xf32>
    %107 = vector.shape_cast %106 : vector<1x2x32xf32> to vector<2x32xf32>
    %108 = vector.broadcast %95 : vector<2x1xf32> to vector<2x32xf32>
    %109 = arith.subf %93, %108 : vector<2x32xf32>
    %110 = math.exp %109 : vector<2x32xf32>
    %cst_72 = arith.constant dense<0.000000e+00> : vector<2xf32>
    %111 = vector.multi_reduction <add>, %110, %cst_72 [1] : vector<2x32xf32> to vector<2xf32>
    %112 = vector.shape_cast %111 : vector<2xf32> to vector<2x1xf32>
    %113 = math.log %112 : vector<2x1xf32>
    %114 = arith.addf %95, %113 : vector<2x1xf32>
    %115 = arith.mulf %93, %107 : vector<2x32xf32>
    %cst_73 = arith.constant dense<0.000000e+00> : vector<2xf32>
    %116 = vector.multi_reduction <add>, %115, %cst_73 [1] : vector<2x32xf32> to vector<2xf32>
    %117 = vector.shape_cast %116 : vector<2xf32> to vector<2x1xf32>
    %118 = vector.extract_strided_slice %107 {offsets = [0, 0], sizes = [2, 1], strides = [1, 1]} : vector<2x32xf32> to vector<2x1xf32>
    %cst_74 = arith.constant 1.000000e+00 : f32
    %119 = vector.broadcast %cst_74 : f32 to vector<2x1xf32>
    %120 = arith.subf %119, %118 : vector<2x1xf32>
    %121 = arith.subf %114, %117 : vector<2x1xf32>
    %122 = arith.mulf %121, %120 : vector<2x1xf32>
    %cst_75 = arith.constant dense<0.000000e+00> : vector<1xf32>
    %123 = vector.multi_reduction <add>, %122, %cst_75 [0] : vector<2x1xf32> to vector<1xf32>
    %124 = vector.shape_cast %123 : vector<1xf32> to vector<1x1xf32>
    %125 = arith.addf %21, %124 : vector<1x1xf32>
    %cst_76 = arith.constant dense<0.000000e+00> : vector<1xf32>
    %126 = vector.multi_reduction <add>, %120, %cst_76 [0] : vector<2x1xf32> to vector<1xf32>
    %127 = vector.shape_cast %126 : vector<1xf32> to vector<1x1xf32>
    %128 = arith.addf %23, %127 : vector<1x1xf32>
    %c1_77 = arith.constant 1 : index
    %129 = memref.load %arg1[%c1_77] : memref<8xi32, #tpu.memory_space<smem>>
    %c0_i32 = arith.constant 0 : i32
    %130 = arith.cmpi ne, %129, %c0_i32 : i32
    %cst_78 = arith.constant 1.000000e+00 : f32
    %cst_79 = arith.constant 0.000000e+00 : f32
    %131 = arith.select %130, %cst_78, %cst_79 : f32
    %c1_80 = arith.constant 1 : index
    %c0_81 = arith.constant 0 : index
    %c0_82 = arith.constant 0 : index
    %132 = vector.load %arg2[%c1_80, %c0_81, %c0_82] : memref<8x2x32xf32, #tpu.memory_space<vmem>>, vector<1x2x32xf32>
    %133 = vector.shape_cast %132 : vector<1x2x32xf32> to vector<2x32xf32>
    %134 = vector.broadcast %131 : f32 to vector<2x32xf32>
    %135 = arith.mulf %134, %133 : vector<2x32xf32>
    %cst_83 = arith.constant 1.000000e+00 : f32
    %136 = arith.subf %cst_83, %131 : f32
    %137 = vector.broadcast %136 : f32 to vector<2x32xf32>
    %138 = arith.mulf %137, %105 : vector<2x32xf32>
    %139 = arith.addf %135, %138 : vector<2x32xf32>
    %c0_84 = arith.constant 0 : index
    %c0_85 = arith.constant 0 : index
    %140 = vector.load %arg8[%c0_84, %c0_85] : memref<32x32xf32, #tpu.memory_space<vmem>>, vector<32x32xf32>
    %cst_86 = arith.constant dense<0.000000e+00> : vector<2x32xf32>
    %141 = tpu.matmul %82, %140, %cst_86 {dimension_numbers = #tpu.dot_dimension_numbers<[1], [0], [0], [1], [0, 0, 1, 1], [], []>} : vector<2x32xf32>, vector<32x32xf32>, vector<2x32xf32> -> vector<2x32xf32>
    %c0_87 = arith.constant 0 : index
    %c0_88 = arith.constant 0 : index
    %c0_89 = arith.constant 0 : index
    %142 = vector.load %arg19[%c0_87, %c0_88, %c0_89] : memref<2x16x32xf32, #tpu.memory_space<vmem>>, vector<2x16x32xf32>
    %143 = vector.shape_cast %141 : vector<2x32xf32> to vector<2x1x32xf32>
    %144 = vector.broadcast %143 : vector<2x1x32xf32> to vector<2x16x32xf32>
    %145 = arith.addf %142, %144 : vector<2x16x32xf32>
    %146 = math.tanh %145 : vector<2x16x32xf32>
    %c0_90 = arith.constant 0 : index
    %c0_91 = arith.constant 0 : index
    %147 = vector.load %arg9[%c0_90, %c0_91] : memref<1x32xf32, #tpu.memory_space<vmem>>, vector<1x32xf32>
    %148 = vector.shape_cast %147 : vector<1x32xf32> to vector<1x1x32xf32>
    %149 = vector.broadcast %148 : vector<1x1x32xf32> to vector<2x16x32xf32>
    %150 = arith.mulf %146, %149 : vector<2x16x32xf32>
    %cst_92 = arith.constant dense<0.000000e+00> : vector<2x16xf32>
    %151 = vector.multi_reduction <add>, %150, %cst_92 [2] : vector<2x16x32xf32> to vector<2x16xf32>
    %c0_93 = arith.constant 0 : index
    %c0_94 = arith.constant 0 : index
    %152 = vector.load %arg4[%c0_93, %c0_94] : memref<2x16xf32, #tpu.memory_space<vmem>>, vector<2x16xf32>
    %153 = arith.addf %151, %152 : vector<2x16xf32>
    %cst_95 = arith.constant dense<0xFF800000> : vector<2xf32>
    %154 = vector.multi_reduction <maximumf>, %153, %cst_95 [1] : vector<2x16xf32> to vector<2xf32>
    %155 = vector.shape_cast %154 : vector<2xf32> to vector<2x1xf32>
    %156 = vector.broadcast %155 : vector<2x1xf32> to vector<2x16xf32>
    %157 = arith.subf %153, %156 : vector<2x16xf32>
    %158 = math.exp %157 : vector<2x16xf32>
    %cst_96 = arith.constant dense<0.000000e+00> : vector<2xf32>
    %159 = vector.multi_reduction <add>, %158, %cst_96 [1] : vector<2x16xf32> to vector<2xf32>
    %160 = vector.shape_cast %159 : vector<2xf32> to vector<2x1xf32>
    %161 = vector.broadcast %160 : vector<2x1xf32> to vector<2x16xf32>
    %162 = arith.divf %158, %161 : vector<2x16xf32>
    %163 = vector.shape_cast %162 : vector<2x16xf32> to vector<2x16x1xf32>
    %c0_97 = arith.constant 0 : index
    %c0_98 = arith.constant 0 : index
    %c0_99 = arith.constant 0 : index
    %164 = vector.load %arg3[%c0_97, %c0_98, %c0_99] : memref<2x16x32xf32, #tpu.memory_space<vmem>>, vector<2x16x32xf32>
    %165 = vector.broadcast %163 : vector<2x16x1xf32> to vector<2x16x32xf32>
    %166 = arith.mulf %165, %164 : vector<2x16x32xf32>
    %cst_100 = arith.constant dense<0.000000e+00> : vector<2x32xf32>
    %167 = vector.multi_reduction <add>, %166, %cst_100 [1] : vector<2x16x32xf32> to vector<2x32xf32>
    %c0_101 = arith.constant 0 : index
    %c0_102 = arith.constant 0 : index
    %168 = vector.load %arg10[%c0_101, %c0_102] : memref<32x128xf32, #tpu.memory_space<vmem>>, vector<32x128xf32>
    %cst_103 = arith.constant dense<0.000000e+00> : vector<2x128xf32>
    %169 = tpu.matmul %139, %168, %cst_103 {dimension_numbers = #tpu.dot_dimension_numbers<[1], [0], [0], [1], [0, 0, 1, 1], [], []>} : vector<2x32xf32>, vector<32x128xf32>, vector<2x128xf32> -> vector<2x128xf32>
    %c0_104 = arith.constant 0 : index
    %c0_105 = arith.constant 0 : index
    %170 = vector.load %arg11[%c0_104, %c0_105] : memref<32x128xf32, #tpu.memory_space<vmem>>, vector<32x128xf32>
    %cst_106 = arith.constant dense<0.000000e+00> : vector<2x128xf32>
    %171 = tpu.matmul %167, %170, %cst_106 {dimension_numbers = #tpu.dot_dimension_numbers<[1], [0], [0], [1], [0, 0, 1, 1], [], []>} : vector<2x32xf32>, vector<32x128xf32>, vector<2x128xf32> -> vector<2x128xf32>
    %172 = arith.addf %169, %171 : vector<2x128xf32>
    %c0_107 = arith.constant 0 : index
    %c0_108 = arith.constant 0 : index
    %173 = vector.load %arg12[%c0_107, %c0_108] : memref<32x128xf32, #tpu.memory_space<vmem>>, vector<32x128xf32>
    %cst_109 = arith.constant dense<0.000000e+00> : vector<2x128xf32>
    %174 = tpu.matmul %82, %173, %cst_109 {dimension_numbers = #tpu.dot_dimension_numbers<[1], [0], [0], [1], [0, 0, 1, 1], [], []>} : vector<2x32xf32>, vector<32x128xf32>, vector<2x128xf32> -> vector<2x128xf32>
    %175 = arith.addf %172, %174 : vector<2x128xf32>
    %c0_110 = arith.constant 0 : index
    %c0_111 = arith.constant 0 : index
    %176 = vector.load %arg13[%c0_110, %c0_111] : memref<1x128xf32, #tpu.memory_space<vmem>>, vector<1x128xf32>
    %177 = vector.broadcast %176 : vector<1x128xf32> to vector<2x128xf32>
    %178 = arith.addf %175, %177 : vector<2x128xf32>
    %179 = arith.negf %178 : vector<2x128xf32>
    %180 = math.exp %179 : vector<2x128xf32>
    %cst_112 = arith.constant 1.000000e+00 : f32
    %181 = vector.broadcast %cst_112 : f32 to vector<2x128xf32>
    %182 = arith.addf %181, %180 : vector<2x128xf32>
    %183 = arith.divf %181, %182 : vector<2x128xf32>
    %184 = math.tanh %178 : vector<2x128xf32>
    %185 = vector.extract_strided_slice %183 {offsets = [0, 0], sizes = [2, 32], strides = [1, 1]} : vector<2x128xf32> to vector<2x32xf32>
    %186 = vector.extract_strided_slice %183 {offsets = [0, 32], sizes = [2, 32], strides = [1, 1]} : vector<2x128xf32> to vector<2x32xf32>
    %187 = vector.extract_strided_slice %184 {offsets = [0, 64], sizes = [2, 32], strides = [1, 1]} : vector<2x128xf32> to vector<2x32xf32>
    %188 = vector.extract_strided_slice %183 {offsets = [0, 96], sizes = [2, 32], strides = [1, 1]} : vector<2x128xf32> to vector<2x32xf32>
    %189 = arith.mulf %186, %80 : vector<2x32xf32>
    %190 = arith.mulf %185, %187 : vector<2x32xf32>
    %191 = arith.addf %189, %190 : vector<2x32xf32>
    %192 = math.tanh %191 : vector<2x32xf32>
    %193 = arith.mulf %188, %192 : vector<2x32xf32>
    %c0_113 = arith.constant 0 : index
    %c0_114 = arith.constant 0 : index
    %194 = vector.load %arg14[%c0_113, %c0_114] : memref<32x32xf32, #tpu.memory_space<vmem>>, vector<32x32xf32>
    %cst_115 = arith.constant dense<0.000000e+00> : vector<2x32xf32>
    %195 = tpu.matmul %139, %194, %cst_115 {dimension_numbers = #tpu.dot_dimension_numbers<[1], [0], [0], [1], [0, 0, 1, 1], [], []>} : vector<2x32xf32>, vector<32x32xf32>, vector<2x32xf32> -> vector<2x32xf32>
    %c0_116 = arith.constant 0 : index
    %c0_117 = arith.constant 0 : index
    %196 = vector.load %arg15[%c0_116, %c0_117] : memref<32x32xf32, #tpu.memory_space<vmem>>, vector<32x32xf32>
    %cst_118 = arith.constant dense<0.000000e+00> : vector<2x32xf32>
    %197 = tpu.matmul %167, %196, %cst_118 {dimension_numbers = #tpu.dot_dimension_numbers<[1], [0], [0], [1], [0, 0, 1, 1], [], []>} : vector<2x32xf32>, vector<32x32xf32>, vector<2x32xf32> -> vector<2x32xf32>
    %198 = arith.addf %195, %197 : vector<2x32xf32>
    %c0_119 = arith.constant 0 : index
    %c0_120 = arith.constant 0 : index
    %199 = vector.load %arg16[%c0_119, %c0_120] : memref<32x32xf32, #tpu.memory_space<vmem>>, vector<32x32xf32>
    %cst_121 = arith.constant dense<0.000000e+00> : vector<2x32xf32>
    %200 = tpu.matmul %193, %199, %cst_121 {dimension_numbers = #tpu.dot_dimension_numbers<[1], [0], [0], [1], [0, 0, 1, 1], [], []>} : vector<2x32xf32>, vector<32x32xf32>, vector<2x32xf32> -> vector<2x32xf32>
    %201 = arith.addf %198, %200 : vector<2x32xf32>
    %c0_122 = arith.constant 0 : index
    %c0_123 = arith.constant 0 : index
    %202 = vector.load %arg17[%c0_122, %c0_123] : memref<1x32xf32, #tpu.memory_space<vmem>>, vector<1x32xf32>
    %203 = vector.broadcast %202 : vector<1x32xf32> to vector<2x32xf32>
    %204 = arith.addf %201, %203 : vector<2x32xf32>
    %cst_124 = arith.constant dense<0xFF800000> : vector<2xf32>
    %205 = vector.multi_reduction <maximumf>, %204, %cst_124 [1] : vector<2x32xf32> to vector<2xf32>
    %206 = vector.shape_cast %205 : vector<2xf32> to vector<2x1xf32>
    %207 = vector.broadcast %206 : vector<2x1xf32> to vector<2x32xf32>
    %208 = arith.cmpf oeq, %204, %207 : vector<2x32xf32>
    %c32_i32_125 = arith.constant 32 : i32
    %209 = vector.broadcast %c32_i32_125 : i32 to vector<2x32xi32>
    %210 = arith.select %208, %26, %209 : vector<2x32xi1>, vector<2x32xi32>
    %cst_126 = arith.constant dense<2147483647> : vector<2xi32>
    %211 = vector.multi_reduction <minsi>, %210, %cst_126 [1] : vector<2x32xi32> to vector<2xi32>
    %212 = vector.shape_cast %211 : vector<2xi32> to vector<2x1xi32>
    %213 = vector.broadcast %212 : vector<2x1xi32> to vector<2x32xi32>
    %214 = arith.cmpi eq, %26, %213 : vector<2x32xi32>
    %215 = arith.extui %214 : vector<2x32xi1> to vector<2x32xi32>
    %216 = arith.sitofp %215 : vector<2x32xi32> to vector<2x32xf32>
    %c2 = arith.constant 2 : index
    %c0_127 = arith.constant 0 : index
    %c0_128 = arith.constant 0 : index
    %217 = vector.load %arg2[%c2, %c0_127, %c0_128] : memref<8x2x32xf32, #tpu.memory_space<vmem>>, vector<1x2x32xf32>
    %218 = vector.shape_cast %217 : vector<1x2x32xf32> to vector<2x32xf32>
    %219 = vector.broadcast %206 : vector<2x1xf32> to vector<2x32xf32>
    %220 = arith.subf %204, %219 : vector<2x32xf32>
    %221 = math.exp %220 : vector<2x32xf32>
    %cst_129 = arith.constant dense<0.000000e+00> : vector<2xf32>
    %222 = vector.multi_reduction <add>, %221, %cst_129 [1] : vector<2x32xf32> to vector<2xf32>
    %223 = vector.shape_cast %222 : vector<2xf32> to vector<2x1xf32>
    %224 = math.log %223 : vector<2x1xf32>
    %225 = arith.addf %206, %224 : vector<2x1xf32>
    %226 = arith.mulf %204, %218 : vector<2x32xf32>
    %cst_130 = arith.constant dense<0.000000e+00> : vector<2xf32>
    %227 = vector.multi_reduction <add>, %226, %cst_130 [1] : vector<2x32xf32> to vector<2xf32>
    %228 = vector.shape_cast %227 : vector<2xf32> to vector<2x1xf32>
    %229 = vector.extract_strided_slice %218 {offsets = [0, 0], sizes = [2, 1], strides = [1, 1]} : vector<2x32xf32> to vector<2x1xf32>
    %cst_131 = arith.constant 1.000000e+00 : f32
    %230 = vector.broadcast %cst_131 : f32 to vector<2x1xf32>
    %231 = arith.subf %230, %229 : vector<2x1xf32>
    %232 = arith.subf %225, %228 : vector<2x1xf32>
    %233 = arith.mulf %232, %231 : vector<2x1xf32>
    %cst_132 = arith.constant dense<0.000000e+00> : vector<1xf32>
    %234 = vector.multi_reduction <add>, %233, %cst_132 [0] : vector<2x1xf32> to vector<1xf32>
    %235 = vector.shape_cast %234 : vector<1xf32> to vector<1x1xf32>
    %236 = arith.addf %125, %235 : vector<1x1xf32>
    %cst_133 = arith.constant dense<0.000000e+00> : vector<1xf32>
    %237 = vector.multi_reduction <add>, %231, %cst_133 [0] : vector<2x1xf32> to vector<1xf32>
    %238 = vector.shape_cast %237 : vector<1xf32> to vector<1x1xf32>
    %239 = arith.addf %128, %238 : vector<1x1xf32>
    %c2_134 = arith.constant 2 : index
    %240 = memref.load %arg1[%c2_134] : memref<8xi32, #tpu.memory_space<smem>>
    %c0_i32_135 = arith.constant 0 : i32
    %241 = arith.cmpi ne, %240, %c0_i32_135 : i32
    %cst_136 = arith.constant 1.000000e+00 : f32
    %cst_137 = arith.constant 0.000000e+00 : f32
    %242 = arith.select %241, %cst_136, %cst_137 : f32
    %c2_138 = arith.constant 2 : index
    %c0_139 = arith.constant 0 : index
    %c0_140 = arith.constant 0 : index
    %243 = vector.load %arg2[%c2_138, %c0_139, %c0_140] : memref<8x2x32xf32, #tpu.memory_space<vmem>>, vector<1x2x32xf32>
    %244 = vector.shape_cast %243 : vector<1x2x32xf32> to vector<2x32xf32>
    %245 = vector.broadcast %242 : f32 to vector<2x32xf32>
    %246 = arith.mulf %245, %244 : vector<2x32xf32>
    %cst_141 = arith.constant 1.000000e+00 : f32
    %247 = arith.subf %cst_141, %242 : f32
    %248 = vector.broadcast %247 : f32 to vector<2x32xf32>
    %249 = arith.mulf %248, %216 : vector<2x32xf32>
    %250 = arith.addf %246, %249 : vector<2x32xf32>
    %c0_142 = arith.constant 0 : index
    %c0_143 = arith.constant 0 : index
    %251 = vector.load %arg8[%c0_142, %c0_143] : memref<32x32xf32, #tpu.memory_space<vmem>>, vector<32x32xf32>
    %cst_144 = arith.constant dense<0.000000e+00> : vector<2x32xf32>
    %252 = tpu.matmul %193, %251, %cst_144 {dimension_numbers = #tpu.dot_dimension_numbers<[1], [0], [0], [1], [0, 0, 1, 1], [], []>} : vector<2x32xf32>, vector<32x32xf32>, vector<2x32xf32> -> vector<2x32xf32>
    %c0_145 = arith.constant 0 : index
    %c0_146 = arith.constant 0 : index
    %c0_147 = arith.constant 0 : index
    %253 = vector.load %arg19[%c0_145, %c0_146, %c0_147] : memref<2x16x32xf32, #tpu.memory_space<vmem>>, vector<2x16x32xf32>
    %254 = vector.shape_cast %252 : vector<2x32xf32> to vector<2x1x32xf32>
    %255 = vector.broadcast %254 : vector<2x1x32xf32> to vector<2x16x32xf32>
    %256 = arith.addf %253, %255 : vector<2x16x32xf32>
    %257 = math.tanh %256 : vector<2x16x32xf32>
    %c0_148 = arith.constant 0 : index
    %c0_149 = arith.constant 0 : index
    %258 = vector.load %arg9[%c0_148, %c0_149] : memref<1x32xf32, #tpu.memory_space<vmem>>, vector<1x32xf32>
    %259 = vector.shape_cast %258 : vector<1x32xf32> to vector<1x1x32xf32>
    %260 = vector.broadcast %259 : vector<1x1x32xf32> to vector<2x16x32xf32>
    %261 = arith.mulf %257, %260 : vector<2x16x32xf32>
    %cst_150 = arith.constant dense<0.000000e+00> : vector<2x16xf32>
    %262 = vector.multi_reduction <add>, %261, %cst_150 [2] : vector<2x16x32xf32> to vector<2x16xf32>
    %c0_151 = arith.constant 0 : index
    %c0_152 = arith.constant 0 : index
    %263 = vector.load %arg4[%c0_151, %c0_152] : memref<2x16xf32, #tpu.memory_space<vmem>>, vector<2x16xf32>
    %264 = arith.addf %262, %263 : vector<2x16xf32>
    %cst_153 = arith.constant dense<0xFF800000> : vector<2xf32>
    %265 = vector.multi_reduction <maximumf>, %264, %cst_153 [1] : vector<2x16xf32> to vector<2xf32>
    %266 = vector.shape_cast %265 : vector<2xf32> to vector<2x1xf32>
    %267 = vector.broadcast %266 : vector<2x1xf32> to vector<2x16xf32>
    %268 = arith.subf %264, %267 : vector<2x16xf32>
    %269 = math.exp %268 : vector<2x16xf32>
    %cst_154 = arith.constant dense<0.000000e+00> : vector<2xf32>
    %270 = vector.multi_reduction <add>, %269, %cst_154 [1] : vector<2x16xf32> to vector<2xf32>
    %271 = vector.shape_cast %270 : vector<2xf32> to vector<2x1xf32>
    %272 = vector.broadcast %271 : vector<2x1xf32> to vector<2x16xf32>
    %273 = arith.divf %269, %272 : vector<2x16xf32>
    %274 = vector.shape_cast %273 : vector<2x16xf32> to vector<2x16x1xf32>
    %c0_155 = arith.constant 0 : index
    %c0_156 = arith.constant 0 : index
    %c0_157 = arith.constant 0 : index
    %275 = vector.load %arg3[%c0_155, %c0_156, %c0_157] : memref<2x16x32xf32, #tpu.memory_space<vmem>>, vector<2x16x32xf32>
    %276 = vector.broadcast %274 : vector<2x16x1xf32> to vector<2x16x32xf32>
    %277 = arith.mulf %276, %275 : vector<2x16x32xf32>
    %cst_158 = arith.constant dense<0.000000e+00> : vector<2x32xf32>
    %278 = vector.multi_reduction <add>, %277, %cst_158 [1] : vector<2x16x32xf32> to vector<2x32xf32>
    %c0_159 = arith.constant 0 : index
    %c0_160 = arith.constant 0 : index
    %279 = vector.load %arg10[%c0_159, %c0_160] : memref<32x128xf32, #tpu.memory_space<vmem>>, vector<32x128xf32>
    %cst_161 = arith.constant dense<0.000000e+00> : vector<2x128xf32>
    %280 = tpu.matmul %250, %279, %cst_161 {dimension_numbers = #tpu.dot_dimension_numbers<[1], [0], [0], [1], [0, 0, 1, 1], [], []>} : vector<2x32xf32>, vector<32x128xf32>, vector<2x128xf32> -> vector<2x128xf32>
    %c0_162 = arith.constant 0 : index
    %c0_163 = arith.constant 0 : index
    %281 = vector.load %arg11[%c0_162, %c0_163] : memref<32x128xf32, #tpu.memory_space<vmem>>, vector<32x128xf32>
    %cst_164 = arith.constant dense<0.000000e+00> : vector<2x128xf32>
    %282 = tpu.matmul %278, %281, %cst_164 {dimension_numbers = #tpu.dot_dimension_numbers<[1], [0], [0], [1], [0, 0, 1, 1], [], []>} : vector<2x32xf32>, vector<32x128xf32>, vector<2x128xf32> -> vector<2x128xf32>
    %283 = arith.addf %280, %282 : vector<2x128xf32>
    %c0_165 = arith.constant 0 : index
    %c0_166 = arith.constant 0 : index
    %284 = vector.load %arg12[%c0_165, %c0_166] : memref<32x128xf32, #tpu.memory_space<vmem>>, vector<32x128xf32>
    %cst_167 = arith.constant dense<0.000000e+00> : vector<2x128xf32>
    %285 = tpu.matmul %193, %284, %cst_167 {dimension_numbers = #tpu.dot_dimension_numbers<[1], [0], [0], [1], [0, 0, 1, 1], [], []>} : vector<2x32xf32>, vector<32x128xf32>, vector<2x128xf32> -> vector<2x128xf32>
    %286 = arith.addf %283, %285 : vector<2x128xf32>
    %c0_168 = arith.constant 0 : index
    %c0_169 = arith.constant 0 : index
    %287 = vector.load %arg13[%c0_168, %c0_169] : memref<1x128xf32, #tpu.memory_space<vmem>>, vector<1x128xf32>
    %288 = vector.broadcast %287 : vector<1x128xf32> to vector<2x128xf32>
    %289 = arith.addf %286, %288 : vector<2x128xf32>
    %290 = arith.negf %289 : vector<2x128xf32>
    %291 = math.exp %290 : vector<2x128xf32>
    %cst_170 = arith.constant 1.000000e+00 : f32
    %292 = vector.broadcast %cst_170 : f32 to vector<2x128xf32>
    %293 = arith.addf %292, %291 : vector<2x128xf32>
    %294 = arith.divf %292, %293 : vector<2x128xf32>
    %295 = math.tanh %289 : vector<2x128xf32>
    %296 = vector.extract_strided_slice %294 {offsets = [0, 0], sizes = [2, 32], strides = [1, 1]} : vector<2x128xf32> to vector<2x32xf32>
    %297 = vector.extract_strided_slice %294 {offsets = [0, 32], sizes = [2, 32], strides = [1, 1]} : vector<2x128xf32> to vector<2x32xf32>
    %298 = vector.extract_strided_slice %295 {offsets = [0, 64], sizes = [2, 32], strides = [1, 1]} : vector<2x128xf32> to vector<2x32xf32>
    %299 = vector.extract_strided_slice %294 {offsets = [0, 96], sizes = [2, 32], strides = [1, 1]} : vector<2x128xf32> to vector<2x32xf32>
    %300 = arith.mulf %297, %191 : vector<2x32xf32>
    %301 = arith.mulf %296, %298 : vector<2x32xf32>
    %302 = arith.addf %300, %301 : vector<2x32xf32>
    %303 = math.tanh %302 : vector<2x32xf32>
    %304 = arith.mulf %299, %303 : vector<2x32xf32>
    %c0_171 = arith.constant 0 : index
    %c0_172 = arith.constant 0 : index
    %305 = vector.load %arg14[%c0_171, %c0_172] : memref<32x32xf32, #tpu.memory_space<vmem>>, vector<32x32xf32>
    %cst_173 = arith.constant dense<0.000000e+00> : vector<2x32xf32>
    %306 = tpu.matmul %250, %305, %cst_173 {dimension_numbers = #tpu.dot_dimension_numbers<[1], [0], [0], [1], [0, 0, 1, 1], [], []>} : vector<2x32xf32>, vector<32x32xf32>, vector<2x32xf32> -> vector<2x32xf32>
    %c0_174 = arith.constant 0 : index
    %c0_175 = arith.constant 0 : index
    %307 = vector.load %arg15[%c0_174, %c0_175] : memref<32x32xf32, #tpu.memory_space<vmem>>, vector<32x32xf32>
    %cst_176 = arith.constant dense<0.000000e+00> : vector<2x32xf32>
    %308 = tpu.matmul %278, %307, %cst_176 {dimension_numbers = #tpu.dot_dimension_numbers<[1], [0], [0], [1], [0, 0, 1, 1], [], []>} : vector<2x32xf32>, vector<32x32xf32>, vector<2x32xf32> -> vector<2x32xf32>
    %309 = arith.addf %306, %308 : vector<2x32xf32>
    %c0_177 = arith.constant 0 : index
    %c0_178 = arith.constant 0 : index
    %310 = vector.load %arg16[%c0_177, %c0_178] : memref<32x32xf32, #tpu.memory_space<vmem>>, vector<32x32xf32>
    %cst_179 = arith.constant dense<0.000000e+00> : vector<2x32xf32>
    %311 = tpu.matmul %304, %310, %cst_179 {dimension_numbers = #tpu.dot_dimension_numbers<[1], [0], [0], [1], [0, 0, 1, 1], [], []>} : vector<2x32xf32>, vector<32x32xf32>, vector<2x32xf32> -> vector<2x32xf32>
    %312 = arith.addf %309, %311 : vector<2x32xf32>
    %c0_180 = arith.constant 0 : index
    %c0_181 = arith.constant 0 : index
    %313 = vector.load %arg17[%c0_180, %c0_181] : memref<1x32xf32, #tpu.memory_space<vmem>>, vector<1x32xf32>
    %314 = vector.broadcast %313 : vector<1x32xf32> to vector<2x32xf32>
    %315 = arith.addf %312, %314 : vector<2x32xf32>
    %cst_182 = arith.constant dense<0xFF800000> : vector<2xf32>
    %316 = vector.multi_reduction <maximumf>, %315, %cst_182 [1] : vector<2x32xf32> to vector<2xf32>
    %317 = vector.shape_cast %316 : vector<2xf32> to vector<2x1xf32>
    %318 = vector.broadcast %317 : vector<2x1xf32> to vector<2x32xf32>
    %319 = arith.cmpf oeq, %315, %318 : vector<2x32xf32>
    %c32_i32_183 = arith.constant 32 : i32
    %320 = vector.broadcast %c32_i32_183 : i32 to vector<2x32xi32>
    %321 = arith.select %319, %26, %320 : vector<2x32xi1>, vector<2x32xi32>
    %cst_184 = arith.constant dense<2147483647> : vector<2xi32>
    %322 = vector.multi_reduction <minsi>, %321, %cst_184 [1] : vector<2x32xi32> to vector<2xi32>
    %323 = vector.shape_cast %322 : vector<2xi32> to vector<2x1xi32>
    %324 = vector.broadcast %323 : vector<2x1xi32> to vector<2x32xi32>
    %325 = arith.cmpi eq, %26, %324 : vector<2x32xi32>
    %326 = arith.extui %325 : vector<2x32xi1> to vector<2x32xi32>
    %327 = arith.sitofp %326 : vector<2x32xi32> to vector<2x32xf32>
    %c3 = arith.constant 3 : index
    %c0_185 = arith.constant 0 : index
    %c0_186 = arith.constant 0 : index
    %328 = vector.load %arg2[%c3, %c0_185, %c0_186] : memref<8x2x32xf32, #tpu.memory_space<vmem>>, vector<1x2x32xf32>
    %329 = vector.shape_cast %328 : vector<1x2x32xf32> to vector<2x32xf32>
    %330 = vector.broadcast %317 : vector<2x1xf32> to vector<2x32xf32>
    %331 = arith.subf %315, %330 : vector<2x32xf32>
    %332 = math.exp %331 : vector<2x32xf32>
    %cst_187 = arith.constant dense<0.000000e+00> : vector<2xf32>
    %333 = vector.multi_reduction <add>, %332, %cst_187 [1] : vector<2x32xf32> to vector<2xf32>
    %334 = vector.shape_cast %333 : vector<2xf32> to vector<2x1xf32>
    %335 = math.log %334 : vector<2x1xf32>
    %336 = arith.addf %317, %335 : vector<2x1xf32>
    %337 = arith.mulf %315, %329 : vector<2x32xf32>
    %cst_188 = arith.constant dense<0.000000e+00> : vector<2xf32>
    %338 = vector.multi_reduction <add>, %337, %cst_188 [1] : vector<2x32xf32> to vector<2xf32>
    %339 = vector.shape_cast %338 : vector<2xf32> to vector<2x1xf32>
    %340 = vector.extract_strided_slice %329 {offsets = [0, 0], sizes = [2, 1], strides = [1, 1]} : vector<2x32xf32> to vector<2x1xf32>
    %cst_189 = arith.constant 1.000000e+00 : f32
    %341 = vector.broadcast %cst_189 : f32 to vector<2x1xf32>
    %342 = arith.subf %341, %340 : vector<2x1xf32>
    %343 = arith.subf %336, %339 : vector<2x1xf32>
    %344 = arith.mulf %343, %342 : vector<2x1xf32>
    %cst_190 = arith.constant dense<0.000000e+00> : vector<1xf32>
    %345 = vector.multi_reduction <add>, %344, %cst_190 [0] : vector<2x1xf32> to vector<1xf32>
    %346 = vector.shape_cast %345 : vector<1xf32> to vector<1x1xf32>
    %347 = arith.addf %236, %346 : vector<1x1xf32>
    %cst_191 = arith.constant dense<0.000000e+00> : vector<1xf32>
    %348 = vector.multi_reduction <add>, %342, %cst_191 [0] : vector<2x1xf32> to vector<1xf32>
    %349 = vector.shape_cast %348 : vector<1xf32> to vector<1x1xf32>
    %350 = arith.addf %239, %349 : vector<1x1xf32>
    %c3_192 = arith.constant 3 : index
    %351 = memref.load %arg1[%c3_192] : memref<8xi32, #tpu.memory_space<smem>>
    %c0_i32_193 = arith.constant 0 : i32
    %352 = arith.cmpi ne, %351, %c0_i32_193 : i32
    %cst_194 = arith.constant 1.000000e+00 : f32
    %cst_195 = arith.constant 0.000000e+00 : f32
    %353 = arith.select %352, %cst_194, %cst_195 : f32
    %c3_196 = arith.constant 3 : index
    %c0_197 = arith.constant 0 : index
    %c0_198 = arith.constant 0 : index
    %354 = vector.load %arg2[%c3_196, %c0_197, %c0_198] : memref<8x2x32xf32, #tpu.memory_space<vmem>>, vector<1x2x32xf32>
    %355 = vector.shape_cast %354 : vector<1x2x32xf32> to vector<2x32xf32>
    %356 = vector.broadcast %353 : f32 to vector<2x32xf32>
    %357 = arith.mulf %356, %355 : vector<2x32xf32>
    %cst_199 = arith.constant 1.000000e+00 : f32
    %358 = arith.subf %cst_199, %353 : f32
    %359 = vector.broadcast %358 : f32 to vector<2x32xf32>
    %360 = arith.mulf %359, %327 : vector<2x32xf32>
    %361 = arith.addf %357, %360 : vector<2x32xf32>
    %c0_200 = arith.constant 0 : index
    %c0_201 = arith.constant 0 : index
    %362 = vector.load %arg8[%c0_200, %c0_201] : memref<32x32xf32, #tpu.memory_space<vmem>>, vector<32x32xf32>
    %cst_202 = arith.constant dense<0.000000e+00> : vector<2x32xf32>
    %363 = tpu.matmul %304, %362, %cst_202 {dimension_numbers = #tpu.dot_dimension_numbers<[1], [0], [0], [1], [0, 0, 1, 1], [], []>} : vector<2x32xf32>, vector<32x32xf32>, vector<2x32xf32> -> vector<2x32xf32>
    %c0_203 = arith.constant 0 : index
    %c0_204 = arith.constant 0 : index
    %c0_205 = arith.constant 0 : index
    %364 = vector.load %arg19[%c0_203, %c0_204, %c0_205] : memref<2x16x32xf32, #tpu.memory_space<vmem>>, vector<2x16x32xf32>
    %365 = vector.shape_cast %363 : vector<2x32xf32> to vector<2x1x32xf32>
    %366 = vector.broadcast %365 : vector<2x1x32xf32> to vector<2x16x32xf32>
    %367 = arith.addf %364, %366 : vector<2x16x32xf32>
    %368 = math.tanh %367 : vector<2x16x32xf32>
    %c0_206 = arith.constant 0 : index
    %c0_207 = arith.constant 0 : index
    %369 = vector.load %arg9[%c0_206, %c0_207] : memref<1x32xf32, #tpu.memory_space<vmem>>, vector<1x32xf32>
    %370 = vector.shape_cast %369 : vector<1x32xf32> to vector<1x1x32xf32>
    %371 = vector.broadcast %370 : vector<1x1x32xf32> to vector<2x16x32xf32>
    %372 = arith.mulf %368, %371 : vector<2x16x32xf32>
    %cst_208 = arith.constant dense<0.000000e+00> : vector<2x16xf32>
    %373 = vector.multi_reduction <add>, %372, %cst_208 [2] : vector<2x16x32xf32> to vector<2x16xf32>
    %c0_209 = arith.constant 0 : index
    %c0_210 = arith.constant 0 : index
    %374 = vector.load %arg4[%c0_209, %c0_210] : memref<2x16xf32, #tpu.memory_space<vmem>>, vector<2x16xf32>
    %375 = arith.addf %373, %374 : vector<2x16xf32>
    %cst_211 = arith.constant dense<0xFF800000> : vector<2xf32>
    %376 = vector.multi_reduction <maximumf>, %375, %cst_211 [1] : vector<2x16xf32> to vector<2xf32>
    %377 = vector.shape_cast %376 : vector<2xf32> to vector<2x1xf32>
    %378 = vector.broadcast %377 : vector<2x1xf32> to vector<2x16xf32>
    %379 = arith.subf %375, %378 : vector<2x16xf32>
    %380 = math.exp %379 : vector<2x16xf32>
    %cst_212 = arith.constant dense<0.000000e+00> : vector<2xf32>
    %381 = vector.multi_reduction <add>, %380, %cst_212 [1] : vector<2x16xf32> to vector<2xf32>
    %382 = vector.shape_cast %381 : vector<2xf32> to vector<2x1xf32>
    %383 = vector.broadcast %382 : vector<2x1xf32> to vector<2x16xf32>
    %384 = arith.divf %380, %383 : vector<2x16xf32>
    %385 = vector.shape_cast %384 : vector<2x16xf32> to vector<2x16x1xf32>
    %c0_213 = arith.constant 0 : index
    %c0_214 = arith.constant 0 : index
    %c0_215 = arith.constant 0 : index
    %386 = vector.load %arg3[%c0_213, %c0_214, %c0_215] : memref<2x16x32xf32, #tpu.memory_space<vmem>>, vector<2x16x32xf32>
    %387 = vector.broadcast %385 : vector<2x16x1xf32> to vector<2x16x32xf32>
    %388 = arith.mulf %387, %386 : vector<2x16x32xf32>
    %cst_216 = arith.constant dense<0.000000e+00> : vector<2x32xf32>
    %389 = vector.multi_reduction <add>, %388, %cst_216 [1] : vector<2x16x32xf32> to vector<2x32xf32>
    %c0_217 = arith.constant 0 : index
    %c0_218 = arith.constant 0 : index
    %390 = vector.load %arg10[%c0_217, %c0_218] : memref<32x128xf32, #tpu.memory_space<vmem>>, vector<32x128xf32>
    %cst_219 = arith.constant dense<0.000000e+00> : vector<2x128xf32>
    %391 = tpu.matmul %361, %390, %cst_219 {dimension_numbers = #tpu.dot_dimension_numbers<[1], [0], [0], [1], [0, 0, 1, 1], [], []>} : vector<2x32xf32>, vector<32x128xf32>, vector<2x128xf32> -> vector<2x128xf32>
    %c0_220 = arith.constant 0 : index
    %c0_221 = arith.constant 0 : index
    %392 = vector.load %arg11[%c0_220, %c0_221] : memref<32x128xf32, #tpu.memory_space<vmem>>, vector<32x128xf32>
    %cst_222 = arith.constant dense<0.000000e+00> : vector<2x128xf32>
    %393 = tpu.matmul %389, %392, %cst_222 {dimension_numbers = #tpu.dot_dimension_numbers<[1], [0], [0], [1], [0, 0, 1, 1], [], []>} : vector<2x32xf32>, vector<32x128xf32>, vector<2x128xf32> -> vector<2x128xf32>
    %394 = arith.addf %391, %393 : vector<2x128xf32>
    %c0_223 = arith.constant 0 : index
    %c0_224 = arith.constant 0 : index
    %395 = vector.load %arg12[%c0_223, %c0_224] : memref<32x128xf32, #tpu.memory_space<vmem>>, vector<32x128xf32>
    %cst_225 = arith.constant dense<0.000000e+00> : vector<2x128xf32>
    %396 = tpu.matmul %304, %395, %cst_225 {dimension_numbers = #tpu.dot_dimension_numbers<[1], [0], [0], [1], [0, 0, 1, 1], [], []>} : vector<2x32xf32>, vector<32x128xf32>, vector<2x128xf32> -> vector<2x128xf32>
    %397 = arith.addf %394, %396 : vector<2x128xf32>
    %c0_226 = arith.constant 0 : index
    %c0_227 = arith.constant 0 : index
    %398 = vector.load %arg13[%c0_226, %c0_227] : memref<1x128xf32, #tpu.memory_space<vmem>>, vector<1x128xf32>
    %399 = vector.broadcast %398 : vector<1x128xf32> to vector<2x128xf32>
    %400 = arith.addf %397, %399 : vector<2x128xf32>
    %401 = arith.negf %400 : vector<2x128xf32>
    %402 = math.exp %401 : vector<2x128xf32>
    %cst_228 = arith.constant 1.000000e+00 : f32
    %403 = vector.broadcast %cst_228 : f32 to vector<2x128xf32>
    %404 = arith.addf %403, %402 : vector<2x128xf32>
    %405 = arith.divf %403, %404 : vector<2x128xf32>
    %406 = math.tanh %400 : vector<2x128xf32>
    %407 = vector.extract_strided_slice %405 {offsets = [0, 0], sizes = [2, 32], strides = [1, 1]} : vector<2x128xf32> to vector<2x32xf32>
    %408 = vector.extract_strided_slice %405 {offsets = [0, 32], sizes = [2, 32], strides = [1, 1]} : vector<2x128xf32> to vector<2x32xf32>
    %409 = vector.extract_strided_slice %406 {offsets = [0, 64], sizes = [2, 32], strides = [1, 1]} : vector<2x128xf32> to vector<2x32xf32>
    %410 = vector.extract_strided_slice %405 {offsets = [0, 96], sizes = [2, 32], strides = [1, 1]} : vector<2x128xf32> to vector<2x32xf32>
    %411 = arith.mulf %408, %302 : vector<2x32xf32>
    %412 = arith.mulf %407, %409 : vector<2x32xf32>
    %413 = arith.addf %411, %412 : vector<2x32xf32>
    %414 = math.tanh %413 : vector<2x32xf32>
    %415 = arith.mulf %410, %414 : vector<2x32xf32>
    %c0_229 = arith.constant 0 : index
    %c0_230 = arith.constant 0 : index
    %416 = vector.load %arg14[%c0_229, %c0_230] : memref<32x32xf32, #tpu.memory_space<vmem>>, vector<32x32xf32>
    %cst_231 = arith.constant dense<0.000000e+00> : vector<2x32xf32>
    %417 = tpu.matmul %361, %416, %cst_231 {dimension_numbers = #tpu.dot_dimension_numbers<[1], [0], [0], [1], [0, 0, 1, 1], [], []>} : vector<2x32xf32>, vector<32x32xf32>, vector<2x32xf32> -> vector<2x32xf32>
    %c0_232 = arith.constant 0 : index
    %c0_233 = arith.constant 0 : index
    %418 = vector.load %arg15[%c0_232, %c0_233] : memref<32x32xf32, #tpu.memory_space<vmem>>, vector<32x32xf32>
    %cst_234 = arith.constant dense<0.000000e+00> : vector<2x32xf32>
    %419 = tpu.matmul %389, %418, %cst_234 {dimension_numbers = #tpu.dot_dimension_numbers<[1], [0], [0], [1], [0, 0, 1, 1], [], []>} : vector<2x32xf32>, vector<32x32xf32>, vector<2x32xf32> -> vector<2x32xf32>
    %420 = arith.addf %417, %419 : vector<2x32xf32>
    %c0_235 = arith.constant 0 : index
    %c0_236 = arith.constant 0 : index
    %421 = vector.load %arg16[%c0_235, %c0_236] : memref<32x32xf32, #tpu.memory_space<vmem>>, vector<32x32xf32>
    %cst_237 = arith.constant dense<0.000000e+00> : vector<2x32xf32>
    %422 = tpu.matmul %415, %421, %cst_237 {dimension_numbers = #tpu.dot_dimension_numbers<[1], [0], [0], [1], [0, 0, 1, 1], [], []>} : vector<2x32xf32>, vector<32x32xf32>, vector<2x32xf32> -> vector<2x32xf32>
    %423 = arith.addf %420, %422 : vector<2x32xf32>
    %c0_238 = arith.constant 0 : index
    %c0_239 = arith.constant 0 : index
    %424 = vector.load %arg17[%c0_238, %c0_239] : memref<1x32xf32, #tpu.memory_space<vmem>>, vector<1x32xf32>
    %425 = vector.broadcast %424 : vector<1x32xf32> to vector<2x32xf32>
    %426 = arith.addf %423, %425 : vector<2x32xf32>
    %cst_240 = arith.constant dense<0xFF800000> : vector<2xf32>
    %427 = vector.multi_reduction <maximumf>, %426, %cst_240 [1] : vector<2x32xf32> to vector<2xf32>
    %428 = vector.shape_cast %427 : vector<2xf32> to vector<2x1xf32>
    %429 = vector.broadcast %428 : vector<2x1xf32> to vector<2x32xf32>
    %430 = arith.cmpf oeq, %426, %429 : vector<2x32xf32>
    %c32_i32_241 = arith.constant 32 : i32
    %431 = vector.broadcast %c32_i32_241 : i32 to vector<2x32xi32>
    %432 = arith.select %430, %26, %431 : vector<2x32xi1>, vector<2x32xi32>
    %cst_242 = arith.constant dense<2147483647> : vector<2xi32>
    %433 = vector.multi_reduction <minsi>, %432, %cst_242 [1] : vector<2x32xi32> to vector<2xi32>
    %434 = vector.shape_cast %433 : vector<2xi32> to vector<2x1xi32>
    %435 = vector.broadcast %434 : vector<2x1xi32> to vector<2x32xi32>
    %436 = arith.cmpi eq, %26, %435 : vector<2x32xi32>
    %437 = arith.extui %436 : vector<2x32xi1> to vector<2x32xi32>
    %438 = arith.sitofp %437 : vector<2x32xi32> to vector<2x32xf32>
    %c4 = arith.constant 4 : index
    %c0_243 = arith.constant 0 : index
    %c0_244 = arith.constant 0 : index
    %439 = vector.load %arg2[%c4, %c0_243, %c0_244] : memref<8x2x32xf32, #tpu.memory_space<vmem>>, vector<1x2x32xf32>
    %440 = vector.shape_cast %439 : vector<1x2x32xf32> to vector<2x32xf32>
    %441 = vector.broadcast %428 : vector<2x1xf32> to vector<2x32xf32>
    %442 = arith.subf %426, %441 : vector<2x32xf32>
    %443 = math.exp %442 : vector<2x32xf32>
    %cst_245 = arith.constant dense<0.000000e+00> : vector<2xf32>
    %444 = vector.multi_reduction <add>, %443, %cst_245 [1] : vector<2x32xf32> to vector<2xf32>
    %445 = vector.shape_cast %444 : vector<2xf32> to vector<2x1xf32>
    %446 = math.log %445 : vector<2x1xf32>
    %447 = arith.addf %428, %446 : vector<2x1xf32>
    %448 = arith.mulf %426, %440 : vector<2x32xf32>
    %cst_246 = arith.constant dense<0.000000e+00> : vector<2xf32>
    %449 = vector.multi_reduction <add>, %448, %cst_246 [1] : vector<2x32xf32> to vector<2xf32>
    %450 = vector.shape_cast %449 : vector<2xf32> to vector<2x1xf32>
    %451 = vector.extract_strided_slice %440 {offsets = [0, 0], sizes = [2, 1], strides = [1, 1]} : vector<2x32xf32> to vector<2x1xf32>
    %cst_247 = arith.constant 1.000000e+00 : f32
    %452 = vector.broadcast %cst_247 : f32 to vector<2x1xf32>
    %453 = arith.subf %452, %451 : vector<2x1xf32>
    %454 = arith.subf %447, %450 : vector<2x1xf32>
    %455 = arith.mulf %454, %453 : vector<2x1xf32>
    %cst_248 = arith.constant dense<0.000000e+00> : vector<1xf32>
    %456 = vector.multi_reduction <add>, %455, %cst_248 [0] : vector<2x1xf32> to vector<1xf32>
    %457 = vector.shape_cast %456 : vector<1xf32> to vector<1x1xf32>
    %458 = arith.addf %347, %457 : vector<1x1xf32>
    %cst_249 = arith.constant dense<0.000000e+00> : vector<1xf32>
    %459 = vector.multi_reduction <add>, %453, %cst_249 [0] : vector<2x1xf32> to vector<1xf32>
    %460 = vector.shape_cast %459 : vector<1xf32> to vector<1x1xf32>
    %461 = arith.addf %350, %460 : vector<1x1xf32>
    %c4_250 = arith.constant 4 : index
    %462 = memref.load %arg1[%c4_250] : memref<8xi32, #tpu.memory_space<smem>>
    %c0_i32_251 = arith.constant 0 : i32
    %463 = arith.cmpi ne, %462, %c0_i32_251 : i32
    %cst_252 = arith.constant 1.000000e+00 : f32
    %cst_253 = arith.constant 0.000000e+00 : f32
    %464 = arith.select %463, %cst_252, %cst_253 : f32
    %c4_254 = arith.constant 4 : index
    %c0_255 = arith.constant 0 : index
    %c0_256 = arith.constant 0 : index
    %465 = vector.load %arg2[%c4_254, %c0_255, %c0_256] : memref<8x2x32xf32, #tpu.memory_space<vmem>>, vector<1x2x32xf32>
    %466 = vector.shape_cast %465 : vector<1x2x32xf32> to vector<2x32xf32>
    %467 = vector.broadcast %464 : f32 to vector<2x32xf32>
    %468 = arith.mulf %467, %466 : vector<2x32xf32>
    %cst_257 = arith.constant 1.000000e+00 : f32
    %469 = arith.subf %cst_257, %464 : f32
    %470 = vector.broadcast %469 : f32 to vector<2x32xf32>
    %471 = arith.mulf %470, %438 : vector<2x32xf32>
    %472 = arith.addf %468, %471 : vector<2x32xf32>
    %c0_258 = arith.constant 0 : index
    %c0_259 = arith.constant 0 : index
    %473 = vector.load %arg8[%c0_258, %c0_259] : memref<32x32xf32, #tpu.memory_space<vmem>>, vector<32x32xf32>
    %cst_260 = arith.constant dense<0.000000e+00> : vector<2x32xf32>
    %474 = tpu.matmul %415, %473, %cst_260 {dimension_numbers = #tpu.dot_dimension_numbers<[1], [0], [0], [1], [0, 0, 1, 1], [], []>} : vector<2x32xf32>, vector<32x32xf32>, vector<2x32xf32> -> vector<2x32xf32>
    %c0_261 = arith.constant 0 : index
    %c0_262 = arith.constant 0 : index
    %c0_263 = arith.constant 0 : index
    %475 = vector.load %arg19[%c0_261, %c0_262, %c0_263] : memref<2x16x32xf32, #tpu.memory_space<vmem>>, vector<2x16x32xf32>
    %476 = vector.shape_cast %474 : vector<2x32xf32> to vector<2x1x32xf32>
    %477 = vector.broadcast %476 : vector<2x1x32xf32> to vector<2x16x32xf32>
    %478 = arith.addf %475, %477 : vector<2x16x32xf32>
    %479 = math.tanh %478 : vector<2x16x32xf32>
    %c0_264 = arith.constant 0 : index
    %c0_265 = arith.constant 0 : index
    %480 = vector.load %arg9[%c0_264, %c0_265] : memref<1x32xf32, #tpu.memory_space<vmem>>, vector<1x32xf32>
    %481 = vector.shape_cast %480 : vector<1x32xf32> to vector<1x1x32xf32>
    %482 = vector.broadcast %481 : vector<1x1x32xf32> to vector<2x16x32xf32>
    %483 = arith.mulf %479, %482 : vector<2x16x32xf32>
    %cst_266 = arith.constant dense<0.000000e+00> : vector<2x16xf32>
    %484 = vector.multi_reduction <add>, %483, %cst_266 [2] : vector<2x16x32xf32> to vector<2x16xf32>
    %c0_267 = arith.constant 0 : index
    %c0_268 = arith.constant 0 : index
    %485 = vector.load %arg4[%c0_267, %c0_268] : memref<2x16xf32, #tpu.memory_space<vmem>>, vector<2x16xf32>
    %486 = arith.addf %484, %485 : vector<2x16xf32>
    %cst_269 = arith.constant dense<0xFF800000> : vector<2xf32>
    %487 = vector.multi_reduction <maximumf>, %486, %cst_269 [1] : vector<2x16xf32> to vector<2xf32>
    %488 = vector.shape_cast %487 : vector<2xf32> to vector<2x1xf32>
    %489 = vector.broadcast %488 : vector<2x1xf32> to vector<2x16xf32>
    %490 = arith.subf %486, %489 : vector<2x16xf32>
    %491 = math.exp %490 : vector<2x16xf32>
    %cst_270 = arith.constant dense<0.000000e+00> : vector<2xf32>
    %492 = vector.multi_reduction <add>, %491, %cst_270 [1] : vector<2x16xf32> to vector<2xf32>
    %493 = vector.shape_cast %492 : vector<2xf32> to vector<2x1xf32>
    %494 = vector.broadcast %493 : vector<2x1xf32> to vector<2x16xf32>
    %495 = arith.divf %491, %494 : vector<2x16xf32>
    %496 = vector.shape_cast %495 : vector<2x16xf32> to vector<2x16x1xf32>
    %c0_271 = arith.constant 0 : index
    %c0_272 = arith.constant 0 : index
    %c0_273 = arith.constant 0 : index
    %497 = vector.load %arg3[%c0_271, %c0_272, %c0_273] : memref<2x16x32xf32, #tpu.memory_space<vmem>>, vector<2x16x32xf32>
    %498 = vector.broadcast %496 : vector<2x16x1xf32> to vector<2x16x32xf32>
    %499 = arith.mulf %498, %497 : vector<2x16x32xf32>
    %cst_274 = arith.constant dense<0.000000e+00> : vector<2x32xf32>
    %500 = vector.multi_reduction <add>, %499, %cst_274 [1] : vector<2x16x32xf32> to vector<2x32xf32>
    %c0_275 = arith.constant 0 : index
    %c0_276 = arith.constant 0 : index
    %501 = vector.load %arg10[%c0_275, %c0_276] : memref<32x128xf32, #tpu.memory_space<vmem>>, vector<32x128xf32>
    %cst_277 = arith.constant dense<0.000000e+00> : vector<2x128xf32>
    %502 = tpu.matmul %472, %501, %cst_277 {dimension_numbers = #tpu.dot_dimension_numbers<[1], [0], [0], [1], [0, 0, 1, 1], [], []>} : vector<2x32xf32>, vector<32x128xf32>, vector<2x128xf32> -> vector<2x128xf32>
    %c0_278 = arith.constant 0 : index
    %c0_279 = arith.constant 0 : index
    %503 = vector.load %arg11[%c0_278, %c0_279] : memref<32x128xf32, #tpu.memory_space<vmem>>, vector<32x128xf32>
    %cst_280 = arith.constant dense<0.000000e+00> : vector<2x128xf32>
    %504 = tpu.matmul %500, %503, %cst_280 {dimension_numbers = #tpu.dot_dimension_numbers<[1], [0], [0], [1], [0, 0, 1, 1], [], []>} : vector<2x32xf32>, vector<32x128xf32>, vector<2x128xf32> -> vector<2x128xf32>
    %505 = arith.addf %502, %504 : vector<2x128xf32>
    %c0_281 = arith.constant 0 : index
    %c0_282 = arith.constant 0 : index
    %506 = vector.load %arg12[%c0_281, %c0_282] : memref<32x128xf32, #tpu.memory_space<vmem>>, vector<32x128xf32>
    %cst_283 = arith.constant dense<0.000000e+00> : vector<2x128xf32>
    %507 = tpu.matmul %415, %506, %cst_283 {dimension_numbers = #tpu.dot_dimension_numbers<[1], [0], [0], [1], [0, 0, 1, 1], [], []>} : vector<2x32xf32>, vector<32x128xf32>, vector<2x128xf32> -> vector<2x128xf32>
    %508 = arith.addf %505, %507 : vector<2x128xf32>
    %c0_284 = arith.constant 0 : index
    %c0_285 = arith.constant 0 : index
    %509 = vector.load %arg13[%c0_284, %c0_285] : memref<1x128xf32, #tpu.memory_space<vmem>>, vector<1x128xf32>
    %510 = vector.broadcast %509 : vector<1x128xf32> to vector<2x128xf32>
    %511 = arith.addf %508, %510 : vector<2x128xf32>
    %512 = arith.negf %511 : vector<2x128xf32>
    %513 = math.exp %512 : vector<2x128xf32>
    %cst_286 = arith.constant 1.000000e+00 : f32
    %514 = vector.broadcast %cst_286 : f32 to vector<2x128xf32>
    %515 = arith.addf %514, %513 : vector<2x128xf32>
    %516 = arith.divf %514, %515 : vector<2x128xf32>
    %517 = math.tanh %511 : vector<2x128xf32>
    %518 = vector.extract_strided_slice %516 {offsets = [0, 0], sizes = [2, 32], strides = [1, 1]} : vector<2x128xf32> to vector<2x32xf32>
    %519 = vector.extract_strided_slice %516 {offsets = [0, 32], sizes = [2, 32], strides = [1, 1]} : vector<2x128xf32> to vector<2x32xf32>
    %520 = vector.extract_strided_slice %517 {offsets = [0, 64], sizes = [2, 32], strides = [1, 1]} : vector<2x128xf32> to vector<2x32xf32>
    %521 = vector.extract_strided_slice %516 {offsets = [0, 96], sizes = [2, 32], strides = [1, 1]} : vector<2x128xf32> to vector<2x32xf32>
    %522 = arith.mulf %519, %413 : vector<2x32xf32>
    %523 = arith.mulf %518, %520 : vector<2x32xf32>
    %524 = arith.addf %522, %523 : vector<2x32xf32>
    %525 = math.tanh %524 : vector<2x32xf32>
    %526 = arith.mulf %521, %525 : vector<2x32xf32>
    %c0_287 = arith.constant 0 : index
    %c0_288 = arith.constant 0 : index
    %527 = vector.load %arg14[%c0_287, %c0_288] : memref<32x32xf32, #tpu.memory_space<vmem>>, vector<32x32xf32>
    %cst_289 = arith.constant dense<0.000000e+00> : vector<2x32xf32>
    %528 = tpu.matmul %472, %527, %cst_289 {dimension_numbers = #tpu.dot_dimension_numbers<[1], [0], [0], [1], [0, 0, 1, 1], [], []>} : vector<2x32xf32>, vector<32x32xf32>, vector<2x32xf32> -> vector<2x32xf32>
    %c0_290 = arith.constant 0 : index
    %c0_291 = arith.constant 0 : index
    %529 = vector.load %arg15[%c0_290, %c0_291] : memref<32x32xf32, #tpu.memory_space<vmem>>, vector<32x32xf32>
    %cst_292 = arith.constant dense<0.000000e+00> : vector<2x32xf32>
    %530 = tpu.matmul %500, %529, %cst_292 {dimension_numbers = #tpu.dot_dimension_numbers<[1], [0], [0], [1], [0, 0, 1, 1], [], []>} : vector<2x32xf32>, vector<32x32xf32>, vector<2x32xf32> -> vector<2x32xf32>
    %531 = arith.addf %528, %530 : vector<2x32xf32>
    %c0_293 = arith.constant 0 : index
    %c0_294 = arith.constant 0 : index
    %532 = vector.load %arg16[%c0_293, %c0_294] : memref<32x32xf32, #tpu.memory_space<vmem>>, vector<32x32xf32>
    %cst_295 = arith.constant dense<0.000000e+00> : vector<2x32xf32>
    %533 = tpu.matmul %526, %532, %cst_295 {dimension_numbers = #tpu.dot_dimension_numbers<[1], [0], [0], [1], [0, 0, 1, 1], [], []>} : vector<2x32xf32>, vector<32x32xf32>, vector<2x32xf32> -> vector<2x32xf32>
    %534 = arith.addf %531, %533 : vector<2x32xf32>
    %c0_296 = arith.constant 0 : index
    %c0_297 = arith.constant 0 : index
    %535 = vector.load %arg17[%c0_296, %c0_297] : memref<1x32xf32, #tpu.memory_space<vmem>>, vector<1x32xf32>
    %536 = vector.broadcast %535 : vector<1x32xf32> to vector<2x32xf32>
    %537 = arith.addf %534, %536 : vector<2x32xf32>
    %cst_298 = arith.constant dense<0xFF800000> : vector<2xf32>
    %538 = vector.multi_reduction <maximumf>, %537, %cst_298 [1] : vector<2x32xf32> to vector<2xf32>
    %539 = vector.shape_cast %538 : vector<2xf32> to vector<2x1xf32>
    %540 = vector.broadcast %539 : vector<2x1xf32> to vector<2x32xf32>
    %541 = arith.cmpf oeq, %537, %540 : vector<2x32xf32>
    %c32_i32_299 = arith.constant 32 : i32
    %542 = vector.broadcast %c32_i32_299 : i32 to vector<2x32xi32>
    %543 = arith.select %541, %26, %542 : vector<2x32xi1>, vector<2x32xi32>
    %cst_300 = arith.constant dense<2147483647> : vector<2xi32>
    %544 = vector.multi_reduction <minsi>, %543, %cst_300 [1] : vector<2x32xi32> to vector<2xi32>
    %545 = vector.shape_cast %544 : vector<2xi32> to vector<2x1xi32>
    %546 = vector.broadcast %545 : vector<2x1xi32> to vector<2x32xi32>
    %547 = arith.cmpi eq, %26, %546 : vector<2x32xi32>
    %548 = arith.extui %547 : vector<2x32xi1> to vector<2x32xi32>
    %549 = arith.sitofp %548 : vector<2x32xi32> to vector<2x32xf32>
    %c5 = arith.constant 5 : index
    %c0_301 = arith.constant 0 : index
    %c0_302 = arith.constant 0 : index
    %550 = vector.load %arg2[%c5, %c0_301, %c0_302] : memref<8x2x32xf32, #tpu.memory_space<vmem>>, vector<1x2x32xf32>
    %551 = vector.shape_cast %550 : vector<1x2x32xf32> to vector<2x32xf32>
    %552 = vector.broadcast %539 : vector<2x1xf32> to vector<2x32xf32>
    %553 = arith.subf %537, %552 : vector<2x32xf32>
    %554 = math.exp %553 : vector<2x32xf32>
    %cst_303 = arith.constant dense<0.000000e+00> : vector<2xf32>
    %555 = vector.multi_reduction <add>, %554, %cst_303 [1] : vector<2x32xf32> to vector<2xf32>
    %556 = vector.shape_cast %555 : vector<2xf32> to vector<2x1xf32>
    %557 = math.log %556 : vector<2x1xf32>
    %558 = arith.addf %539, %557 : vector<2x1xf32>
    %559 = arith.mulf %537, %551 : vector<2x32xf32>
    %cst_304 = arith.constant dense<0.000000e+00> : vector<2xf32>
    %560 = vector.multi_reduction <add>, %559, %cst_304 [1] : vector<2x32xf32> to vector<2xf32>
    %561 = vector.shape_cast %560 : vector<2xf32> to vector<2x1xf32>
    %562 = vector.extract_strided_slice %551 {offsets = [0, 0], sizes = [2, 1], strides = [1, 1]} : vector<2x32xf32> to vector<2x1xf32>
    %cst_305 = arith.constant 1.000000e+00 : f32
    %563 = vector.broadcast %cst_305 : f32 to vector<2x1xf32>
    %564 = arith.subf %563, %562 : vector<2x1xf32>
    %565 = arith.subf %558, %561 : vector<2x1xf32>
    %566 = arith.mulf %565, %564 : vector<2x1xf32>
    %cst_306 = arith.constant dense<0.000000e+00> : vector<1xf32>
    %567 = vector.multi_reduction <add>, %566, %cst_306 [0] : vector<2x1xf32> to vector<1xf32>
    %568 = vector.shape_cast %567 : vector<1xf32> to vector<1x1xf32>
    %569 = arith.addf %458, %568 : vector<1x1xf32>
    %cst_307 = arith.constant dense<0.000000e+00> : vector<1xf32>
    %570 = vector.multi_reduction <add>, %564, %cst_307 [0] : vector<2x1xf32> to vector<1xf32>
    %571 = vector.shape_cast %570 : vector<1xf32> to vector<1x1xf32>
    %572 = arith.addf %461, %571 : vector<1x1xf32>
    %c5_308 = arith.constant 5 : index
    %573 = memref.load %arg1[%c5_308] : memref<8xi32, #tpu.memory_space<smem>>
    %c0_i32_309 = arith.constant 0 : i32
    %574 = arith.cmpi ne, %573, %c0_i32_309 : i32
    %cst_310 = arith.constant 1.000000e+00 : f32
    %cst_311 = arith.constant 0.000000e+00 : f32
    %575 = arith.select %574, %cst_310, %cst_311 : f32
    %c5_312 = arith.constant 5 : index
    %c0_313 = arith.constant 0 : index
    %c0_314 = arith.constant 0 : index
    %576 = vector.load %arg2[%c5_312, %c0_313, %c0_314] : memref<8x2x32xf32, #tpu.memory_space<vmem>>, vector<1x2x32xf32>
    %577 = vector.shape_cast %576 : vector<1x2x32xf32> to vector<2x32xf32>
    %578 = vector.broadcast %575 : f32 to vector<2x32xf32>
    %579 = arith.mulf %578, %577 : vector<2x32xf32>
    %cst_315 = arith.constant 1.000000e+00 : f32
    %580 = arith.subf %cst_315, %575 : f32
    %581 = vector.broadcast %580 : f32 to vector<2x32xf32>
    %582 = arith.mulf %581, %549 : vector<2x32xf32>
    %583 = arith.addf %579, %582 : vector<2x32xf32>
    %c0_316 = arith.constant 0 : index
    %c0_317 = arith.constant 0 : index
    %584 = vector.load %arg8[%c0_316, %c0_317] : memref<32x32xf32, #tpu.memory_space<vmem>>, vector<32x32xf32>
    %cst_318 = arith.constant dense<0.000000e+00> : vector<2x32xf32>
    %585 = tpu.matmul %526, %584, %cst_318 {dimension_numbers = #tpu.dot_dimension_numbers<[1], [0], [0], [1], [0, 0, 1, 1], [], []>} : vector<2x32xf32>, vector<32x32xf32>, vector<2x32xf32> -> vector<2x32xf32>
    %c0_319 = arith.constant 0 : index
    %c0_320 = arith.constant 0 : index
    %c0_321 = arith.constant 0 : index
    %586 = vector.load %arg19[%c0_319, %c0_320, %c0_321] : memref<2x16x32xf32, #tpu.memory_space<vmem>>, vector<2x16x32xf32>
    %587 = vector.shape_cast %585 : vector<2x32xf32> to vector<2x1x32xf32>
    %588 = vector.broadcast %587 : vector<2x1x32xf32> to vector<2x16x32xf32>
    %589 = arith.addf %586, %588 : vector<2x16x32xf32>
    %590 = math.tanh %589 : vector<2x16x32xf32>
    %c0_322 = arith.constant 0 : index
    %c0_323 = arith.constant 0 : index
    %591 = vector.load %arg9[%c0_322, %c0_323] : memref<1x32xf32, #tpu.memory_space<vmem>>, vector<1x32xf32>
    %592 = vector.shape_cast %591 : vector<1x32xf32> to vector<1x1x32xf32>
    %593 = vector.broadcast %592 : vector<1x1x32xf32> to vector<2x16x32xf32>
    %594 = arith.mulf %590, %593 : vector<2x16x32xf32>
    %cst_324 = arith.constant dense<0.000000e+00> : vector<2x16xf32>
    %595 = vector.multi_reduction <add>, %594, %cst_324 [2] : vector<2x16x32xf32> to vector<2x16xf32>
    %c0_325 = arith.constant 0 : index
    %c0_326 = arith.constant 0 : index
    %596 = vector.load %arg4[%c0_325, %c0_326] : memref<2x16xf32, #tpu.memory_space<vmem>>, vector<2x16xf32>
    %597 = arith.addf %595, %596 : vector<2x16xf32>
    %cst_327 = arith.constant dense<0xFF800000> : vector<2xf32>
    %598 = vector.multi_reduction <maximumf>, %597, %cst_327 [1] : vector<2x16xf32> to vector<2xf32>
    %599 = vector.shape_cast %598 : vector<2xf32> to vector<2x1xf32>
    %600 = vector.broadcast %599 : vector<2x1xf32> to vector<2x16xf32>
    %601 = arith.subf %597, %600 : vector<2x16xf32>
    %602 = math.exp %601 : vector<2x16xf32>
    %cst_328 = arith.constant dense<0.000000e+00> : vector<2xf32>
    %603 = vector.multi_reduction <add>, %602, %cst_328 [1] : vector<2x16xf32> to vector<2xf32>
    %604 = vector.shape_cast %603 : vector<2xf32> to vector<2x1xf32>
    %605 = vector.broadcast %604 : vector<2x1xf32> to vector<2x16xf32>
    %606 = arith.divf %602, %605 : vector<2x16xf32>
    %607 = vector.shape_cast %606 : vector<2x16xf32> to vector<2x16x1xf32>
    %c0_329 = arith.constant 0 : index
    %c0_330 = arith.constant 0 : index
    %c0_331 = arith.constant 0 : index
    %608 = vector.load %arg3[%c0_329, %c0_330, %c0_331] : memref<2x16x32xf32, #tpu.memory_space<vmem>>, vector<2x16x32xf32>
    %609 = vector.broadcast %607 : vector<2x16x1xf32> to vector<2x16x32xf32>
    %610 = arith.mulf %609, %608 : vector<2x16x32xf32>
    %cst_332 = arith.constant dense<0.000000e+00> : vector<2x32xf32>
    %611 = vector.multi_reduction <add>, %610, %cst_332 [1] : vector<2x16x32xf32> to vector<2x32xf32>
    %c0_333 = arith.constant 0 : index
    %c0_334 = arith.constant 0 : index
    %612 = vector.load %arg10[%c0_333, %c0_334] : memref<32x128xf32, #tpu.memory_space<vmem>>, vector<32x128xf32>
    %cst_335 = arith.constant dense<0.000000e+00> : vector<2x128xf32>
    %613 = tpu.matmul %583, %612, %cst_335 {dimension_numbers = #tpu.dot_dimension_numbers<[1], [0], [0], [1], [0, 0, 1, 1], [], []>} : vector<2x32xf32>, vector<32x128xf32>, vector<2x128xf32> -> vector<2x128xf32>
    %c0_336 = arith.constant 0 : index
    %c0_337 = arith.constant 0 : index
    %614 = vector.load %arg11[%c0_336, %c0_337] : memref<32x128xf32, #tpu.memory_space<vmem>>, vector<32x128xf32>
    %cst_338 = arith.constant dense<0.000000e+00> : vector<2x128xf32>
    %615 = tpu.matmul %611, %614, %cst_338 {dimension_numbers = #tpu.dot_dimension_numbers<[1], [0], [0], [1], [0, 0, 1, 1], [], []>} : vector<2x32xf32>, vector<32x128xf32>, vector<2x128xf32> -> vector<2x128xf32>
    %616 = arith.addf %613, %615 : vector<2x128xf32>
    %c0_339 = arith.constant 0 : index
    %c0_340 = arith.constant 0 : index
    %617 = vector.load %arg12[%c0_339, %c0_340] : memref<32x128xf32, #tpu.memory_space<vmem>>, vector<32x128xf32>
    %cst_341 = arith.constant dense<0.000000e+00> : vector<2x128xf32>
    %618 = tpu.matmul %526, %617, %cst_341 {dimension_numbers = #tpu.dot_dimension_numbers<[1], [0], [0], [1], [0, 0, 1, 1], [], []>} : vector<2x32xf32>, vector<32x128xf32>, vector<2x128xf32> -> vector<2x128xf32>
    %619 = arith.addf %616, %618 : vector<2x128xf32>
    %c0_342 = arith.constant 0 : index
    %c0_343 = arith.constant 0 : index
    %620 = vector.load %arg13[%c0_342, %c0_343] : memref<1x128xf32, #tpu.memory_space<vmem>>, vector<1x128xf32>
    %621 = vector.broadcast %620 : vector<1x128xf32> to vector<2x128xf32>
    %622 = arith.addf %619, %621 : vector<2x128xf32>
    %623 = arith.negf %622 : vector<2x128xf32>
    %624 = math.exp %623 : vector<2x128xf32>
    %cst_344 = arith.constant 1.000000e+00 : f32
    %625 = vector.broadcast %cst_344 : f32 to vector<2x128xf32>
    %626 = arith.addf %625, %624 : vector<2x128xf32>
    %627 = arith.divf %625, %626 : vector<2x128xf32>
    %628 = math.tanh %622 : vector<2x128xf32>
    %629 = vector.extract_strided_slice %627 {offsets = [0, 0], sizes = [2, 32], strides = [1, 1]} : vector<2x128xf32> to vector<2x32xf32>
    %630 = vector.extract_strided_slice %627 {offsets = [0, 32], sizes = [2, 32], strides = [1, 1]} : vector<2x128xf32> to vector<2x32xf32>
    %631 = vector.extract_strided_slice %628 {offsets = [0, 64], sizes = [2, 32], strides = [1, 1]} : vector<2x128xf32> to vector<2x32xf32>
    %632 = vector.extract_strided_slice %627 {offsets = [0, 96], sizes = [2, 32], strides = [1, 1]} : vector<2x128xf32> to vector<2x32xf32>
    %633 = arith.mulf %630, %524 : vector<2x32xf32>
    %634 = arith.mulf %629, %631 : vector<2x32xf32>
    %635 = arith.addf %633, %634 : vector<2x32xf32>
    %636 = math.tanh %635 : vector<2x32xf32>
    %637 = arith.mulf %632, %636 : vector<2x32xf32>
    %c0_345 = arith.constant 0 : index
    %c0_346 = arith.constant 0 : index
    %638 = vector.load %arg14[%c0_345, %c0_346] : memref<32x32xf32, #tpu.memory_space<vmem>>, vector<32x32xf32>
    %cst_347 = arith.constant dense<0.000000e+00> : vector<2x32xf32>
    %639 = tpu.matmul %583, %638, %cst_347 {dimension_numbers = #tpu.dot_dimension_numbers<[1], [0], [0], [1], [0, 0, 1, 1], [], []>} : vector<2x32xf32>, vector<32x32xf32>, vector<2x32xf32> -> vector<2x32xf32>
    %c0_348 = arith.constant 0 : index
    %c0_349 = arith.constant 0 : index
    %640 = vector.load %arg15[%c0_348, %c0_349] : memref<32x32xf32, #tpu.memory_space<vmem>>, vector<32x32xf32>
    %cst_350 = arith.constant dense<0.000000e+00> : vector<2x32xf32>
    %641 = tpu.matmul %611, %640, %cst_350 {dimension_numbers = #tpu.dot_dimension_numbers<[1], [0], [0], [1], [0, 0, 1, 1], [], []>} : vector<2x32xf32>, vector<32x32xf32>, vector<2x32xf32> -> vector<2x32xf32>
    %642 = arith.addf %639, %641 : vector<2x32xf32>
    %c0_351 = arith.constant 0 : index
    %c0_352 = arith.constant 0 : index
    %643 = vector.load %arg16[%c0_351, %c0_352] : memref<32x32xf32, #tpu.memory_space<vmem>>, vector<32x32xf32>
    %cst_353 = arith.constant dense<0.000000e+00> : vector<2x32xf32>
    %644 = tpu.matmul %637, %643, %cst_353 {dimension_numbers = #tpu.dot_dimension_numbers<[1], [0], [0], [1], [0, 0, 1, 1], [], []>} : vector<2x32xf32>, vector<32x32xf32>, vector<2x32xf32> -> vector<2x32xf32>
    %645 = arith.addf %642, %644 : vector<2x32xf32>
    %c0_354 = arith.constant 0 : index
    %c0_355 = arith.constant 0 : index
    %646 = vector.load %arg17[%c0_354, %c0_355] : memref<1x32xf32, #tpu.memory_space<vmem>>, vector<1x32xf32>
    %647 = vector.broadcast %646 : vector<1x32xf32> to vector<2x32xf32>
    %648 = arith.addf %645, %647 : vector<2x32xf32>
    %cst_356 = arith.constant dense<0xFF800000> : vector<2xf32>
    %649 = vector.multi_reduction <maximumf>, %648, %cst_356 [1] : vector<2x32xf32> to vector<2xf32>
    %650 = vector.shape_cast %649 : vector<2xf32> to vector<2x1xf32>
    %651 = vector.broadcast %650 : vector<2x1xf32> to vector<2x32xf32>
    %652 = arith.cmpf oeq, %648, %651 : vector<2x32xf32>
    %c32_i32_357 = arith.constant 32 : i32
    %653 = vector.broadcast %c32_i32_357 : i32 to vector<2x32xi32>
    %654 = arith.select %652, %26, %653 : vector<2x32xi1>, vector<2x32xi32>
    %cst_358 = arith.constant dense<2147483647> : vector<2xi32>
    %655 = vector.multi_reduction <minsi>, %654, %cst_358 [1] : vector<2x32xi32> to vector<2xi32>
    %656 = vector.shape_cast %655 : vector<2xi32> to vector<2x1xi32>
    %657 = vector.broadcast %656 : vector<2x1xi32> to vector<2x32xi32>
    %658 = arith.cmpi eq, %26, %657 : vector<2x32xi32>
    %659 = arith.extui %658 : vector<2x32xi1> to vector<2x32xi32>
    %660 = arith.sitofp %659 : vector<2x32xi32> to vector<2x32xf32>
    %c6 = arith.constant 6 : index
    %c0_359 = arith.constant 0 : index
    %c0_360 = arith.constant 0 : index
    %661 = vector.load %arg2[%c6, %c0_359, %c0_360] : memref<8x2x32xf32, #tpu.memory_space<vmem>>, vector<1x2x32xf32>
    %662 = vector.shape_cast %661 : vector<1x2x32xf32> to vector<2x32xf32>
    %663 = vector.broadcast %650 : vector<2x1xf32> to vector<2x32xf32>
    %664 = arith.subf %648, %663 : vector<2x32xf32>
    %665 = math.exp %664 : vector<2x32xf32>
    %cst_361 = arith.constant dense<0.000000e+00> : vector<2xf32>
    %666 = vector.multi_reduction <add>, %665, %cst_361 [1] : vector<2x32xf32> to vector<2xf32>
    %667 = vector.shape_cast %666 : vector<2xf32> to vector<2x1xf32>
    %668 = math.log %667 : vector<2x1xf32>
    %669 = arith.addf %650, %668 : vector<2x1xf32>
    %670 = arith.mulf %648, %662 : vector<2x32xf32>
    %cst_362 = arith.constant dense<0.000000e+00> : vector<2xf32>
    %671 = vector.multi_reduction <add>, %670, %cst_362 [1] : vector<2x32xf32> to vector<2xf32>
    %672 = vector.shape_cast %671 : vector<2xf32> to vector<2x1xf32>
    %673 = vector.extract_strided_slice %662 {offsets = [0, 0], sizes = [2, 1], strides = [1, 1]} : vector<2x32xf32> to vector<2x1xf32>
    %cst_363 = arith.constant 1.000000e+00 : f32
    %674 = vector.broadcast %cst_363 : f32 to vector<2x1xf32>
    %675 = arith.subf %674, %673 : vector<2x1xf32>
    %676 = arith.subf %669, %672 : vector<2x1xf32>
    %677 = arith.mulf %676, %675 : vector<2x1xf32>
    %cst_364 = arith.constant dense<0.000000e+00> : vector<1xf32>
    %678 = vector.multi_reduction <add>, %677, %cst_364 [0] : vector<2x1xf32> to vector<1xf32>
    %679 = vector.shape_cast %678 : vector<1xf32> to vector<1x1xf32>
    %680 = arith.addf %569, %679 : vector<1x1xf32>
    %cst_365 = arith.constant dense<0.000000e+00> : vector<1xf32>
    %681 = vector.multi_reduction <add>, %675, %cst_365 [0] : vector<2x1xf32> to vector<1xf32>
    %682 = vector.shape_cast %681 : vector<1xf32> to vector<1x1xf32>
    %683 = arith.addf %572, %682 : vector<1x1xf32>
    %c6_366 = arith.constant 6 : index
    %684 = memref.load %arg1[%c6_366] : memref<8xi32, #tpu.memory_space<smem>>
    %c0_i32_367 = arith.constant 0 : i32
    %685 = arith.cmpi ne, %684, %c0_i32_367 : i32
    %cst_368 = arith.constant 1.000000e+00 : f32
    %cst_369 = arith.constant 0.000000e+00 : f32
    %686 = arith.select %685, %cst_368, %cst_369 : f32
    %c6_370 = arith.constant 6 : index
    %c0_371 = arith.constant 0 : index
    %c0_372 = arith.constant 0 : index
    %687 = vector.load %arg2[%c6_370, %c0_371, %c0_372] : memref<8x2x32xf32, #tpu.memory_space<vmem>>, vector<1x2x32xf32>
    %688 = vector.shape_cast %687 : vector<1x2x32xf32> to vector<2x32xf32>
    %689 = vector.broadcast %686 : f32 to vector<2x32xf32>
    %690 = arith.mulf %689, %688 : vector<2x32xf32>
    %cst_373 = arith.constant 1.000000e+00 : f32
    %691 = arith.subf %cst_373, %686 : f32
    %692 = vector.broadcast %691 : f32 to vector<2x32xf32>
    %693 = arith.mulf %692, %660 : vector<2x32xf32>
    %694 = arith.addf %690, %693 : vector<2x32xf32>
    %c0_374 = arith.constant 0 : index
    %c0_375 = arith.constant 0 : index
    %695 = vector.load %arg8[%c0_374, %c0_375] : memref<32x32xf32, #tpu.memory_space<vmem>>, vector<32x32xf32>
    %cst_376 = arith.constant dense<0.000000e+00> : vector<2x32xf32>
    %696 = tpu.matmul %637, %695, %cst_376 {dimension_numbers = #tpu.dot_dimension_numbers<[1], [0], [0], [1], [0, 0, 1, 1], [], []>} : vector<2x32xf32>, vector<32x32xf32>, vector<2x32xf32> -> vector<2x32xf32>
    %c0_377 = arith.constant 0 : index
    %c0_378 = arith.constant 0 : index
    %c0_379 = arith.constant 0 : index
    %697 = vector.load %arg19[%c0_377, %c0_378, %c0_379] : memref<2x16x32xf32, #tpu.memory_space<vmem>>, vector<2x16x32xf32>
    %698 = vector.shape_cast %696 : vector<2x32xf32> to vector<2x1x32xf32>
    %699 = vector.broadcast %698 : vector<2x1x32xf32> to vector<2x16x32xf32>
    %700 = arith.addf %697, %699 : vector<2x16x32xf32>
    %701 = math.tanh %700 : vector<2x16x32xf32>
    %c0_380 = arith.constant 0 : index
    %c0_381 = arith.constant 0 : index
    %702 = vector.load %arg9[%c0_380, %c0_381] : memref<1x32xf32, #tpu.memory_space<vmem>>, vector<1x32xf32>
    %703 = vector.shape_cast %702 : vector<1x32xf32> to vector<1x1x32xf32>
    %704 = vector.broadcast %703 : vector<1x1x32xf32> to vector<2x16x32xf32>
    %705 = arith.mulf %701, %704 : vector<2x16x32xf32>
    %cst_382 = arith.constant dense<0.000000e+00> : vector<2x16xf32>
    %706 = vector.multi_reduction <add>, %705, %cst_382 [2] : vector<2x16x32xf32> to vector<2x16xf32>
    %c0_383 = arith.constant 0 : index
    %c0_384 = arith.constant 0 : index
    %707 = vector.load %arg4[%c0_383, %c0_384] : memref<2x16xf32, #tpu.memory_space<vmem>>, vector<2x16xf32>
    %708 = arith.addf %706, %707 : vector<2x16xf32>
    %cst_385 = arith.constant dense<0xFF800000> : vector<2xf32>
    %709 = vector.multi_reduction <maximumf>, %708, %cst_385 [1] : vector<2x16xf32> to vector<2xf32>
    %710 = vector.shape_cast %709 : vector<2xf32> to vector<2x1xf32>
    %711 = vector.broadcast %710 : vector<2x1xf32> to vector<2x16xf32>
    %712 = arith.subf %708, %711 : vector<2x16xf32>
    %713 = math.exp %712 : vector<2x16xf32>
    %cst_386 = arith.constant dense<0.000000e+00> : vector<2xf32>
    %714 = vector.multi_reduction <add>, %713, %cst_386 [1] : vector<2x16xf32> to vector<2xf32>
    %715 = vector.shape_cast %714 : vector<2xf32> to vector<2x1xf32>
    %716 = vector.broadcast %715 : vector<2x1xf32> to vector<2x16xf32>
    %717 = arith.divf %713, %716 : vector<2x16xf32>
    %718 = vector.shape_cast %717 : vector<2x16xf32> to vector<2x16x1xf32>
    %c0_387 = arith.constant 0 : index
    %c0_388 = arith.constant 0 : index
    %c0_389 = arith.constant 0 : index
    %719 = vector.load %arg3[%c0_387, %c0_388, %c0_389] : memref<2x16x32xf32, #tpu.memory_space<vmem>>, vector<2x16x32xf32>
    %720 = vector.broadcast %718 : vector<2x16x1xf32> to vector<2x16x32xf32>
    %721 = arith.mulf %720, %719 : vector<2x16x32xf32>
    %cst_390 = arith.constant dense<0.000000e+00> : vector<2x32xf32>
    %722 = vector.multi_reduction <add>, %721, %cst_390 [1] : vector<2x16x32xf32> to vector<2x32xf32>
    %c0_391 = arith.constant 0 : index
    %c0_392 = arith.constant 0 : index
    %723 = vector.load %arg10[%c0_391, %c0_392] : memref<32x128xf32, #tpu.memory_space<vmem>>, vector<32x128xf32>
    %cst_393 = arith.constant dense<0.000000e+00> : vector<2x128xf32>
    %724 = tpu.matmul %694, %723, %cst_393 {dimension_numbers = #tpu.dot_dimension_numbers<[1], [0], [0], [1], [0, 0, 1, 1], [], []>} : vector<2x32xf32>, vector<32x128xf32>, vector<2x128xf32> -> vector<2x128xf32>
    %c0_394 = arith.constant 0 : index
    %c0_395 = arith.constant 0 : index
    %725 = vector.load %arg11[%c0_394, %c0_395] : memref<32x128xf32, #tpu.memory_space<vmem>>, vector<32x128xf32>
    %cst_396 = arith.constant dense<0.000000e+00> : vector<2x128xf32>
    %726 = tpu.matmul %722, %725, %cst_396 {dimension_numbers = #tpu.dot_dimension_numbers<[1], [0], [0], [1], [0, 0, 1, 1], [], []>} : vector<2x32xf32>, vector<32x128xf32>, vector<2x128xf32> -> vector<2x128xf32>
    %727 = arith.addf %724, %726 : vector<2x128xf32>
    %c0_397 = arith.constant 0 : index
    %c0_398 = arith.constant 0 : index
    %728 = vector.load %arg12[%c0_397, %c0_398] : memref<32x128xf32, #tpu.memory_space<vmem>>, vector<32x128xf32>
    %cst_399 = arith.constant dense<0.000000e+00> : vector<2x128xf32>
    %729 = tpu.matmul %637, %728, %cst_399 {dimension_numbers = #tpu.dot_dimension_numbers<[1], [0], [0], [1], [0, 0, 1, 1], [], []>} : vector<2x32xf32>, vector<32x128xf32>, vector<2x128xf32> -> vector<2x128xf32>
    %730 = arith.addf %727, %729 : vector<2x128xf32>
    %c0_400 = arith.constant 0 : index
    %c0_401 = arith.constant 0 : index
    %731 = vector.load %arg13[%c0_400, %c0_401] : memref<1x128xf32, #tpu.memory_space<vmem>>, vector<1x128xf32>
    %732 = vector.broadcast %731 : vector<1x128xf32> to vector<2x128xf32>
    %733 = arith.addf %730, %732 : vector<2x128xf32>
    %734 = arith.negf %733 : vector<2x128xf32>
    %735 = math.exp %734 : vector<2x128xf32>
    %cst_402 = arith.constant 1.000000e+00 : f32
    %736 = vector.broadcast %cst_402 : f32 to vector<2x128xf32>
    %737 = arith.addf %736, %735 : vector<2x128xf32>
    %738 = arith.divf %736, %737 : vector<2x128xf32>
    %739 = math.tanh %733 : vector<2x128xf32>
    %740 = vector.extract_strided_slice %738 {offsets = [0, 0], sizes = [2, 32], strides = [1, 1]} : vector<2x128xf32> to vector<2x32xf32>
    %741 = vector.extract_strided_slice %738 {offsets = [0, 32], sizes = [2, 32], strides = [1, 1]} : vector<2x128xf32> to vector<2x32xf32>
    %742 = vector.extract_strided_slice %739 {offsets = [0, 64], sizes = [2, 32], strides = [1, 1]} : vector<2x128xf32> to vector<2x32xf32>
    %743 = vector.extract_strided_slice %738 {offsets = [0, 96], sizes = [2, 32], strides = [1, 1]} : vector<2x128xf32> to vector<2x32xf32>
    %744 = arith.mulf %741, %635 : vector<2x32xf32>
    %745 = arith.mulf %740, %742 : vector<2x32xf32>
    %746 = arith.addf %744, %745 : vector<2x32xf32>
    %747 = math.tanh %746 : vector<2x32xf32>
    %748 = arith.mulf %743, %747 : vector<2x32xf32>
    %c0_403 = arith.constant 0 : index
    %c0_404 = arith.constant 0 : index
    %749 = vector.load %arg14[%c0_403, %c0_404] : memref<32x32xf32, #tpu.memory_space<vmem>>, vector<32x32xf32>
    %cst_405 = arith.constant dense<0.000000e+00> : vector<2x32xf32>
    %750 = tpu.matmul %694, %749, %cst_405 {dimension_numbers = #tpu.dot_dimension_numbers<[1], [0], [0], [1], [0, 0, 1, 1], [], []>} : vector<2x32xf32>, vector<32x32xf32>, vector<2x32xf32> -> vector<2x32xf32>
    %c0_406 = arith.constant 0 : index
    %c0_407 = arith.constant 0 : index
    %751 = vector.load %arg15[%c0_406, %c0_407] : memref<32x32xf32, #tpu.memory_space<vmem>>, vector<32x32xf32>
    %cst_408 = arith.constant dense<0.000000e+00> : vector<2x32xf32>
    %752 = tpu.matmul %722, %751, %cst_408 {dimension_numbers = #tpu.dot_dimension_numbers<[1], [0], [0], [1], [0, 0, 1, 1], [], []>} : vector<2x32xf32>, vector<32x32xf32>, vector<2x32xf32> -> vector<2x32xf32>
    %753 = arith.addf %750, %752 : vector<2x32xf32>
    %c0_409 = arith.constant 0 : index
    %c0_410 = arith.constant 0 : index
    %754 = vector.load %arg16[%c0_409, %c0_410] : memref<32x32xf32, #tpu.memory_space<vmem>>, vector<32x32xf32>
    %cst_411 = arith.constant dense<0.000000e+00> : vector<2x32xf32>
    %755 = tpu.matmul %748, %754, %cst_411 {dimension_numbers = #tpu.dot_dimension_numbers<[1], [0], [0], [1], [0, 0, 1, 1], [], []>} : vector<2x32xf32>, vector<32x32xf32>, vector<2x32xf32> -> vector<2x32xf32>
    %756 = arith.addf %753, %755 : vector<2x32xf32>
    %c0_412 = arith.constant 0 : index
    %c0_413 = arith.constant 0 : index
    %757 = vector.load %arg17[%c0_412, %c0_413] : memref<1x32xf32, #tpu.memory_space<vmem>>, vector<1x32xf32>
    %758 = vector.broadcast %757 : vector<1x32xf32> to vector<2x32xf32>
    %759 = arith.addf %756, %758 : vector<2x32xf32>
    %cst_414 = arith.constant dense<0xFF800000> : vector<2xf32>
    %760 = vector.multi_reduction <maximumf>, %759, %cst_414 [1] : vector<2x32xf32> to vector<2xf32>
    %761 = vector.shape_cast %760 : vector<2xf32> to vector<2x1xf32>
    %c7 = arith.constant 7 : index
    %c0_415 = arith.constant 0 : index
    %c0_416 = arith.constant 0 : index
    %762 = vector.load %arg2[%c7, %c0_415, %c0_416] : memref<8x2x32xf32, #tpu.memory_space<vmem>>, vector<1x2x32xf32>
    %763 = vector.shape_cast %762 : vector<1x2x32xf32> to vector<2x32xf32>
    %764 = vector.broadcast %761 : vector<2x1xf32> to vector<2x32xf32>
    %765 = arith.subf %759, %764 : vector<2x32xf32>
    %766 = math.exp %765 : vector<2x32xf32>
    %cst_417 = arith.constant dense<0.000000e+00> : vector<2xf32>
    %767 = vector.multi_reduction <add>, %766, %cst_417 [1] : vector<2x32xf32> to vector<2xf32>
    %768 = vector.shape_cast %767 : vector<2xf32> to vector<2x1xf32>
    %769 = math.log %768 : vector<2x1xf32>
    %770 = arith.addf %761, %769 : vector<2x1xf32>
    %771 = arith.mulf %759, %763 : vector<2x32xf32>
    %cst_418 = arith.constant dense<0.000000e+00> : vector<2xf32>
    %772 = vector.multi_reduction <add>, %771, %cst_418 [1] : vector<2x32xf32> to vector<2xf32>
    %773 = vector.shape_cast %772 : vector<2xf32> to vector<2x1xf32>
    %774 = vector.extract_strided_slice %763 {offsets = [0, 0], sizes = [2, 1], strides = [1, 1]} : vector<2x32xf32> to vector<2x1xf32>
    %cst_419 = arith.constant 1.000000e+00 : f32
    %775 = vector.broadcast %cst_419 : f32 to vector<2x1xf32>
    %776 = arith.subf %775, %774 : vector<2x1xf32>
    %777 = arith.subf %770, %773 : vector<2x1xf32>
    %778 = arith.mulf %777, %776 : vector<2x1xf32>
    %cst_420 = arith.constant dense<0.000000e+00> : vector<1xf32>
    %779 = vector.multi_reduction <add>, %778, %cst_420 [0] : vector<2x1xf32> to vector<1xf32>
    %780 = vector.shape_cast %779 : vector<1xf32> to vector<1x1xf32>
    %781 = arith.addf %680, %780 : vector<1x1xf32>
    %cst_421 = arith.constant dense<0.000000e+00> : vector<1xf32>
    %782 = vector.multi_reduction <add>, %776, %cst_421 [0] : vector<2x1xf32> to vector<1xf32>
    %783 = vector.shape_cast %782 : vector<1xf32> to vector<1x1xf32>
    %784 = arith.addf %683, %783 : vector<1x1xf32>
    %785 = arith.divf %781, %784 : vector<1x1xf32>
    %c0_422 = arith.constant 0 : index
    %c0_423 = arith.constant 0 : index
    %786 = vector.load %arg18[%c0_422, %c0_423] : memref<1x1xf32, #tpu.memory_space<vmem>>, vector<1x1xf32>
    tpu.vector_store %arg18[%c0_422, %c0_423], %785 {strides = array<i32>} : memref<1x1xf32, #tpu.memory_space<vmem>>, vector<1x1xf32>,
    return
  }
  func.func @transform_0(%arg0: i32, %arg1: memref<8xi32, #tpu.memory_space<smem>>) -> (i32, i32, i32) {
    %c0_i32 = arith.constant 0 : i32
    %c0_i32_0 = arith.constant 0 : i32
    %c0_i32_1 = arith.constant 0 : i32
    %c0_i32_2 = arith.constant 0 : i32
    return %c0_i32, %c0_i32_0, %c0_i32_1 : i32, i32, i32
  }
  func.func @transform_1(%arg0: i32, %arg1: memref<8xi32, #tpu.memory_space<smem>>) -> (i32, i32, i32) {
    %c0_i32 = arith.constant 0 : i32
    %c0_i32_0 = arith.constant 0 : i32
    %c0_i32_1 = arith.constant 0 : i32
    %c0_i32_2 = arith.constant 0 : i32
    return %c0_i32, %c0_i32_0, %c0_i32_1 : i32, i32, i32
  }
  func.func @transform_2(%arg0: i32, %arg1: memref<8xi32, #tpu.memory_space<smem>>) -> (i32, i32) {
    %c0_i32 = arith.constant 0 : i32
    %c0_i32_0 = arith.constant 0 : i32
    %c0_i32_1 = arith.constant 0 : i32
    return %c0_i32, %c0_i32_0 : i32, i32
  }
  func.func @transform_3(%arg0: i32, %arg1: memref<8xi32, #tpu.memory_space<smem>>) -> (i32, i32) {
    %c0_i32 = arith.constant 0 : i32
    %c0_i32_0 = arith.constant 0 : i32
    %c0_i32_1 = arith.constant 0 : i32
    return %c0_i32, %c0_i32_0 : i32, i32
  }
  func.func @transform_4(%arg0: i32, %arg1: memref<8xi32, #tpu.memory_space<smem>>) -> (i32, i32) {
    %c0_i32 = arith.constant 0 : i32
    %c0_i32_0 = arith.constant 0 : i32
    %c0_i32_1 = arith.constant 0 : i32
    return %c0_i32, %c0_i32_0 : i32, i32
  }
  func.func @transform_5(%arg0: i32, %arg1: memref<8xi32, #tpu.memory_space<smem>>) -> (i32, i32) {
    %c0_i32 = arith.constant 0 : i32
    %c0_i32_0 = arith.constant 0 : i32
    %c0_i32_1 = arith.constant 0 : i32
    return %c0_i32, %c0_i32_0 : i32, i32
  }
  func.func @transform_6(%arg0: i32, %arg1: memref<8xi32, #tpu.memory_space<smem>>) -> (i32, i32) {
    %c0_i32 = arith.constant 0 : i32
    %c0_i32_0 = arith.constant 0 : i32
    %c0_i32_1 = arith.constant 0 : i32
    return %c0_i32, %c0_i32_0 : i32, i32
  }
  func.func @transform_7(%arg0: i32, %arg1: memref<8xi32, #tpu.memory_space<smem>>) -> (i32, i32) {
    %c0_i32 = arith.constant 0 : i32
    %c0_i32_0 = arith.constant 0 : i32
    %c0_i32_1 = arith.constant 0 : i32
    return %c0_i32, %c0_i32_0 : i32, i32
  }
  func.func @transform_8(%arg0: i32, %arg1: memref<8xi32, #tpu.memory_space<smem>>) -> (i32, i32) {
    %c0_i32 = arith.constant 0 : i32
    %c0_i32_0 = arith.constant 0 : i32
    %c0_i32_1 = arith.constant 0 : i32
    return %c0_i32, %c0_i32_0 : i32, i32
  }
  func.func @transform_9(%arg0: i32, %arg1: memref<8xi32, #tpu.memory_space<smem>>) -> (i32, i32) {
    %c0_i32 = arith.constant 0 : i32
    %c0_i32_0 = arith.constant 0 : i32
    %c0_i32_1 = arith.constant 0 : i32
    return %c0_i32, %c0_i32_0 : i32, i32
  }
  func.func @transform_10(%arg0: i32, %arg1: memref<8xi32, #tpu.memory_space<smem>>) -> (i32, i32) {
    %c0_i32 = arith.constant 0 : i32
    %c0_i32_0 = arith.constant 0 : i32
    %c0_i32_1 = arith.constant 0 : i32
    return %c0_i32, %c0_i32_0 : i32, i32
  }
  func.func @transform_11(%arg0: i32, %arg1: memref<8xi32, #tpu.memory_space<smem>>) -> (i32, i32) {
    %c0_i32 = arith.constant 0 : i32
    %c0_i32_0 = arith.constant 0 : i32
    %c0_i32_1 = arith.constant 0 : i32
    return %c0_i32, %c0_i32_0 : i32, i32
  }
  func.func @transform_12(%arg0: i32, %arg1: memref<8xi32, #tpu.memory_space<smem>>) -> (i32, i32) {
    %c0_i32 = arith.constant 0 : i32
    %c0_i32_0 = arith.constant 0 : i32
    %c0_i32_1 = arith.constant 0 : i32
    return %c0_i32, %c0_i32_0 : i32, i32
  }
  func.func @transform_13(%arg0: i32, %arg1: memref<8xi32, #tpu.memory_space<smem>>) -> (i32, i32) {
    %c0_i32 = arith.constant 0 : i32
    %c0_i32_0 = arith.constant 0 : i32
    %c0_i32_1 = arith.constant 0 : i32
    return %c0_i32, %c0_i32_0 : i32, i32
  }
  func.func @transform_14(%arg0: i32, %arg1: memref<8xi32, #tpu.memory_space<smem>>) -> (i32, i32) {
    %c0_i32 = arith.constant 0 : i32
    %c0_i32_0 = arith.constant 0 : i32
    %c0_i32_1 = arith.constant 0 : i32
    return %c0_i32, %c0_i32_0 : i32, i32
  }
  func.func @transform_15(%arg0: i32, %arg1: memref<8xi32, #tpu.memory_space<smem>>) -> (i32, i32) {
    %c0_i32 = arith.constant 0 : i32
    %c0_i32_0 = arith.constant 0 : i32
    %c0_i32_1 = arith.constant 0 : i32
    return %c0_i32, %c0_i32_0 : i32, i32
  }
  func.func @transform_16(%arg0: i32, %arg1: memref<8xi32, #tpu.memory_space<smem>>) -> (i32, i32) {
    %c0_i32 = arith.constant 0 : i32
    %c0_i32_0 = arith.constant 0 : i32
    %c0_i32_1 = arith.constant 0 : i32
    return %c0_i32, %c0_i32_0 : i32, i32
  }
}

</mosaic_0001>

<llo_original>
// kernel: seq2seq_forward.1
$region0: #{seq2seq_forward.1}
  #allocation0 [shape = 'u32[]', space=smem, size = 0x4, offset = 0x4, fixed_abs, tag = 'smem constant byte address 0x4 - core index']
  #allocation1 [shape = 'u32[144,128]{1,0:T(1,128)}', space=vmem, size = 0x12000, scoped, tag = 'internal scratch']
  #allocation2 [shape = 'f32[2,16,32]{2,1,0:T(8,128)}', space=vmem, size = 0x4000, scoped, tag = 'scratch operand']
  #allocation3 [shape = 's32[1]{0}', space=sflag, size = 0x4, scoped, tag = 'scoped memory for seq2seq_forward.1']
  #allocation4 [shape = 'u8[512]{0}', space=smem, size = 0x200, scoped, tag = 'prefetched SMEM operand 0']
  %s0 = inlined_call_operand.vmem [shape: s32[8], index: 0, kind: input, shape index: {}]
  %s1 = inlined_call_operand.vmem [shape: f32[8,2,32], index: 1, kind: input, shape index: {}]
  %s2 = inlined_call_operand.vmem [shape: f32[2,16,32], index: 2, kind: input, shape index: {}]
  %s3 = inlined_call_operand.vmem [shape: f32[2,16], index: 3, kind: input, shape index: {}]
  %s4 = inlined_call_operand.hbm [shape: f32[2,32], index: 4, kind: input, shape index: {}]
  %s5 = inlined_call_operand.hbm [shape: f32[2,32], index: 5, kind: input, shape index: {}]
  %s6 = inlined_call_operand.vmem [shape: f32[32,32], index: 6, kind: input, shape index: {}]
  %s7 = inlined_call_operand.vmem [shape: f32[32,32], index: 7, kind: input, shape index: {}]
  %s8 = inlined_call_operand.vmem [shape: f32[1,32], index: 8, kind: input, shape index: {}]
  %s9 = inlined_call_operand.vmem [shape: f32[32,128], index: 9, kind: input, shape index: {}]
  %s10 = inlined_call_operand.vmem [shape: f32[32,128], index: 10, kind: input, shape index: {}]
  %s11 = inlined_call_operand.vmem [shape: f32[32,128], index: 11, kind: input, shape index: {}]
  %s12 = inlined_call_operand.hbm [shape: f32[1,128], index: 12, kind: input, shape index: {}]
  %s13 = inlined_call_operand.vmem [shape: f32[32,32], index: 13, kind: input, shape index: {}]
  %s14 = inlined_call_operand.vmem [shape: f32[32,32], index: 14, kind: input, shape index: {}]
  %s15 = inlined_call_operand.hbm [shape: f32[32,32], index: 15, kind: input, shape index: {}]
  %s16 = inlined_call_operand.vmem [shape: f32[1,32], index: 16, kind: input, shape index: {}]
  %s17 = inlined_call_operand.hbm [shape: f32[1,1], index: 17, kind: output, shape index: {}]
  %s18 = sld [smem:[#allocation0]]
  $region90: #{seq2seq_forward.1} parent=0
    _
  %s20 = ssub.s32 1, %s18
  %s21 = scalar_select 0, %s20, %s18
  %s22 = sshll.u32 %s0, 4
  %s23 = int_to_ptr.vmem [resolvable:$true] %s22
  %25 = dma.vmem_to_smem %s23, 16, [#allocation4], [#allocation3]
  %26 = dma.done [#allocation3], 16
  %27 = sfence
  $region1: #{seq2seq_forward.1} parent=0
    #allocation5 [shape = 'u8[1024]{0}', space=vmem, size = 0x400, scoped, tag = 'input window, operand 4, single buffered']
    #allocation6 [shape = 's32[1]{0}', space=sflag, size = 0x4, scoped, tag = 'scoped memory for seq2seq_forward.1']
    #allocation7 [shape = 's32[1]{0}', space=sflag, size = 0x4, scoped, tag = 'scoped memory for seq2seq_forward.1']
    #allocation8 [shape = 'u8[1024]{0}', space=vmem, size = 0x400, scoped, tag = 'input window, operand 5, single buffered']
    #allocation9 [shape = 's32[1]{0}', space=sflag, size = 0x4, scoped, tag = 'scoped memory for seq2seq_forward.1']
    #allocation10 [shape = 'u8[512]{0}', space=vmem, size = 0x400, scoped, tag = 'input window, operand 12, single buffered']
    #allocation11 [shape = 'u8[16384]{0}', space=vmem, size = 0x4000, scoped, tag = 'input window, operand 15, single buffered']
    #allocation12 [shape = 's32[1]{0}', space=sflag, size = 0x4, scoped, tag = 'scoped memory for seq2seq_forward.1']
    #allocation13 [shape = 'u8[512]{0}', space=vmem, size = 0x400, scoped, tag = 'output window, operand 0, single buffered']
    %28 = vsyncpa [#allocation6], 0
    %29 = vsyncpa [#allocation9], 0
    %30 = vsyncpa [#allocation12], 0
    %31 = vsyncpa [#allocation7], 0
    // Predicated region
    $region2: #{seq2seq_forward.1} parent=1 // pred_check
      _
    $region3: #{seq2seq_forward.1} parent=1 // pred_check_branch
      %33 = sbr.rel (0) target = $region5
    $region4: #{seq2seq_forward.1} parent=1 // pred_region
      _
    $region5: #{seq2seq_forward.1} parent=1 // pred_fallthru
      _
    // Predicated region
    $region6: #{seq2seq_forward.1} parent=1 // pred_check
      _
    $region7: #{seq2seq_forward.1} parent=1 // pred_check_branch
      %35 = sbr.rel (0) target = $region9
    $region8: #{seq2seq_forward.1} parent=1 // pred_region
      _
    $region9: #{seq2seq_forward.1} parent=1 // pred_fallthru
      _
    // Predicated region
    $region10: #{seq2seq_forward.1} parent=1 // pred_check
      _
    $region11: #{seq2seq_forward.1} parent=1 // pred_check_branch
      %37 = sbr.rel (0) target = $region13
    $region12: #{seq2seq_forward.1} parent=1 // pred_region
      _
    $region13: #{seq2seq_forward.1} parent=1 // pred_fallthru
      _
    // Predicated region
    $region14: #{seq2seq_forward.1} parent=1 // pred_check
      _
    $region15: #{seq2seq_forward.1} parent=1 // pred_check_branch
      %39 = sbr.rel (0) target = $region17
    $region16: #{seq2seq_forward.1} parent=1 // pred_region
      %s41 = ssub.s32 32, 32
      %42 = vsyncadd [#allocation6], %s41
      %s44 = sshll.u32 [#allocation5], 4
      %s45 = int_to_ptr.vmem [resolvable:$true] %s44
      %47 = dma.hbm_to_vmem [thread:$0]  %s4, 32, %s45, [#allocation6]
    $region17: #{seq2seq_forward.1} parent=1 // pred_fallthru
      _
    // Predicated region
    $region18: #{seq2seq_forward.1} parent=1 // pred_check
      _
    $region19: #{seq2seq_forward.1} parent=1 // pred_check_branch
      %49 = sbr.rel (0) target = $region21
    $region20: #{seq2seq_forward.1} parent=1 // pred_region
      %s51 = ssub.s32 32, 32
      %52 = vsyncadd [#allocation9], %s51
      %s54 = sshll.u32 [#allocation8], 4
      %s55 = int_to_ptr.vmem [resolvable:$true] %s54
      %57 = dma.hbm_to_vmem [thread:$0]  %s5, 32, %s55, [#allocation9]
    $region21: #{seq2seq_forward.1} parent=1 // pred_fallthru
      _
    // Predicated region
    $region22: #{seq2seq_forward.1} parent=1 // pred_check
      _
    $region23: #{seq2seq_forward.1} parent=1 // pred_check_branch
      %59 = sbr.rel (0) target = $region25
    $region24: #{seq2seq_forward.1} parent=1 // pred_region
      _
    $region25: #{seq2seq_forward.1} parent=1 // pred_fallthru
      _
    // Predicated region
    $region26: #{seq2seq_forward.1} parent=1 // pred_check
      _
    $region27: #{seq2seq_forward.1} parent=1 // pred_check_branch
      %61 = sbr.rel (0) target = $region29
    $region28: #{seq2seq_forward.1} parent=1 // pred_region
      _
    $region29: #{seq2seq_forward.1} parent=1 // pred_fallthru
      _
    // Predicated region
    $region30: #{seq2seq_forward.1} parent=1 // pred_check
      _
    $region31: #{seq2seq_forward.1} parent=1 // pred_check_branch
      %63 = sbr.rel (0) target = $region33
    $region32: #{seq2seq_forward.1} parent=1 // pred_region
      _
    $region33: #{seq2seq_forward.1} parent=1 // pred_fallthru
      _
    // Predicated region
    $region34: #{seq2seq_forward.1} parent=1 // pred_check
      _
    $region35: #{seq2seq_forward.1} parent=1 // pred_check_branch
      %65 = sbr.rel (0) target = $region37
    $region36: #{seq2seq_forward.1} parent=1 // pred_region
      _
    $region37: #{seq2seq_forward.1} parent=1 // pred_fallthru
      _
    // Predicated region
    $region38: #{seq2seq_forward.1} parent=1 // pred_check
      _
    $region39: #{seq2seq_forward.1} parent=1 // pred_check_branch
      %67 = sbr.rel (0) target = $region41
    $region40: #{seq2seq_forward.1} parent=1 // pred_region
      _
    $region41: #{seq2seq_forward.1} parent=1 // pred_fallthru
      _
    // Predicated region
    $region42: #{seq2seq_forward.1} parent=1 // pred_check
      _
    $region43: #{seq2seq_forward.1} parent=1 // pred_check_branch
      %69 = sbr.rel (0) target = $region45
    $region44: #{seq2seq_forward.1} parent=1 // pred_region
      _
    $region45: #{seq2seq_forward.1} parent=1 // pred_fallthru
      _
    // Predicated region
    $region46: #{seq2seq_forward.1} parent=1 // pred_check
      _
    $region47: #{seq2seq_forward.1} parent=1 // pred_check_branch
      %71 = sbr.rel (0) target = $region49
    $region48: #{seq2seq_forward.1} parent=1 // pred_region
      %s73 = ssub.s32 16, 16
      %74 = vsyncadd [#allocation9], %s73
      %s76 = sshll.u32 [#allocation10], 4
      %s77 = int_to_ptr.vmem [resolvable:$true] %s76
      %79 = dma.hbm_to_vmem [thread:$0]  %s12, 16, %s77, [#allocation9]
    $region49: #{seq2seq_forward.1} parent=1 // pred_fallthru
      _
    // Predicated region
    $region50: #{seq2seq_forward.1} parent=1 // pred_check
      _
    $region51: #{seq2seq_forward.1} parent=1 // pred_check_branch
      %81 = sbr.rel (0) target = $region53
    $region52: #{seq2seq_forward.1} parent=1 // pred_region
      _
    $region53: #{seq2seq_forward.1} parent=1 // pred_fallthru
      _
    // Predicated region
    $region54: #{seq2seq_forward.1} parent=1 // pred_check
      _
    $region55: #{seq2seq_forward.1} parent=1 // pred_check_branch
      %83 = sbr.rel (0) target = $region57
    $region56: #{seq2seq_forward.1} parent=1 // pred_region
      _
    $region57: #{seq2seq_forward.1} parent=1 // pred_fallthru
      _
    // Predicated region
    $region58: #{seq2seq_forward.1} parent=1 // pred_check
      _
    $region59: #{seq2seq_forward.1} parent=1 // pred_check_branch
      %85 = sbr.rel (0) target = $region61
    $region60: #{seq2seq_forward.1} parent=1 // pred_region
      %s87 = ssub.s32 512, 512
      %88 = vsyncadd [#allocation12], %s87
      %s89 = sshll.u32 [#allocation11], 4
      %s90 = int_to_ptr.vmem [resolvable:$true] %s89
      %95 = dma.hbm_to_vmem [thread:$0]  %s15, 512, %s90, [#allocation12], 128, 128, 8
    $region61: #{seq2seq_forward.1} parent=1 // pred_fallthru
      _
    // Predicated region
    $region62: #{seq2seq_forward.1} parent=1 // pred_check
      _
    $region63: #{seq2seq_forward.1} parent=1 // pred_check_branch
      %97 = sbr.rel (0) target = $region65
    $region64: #{seq2seq_forward.1} parent=1 // pred_region
      _
    $region65: #{seq2seq_forward.1} parent=1 // pred_fallthru
      _
    // Predicated region
    $region66: #{seq2seq_forward.1} parent=1 // pred_check
      _
    $region67: #{seq2seq_forward.1} parent=1 // pred_check_branch
      %99 = sbr.rel (0) target = $region69
    $region68: #{seq2seq_forward.1} parent=1 // pred_region
      %100 = dma.done [#allocation6], 32
    $region69: #{seq2seq_forward.1} parent=1 // pred_fallthru
      _
    // Predicated region
    $region70: #{seq2seq_forward.1} parent=1 // pred_check
      _
    $region71: #{seq2seq_forward.1} parent=1 // pred_check_branch
      %102 = sbr.rel (0) target = $region73
    $region72: #{seq2seq_forward.1} parent=1 // pred_region
      %103 = dma.done [#allocation9], 32
    $region73: #{seq2seq_forward.1} parent=1 // pred_fallthru
      _
    // Predicated region
    $region74: #{seq2seq_forward.1} parent=1 // pred_check
      _
    $region75: #{seq2seq_forward.1} parent=1 // pred_check_branch
      %105 = sbr.rel (0) target = $region77
    $region76: #{seq2seq_forward.1} parent=1 // pred_region
      %106 = dma.done [#allocation9], 16
    $region77: #{seq2seq_forward.1} parent=1 // pred_fallthru
      _
    // Predicated region
    $region78: #{seq2seq_forward.1} parent=1 // pred_check
      _
    $region79: #{seq2seq_forward.1} parent=1 // pred_check_branch
      %108 = sbr.rel (0) target = $region81
    $region80: #{seq2seq_forward.1} parent=1 // pred_region
      %109 = dma.done [#allocation12], 512
    $region81: #{seq2seq_forward.1} parent=1 // pred_fallthru
      _
    %v110 = vld [vmem:[%s6] sm:$0xff]
    %v111 = vld [vmem:[%s6 + $0x8] sm:$0xff]
    %v112 = vld [vmem:[%s6 + $0x10] sm:$0xff]
    %v113 = vld [vmem:[%s6 + $0x18] sm:$0xff]
    %v114 = vld [vmem:[%s2] sm:$0xff]
    %v115 = vld [vmem:[%s2 + $0x8] sm:$0xff]
    %vm116 = vcmask 261120
    %v118 = vsel %vm116, %v114, 0
    %v121 = vsel %vm116, %v115, 0
    %123 = vmatprep.subr.mxu0 0.0
    %124 = vmatpush1.msra.mxu0 0.0
    %125 = vmatprep.subr.mxu0 0.0
    %126 = vmatpush1.msra.mxu0 0.0
    %127 = vmatprep.subr.mxu0 0.0
    %128 = vmatpush1.msra.mxu0 0.0
    %129 = vmatprep.subr.mxu0 0.0
    %130 = vmatpush1.msra.mxu0 0.0
    %131 = vmatprep.subr.mxu0 0.0
    %132 = vmatpush1.msra.mxu0 0.0
    %133 = vmatprep.subr.mxu0 0.0
    %134 = vmatpush1.msra.mxu0 0.0
    %135 = vmatprep.subr.mxu0 0.0
    %136 = vmatpush1.msra.mxu0 0.0
    %137 = vmatprep.subr.mxu0 0.0
    %138 = vmatpush1.msra.mxu0 0.0
    %139 = vmatprep.subr.mxu0 0.0
    %140 = vmatpush1.msra.mxu0 0.0
    %141 = vmatprep.subr.mxu0 0.0
    %142 = vmatpush1.msra.mxu0 0.0
    %143 = vmatprep.subr.mxu0 0.0
    %144 = vmatpush1.msra.mxu0 0.0
    %145 = vmatprep.subr.mxu0 0.0
    %146 = vmatpush1.msra.mxu0 0.0
    %147 = vmatprep.subr.mxu0 0.0
    %148 = vmatpush1.msra.mxu0 %v113
    %149 = vmatprep.subr.mxu0 0.0
    %150 = vmatpush1.msra.mxu0 %v112
    %151 = vmatprep.subr.mxu0 0.0
    %152 = vmatpush1.msra.mxu0 %v111
    %153 = vmatprep.subr.mxu0 0.0
    %154 = vmatpush1.msra.mxu0 %v110
    %155 = vmatprep.subr.mxu0 0.0
    %156 = vmatpush2.msra.mxu0 0.0
    %157 = vmatprep.subr.mxu0 0.0
    %158 = vmatpush2.msra.mxu0 0.0
    %159 = vmatprep.subr.mxu0 0.0
    %160 = vmatpush2.msra.mxu0 0.0
    %161 = vmatprep.subr.mxu0 0.0
    %162 = vmatpush2.msra.mxu0 0.0
    %163 = vmatprep.subr.mxu0 0.0
    %164 = vmatpush2.msra.mxu0 0.0
    %165 = vmatprep.subr.mxu0 0.0
    %166 = vmatpush2.msra.mxu0 0.0
    %167 = vmatprep.subr.mxu0 0.0
    %168 = vmatpush2.msra.mxu0 0.0
    %169 = vmatprep.subr.mxu0 0.0
    %170 = vmatpush2.msra.mxu0 0.0
    %171 = vmatprep.subr.mxu0 0.0
    %172 = vmatpush2.msra.mxu0 0.0
    %173 = vmatprep.subr.mxu0 0.0
    %174 = vmatpush2.msra.mxu0 0.0
    %175 = vmatprep.subr.mxu0 0.0
    %176 = vmatpush2.msra.mxu0 0.0
    %177 = vmatprep.subr.mxu0 0.0
    %178 = vmatpush2.msra.mxu0 0.0
    %179 = vmatprep.subr.mxu0 0.0
    %180 = vmatpush2.msra.mxu0 0.0
    %181 = vmatprep.subr.mxu0 0.0
    %182 = vmatpush2.msra.mxu0 0.0
    %183 = vmatprep.subr.mxu0 0.0
    %184 = vmatpush2.msra.mxu0 0.0
    %185 = vmatprep.subr.mxu0 0.0
    %186 = vmatpush2.msra.mxu0 0.0
    %187 = vmatprep.mubr.f32.mxu0 0.0
    %188 = vmatmul.mubr.f32.gmra.mxu0 %v118
    %v189 = vpop.f32.mrf.mxu0
    %v190 = vadd.f32 0.0, %v189
    %v191 = vpop.f32.mrf.mxu0
    %192 = vmatprep.mubr.f32.mxu0 0.0
    %193 = vmatmul.mubr.f32.gmra.mxu0 %v121
    %v194 = vpop.f32.mrf.mxu0
    %v195 = vadd.f32 0.0, %v194
    %v196 = vpop.f32.mrf.mxu0
    %197 = vdwg.mxu0
    %198 = vst.msk [vmem:[#allocation2] sm:$0xff] %vm116, %v190
    %199 = vst.msk [vmem:[#allocation2 + $0x8] sm:$0xff] %vm116, %v195
    %s200 = scalar_lea.vmem %s2, 16
    %v201 = vld [vmem:[%s200] sm:$0xff]
    %v202 = vld [vmem:[%s200 + $0x8] sm:$0xff]
    %v204 = vsel %vm116, %v201, 0
    %v207 = vsel %vm116, %v202, 0
    %209 = vmatprep.subr.mxu0 0.0
    %210 = vmatpush1.msra.mxu0 0.0
    %211 = vmatprep.subr.mxu0 0.0
    %212 = vmatpush1.msra.mxu0 0.0
    %213 = vmatprep.subr.mxu0 0.0
    %214 = vmatpush1.msra.mxu0 0.0
    %215 = vmatprep.subr.mxu0 0.0
    %216 = vmatpush1.msra.mxu0 0.0
    %217 = vmatprep.subr.mxu0 0.0
    %218 = vmatpush1.msra.mxu0 0.0
    %219 = vmatprep.subr.mxu0 0.0
    %220 = vmatpush1.msra.mxu0 0.0
    %221 = vmatprep.subr.mxu0 0.0
    %222 = vmatpush1.msra.mxu0 0.0
    %223 = vmatprep.subr.mxu0 0.0
    %224 = vmatpush1.msra.mxu0 0.0
    %225 = vmatprep.subr.mxu0 0.0
    %226 = vmatpush1.msra.mxu0 0.0
    %227 = vmatprep.subr.mxu0 0.0
    %228 = vmatpush1.msra.mxu0 0.0
    %229 = vmatprep.subr.mxu0 0.0
    %230 = vmatpush1.msra.mxu0 0.0
    %231 = vmatprep.subr.mxu0 0.0
    %232 = vmatpush1.msra.mxu0 0.0
    %233 = vmatprep.subr.mxu0 0.0
    %234 = vmatpush1.msra.mxu0 %v113
    %235 = vmatprep.subr.mxu0 0.0
    %236 = vmatpush1.msra.mxu0 %v112
    %237 = vmatprep.subr.mxu0 0.0
    %238 = vmatpush1.msra.mxu0 %v111
    %239 = vmatprep.subr.mxu0 0.0
    %240 = vmatpush1.msra.mxu0 %v110
    %241 = vmatprep.subr.mxu0 0.0
    %242 = vmatpush2.msra.mxu0 0.0
    %243 = vmatprep.subr.mxu0 0.0
    %244 = vmatpush2.msra.mxu0 0.0
    %245 = vmatprep.subr.mxu0 0.0
    %246 = vmatpush2.msra.mxu0 0.0
    %247 = vmatprep.subr.mxu0 0.0
    %248 = vmatpush2.msra.mxu0 0.0
    %249 = vmatprep.subr.mxu0 0.0
    %250 = vmatpush2.msra.mxu0 0.0
    %251 = vmatprep.subr.mxu0 0.0
    %252 = vmatpush2.msra.mxu0 0.0
    %253 = vmatprep.subr.mxu0 0.0
    %254 = vmatpush2.msra.mxu0 0.0
    %255 = vmatprep.subr.mxu0 0.0
    %256 = vmatpush2.msra.mxu0 0.0
    %257 = vmatprep.subr.mxu0 0.0
    %258 = vmatpush2.msra.mxu0 0.0
    %259 = vmatprep.subr.mxu0 0.0
    %260 = vmatpush2.msra.mxu0 0.0
    %261 = vmatprep.subr.mxu0 0.0
    %262 = vmatpush2.msra.mxu0 0.0
    %263 = vmatprep.subr.mxu0 0.0
    %264 = vmatpush2.msra.mxu0 0.0
    %265 = vmatprep.subr.mxu0 0.0
    %266 = vmatpush2.msra.mxu0 0.0
    %267 = vmatprep.subr.mxu0 0.0
    %268 = vmatpush2.msra.mxu0 0.0
    %269 = vmatprep.subr.mxu0 0.0
    %270 = vmatpush2.msra.mxu0 0.0
    %271 = vmatprep.subr.mxu0 0.0
    %272 = vmatpush2.msra.mxu0 0.0
    %273 = vmatprep.mubr.f32.mxu0 0.0
    %274 = vmatmul.mubr.f32.gmra.mxu0 %v204
    %v275 = vpop.f32.mrf.mxu0
    %v276 = vadd.f32 0.0, %v275
    %v277 = vpop.f32.mrf.mxu0
    %278 = vmatprep.mubr.f32.mxu0 0.0
    %279 = vmatmul.mubr.f32.gmra.mxu0 %v207
    %v280 = vpop.f32.mrf.mxu0
    %v281 = vadd.f32 0.0, %v280
    %v282 = vpop.f32.mrf.mxu0
    %283 = vdwg.mxu0
    %s284 = scalar_lea.vmem [#allocation2], 16
    %285 = vst.msk [vmem:[%s284] sm:$0xff] %vm116, %v276
    %286 = vst.msk [vmem:[%s284 + $0x8] sm:$0xff] %vm116, %v281
    %v287 = vld [vmem:[%s1] sm:$0x3]
    %v288 = vsub.f32 1.0, %v287
    %vm289 = vcmask 1024
    %v290 = vsel %vm289, %v288, 0.0
    %v291 = vrot.slane %v290, 4
    %v292 = vadd.f32 %v290, %v291
    %v293 = vrot.slane %v292, 2
    %v294 = vadd.f32 %v292, %v293
    %v295 = vrot.slane %v294, 1
    %v296 = vadd.f32 %v294, %v295
    %v297 = vmul.f32 %v296, 3.465736
    %v298 = vld [vmem:[#allocation5] sm:$0x3]
    %v299 = vld [vmem:[#allocation8] sm:$0x3]
    %v300 = vlaneseq
    %v301 = vand.u32 %v300, 127
    %v302 = vld [vmem:[%s7] sm:$0xff]
    %v303 = vld [vmem:[%s7 + $0x8] sm:$0xff]
    %v304 = vld [vmem:[%s7 + $0x10] sm:$0xff]
    %v305 = vld [vmem:[%s7 + $0x18] sm:$0xff]
    %v307 = vsel %vm116, %v298, 0
    %309 = vmatprep.subr.mxu0 0.0
    %310 = vmatpush1.msra.mxu0 0.0
    %311 = vmatprep.subr.mxu0 0.0
    %312 = vmatpush1.msra.mxu0 0.0
    %313 = vmatprep.subr.mxu0 0.0
    %314 = vmatpush1.msra.mxu0 0.0
    %315 = vmatprep.subr.mxu0 0.0
    %316 = vmatpush1.msra.mxu0 0.0
    %317 = vmatprep.subr.mxu0 0.0
    %318 = vmatpush1.msra.mxu0 0.0
    %319 = vmatprep.subr.mxu0 0.0
    %320 = vmatpush1.msra.mxu0 0.0
    %321 = vmatprep.subr.mxu0 0.0
    %322 = vmatpush1.msra.mxu0 0.0
    %323 = vmatprep.subr.mxu0 0.0
    %324 = vmatpush1.msra.mxu0 0.0
    %325 = vmatprep.subr.mxu0 0.0
    %326 = vmatpush1.msra.mxu0 0.0
    %327 = vmatprep.subr.mxu0 0.0
    %328 = vmatpush1.msra.mxu0 0.0
    %329 = vmatprep.subr.mxu0 0.0
    %330 = vmatpush1.msra.mxu0 0.0
    %331 = vmatprep.subr.mxu0 0.0
    %332 = vmatpush1.msra.mxu0 0.0
    %333 = vmatprep.subr.mxu0 0.0
    %334 = vmatpush1.msra.mxu0 %v305
    %335 = vmatprep.subr.mxu0 0.0
    %336 = vmatpush1.msra.mxu0 %v304
    %337 = vmatprep.subr.mxu0 0.0
    %338 = vmatpush1.msra.mxu0 %v303
    %339 = vmatprep.subr.mxu0 0.0
    %340 = vmatpush1.msra.mxu0 %v302
    %341 = vmatprep.subr.mxu0 0.0
    %342 = vmatpush2.msra.mxu0 0.0
    %343 = vmatprep.subr.mxu0 0.0
    %344 = vmatpush2.msra.mxu0 0.0
    %345 = vmatprep.subr.mxu0 0.0
    %346 = vmatpush2.msra.mxu0 0.0
    %347 = vmatprep.subr.mxu0 0.0
    %348 = vmatpush2.msra.mxu0 0.0
    %349 = vmatprep.subr.mxu0 0.0
    %350 = vmatpush2.msra.mxu0 0.0
    %351 = vmatprep.subr.mxu0 0.0
    %352 = vmatpush2.msra.mxu0 0.0
    %353 = vmatprep.subr.mxu0 0.0
    %354 = vmatpush2.msra.mxu0 0.0
    %355 = vmatprep.subr.mxu0 0.0
    %356 = vmatpush2.msra.mxu0 0.0
    %357 = vmatprep.subr.mxu0 0.0
    %358 = vmatpush2.msra.mxu0 0.0
    %359 = vmatprep.subr.mxu0 0.0
    %360 = vmatpush2.msra.mxu0 0.0
    %361 = vmatprep.subr.mxu0 0.0
    %362 = vmatpush2.msra.mxu0 0.0
    %363 = vmatprep.subr.mxu0 0.0
    %364 = vmatpush2.msra.mxu0 0.0
    %365 = vmatprep.subr.mxu0 0.0
    %366 = vmatpush2.msra.mxu0 0.0
    %367 = vmatprep.subr.mxu0 0.0
    %368 = vmatpush2.msra.mxu0 0.0
    %369 = vmatprep.subr.mxu0 0.0
    %370 = vmatpush2.msra.mxu0 0.0
    %371 = vmatprep.subr.mxu0 0.0
    %372 = vmatpush2.msra.mxu0 0.0
    %373 = vmatprep.mubr.f32.mxu0 0.0
    %374 = vmatmul.mubr.f32.gmra.mxu0 %v307
    %v375 = vpop.f32.mrf.mxu0
    %v376 = vadd.f32 0.0, %v375
    %v377 = vpop.f32.mrf.mxu0
    %378 = vdwg.mxu0
    %v379 = vld [vmem:[#allocation2] sm:$0xff]
    %v380 = vld [vmem:[#allocation2 + $0x8] sm:$0xff]
    %v381 = vld [vmem:[#allocation2 + $0x10] sm:$0xff]
    %v382 = vld [vmem:[#allocation2 + $0x18] sm:$0xff]
    %v385 = vunpack.c.l.s4 1966171168
    %v386 = vunpack.c.0.s8 %v385
    %v387 = vlaneseq
    %v388 = vshrl.u32 %v387, 7
    %v389 = vsub.s32 %v386, %v388
    %v390 = vrot.slane %v376, %v389
    %v391 = vcombine.high %v390, %v390
    %v393 = vunpack.c.l.s4 1966171168
    %v394 = vunpack.c.0.s8 %v393
    %v395 = vlaneseq
    %v396 = vshrl.u32 %v395, 7
    %v397 = vsub.s32 %v394, %v396
    %v398 = vrot.slane %v390, %v397
    %v400 = vunpack.c.l.s4 1966171168
    %v401 = vunpack.c.0.s8 %v400
    %v402 = vlaneseq
    %v403 = vshrl.u32 %v402, 7
    %v404 = vsub.s32 %v401, %v403
    %v405 = vrot.slane %v391, %v404
    %v406 = vlaneseq
    %v407 = vshrl.u32 %v406, 7
    %v408 = vsub.s32 0, %v407
    %v409 = vrot.slane %v398, %v408
    %v410 = vlaneseq
    %v411 = vshrl.u32 %v410, 7
    %v412 = vsub.s32 0, %v411
    %v413 = vrot.slane %v405, %v412
    %v416 = vadd.f32 %v379, %v409
    %v417 = vadd.f32 %v380, %v409
    %v418 = vadd.f32 %v381, %v413
    %v419 = vadd.f32 %v382, %v413
    %v420 = vtanh.pop %v416
    %v421 = vtanh.pop %v417
    %v422 = vtanh.pop %v418
    %v423 = vtanh.pop %v419
    %v424 = vld [vmem:[%s8] sm:$0x1]
    %v426 = vlaneseq
    %v427 = vshrl.u32 %v426, 7
    %v428 = vsub.s32 0, %v427
    %v429 = vrot.slane %v424, %v428
    %v431 = vmul.f32 %v420, %v429
    %v432 = vmul.f32 %v421, %v429
    %v433 = vmul.f32 %v422, %v429
    %v434 = vmul.f32 %v423, %v429
    %v435 = vsel %vm116, %v431, 0.0
    %436 = vadd.xlane.f32.xlu0 %v435
    %v437 = vpop.xlane.xlu0 %436
    %v438 = vsel %vm116, %v432, 0.0
    %439 = vadd.xlane.f32.xlu0 %v438
    %v440 = vpop.xlane.xlu0 %439
    %v441 = vsel %vm116, %v433, 0.0
    %442 = vadd.xlane.f32.xlu0 %v441
    %v443 = vpop.xlane.xlu0 %442
    %v444 = vsel %vm116, %v434, 0.0
    %445 = vadd.xlane.f32.xlu0 %v444
    %v446 = vpop.xlane.xlu0 %445
    %v447 = vld [vmem:[%s3] sm:$0x3]
    %v449 = vlaneseq
    %v450 = vshrl.u32 %v449, 7
    %v451 = vsub.s32 0, %v450
    %v452 = vrot.slane %v447, %v451
    %454 = vbcast.lane.b32.xlu0 %v452, 256
    %v455 = vpop.permute.xlu0 %454
    %s457 = sor.u32 256, 8
    %458 = vbcast.lane.b32.xlu0 %v452, %s457
    %v459 = vpop.permute.xlu0 %458
    %v460 = vlaneseq
    %v461 = vshrl.u32 %v460, 7
    %v462 = vsub.s32 1, %v461
    %v463 = vrot.slane %v447, %v462
    %465 = vbcast.lane.b32.xlu0 %v463, 256
    %v466 = vpop.permute.xlu0 %465
    %s468 = sor.u32 256, 8
    %469 = vbcast.lane.b32.xlu0 %v463, %s468
    %v470 = vpop.permute.xlu0 %469
    %v475 = vadd.f32 %v437, %v455
    %v476 = vadd.f32 %v440, %v459
    %v477 = vadd.f32 %v443, %v466
    %v478 = vadd.f32 %v446, %v470
    %483 = vset.pattern.permute.xlu0 0
    %484 = vperm.xlu0 %483, %v475
    %v485 = vpop.permute.xlu0 %484
    %486 = vset.pattern.permute.xlu0 0
    %487 = vperm.xlu0 %486, %v476
    %v488 = vpop.permute.xlu0 %487
    %489 = vset.pattern.permute.xlu0 0
    %490 = vperm.xlu0 %489, %v477
    %v491 = vpop.permute.xlu0 %490
    %492 = vset.pattern.permute.xlu0 0
    %493 = vperm.xlu0 %492, %v478
    %v494 = vpop.permute.xlu0 %493
    %v495 = vlaneseq
    %v496 = vshrl.u32 %v495, 7
    %v497 = vsub.s32 %v301, %v496
    %v498 = vrot.slane %v485, %v497
    %v499 = vadd.s32 %v301, 4294967288
    %v500 = vlaneseq
    %v501 = vshrl.u32 %v500, 7
    %v502 = vsub.s32 %v499, %v501
    %v503 = vrot.slane %v488, %v502
    %vm504 = vcmask 130112
    %v505 = vsel %vm504, %v503, %v498
    %v506 = vlaneseq
    %v507 = vshrl.u32 %v506, 7
    %v508 = vsub.s32 %v301, %v507
    %v509 = vrot.slane %v491, %v508
    %v510 = vlaneseq
    %v511 = vshrl.u32 %v510, 7
    %v512 = vsub.s32 %v499, %v511
    %v513 = vrot.slane %v494, %v512
    %v514 = vsel %vm504, %v513, %v509
    %vm515 = vcmask 1041409
    %v516 = vsel %vm515, %v514, %v505
    %vm518 = vcmask 123904
    %v519 = vsel %vm518, %v516, -inf
    %520 = vmax.xlane.f32.xlu0 %v519
    %v521 = vpop.xlane.xlu0 %520
    %v523 = vlaneseq
    %v524 = vshrl.u32 %v523, 7
    %v525 = vsub.s32 0, %v524
    %v526 = vrot.slane %v521, %v525
    %v527 = vlaneseq
    %v528 = vshrl.u32 %v527, 7
    %v529 = vsub.s32 1, %v528
    %v530 = vrot.slane %v521, %v529
    %v533 = vsub.f32 %v475, %v526
    %v534 = vsub.f32 %v476, %v526
    %v535 = vsub.f32 %v477, %v530
    %v536 = vsub.f32 %v478, %v530
    %v537 = vmul.f32 %v533, 1.442695
    %v538 = vpow.pop %v537
    %v539 = vmul.f32 %v534, 1.442695
    %v540 = vpow.pop %v539
    %v541 = vmul.f32 %v535, 1.442695
    %v542 = vpow.pop %v541
    %v543 = vmul.f32 %v536, 1.442695
    %v544 = vpow.pop %v543
    %549 = vset.pattern.permute.xlu0 0
    %550 = vperm.xlu0 %549, %v538
    %v551 = vpop.permute.xlu0 %550
    %552 = vset.pattern.permute.xlu0 0
    %553 = vperm.xlu0 %552, %v540
    %v554 = vpop.permute.xlu0 %553
    %555 = vset.pattern.permute.xlu0 0
    %556 = vperm.xlu0 %555, %v542
    %v557 = vpop.permute.xlu0 %556
    %558 = vset.pattern.permute.xlu0 0
    %559 = vperm.xlu0 %558, %v544
    %v560 = vpop.permute.xlu0 %559
    %v561 = vlaneseq
    %v562 = vshrl.u32 %v561, 7
    %v563 = vsub.s32 %v301, %v562
    %v564 = vrot.slane %v551, %v563
    %v565 = vlaneseq
    %v566 = vshrl.u32 %v565, 7
    %v567 = vsub.s32 %v499, %v566
    %v568 = vrot.slane %v554, %v567
    %v569 = vsel %vm504, %v568, %v564
    %v570 = vlaneseq
    %v571 = vshrl.u32 %v570, 7
    %v572 = vsub.s32 %v301, %v571
    %v573 = vrot.slane %v557, %v572
    %v574 = vlaneseq
    %v575 = vshrl.u32 %v574, 7
    %v576 = vsub.s32 %v499, %v575
    %v577 = vrot.slane %v560, %v576
    %v578 = vsel %vm504, %v577, %v573
    %v579 = vsel %vm515, %v578, %v569
    %v581 = vsel %vm518, %v579, 0.0
    %582 = vadd.xlane.f32.xlu0 %v581
    %v583 = vpop.xlane.xlu0 %582
    %v585 = vlaneseq
    %v586 = vshrl.u32 %v585, 7
    %v587 = vsub.s32 0, %v586
    %v588 = vrot.slane %v583, %v587
    %v589 = vlaneseq
    %v590 = vshrl.u32 %v589, 7
    %v591 = vsub.s32 1, %v590
    %v592 = vrot.slane %v583, %v591
    %v595 = vrcp.pop %v588
    %v596 = vmul.f32 %v538, %v595
    %v597 = vmul.f32 %v540, %v595
    %v598 = vrcp.pop %v592
    %v599 = vmul.f32 %v542, %v598
    %v600 = vmul.f32 %v544, %v598
    %v601 = vld [vmem:[%s2] sm:$0xff]
    %v602 = vld [vmem:[%s2 + $0x8] sm:$0xff]
    %v603 = vld [vmem:[%s2 + $0x10] sm:$0xff]
    %v604 = vld [vmem:[%s2 + $0x18] sm:$0xff]
    %606 = vset.pattern.permute.xlu0 0
    %607 = vperm.xlu0 %606, %v596
    %v608 = vpop.permute.xlu0 %607
    %611 = vset.pattern.permute.xlu0 0
    %612 = vperm.xlu0 %611, %v597
    %v613 = vpop.permute.xlu0 %612
    %616 = vset.pattern.permute.xlu0 0
    %617 = vperm.xlu0 %616, %v599
    %v618 = vpop.permute.xlu0 %617
    %621 = vset.pattern.permute.xlu0 0
    %622 = vperm.xlu0 %621, %v600
    %v623 = vpop.permute.xlu0 %622
    %v625 = vmul.f32 %v608, %v601
    %v626 = vmul.f32 %v613, %v602
    %v627 = vmul.f32 %v618, %v603
    %v628 = vmul.f32 %v623, %v604
    %v629 = vsel %vm116, %v625, 0.0
    %v630 = vsel %vm116, %v626, 0.0
    %v631 = vadd.f32 %v629, %v630
    %v632 = vrot.slane %v631, 4
    %v633 = vadd.f32 %v631, %v632
    %v634 = vrot.slane %v633, 2
    %v635 = vadd.f32 %v633, %v634
    %v636 = vrot.slane %v635, 1
    %v637 = vadd.f32 %v635, %v636
    %v638 = vsel %vm116, %v627, 0.0
    %v639 = vsel %vm116, %v628, 0.0
    %v640 = vadd.f32 %v638, %v639
    %v641 = vrot.slane %v640, 4
    %v642 = vadd.f32 %v640, %v641
    %v643 = vrot.slane %v642, 2
    %v644 = vadd.f32 %v642, %v643
    %v645 = vrot.slane %v644, 1
    %v646 = vadd.f32 %v644, %v645
    %v647 = vld [vmem:[%s9] sm:$0xff]
    %v648 = vld [vmem:[%s9 + $0x8] sm:$0xff]
    %v649 = vld [vmem:[%s9 + $0x10] sm:$0xff]
    %v650 = vld [vmem:[%s9 + $0x18] sm:$0xff]
    %v651 = vld [vmem:[%s10] sm:$0xff]
    %v652 = vld [vmem:[%s10 + $0x8] sm:$0xff]
    %v653 = vld [vmem:[%s10 + $0x10] sm:$0xff]
    %v654 = vld [vmem:[%s10 + $0x18] sm:$0xff]
    %v657 = vsel %vm515, %v646, %v637
    %v658 = vsel %vm116, %v657, 0
    %660 = vmatprep.subr.mxu0 0.0
    %661 = vmatpush1.msra.mxu0 0.0
    %662 = vmatprep.subr.mxu0 0.0
    %663 = vmatpush1.msra.mxu0 0.0
    %664 = vmatprep.subr.mxu0 0.0
    %665 = vmatpush1.msra.mxu0 0.0
    %666 = vmatprep.subr.mxu0 0.0
    %667 = vmatpush1.msra.mxu0 0.0
    %668 = vmatprep.subr.mxu0 0.0
    %669 = vmatpush1.msra.mxu0 0.0
    %670 = vmatprep.subr.mxu0 0.0
    %671 = vmatpush1.msra.mxu0 0.0
    %672 = vmatprep.subr.mxu0 0.0
    %673 = vmatpush1.msra.mxu0 0.0
    %674 = vmatprep.subr.mxu0 0.0
    %675 = vmatpush1.msra.mxu0 0.0
    %676 = vmatprep.subr.mxu0 0.0
    %677 = vmatpush1.msra.mxu0 0.0
    %678 = vmatprep.subr.mxu0 0.0
    %679 = vmatpush1.msra.mxu0 0.0
    %680 = vmatprep.subr.mxu0 0.0
    %681 = vmatpush1.msra.mxu0 0.0
    %682 = vmatprep.subr.mxu0 0.0
    %683 = vmatpush1.msra.mxu0 0.0
    %684 = vmatprep.subr.mxu0 0.0
    %685 = vmatpush1.msra.mxu0 %v654
    %686 = vmatprep.subr.mxu0 0.0
    %687 = vmatpush1.msra.mxu0 %v653
    %688 = vmatprep.subr.mxu0 0.0
    %689 = vmatpush1.msra.mxu0 %v652
    %690 = vmatprep.subr.mxu0 0.0
    %691 = vmatpush1.msra.mxu0 %v651
    %692 = vmatprep.subr.mxu0 0.0
    %693 = vmatpush2.msra.mxu0 0.0
    %694 = vmatprep.subr.mxu0 0.0
    %695 = vmatpush2.msra.mxu0 0.0
    %696 = vmatprep.subr.mxu0 0.0
    %697 = vmatpush2.msra.mxu0 0.0
    %698 = vmatprep.subr.mxu0 0.0
    %699 = vmatpush2.msra.mxu0 0.0
    %700 = vmatprep.subr.mxu0 0.0
    %701 = vmatpush2.msra.mxu0 0.0
    %702 = vmatprep.subr.mxu0 0.0
    %703 = vmatpush2.msra.mxu0 0.0
    %704 = vmatprep.subr.mxu0 0.0
    %705 = vmatpush2.msra.mxu0 0.0
    %706 = vmatprep.subr.mxu0 0.0
    %707 = vmatpush2.msra.mxu0 0.0
    %708 = vmatprep.subr.mxu0 0.0
    %709 = vmatpush2.msra.mxu0 0.0
    %710 = vmatprep.subr.mxu0 0.0
    %711 = vmatpush2.msra.mxu0 0.0
    %712 = vmatprep.subr.mxu0 0.0
    %713 = vmatpush2.msra.mxu0 0.0
    %714 = vmatprep.subr.mxu0 0.0
    %715 = vmatpush2.msra.mxu0 0.0
    %716 = vmatprep.subr.mxu0 0.0
    %717 = vmatpush2.msra.mxu0 0.0
    %718 = vmatprep.subr.mxu0 0.0
    %719 = vmatpush2.msra.mxu0 0.0
    %720 = vmatprep.subr.mxu0 0.0
    %721 = vmatpush2.msra.mxu0 0.0
    %722 = vmatprep.subr.mxu0 0.0
    %723 = vmatpush2.msra.mxu0 0.0
    %724 = vmatprep.mubr.f32.mxu0 0.0
    %725 = vmatmul.mubr.f32.gmra.mxu0 %v658
    %v726 = vpop.f32.mrf.mxu0
    %v727 = vadd.f32 0.0, %v726
    %v728 = vpop.f32.mrf.mxu0
    %729 = vdwg.mxu0
    %v731 = vsel %vm116, %v287, 0
    %733 = vmatprep.subr.mxu0 0.0
    %734 = vmatpush1.msra.mxu0 0.0
    %735 = vmatprep.subr.mxu0 0.0
    %736 = vmatpush1.msra.mxu0 0.0
    %737 = vmatprep.subr.mxu0 0.0
    %738 = vmatpush1.msra.mxu0 0.0
    %739 = vmatprep.subr.mxu0 0.0
    %740 = vmatpush1.msra.mxu0 0.0
    %741 = vmatprep.subr.mxu0 0.0
    %742 = vmatpush1.msra.mxu0 0.0
    %743 = vmatprep.subr.mxu0 0.0
    %744 = vmatpush1.msra.mxu0 0.0
    %745 = vmatprep.subr.mxu0 0.0
    %746 = vmatpush1.msra.mxu0 0.0
    %747 = vmatprep.subr.mxu0 0.0
    %748 = vmatpush1.msra.mxu0 0.0
    %749 = vmatprep.subr.mxu0 0.0
    %750 = vmatpush1.msra.mxu0 0.0
    %751 = vmatprep.subr.mxu0 0.0
    %752 = vmatpush1.msra.mxu0 0.0
    %753 = vmatprep.subr.mxu0 0.0
    %754 = vmatpush1.msra.mxu0 0.0
    %755 = vmatprep.subr.mxu0 0.0
    %756 = vmatpush1.msra.mxu0 0.0
    %757 = vmatprep.subr.mxu0 0.0
    %758 = vmatpush1.msra.mxu0 %v650
    %759 = vmatprep.subr.mxu0 0.0
    %760 = vmatpush1.msra.mxu0 %v649
    %761 = vmatprep.subr.mxu0 0.0
    %762 = vmatpush1.msra.mxu0 %v648
    %763 = vmatprep.subr.mxu0 0.0
    %764 = vmatpush1.msra.mxu0 %v647
    %765 = vmatprep.subr.mxu0 0.0
    %766 = vmatpush2.msra.mxu0 0.0
    %767 = vmatprep.subr.mxu0 0.0
    %768 = vmatpush2.msra.mxu0 0.0
    %769 = vmatprep.subr.mxu0 0.0
    %770 = vmatpush2.msra.mxu0 0.0
    %771 = vmatprep.subr.mxu0 0.0
    %772 = vmatpush2.msra.mxu0 0.0
    %773 = vmatprep.subr.mxu0 0.0
    %774 = vmatpush2.msra.mxu0 0.0
    %775 = vmatprep.subr.mxu0 0.0
    %776 = vmatpush2.msra.mxu0 0.0
    %777 = vmatprep.subr.mxu0 0.0
    %778 = vmatpush2.msra.mxu0 0.0
    %779 = vmatprep.subr.mxu0 0.0
    %780 = vmatpush2.msra.mxu0 0.0
    %781 = vmatprep.subr.mxu0 0.0
    %782 = vmatpush2.msra.mxu0 0.0
    %783 = vmatprep.subr.mxu0 0.0
    %784 = vmatpush2.msra.mxu0 0.0
    %785 = vmatprep.subr.mxu0 0.0
    %786 = vmatpush2.msra.mxu0 0.0
    %787 = vmatprep.subr.mxu0 0.0
    %788 = vmatpush2.msra.mxu0 0.0
    %789 = vmatprep.subr.mxu0 0.0
    %790 = vmatpush2.msra.mxu0 0.0
    %791 = vmatprep.subr.mxu0 0.0
    %792 = vmatpush2.msra.mxu0 0.0
    %793 = vmatprep.subr.mxu0 0.0
    %794 = vmatpush2.msra.mxu0 0.0
    %795 = vmatprep.subr.mxu0 0.0
    %796 = vmatpush2.msra.mxu0 0.0
    %797 = vmatprep.mubr.f32.mxu0 0.0
    %798 = vmatmul.mubr.f32.gmra.mxu0 %v731
    %v799 = vpop.f32.mrf.mxu0
    %v800 = vadd.f32 %v727, %v799
    %v801 = vpop.f32.mrf.mxu0
    %802 = vdwg.mxu0
    %v803 = vld [vmem:[%s11] sm:$0xff]
    %v804 = vld [vmem:[%s11 + $0x8] sm:$0xff]
    %v805 = vld [vmem:[%s11 + $0x10] sm:$0xff]
    %v806 = vld [vmem:[%s11 + $0x18] sm:$0xff]
    %807 = vmatprep.subr.mxu0 0.0
    %808 = vmatpush1.msra.mxu0 0.0
    %809 = vmatprep.subr.mxu0 0.0
    %810 = vmatpush1.msra.mxu0 0.0
    %811 = vmatprep.subr.mxu0 0.0
    %812 = vmatpush1.msra.mxu0 0.0
    %813 = vmatprep.subr.mxu0 0.0
    %814 = vmatpush1.msra.mxu0 0.0
    %815 = vmatprep.subr.mxu0 0.0
    %816 = vmatpush1.msra.mxu0 0.0
    %817 = vmatprep.subr.mxu0 0.0
    %818 = vmatpush1.msra.mxu0 0.0
    %819 = vmatprep.subr.mxu0 0.0
    %820 = vmatpush1.msra.mxu0 0.0
    %821 = vmatprep.subr.mxu0 0.0
    %822 = vmatpush1.msra.mxu0 0.0
    %823 = vmatprep.subr.mxu0 0.0
    %824 = vmatpush1.msra.mxu0 0.0
    %825 = vmatprep.subr.mxu0 0.0
    %826 = vmatpush1.msra.mxu0 0.0
    %827 = vmatprep.subr.mxu0 0.0
    %828 = vmatpush1.msra.mxu0 0.0
    %829 = vmatprep.subr.mxu0 0.0
    %830 = vmatpush1.msra.mxu0 0.0
    %831 = vmatprep.subr.mxu0 0.0
    %832 = vmatpush1.msra.mxu0 %v806
    %833 = vmatprep.subr.mxu0 0.0
    %834 = vmatpush1.msra.mxu0 %v805
    %835 = vmatprep.subr.mxu0 0.0
    %836 = vmatpush1.msra.mxu0 %v804
    %837 = vmatprep.subr.mxu0 0.0
    %838 = vmatpush1.msra.mxu0 %v803
    %839 = vmatprep.subr.mxu0 0.0
    %840 = vmatpush2.msra.mxu0 0.0
    %841 = vmatprep.subr.mxu0 0.0
    %842 = vmatpush2.msra.mxu0 0.0
    %843 = vmatprep.subr.mxu0 0.0
    %844 = vmatpush2.msra.mxu0 0.0
    %845 = vmatprep.subr.mxu0 0.0
    %846 = vmatpush2.msra.mxu0 0.0
    %847 = vmatprep.subr.mxu0 0.0
    %848 = vmatpush2.msra.mxu0 0.0
    %849 = vmatprep.subr.mxu0 0.0
    %850 = vmatpush2.msra.mxu0 0.0
    %851 = vmatprep.subr.mxu0 0.0
    %852 = vmatpush2.msra.mxu0 0.0
    %853 = vmatprep.subr.mxu0 0.0
    %854 = vmatpush2.msra.mxu0 0.0
    %855 = vmatprep.subr.mxu0 0.0
    %856 = vmatpush2.msra.mxu0 0.0
    %857 = vmatprep.subr.mxu0 0.0
    %858 = vmatpush2.msra.mxu0 0.0
    %859 = vmatprep.subr.mxu0 0.0
    %860 = vmatpush2.msra.mxu0 0.0
    %861 = vmatprep.subr.mxu0 0.0
    %862 = vmatpush2.msra.mxu0 0.0
    %863 = vmatprep.subr.mxu0 0.0
    %864 = vmatpush2.msra.mxu0 0.0
    %865 = vmatprep.subr.mxu0 0.0
    %866 = vmatpush2.msra.mxu0 0.0
    %867 = vmatprep.subr.mxu0 0.0
    %868 = vmatpush2.msra.mxu0 0.0
    %869 = vmatprep.subr.mxu0 0.0
    %870 = vmatpush2.msra.mxu0 0.0
    %871 = vmatprep.mubr.f32.mxu0 0.0
    %872 = vmatmul.mubr.f32.gmra.mxu0 %v307
    %v873 = vpop.f32.mrf.mxu0
    %v874 = vadd.f32 0.0, %v873
    %v875 = vpop.f32.mrf.mxu0
    %876 = vdwg.mxu0
    %v877 = vadd.f32 %v800, %v874
    %v878 = vld [vmem:[#allocation10] sm:$0x1]
    %v880 = vlaneseq
    %v881 = vshrl.u32 %v880, 7
    %v882 = vsub.s32 0, %v881
    %v883 = vrot.slane %v878, %v882
    %v885 = vadd.f32 %v877, %v883
    %v886 = vxor.u32 %v885, 2147483648
    %v887 = vmul.f32 %v886, 1.442695
    %v888 = vpow.pop %v887
    %v889 = vadd.f32 %v888, 1.0
    %v890 = vrcp.pop %v889
    %v891 = vmul.f32 1.0, %v890
    %v892 = vtanh.pop %v885
    %894 = vrot.lane.b32.xlu0 %v299, 32
    %v895 = vpop.permute.xlu0 %894
    %v897 = vmul.f32 %v891, %v895
    %899 = vrot.lane.b32.xlu0 %v892, 64
    %v900 = vpop.permute.xlu0 %899
    %v902 = vmul.f32 %v891, %v900
    %904 = vrot.lane.b32.xlu0 %v902, 32
    %v905 = vpop.permute.xlu0 %904
    %v907 = vadd.f32 %v897, %v905
    %v908 = vtanh.pop %v907
    %910 = vrot.lane.b32.xlu0 %v908, 64
    %v911 = vpop.permute.xlu0 %910
    %v913 = vmul.f32 %v891, %v911
    %v914 = vld [vmem:[%s13] sm:$0xff]
    %v915 = vld [vmem:[%s13 + $0x8] sm:$0xff]
    %v916 = vld [vmem:[%s13 + $0x10] sm:$0xff]
    %v917 = vld [vmem:[%s13 + $0x18] sm:$0xff]
    %v918 = vld [vmem:[%s14] sm:$0xff]
    %v919 = vld [vmem:[%s14 + $0x8] sm:$0xff]
    %v920 = vld [vmem:[%s14 + $0x10] sm:$0xff]
    %v921 = vld [vmem:[%s14 + $0x18] sm:$0xff]
    %922 = vmatprep.subr.mxu0 0.0
    %923 = vmatpush1.msra.mxu0 0.0
    %924 = vmatprep.subr.mxu0 0.0
    %925 = vmatpush1.msra.mxu0 0.0
    %926 = vmatprep.subr.mxu0 0.0
    %927 = vmatpush1.msra.mxu0 0.0
    %928 = vmatprep.subr.mxu0 0.0
    %929 = vmatpush1.msra.mxu0 0.0
    %930 = vmatprep.subr.mxu0 0.0
    %931 = vmatpush1.msra.mxu0 0.0
    %932 = vmatprep.subr.mxu0 0.0
    %933 = vmatpush1.msra.mxu0 0.0
    %934 = vmatprep.subr.mxu0 0.0
    %935 = vmatpush1.msra.mxu0 0.0
    %936 = vmatprep.subr.mxu0 0.0
    %937 = vmatpush1.msra.mxu0 0.0
    %938 = vmatprep.subr.mxu0 0.0
    %939 = vmatpush1.msra.mxu0 0.0
    %940 = vmatprep.subr.mxu0 0.0
    %941 = vmatpush1.msra.mxu0 0.0
    %942 = vmatprep.subr.mxu0 0.0
    %943 = vmatpush1.msra.mxu0 0.0
    %944 = vmatprep.subr.mxu0 0.0
    %945 = vmatpush1.msra.mxu0 0.0
    %946 = vmatprep.subr.mxu0 0.0
    %947 = vmatpush1.msra.mxu0 %v921
    %948 = vmatprep.subr.mxu0 0.0
    %949 = vmatpush1.msra.mxu0 %v920
    %950 = vmatprep.subr.mxu0 0.0
    %951 = vmatpush1.msra.mxu0 %v919
    %952 = vmatprep.subr.mxu0 0.0
    %953 = vmatpush1.msra.mxu0 %v918
    %954 = vmatprep.subr.mxu0 0.0
    %955 = vmatpush2.msra.mxu0 0.0
    %956 = vmatprep.subr.mxu0 0.0
    %957 = vmatpush2.msra.mxu0 0.0
    %958 = vmatprep.subr.mxu0 0.0
    %959 = vmatpush2.msra.mxu0 0.0
    %960 = vmatprep.subr.mxu0 0.0
    %961 = vmatpush2.msra.mxu0 0.0
    %962 = vmatprep.subr.mxu0 0.0
    %963 = vmatpush2.msra.mxu0 0.0
    %964 = vmatprep.subr.mxu0 0.0
    %965 = vmatpush2.msra.mxu0 0.0
    %966 = vmatprep.subr.mxu0 0.0
    %967 = vmatpush2.msra.mxu0 0.0
    %968 = vmatprep.subr.mxu0 0.0
    %969 = vmatpush2.msra.mxu0 0.0
    %970 = vmatprep.subr.mxu0 0.0
    %971 = vmatpush2.msra.mxu0 0.0
    %972 = vmatprep.subr.mxu0 0.0
    %973 = vmatpush2.msra.mxu0 0.0
    %974 = vmatprep.subr.mxu0 0.0
    %975 = vmatpush2.msra.mxu0 0.0
    %976 = vmatprep.subr.mxu0 0.0
    %977 = vmatpush2.msra.mxu0 0.0
    %978 = vmatprep.subr.mxu0 0.0
    %979 = vmatpush2.msra.mxu0 0.0
    %980 = vmatprep.subr.mxu0 0.0
    %981 = vmatpush2.msra.mxu0 0.0
    %982 = vmatprep.subr.mxu0 0.0
    %983 = vmatpush2.msra.mxu0 0.0
    %984 = vmatprep.subr.mxu0 0.0
    %985 = vmatpush2.msra.mxu0 0.0
    %986 = vmatprep.mubr.f32.mxu0 0.0
    %987 = vmatmul.mubr.f32.gmra.mxu0 %v658
    %v988 = vpop.f32.mrf.mxu0
    %v989 = vadd.f32 0.0, %v988
    %v990 = vpop.f32.mrf.mxu0
    %991 = vdwg.mxu0
    %992 = vmatprep.subr.mxu0 0.0
    %993 = vmatpush1.msra.mxu0 0.0
    %994 = vmatprep.subr.mxu0 0.0
    %995 = vmatpush1.msra.mxu0 0.0
    %996 = vmatprep.subr.mxu0 0.0
    %997 = vmatpush1.msra.mxu0 0.0
    %998 = vmatprep.subr.mxu0 0.0
    %999 = vmatpush1.msra.mxu0 0.0
    %1000 = vmatprep.subr.mxu0 0.0
    %1001 = vmatpush1.msra.mxu0 0.0
    %1002 = vmatprep.subr.mxu0 0.0
    %1003 = vmatpush1.msra.mxu0 0.0
    %1004 = vmatprep.subr.mxu0 0.0
    %1005 = vmatpush1.msra.mxu0 0.0
    %1006 = vmatprep.subr.mxu0 0.0
    %1007 = vmatpush1.msra.mxu0 0.0
    %1008 = vmatprep.subr.mxu0 0.0
    %1009 = vmatpush1.msra.mxu0 0.0
    %1010 = vmatprep.subr.mxu0 0.0
    %1011 = vmatpush1.msra.mxu0 0.0
    %1012 = vmatprep.subr.mxu0 0.0
    %1013 = vmatpush1.msra.mxu0 0.0
    %1014 = vmatprep.subr.mxu0 0.0
    %1015 = vmatpush1.msra.mxu0 0.0
    %1016 = vmatprep.subr.mxu0 0.0
    %1017 = vmatpush1.msra.mxu0 %v917
    %1018 = vmatprep.subr.mxu0 0.0
    %1019 = vmatpush1.msra.mxu0 %v916
    %1020 = vmatprep.subr.mxu0 0.0
    %1021 = vmatpush1.msra.mxu0 %v915
    %1022 = vmatprep.subr.mxu0 0.0
    %1023 = vmatpush1.msra.mxu0 %v914
    %1024 = vmatprep.subr.mxu0 0.0
    %1025 = vmatpush2.msra.mxu0 0.0
    %1026 = vmatprep.subr.mxu0 0.0
    %1027 = vmatpush2.msra.mxu0 0.0
    %1028 = vmatprep.subr.mxu0 0.0
    %1029 = vmatpush2.msra.mxu0 0.0
    %1030 = vmatprep.subr.mxu0 0.0
    %1031 = vmatpush2.msra.mxu0 0.0
    %1032 = vmatprep.subr.mxu0 0.0
    %1033 = vmatpush2.msra.mxu0 0.0
    %1034 = vmatprep.subr.mxu0 0.0
    %1035 = vmatpush2.msra.mxu0 0.0
    %1036 = vmatprep.subr.mxu0 0.0
    %1037 = vmatpush2.msra.mxu0 0.0
    %1038 = vmatprep.subr.mxu0 0.0
    %1039 = vmatpush2.msra.mxu0 0.0
    %1040 = vmatprep.subr.mxu0 0.0
    %1041 = vmatpush2.msra.mxu0 0.0
    %1042 = vmatprep.subr.mxu0 0.0
    %1043 = vmatpush2.msra.mxu0 0.0
    %1044 = vmatprep.subr.mxu0 0.0
    %1045 = vmatpush2.msra.mxu0 0.0
    %1046 = vmatprep.subr.mxu0 0.0
    %1047 = vmatpush2.msra.mxu0 0.0
    %1048 = vmatprep.subr.mxu0 0.0
    %1049 = vmatpush2.msra.mxu0 0.0
    %1050 = vmatprep.subr.mxu0 0.0
    %1051 = vmatpush2.msra.mxu0 0.0
    %1052 = vmatprep.subr.mxu0 0.0
    %1053 = vmatpush2.msra.mxu0 0.0
    %1054 = vmatprep.subr.mxu0 0.0
    %1055 = vmatpush2.msra.mxu0 0.0
    %1056 = vmatprep.mubr.f32.mxu0 0.0
    %1057 = vmatmul.mubr.f32.gmra.mxu0 %v731
    %v1058 = vpop.f32.mrf.mxu0
    %v1059 = vadd.f32 %v989, %v1058
    %v1060 = vpop.f32.mrf.mxu0
    %1061 = vdwg.mxu0
    %v1062 = vld [vmem:[#allocation11] sm:$0xff]
    %v1063 = vld [vmem:[#allocation11 + $0x8] sm:$0xff]
    %v1064 = vld [vmem:[#allocation11 + $0x10] sm:$0xff]
    %v1065 = vld [vmem:[#allocation11 + $0x18] sm:$0xff]
    %1067 = vrot.lane.b32.xlu0 %v913, 32
    %v1068 = vpop.permute.xlu0 %1067
    %v1069 = vsel %vm116, %v1068, 0
    %1071 = vmatprep.subr.mxu0 0.0
    %1072 = vmatpush1.msra.mxu0 0.0
    %1073 = vmatprep.subr.mxu0 0.0
    %1074 = vmatpush1.msra.mxu0 0.0
    %1075 = vmatprep.subr.mxu0 0.0
    %1076 = vmatpush1.msra.mxu0 0.0
    %1077 = vmatprep.subr.mxu0 0.0
    %1078 = vmatpush1.msra.mxu0 0.0
    %1079 = vmatprep.subr.mxu0 0.0
    %1080 = vmatpush1.msra.mxu0 0.0
    %1081 = vmatprep.subr.mxu0 0.0
    %1082 = vmatpush1.msra.mxu0 0.0
    %1083 = vmatprep.subr.mxu0 0.0
    %1084 = vmatpush1.msra.mxu0 0.0
    %1085 = vmatprep.subr.mxu0 0.0
    %1086 = vmatpush1.msra.mxu0 0.0
    %1087 = vmatprep.subr.mxu0 0.0
    %1088 = vmatpush1.msra.mxu0 0.0
    %1089 = vmatprep.subr.mxu0 0.0
    %1090 = vmatpush1.msra.mxu0 0.0
    %1091 = vmatprep.subr.mxu0 0.0
    %1092 = vmatpush1.msra.mxu0 0.0
    %1093 = vmatprep.subr.mxu0 0.0
    %1094 = vmatpush1.msra.mxu0 0.0
    %1095 = vmatprep.subr.mxu0 0.0
    %1096 = vmatpush1.msra.mxu0 %v1065
    %1097 = vmatprep.subr.mxu0 0.0
    %1098 = vmatpush1.msra.mxu0 %v1064
    %1099 = vmatprep.subr.mxu0 0.0
    %1100 = vmatpush1.msra.mxu0 %v1063
    %1101 = vmatprep.subr.mxu0 0.0
    %1102 = vmatpush1.msra.mxu0 %v1062
    %1103 = vmatprep.subr.mxu0 0.0
    %1104 = vmatpush2.msra.mxu0 0.0
    %1105 = vmatprep.subr.mxu0 0.0
    %1106 = vmatpush2.msra.mxu0 0.0
    %1107 = vmatprep.subr.mxu0 0.0
    %1108 = vmatpush2.msra.mxu0 0.0
    %1109 = vmatprep.subr.mxu0 0.0
    %1110 = vmatpush2.msra.mxu0 0.0
    %1111 = vmatprep.subr.mxu0 0.0
    %1112 = vmatpush2.msra.mxu0 0.0
    %1113 = vmatprep.subr.mxu0 0.0
    %1114 = vmatpush2.msra.mxu0 0.0
    %1115 = vmatprep.subr.mxu0 0.0
    %1116 = vmatpush2.msra.mxu0 0.0
    %1117 = vmatprep.subr.mxu0 0.0
    %1118 = vmatpush2.msra.mxu0 0.0
    %1119 = vmatprep.subr.mxu0 0.0
    %1120 = vmatpush2.msra.mxu0 0.0
    %1121 = vmatprep.subr.mxu0 0.0
    %1122 = vmatpush2.msra.mxu0 0.0
    %1123 = vmatprep.subr.mxu0 0.0
    %1124 = vmatpush2.msra.mxu0 0.0
    %1125 = vmatprep.subr.mxu0 0.0
    %1126 = vmatpush2.msra.mxu0 0.0
    %1127 = vmatprep.subr.mxu0 0.0
    %1128 = vmatpush2.msra.mxu0 0.0
    %1129 = vmatprep.subr.mxu0 0.0
    %1130 = vmatpush2.msra.mxu0 0.0
    %1131 = vmatprep.subr.mxu0 0.0
    %1132 = vmatpush2.msra.mxu0 0.0
    %1133 = vmatprep.subr.mxu0 0.0
    %1134 = vmatpush2.msra.mxu0 0.0
    %1135 = vmatprep.mubr.f32.mxu0 0.0
    %1136 = vmatmul.mubr.f32.gmra.mxu0 %v1069
    %v1137 = vpop.f32.mrf.mxu0
    %v1138 = vadd.f32 0.0, %v1137
    %v1139 = vpop.f32.mrf.mxu0
    %1140 = vdwg.mxu0
    %v1141 = vadd.f32 %v1059, %v1138
    %v1142 = vld [vmem:[%s16] sm:$0x1]
    %v1144 = vlaneseq
    %v1145 = vshrl.u32 %v1144, 7
    %v1146 = vsub.s32 0, %v1145
    %v1147 = vrot.slane %v1142, %v1146
    %v1149 = vadd.f32 %v1141, %v1147
    %vm1150 = vcmask 254976
    %v1151 = vsel %vm1150, %v1149, -inf
    %1152 = vmax.xlane.f32.xlu0 %v1151
    %v1153 = vpop.xlane.xlu0 %1152
    %vm1154 = vcmp.eq.f32.partialorder %v1149, %v1153
    %v1155 = vsel %vm1154, %v301, 32
    %v1156 = vsel %vm1150, %v1155, 2147483647
    %v1157 = vand.u32 %v1156, 65535
    %v1158 = vshra.s32 %v1156, 16
    %v1159 = vcvt.s32.f32 %v1157
    %v1160 = vcvt.s32.f32 %v1158
    %1161 = vmin.xlane.f32.xlu0 %v1160
    %v1162 = vpop.xlane.xlu0 %1161
    %vm1163 = vcmp.eq.f32.partialorder %v1160, %v1162
    %v1164 = vsel %vm1163, %v1159, inf
    %1165 = vmin.xlane.f32.xlu0 %v1164
    %v1166 = vpop.xlane.xlu0 %1165
    %v1167 = vcvt.f32.s32 %v1166
    %v1168 = vcvt.f32.s32 %v1162
    %v1169 = vshll.u32 %v1168, 16
    %v1170 = vadd.s32 %v1169, %v1167
    %vm1171 = vcmp.eq.s32.totalorder %v301, %v1170
    %v1172 = vsel %vm1171, 1, 0
    %v1173 = vcvt.s32.f32 %v1172
    %s1174 = scalar_lea.vmem %s1, 2
    %v1175 = vld [vmem:[%s1174] sm:$0x3]
    %v1176 = vsub.f32 %v1149, %v1153
    %v1177 = vmul.f32 %v1176, 1.442695
    %v1178 = vpow.pop %v1177
    %v1179 = vsel %vm1150, %v1178, 0.0
    %1180 = vadd.xlane.f32.xlu0 %v1179
    %v1181 = vpop.xlane.xlu0 %1180
    %v1182 = vlog2.pop %v1181
    %v1183 = vmul.f32 %v1182, 0.6931472
    %v1184 = vadd.f32 %v1153, %v1183
    %v1185 = vmul.f32 %v1149, %v1175
    %v1186 = vsel %vm1150, %v1185, 0.0
    %1187 = vadd.xlane.f32.xlu0 %v1186
    %v1188 = vpop.xlane.xlu0 %1187
    %v1189 = vsub.f32 1.0, %v1175
    %v1190 = vsub.f32 %v1184, %v1188
    %v1191 = vmul.f32 %v1190, %v1189
    %v1192 = vsel %vm289, %v1191, 0.0
    %v1193 = vrot.slane %v1192, 4
    %v1194 = vadd.f32 %v1192, %v1193
    %v1195 = vrot.slane %v1194, 2
    %v1196 = vadd.f32 %v1194, %v1195
    %v1197 = vrot.slane %v1196, 1
    %v1198 = vadd.f32 %v1196, %v1197
    %v1199 = vadd.f32 %v297, %v1198
    %v1200 = vsel %vm289, %v1189, 0.0
    %v1201 = vrot.slane %v1200, 4
    %v1202 = vadd.f32 %v1200, %v1201
    %v1203 = vrot.slane %v1202, 2
    %v1204 = vadd.f32 %v1202, %v1203
    %v1205 = vrot.slane %v1204, 1
    %v1206 = vadd.f32 %v1204, %v1205
    %v1207 = vadd.f32 %v296, %v1206
    %s1208 = sld [smem:[#allocation4 + $0x1]]
    %p1209 = scmp.ne.s32.totalorder %s1208, 0
    %s1210 = scalar_select %p1209, 1.0, 0.0
    %v1211 = vstv %s1210
    %v1212 = vmul.f32 %v1211, %v1175
    %s1213 = ssub.f32 1.0, %s1210
    %v1214 = vstv %s1213
    %v1215 = vmul.f32 %v1214, %v1173
    %v1216 = vadd.f32 %v1212, %v1215
    %1217 = vmatprep.subr.mxu0 0.0
    %1218 = vmatpush1.msra.mxu0 0.0
    %1219 = vmatprep.subr.mxu0 0.0
    %1220 = vmatpush1.msra.mxu0 0.0
    %1221 = vmatprep.subr.mxu0 0.0
    %1222 = vmatpush1.msra.mxu0 0.0
    %1223 = vmatprep.subr.mxu0 0.0
    %1224 = vmatpush1.msra.mxu0 0.0
    %1225 = vmatprep.subr.mxu0 0.0
    %1226 = vmatpush1.msra.mxu0 0.0
    %1227 = vmatprep.subr.mxu0 0.0
    %1228 = vmatpush1.msra.mxu0 0.0
    %1229 = vmatprep.subr.mxu0 0.0
    %1230 = vmatpush1.msra.mxu0 0.0
    %1231 = vmatprep.subr.mxu0 0.0
    %1232 = vmatpush1.msra.mxu0 0.0
    %1233 = vmatprep.subr.mxu0 0.0
    %1234 = vmatpush1.msra.mxu0 0.0
    %1235 = vmatprep.subr.mxu0 0.0
    %1236 = vmatpush1.msra.mxu0 0.0
    %1237 = vmatprep.subr.mxu0 0.0
    %1238 = vmatpush1.msra.mxu0 0.0
    %1239 = vmatprep.subr.mxu0 0.0
    %1240 = vmatpush1.msra.mxu0 0.0
    %1241 = vmatprep.subr.mxu0 0.0
    %1242 = vmatpush1.msra.mxu0 %v305
    %1243 = vmatprep.subr.mxu0 0.0
    %1244 = vmatpush1.msra.mxu0 %v304
    %1245 = vmatprep.subr.mxu0 0.0
    %1246 = vmatpush1.msra.mxu0 %v303
    %1247 = vmatprep.subr.mxu0 0.0
    %1248 = vmatpush1.msra.mxu0 %v302
    %1249 = vmatprep.subr.mxu0 0.0
    %1250 = vmatpush2.msra.mxu0 0.0
    %1251 = vmatprep.subr.mxu0 0.0
    %1252 = vmatpush2.msra.mxu0 0.0
    %1253 = vmatprep.subr.mxu0 0.0
    %1254 = vmatpush2.msra.mxu0 0.0
    %1255 = vmatprep.subr.mxu0 0.0
    %1256 = vmatpush2.msra.mxu0 0.0
    %1257 = vmatprep.subr.mxu0 0.0
    %1258 = vmatpush2.msra.mxu0 0.0
    %1259 = vmatprep.subr.mxu0 0.0
    %1260 = vmatpush2.msra.mxu0 0.0
    %1261 = vmatprep.subr.mxu0 0.0
    %1262 = vmatpush2.msra.mxu0 0.0
    %1263 = vmatprep.subr.mxu0 0.0
    %1264 = vmatpush2.msra.mxu0 0.0
    %1265 = vmatprep.subr.mxu0 0.0
    %1266 = vmatpush2.msra.mxu0 0.0
    %1267 = vmatprep.subr.mxu0 0.0
    %1268 = vmatpush2.msra.mxu0 0.0
    %1269 = vmatprep.subr.mxu0 0.0
    %1270 = vmatpush2.msra.mxu0 0.0
    %1271 = vmatprep.subr.mxu0 0.0
    %1272 = vmatpush2.msra.mxu0 0.0
    %1273 = vmatprep.subr.mxu0 0.0
    %1274 = vmatpush2.msra.mxu0 0.0
    %1275 = vmatprep.subr.mxu0 0.0
    %1276 = vmatpush2.msra.mxu0 0.0
    %1277 = vmatprep.subr.mxu0 0.0
    %1278 = vmatpush2.msra.mxu0 0.0
    %1279 = vmatprep.subr.mxu0 0.0
    %1280 = vmatpush2.msra.mxu0 0.0
    %1281 = vmatprep.mubr.f32.mxu0 0.0
    %1282 = vmatmul.mubr.f32.gmra.mxu0 %v1069
    %v1283 = vpop.f32.mrf.mxu0
    %v1284 = vadd.f32 0.0, %v1283
    %v1285 = vpop.f32.mrf.mxu0
    %1286 = vdwg.mxu0
    %v1289 = vunpack.c.l.s4 1966171168
    %v1290 = vunpack.c.0.s8 %v1289
    %v1291 = vlaneseq
    %v1292 = vshrl.u32 %v1291, 7
    %v1293 = vsub.s32 %v1290, %v1292
    %v1294 = vrot.slane %v1284, %v1293
    %v1295 = vcombine.high %v1294, %v1294
    %v1297 = vunpack.c.l.s4 1966171168
    %v1298 = vunpack.c.0.s8 %v1297
    %v1299 = vlaneseq
    %v1300 = vshrl.u32 %v1299, 7
    %v1301 = vsub.s32 %v1298, %v1300
    %v1302 = vrot.slane %v1294, %v1301
    %v1304 = vunpack.c.l.s4 1966171168
    %v1305 = vunpack.c.0.s8 %v1304
    %v1306 = vlaneseq
    %v1307 = vshrl.u32 %v1306, 7
    %v1308 = vsub.s32 %v1305, %v1307
    %v1309 = vrot.slane %v1295, %v1308
    %v1310 = vlaneseq
    %v1311 = vshrl.u32 %v1310, 7
    %v1312 = vsub.s32 0, %v1311
    %v1313 = vrot.slane %v1302, %v1312
    %v1314 = vlaneseq
    %v1315 = vshrl.u32 %v1314, 7
    %v1316 = vsub.s32 0, %v1315
    %v1317 = vrot.slane %v1309, %v1316
    %v1320 = vadd.f32 %v379, %v1313
    %v1321 = vadd.f32 %v380, %v1313
    %v1322 = vadd.f32 %v381, %v1317
    %v1323 = vadd.f32 %v382, %v1317
    %v1324 = vtanh.pop %v1320
    %v1325 = vtanh.pop %v1321
    %v1326 = vtanh.pop %v1322
    %v1327 = vtanh.pop %v1323
    %v1328 = vmul.f32 %v1324, %v429
    %v1329 = vmul.f32 %v1325, %v429
    %v1330 = vmul.f32 %v1326, %v429
    %v1331 = vmul.f32 %v1327, %v429
    %v1332 = vsel %vm116, %v1328, 0.0
    %1333 = vadd.xlane.f32.xlu0 %v1332
    %v1334 = vpop.xlane.xlu0 %1333
    %v1335 = vsel %vm116, %v1329, 0.0
    %1336 = vadd.xlane.f32.xlu0 %v1335
    %v1337 = vpop.xlane.xlu0 %1336
    %v1338 = vsel %vm116, %v1330, 0.0
    %1339 = vadd.xlane.f32.xlu0 %v1338
    %v1340 = vpop.xlane.xlu0 %1339
    %v1341 = vsel %vm116, %v1331, 0.0
    %1342 = vadd.xlane.f32.xlu0 %v1341
    %v1343 = vpop.xlane.xlu0 %1342
    %v1344 = vadd.f32 %v1334, %v455
    %v1345 = vadd.f32 %v1337, %v459
    %v1346 = vadd.f32 %v1340, %v466
    %v1347 = vadd.f32 %v1343, %v470
    %1352 = vset.pattern.permute.xlu0 0
    %1353 = vperm.xlu0 %1352, %v1344
    %v1354 = vpop.permute.xlu0 %1353
    %1355 = vset.pattern.permute.xlu0 0
    %1356 = vperm.xlu0 %1355, %v1345
    %v1357 = vpop.permute.xlu0 %1356
    %1358 = vset.pattern.permute.xlu0 0
    %1359 = vperm.xlu0 %1358, %v1346
    %v1360 = vpop.permute.xlu0 %1359
    %1361 = vset.pattern.permute.xlu0 0
    %1362 = vperm.xlu0 %1361, %v1347
    %v1363 = vpop.permute.xlu0 %1362
    %v1364 = vlaneseq
    %v1365 = vshrl.u32 %v1364, 7
    %v1366 = vsub.s32 %v301, %v1365
    %v1367 = vrot.slane %v1354, %v1366
    %v1368 = vlaneseq
    %v1369 = vshrl.u32 %v1368, 7
    %v1370 = vsub.s32 %v499, %v1369
    %v1371 = vrot.slane %v1357, %v1370
    %v1372 = vsel %vm504, %v1371, %v1367
    %v1373 = vlaneseq
    %v1374 = vshrl.u32 %v1373, 7
    %v1375 = vsub.s32 %v301, %v1374
    %v1376 = vrot.slane %v1360, %v1375
    %v1377 = vlaneseq
    %v1378 = vshrl.u32 %v1377, 7
    %v1379 = vsub.s32 %v499, %v1378
    %v1380 = vrot.slane %v1363, %v1379
    %v1381 = vsel %vm504, %v1380, %v1376
    %v1382 = vsel %vm515, %v1381, %v1372
    %v1384 = vsel %vm518, %v1382, -inf
    %1385 = vmax.xlane.f32.xlu0 %v1384
    %v1386 = vpop.xlane.xlu0 %1385
    %v1388 = vlaneseq
    %v1389 = vshrl.u32 %v1388, 7
    %v1390 = vsub.s32 0, %v1389
    %v1391 = vrot.slane %v1386, %v1390
    %v1392 = vlaneseq
    %v1393 = vshrl.u32 %v1392, 7
    %v1394 = vsub.s32 1, %v1393
    %v1395 = vrot.slane %v1386, %v1394
    %v1398 = vsub.f32 %v1344, %v1391
    %v1399 = vsub.f32 %v1345, %v1391
    %v1400 = vsub.f32 %v1346, %v1395
    %v1401 = vsub.f32 %v1347, %v1395
    %v1402 = vmul.f32 %v1398, 1.442695
    %v1403 = vpow.pop %v1402
    %v1404 = vmul.f32 %v1399, 1.442695
    %v1405 = vpow.pop %v1404
    %v1406 = vmul.f32 %v1400, 1.442695
    %v1407 = vpow.pop %v1406
    %v1408 = vmul.f32 %v1401, 1.442695
    %v1409 = vpow.pop %v1408
    %1414 = vset.pattern.permute.xlu0 0
    %1415 = vperm.xlu0 %1414, %v1403
    %v1416 = vpop.permute.xlu0 %1415
    %1417 = vset.pattern.permute.xlu0 0
    %1418 = vperm.xlu0 %1417, %v1405
    %v1419 = vpop.permute.xlu0 %1418
    %1420 = vset.pattern.permute.xlu0 0
    %1421 = vperm.xlu0 %1420, %v1407
    %v1422 = vpop.permute.xlu0 %1421
    %1423 = vset.pattern.permute.xlu0 0
    %1424 = vperm.xlu0 %1423, %v1409
    %v1425 = vpop.permute.xlu0 %1424
    %v1426 = vlaneseq
    %v1427 = vshrl.u32 %v1426, 7
    %v1428 = vsub.s32 %v301, %v1427
    %v1429 = vrot.slane %v1416, %v1428
    %v1430 = vlaneseq
    %v1431 = vshrl.u32 %v1430, 7
    %v1432 = vsub.s32 %v499, %v1431
    %v1433 = vrot.slane %v1419, %v1432
    %v1434 = vsel %vm504, %v1433, %v1429
    %v1435 = vlaneseq
    %v1436 = vshrl.u32 %v1435, 7
    %v1437 = vsub.s32 %v301, %v1436
    %v1438 = vrot.slane %v1422, %v1437
    %v1439 = vlaneseq
    %v1440 = vshrl.u32 %v1439, 7
    %v1441 = vsub.s32 %v499, %v1440
    %v1442 = vrot.slane %v1425, %v1441
    %v1443 = vsel %vm504, %v1442, %v1438
    %v1444 = vsel %vm515, %v1443, %v1434
    %v1446 = vsel %vm518, %v1444, 0.0
    %1447 = vadd.xlane.f32.xlu0 %v1446
    %v1448 = vpop.xlane.xlu0 %1447
    %v1450 = vlaneseq
    %v1451 = vshrl.u32 %v1450, 7
    %v1452 = vsub.s32 0, %v1451
    %v1453 = vrot.slane %v1448, %v1452
    %v1454 = vlaneseq
    %v1455 = vshrl.u32 %v1454, 7
    %v1456 = vsub.s32 1, %v1455
    %v1457 = vrot.slane %v1448, %v1456
    %v1460 = vrcp.pop %v1453
    %v1461 = vmul.f32 %v1403, %v1460
    %v1462 = vmul.f32 %v1405, %v1460
    %v1463 = vrcp.pop %v1457
    %v1464 = vmul.f32 %v1407, %v1463
    %v1465 = vmul.f32 %v1409, %v1463
    %1467 = vset.pattern.permute.xlu0 0
    %1468 = vperm.xlu0 %1467, %v1461
    %v1469 = vpop.permute.xlu0 %1468
    %1472 = vset.pattern.permute.xlu0 0
    %1473 = vperm.xlu0 %1472, %v1462
    %v1474 = vpop.permute.xlu0 %1473
    %1477 = vset.pattern.permute.xlu0 0
    %1478 = vperm.xlu0 %1477, %v1464
    %v1479 = vpop.permute.xlu0 %1478
    %1482 = vset.pattern.permute.xlu0 0
    %1483 = vperm.xlu0 %1482, %v1465
    %v1484 = vpop.permute.xlu0 %1483
    %v1486 = vmul.f32 %v1469, %v601
    %v1487 = vmul.f32 %v1474, %v602
    %v1488 = vmul.f32 %v1479, %v603
    %v1489 = vmul.f32 %v1484, %v604
    %v1490 = vsel %vm116, %v1486, 0.0
    %v1491 = vsel %vm116, %v1487, 0.0
    %v1492 = vadd.f32 %v1490, %v1491
    %v1493 = vrot.slane %v1492, 4
    %v1494 = vadd.f32 %v1492, %v1493
    %v1495 = vrot.slane %v1494, 2
    %v1496 = vadd.f32 %v1494, %v1495
    %v1497 = vrot.slane %v1496, 1
    %v1498 = vadd.f32 %v1496, %v1497
    %v1499 = vsel %vm116, %v1488, 0.0
    %v1500 = vsel %vm116, %v1489, 0.0
    %v1501 = vadd.f32 %v1499, %v1500
    %v1502 = vrot.slane %v1501, 4
    %v1503 = vadd.f32 %v1501, %v1502
    %v1504 = vrot.slane %v1503, 2
    %v1505 = vadd.f32 %v1503, %v1504
    %v1506 = vrot.slane %v1505, 1
    %v1507 = vadd.f32 %v1505, %v1506
    %v1510 = vsel %vm515, %v1507, %v1498
    %v1511 = vsel %vm116, %v1510, 0
    %1513 = vmatprep.subr.mxu0 0.0
    %1514 = vmatpush1.msra.mxu0 0.0
    %1515 = vmatprep.subr.mxu0 0.0
    %1516 = vmatpush1.msra.mxu0 0.0
    %1517 = vmatprep.subr.mxu0 0.0
    %1518 = vmatpush1.msra.mxu0 0.0
    %1519 = vmatprep.subr.mxu0 0.0
    %1520 = vmatpush1.msra.mxu0 0.0
    %1521 = vmatprep.subr.mxu0 0.0
    %1522 = vmatpush1.msra.mxu0 0.0
    %1523 = vmatprep.subr.mxu0 0.0
    %1524 = vmatpush1.msra.mxu0 0.0
    %1525 = vmatprep.subr.mxu0 0.0
    %1526 = vmatpush1.msra.mxu0 0.0
    %1527 = vmatprep.subr.mxu0 0.0
    %1528 = vmatpush1.msra.mxu0 0.0
    %1529 = vmatprep.subr.mxu0 0.0
    %1530 = vmatpush1.msra.mxu0 0.0
    %1531 = vmatprep.subr.mxu0 0.0
    %1532 = vmatpush1.msra.mxu0 0.0
    %1533 = vmatprep.subr.mxu0 0.0
    %1534 = vmatpush1.msra.mxu0 0.0
    %1535 = vmatprep.subr.mxu0 0.0
    %1536 = vmatpush1.msra.mxu0 0.0
    %1537 = vmatprep.subr.mxu0 0.0
    %1538 = vmatpush1.msra.mxu0 %v654
    %1539 = vmatprep.subr.mxu0 0.0
    %1540 = vmatpush1.msra.mxu0 %v653
    %1541 = vmatprep.subr.mxu0 0.0
    %1542 = vmatpush1.msra.mxu0 %v652
    %1543 = vmatprep.subr.mxu0 0.0
    %1544 = vmatpush1.msra.mxu0 %v651
    %1545 = vmatprep.subr.mxu0 0.0
    %1546 = vmatpush2.msra.mxu0 0.0
    %1547 = vmatprep.subr.mxu0 0.0
    %1548 = vmatpush2.msra.mxu0 0.0
    %1549 = vmatprep.subr.mxu0 0.0
    %1550 = vmatpush2.msra.mxu0 0.0
    %1551 = vmatprep.subr.mxu0 0.0
    %1552 = vmatpush2.msra.mxu0 0.0
    %1553 = vmatprep.subr.mxu0 0.0
    %1554 = vmatpush2.msra.mxu0 0.0
    %1555 = vmatprep.subr.mxu0 0.0
    %1556 = vmatpush2.msra.mxu0 0.0
    %1557 = vmatprep.subr.mxu0 0.0
    %1558 = vmatpush2.msra.mxu0 0.0
    %1559 = vmatprep.subr.mxu0 0.0
    %1560 = vmatpush2.msra.mxu0 0.0
    %1561 = vmatprep.subr.mxu0 0.0
    %1562 = vmatpush2.msra.mxu0 0.0
    %1563 = vmatprep.subr.mxu0 0.0
    %1564 = vmatpush2.msra.mxu0 0.0
    %1565 = vmatprep.subr.mxu0 0.0
    %1566 = vmatpush2.msra.mxu0 0.0
    %1567 = vmatprep.subr.mxu0 0.0
    %1568 = vmatpush2.msra.mxu0 0.0
    %1569 = vmatprep.subr.mxu0 0.0
    %1570 = vmatpush2.msra.mxu0 0.0
    %1571 = vmatprep.subr.mxu0 0.0
    %1572 = vmatpush2.msra.mxu0 0.0
    %1573 = vmatprep.subr.mxu0 0.0
    %1574 = vmatpush2.msra.mxu0 0.0
    %1575 = vmatprep.subr.mxu0 0.0
    %1576 = vmatpush2.msra.mxu0 0.0
    %1577 = vmatprep.mubr.f32.mxu0 0.0
    %1578 = vmatmul.mubr.f32.gmra.mxu0 %v1511
    %v1579 = vpop.f32.mrf.mxu0
    %v1580 = vadd.f32 0.0, %v1579
    %v1581 = vpop.f32.mrf.mxu0
    %1582 = vdwg.mxu0
    %v1584 = vsel %vm116, %v1216, 0
    %1586 = vmatprep.subr.mxu0 0.0
    %1587 = vmatpush1.msra.mxu0 0.0
    %1588 = vmatprep.subr.mxu0 0.0
    %1589 = vmatpush1.msra.mxu0 0.0
    %1590 = vmatprep.subr.mxu0 0.0
    %1591 = vmatpush1.msra.mxu0 0.0
    %1592 = vmatprep.subr.mxu0 0.0
    %1593 = vmatpush1.msra.mxu0 0.0
    %1594 = vmatprep.subr.mxu0 0.0
    %1595 = vmatpush1.msra.mxu0 0.0
    %1596 = vmatprep.subr.mxu0 0.0
    %1597 = vmatpush1.msra.mxu0 0.0
    %1598 = vmatprep.subr.mxu0 0.0
    %1599 = vmatpush1.msra.mxu0 0.0
    %1600 = vmatprep.subr.mxu0 0.0
    %1601 = vmatpush1.msra.mxu0 0.0
    %1602 = vmatprep.subr.mxu0 0.0
    %1603 = vmatpush1.msra.mxu0 0.0
    %1604 = vmatprep.subr.mxu0 0.0
    %1605 = vmatpush1.msra.mxu0 0.0
    %1606 = vmatprep.subr.mxu0 0.0
    %1607 = vmatpush1.msra.mxu0 0.0
    %1608 = vmatprep.subr.mxu0 0.0
    %1609 = vmatpush1.msra.mxu0 0.0
    %1610 = vmatprep.subr.mxu0 0.0
    %1611 = vmatpush1.msra.mxu0 %v650
    %1612 = vmatprep.subr.mxu0 0.0
    %1613 = vmatpush1.msra.mxu0 %v649
    %1614 = vmatprep.subr.mxu0 0.0
    %1615 = vmatpush1.msra.mxu0 %v648
    %1616 = vmatprep.subr.mxu0 0.0
    %1617 = vmatpush1.msra.mxu0 %v647
    %1618 = vmatprep.subr.mxu0 0.0
    %1619 = vmatpush2.msra.mxu0 0.0
    %1620 = vmatprep.subr.mxu0 0.0
    %1621 = vmatpush2.msra.mxu0 0.0
    %1622 = vmatprep.subr.mxu0 0.0
    %1623 = vmatpush2.msra.mxu0 0.0
    %1624 = vmatprep.subr.mxu0 0.0
    %1625 = vmatpush2.msra.mxu0 0.0
    %1626 = vmatprep.subr.mxu0 0.0
    %1627 = vmatpush2.msra.mxu0 0.0
    %1628 = vmatprep.subr.mxu0 0.0
    %1629 = vmatpush2.msra.mxu0 0.0
    %1630 = vmatprep.subr.mxu0 0.0
    %1631 = vmatpush2.msra.mxu0 0.0
    %1632 = vmatprep.subr.mxu0 0.0
    %1633 = vmatpush2.msra.mxu0 0.0
    %1634 = vmatprep.subr.mxu0 0.0
    %1635 = vmatpush2.msra.mxu0 0.0
    %1636 = vmatprep.subr.mxu0 0.0
    %1637 = vmatpush2.msra.mxu0 0.0
    %1638 = vmatprep.subr.mxu0 0.0
    %1639 = vmatpush2.msra.mxu0 0.0
    %1640 = vmatprep.subr.mxu0 0.0
    %1641 = vmatpush2.msra.mxu0 0.0
    %1642 = vmatprep.subr.mxu0 0.0
    %1643 = vmatpush2.msra.mxu0 0.0
    %1644 = vmatprep.subr.mxu0 0.0
    %1645 = vmatpush2.msra.mxu0 0.0
    %1646 = vmatprep.subr.mxu0 0.0
    %1647 = vmatpush2.msra.mxu0 0.0
    %1648 = vmatprep.subr.mxu0 0.0
    %1649 = vmatpush2.msra.mxu0 0.0
    %1650 = vmatprep.mubr.f32.mxu0 0.0
    %1651 = vmatmul.mubr.f32.gmra.mxu0 %v1584
    %v1652 = vpop.f32.mrf.mxu0
    %v1653 = vadd.f32 %v1580, %v1652
    %v1654 = vpop.f32.mrf.mxu0
    %1655 = vdwg.mxu0
    %1656 = vmatprep.subr.mxu0 0.0
    %1657 = vmatpush1.msra.mxu0 0.0
    %1658 = vmatprep.subr.mxu0 0.0
    %1659 = vmatpush1.msra.mxu0 0.0
    %1660 = vmatprep.subr.mxu0 0.0
    %1661 = vmatpush1.msra.mxu0 0.0
    %1662 = vmatprep.subr.mxu0 0.0
    %1663 = vmatpush1.msra.mxu0 0.0
    %1664 = vmatprep.subr.mxu0 0.0
    %1665 = vmatpush1.msra.mxu0 0.0
    %1666 = vmatprep.subr.mxu0 0.0
    %1667 = vmatpush1.msra.mxu0 0.0
    %1668 = vmatprep.subr.mxu0 0.0
    %1669 = vmatpush1.msra.mxu0 0.0
    %1670 = vmatprep.subr.mxu0 0.0
    %1671 = vmatpush1.msra.mxu0 0.0
    %1672 = vmatprep.subr.mxu0 0.0
    %1673 = vmatpush1.msra.mxu0 0.0
    %1674 = vmatprep.subr.mxu0 0.0
    %1675 = vmatpush1.msra.mxu0 0.0
    %1676 = vmatprep.subr.mxu0 0.0
    %1677 = vmatpush1.msra.mxu0 0.0
    %1678 = vmatprep.subr.mxu0 0.0
    %1679 = vmatpush1.msra.mxu0 0.0
    %1680 = vmatprep.subr.mxu0 0.0
    %1681 = vmatpush1.msra.mxu0 %v806
    %1682 = vmatprep.subr.mxu0 0.0
    %1683 = vmatpush1.msra.mxu0 %v805
    %1684 = vmatprep.subr.mxu0 0.0
    %1685 = vmatpush1.msra.mxu0 %v804
    %1686 = vmatprep.subr.mxu0 0.0
    %1687 = vmatpush1.msra.mxu0 %v803
    %1688 = vmatprep.subr.mxu0 0.0
    %1689 = vmatpush2.msra.mxu0 0.0
    %1690 = vmatprep.subr.mxu0 0.0
    %1691 = vmatpush2.msra.mxu0 0.0
    %1692 = vmatprep.subr.mxu0 0.0
    %1693 = vmatpush2.msra.mxu0 0.0
    %1694 = vmatprep.subr.mxu0 0.0
    %1695 = vmatpush2.msra.mxu0 0.0
    %1696 = vmatprep.subr.mxu0 0.0
    %1697 = vmatpush2.msra.mxu0 0.0
    %1698 = vmatprep.subr.mxu0 0.0
    %1699 = vmatpush2.msra.mxu0 0.0
    %1700 = vmatprep.subr.mxu0 0.0
    %1701 = vmatpush2.msra.mxu0 0.0
    %1702 = vmatprep.subr.mxu0 0.0
    %1703 = vmatpush2.msra.mxu0 0.0
    %1704 = vmatprep.subr.mxu0 0.0
    %1705 = vmatpush2.msra.mxu0 0.0
    %1706 = vmatprep.subr.mxu0 0.0
    %1707 = vmatpush2.msra.mxu0 0.0
    %1708 = vmatprep.subr.mxu0 0.0
    %1709 = vmatpush2.msra.mxu0 0.0
    %1710 = vmatprep.subr.mxu0 0.0
    %1711 = vmatpush2.msra.mxu0 0.0
    %1712 = vmatprep.subr.mxu0 0.0
    %1713 = vmatpush2.msra.mxu0 0.0
    %1714 = vmatprep.subr.mxu0 0.0
    %1715 = vmatpush2.msra.mxu0 0.0
    %1716 = vmatprep.subr.mxu0 0.0
    %1717 = vmatpush2.msra.mxu0 0.0
    %1718 = vmatprep.subr.mxu0 0.0
    %1719 = vmatpush2.msra.mxu0 0.0
    %1720 = vmatprep.mubr.f32.mxu0 0.0
    %1721 = vmatmul.mubr.f32.gmra.mxu0 %v1069
    %v1722 = vpop.f32.mrf.mxu0
    %v1723 = vadd.f32 0.0, %v1722
    %v1724 = vpop.f32.mrf.mxu0
    %1725 = vdwg.mxu0
    %v1726 = vadd.f32 %v1653, %v1723
    %v1727 = vadd.f32 %v1726, %v883
    %v1728 = vxor.u32 %v1727, 2147483648
    %v1729 = vmul.f32 %v1728, 1.442695
    %v1730 = vpow.pop %v1729
    %v1731 = vadd.f32 %v1730, 1.0
    %v1732 = vrcp.pop %v1731
    %v1733 = vmul.f32 1.0, %v1732
    %v1734 = vtanh.pop %v1727
    %v1735 = vmul.f32 %v1733, %v907
    %1737 = vrot.lane.b32.xlu0 %v1734, 64
    %v1738 = vpop.permute.xlu0 %1737
    %v1740 = vmul.f32 %v1733, %v1738
    %1742 = vrot.lane.b32.xlu0 %v1740, 32
    %v1743 = vpop.permute.xlu0 %1742
    %v1745 = vadd.f32 %v1735, %v1743
    %v1746 = vtanh.pop %v1745
    %1748 = vrot.lane.b32.xlu0 %v1746, 64
    %v1749 = vpop.permute.xlu0 %1748
    %v1751 = vmul.f32 %v1733, %v1749
    %1752 = vmatprep.subr.mxu0 0.0
    %1753 = vmatpush1.msra.mxu0 0.0
    %1754 = vmatprep.subr.mxu0 0.0
    %1755 = vmatpush1.msra.mxu0 0.0
    %1756 = vmatprep.subr.mxu0 0.0
    %1757 = vmatpush1.msra.mxu0 0.0
    %1758 = vmatprep.subr.mxu0 0.0
    %1759 = vmatpush1.msra.mxu0 0.0
    %1760 = vmatprep.subr.mxu0 0.0
    %1761 = vmatpush1.msra.mxu0 0.0
    %1762 = vmatprep.subr.mxu0 0.0
    %1763 = vmatpush1.msra.mxu0 0.0
    %1764 = vmatprep.subr.mxu0 0.0
    %1765 = vmatpush1.msra.mxu0 0.0
    %1766 = vmatprep.subr.mxu0 0.0
    %1767 = vmatpush1.msra.mxu0 0.0
    %1768 = vmatprep.subr.mxu0 0.0
    %1769 = vmatpush1.msra.mxu0 0.0
    %1770 = vmatprep.subr.mxu0 0.0
    %1771 = vmatpush1.msra.mxu0 0.0
    %1772 = vmatprep.subr.mxu0 0.0
    %1773 = vmatpush1.msra.mxu0 0.0
    %1774 = vmatprep.subr.mxu0 0.0
    %1775 = vmatpush1.msra.mxu0 0.0
    %1776 = vmatprep.subr.mxu0 0.0
    %1777 = vmatpush1.msra.mxu0 %v921
    %1778 = vmatprep.subr.mxu0 0.0
    %1779 = vmatpush1.msra.mxu0 %v920
    %1780 = vmatprep.subr.mxu0 0.0
    %1781 = vmatpush1.msra.mxu0 %v919
    %1782 = vmatprep.subr.mxu0 0.0
    %1783 = vmatpush1.msra.mxu0 %v918
    %1784 = vmatprep.subr.mxu0 0.0
    %1785 = vmatpush2.msra.mxu0 0.0
    %1786 = vmatprep.subr.mxu0 0.0
    %1787 = vmatpush2.msra.mxu0 0.0
    %1788 = vmatprep.subr.mxu0 0.0
    %1789 = vmatpush2.msra.mxu0 0.0
    %1790 = vmatprep.subr.mxu0 0.0
    %1791 = vmatpush2.msra.mxu0 0.0
    %1792 = vmatprep.subr.mxu0 0.0
    %1793 = vmatpush2.msra.mxu0 0.0
    %1794 = vmatprep.subr.mxu0 0.0
    %1795 = vmatpush2.msra.mxu0 0.0
    %1796 = vmatprep.subr.mxu0 0.0
    %1797 = vmatpush2.msra.mxu0 0.0
    %1798 = vmatprep.subr.mxu0 0.0
    %1799 = vmatpush2.msra.mxu0 0.0
    %1800 = vmatprep.subr.mxu0 0.0
    %1801 = vmatpush2.msra.mxu0 0.0
    %1802 = vmatprep.subr.mxu0 0.0
    %1803 = vmatpush2.msra.mxu0 0.0
    %1804 = vmatprep.subr.mxu0 0.0
    %1805 = vmatpush2.msra.mxu0 0.0
    %1806 = vmatprep.subr.mxu0 0.0
    %1807 = vmatpush2.msra.mxu0 0.0
    %1808 = vmatprep.subr.mxu0 0.0
    %1809 = vmatpush2.msra.mxu0 0.0
    %1810 = vmatprep.subr.mxu0 0.0
    %1811 = vmatpush2.msra.mxu0 0.0
    %1812 = vmatprep.subr.mxu0 0.0
    %1813 = vmatpush2.msra.mxu0 0.0
    %1814 = vmatprep.subr.mxu0 0.0
    %1815 = vmatpush2.msra.mxu0 0.0
    %1816 = vmatprep.mubr.f32.mxu0 0.0
    %1817 = vmatmul.mubr.f32.gmra.mxu0 %v1511
    %v1818 = vpop.f32.mrf.mxu0
    %v1819 = vadd.f32 0.0, %v1818
    %v1820 = vpop.f32.mrf.mxu0
    %1821 = vdwg.mxu0
    %1822 = vmatprep.subr.mxu0 0.0
    %1823 = vmatpush1.msra.mxu0 0.0
    %1824 = vmatprep.subr.mxu0 0.0
    %1825 = vmatpush1.msra.mxu0 0.0
    %1826 = vmatprep.subr.mxu0 0.0
    %1827 = vmatpush1.msra.mxu0 0.0
    %1828 = vmatprep.subr.mxu0 0.0
    %1829 = vmatpush1.msra.mxu0 0.0
    %1830 = vmatprep.subr.mxu0 0.0
    %1831 = vmatpush1.msra.mxu0 0.0
    %1832 = vmatprep.subr.mxu0 0.0
    %1833 = vmatpush1.msra.mxu0 0.0
    %1834 = vmatprep.subr.mxu0 0.0
    %1835 = vmatpush1.msra.mxu0 0.0
    %1836 = vmatprep.subr.mxu0 0.0
    %1837 = vmatpush1.msra.mxu0 0.0
    %1838 = vmatprep.subr.mxu0 0.0
    %1839 = vmatpush1.msra.mxu0 0.0
    %1840 = vmatprep.subr.mxu0 0.0
    %1841 = vmatpush1.msra.mxu0 0.0
    %1842 = vmatprep.subr.mxu0 0.0
    %1843 = vmatpush1.msra.mxu0 0.0
    %1844 = vmatprep.subr.mxu0 0.0
    %1845 = vmatpush1.msra.mxu0 0.0
    %1846 = vmatprep.subr.mxu0 0.0
    %1847 = vmatpush1.msra.mxu0 %v917
    %1848 = vmatprep.subr.mxu0 0.0
    %1849 = vmatpush1.msra.mxu0 %v916
    %1850 = vmatprep.subr.mxu0 0.0
    %1851 = vmatpush1.msra.mxu0 %v915
    %1852 = vmatprep.subr.mxu0 0.0
    %1853 = vmatpush1.msra.mxu0 %v914
    %1854 = vmatprep.subr.mxu0 0.0
    %1855 = vmatpush2.msra.mxu0 0.0
    %1856 = vmatprep.subr.mxu0 0.0
    %1857 = vmatpush2.msra.mxu0 0.0
    %1858 = vmatprep.subr.mxu0 0.0
    %1859 = vmatpush2.msra.mxu0 0.0
    %1860 = vmatprep.subr.mxu0 0.0
    %1861 = vmatpush2.msra.mxu0 0.0
    %1862 = vmatprep.subr.mxu0 0.0
    %1863 = vmatpush2.msra.mxu0 0.0
    %1864 = vmatprep.subr.mxu0 0.0
    %1865 = vmatpush2.msra.mxu0 0.0
    %1866 = vmatprep.subr.mxu0 0.0
    %1867 = vmatpush2.msra.mxu0 0.0
    %1868 = vmatprep.subr.mxu0 0.0
    %1869 = vmatpush2.msra.mxu0 0.0
    %1870 = vmatprep.subr.mxu0 0.0
    %1871 = vmatpush2.msra.mxu0 0.0
    %1872 = vmatprep.subr.mxu0 0.0
    %1873 = vmatpush2.msra.mxu0 0.0
    %1874 = vmatprep.subr.mxu0 0.0
    %1875 = vmatpush2.msra.mxu0 0.0
    %1876 = vmatprep.subr.mxu0 0.0
    %1877 = vmatpush2.msra.mxu0 0.0
    %1878 = vmatprep.subr.mxu0 0.0
    %1879 = vmatpush2.msra.mxu0 0.0
    %1880 = vmatprep.subr.mxu0 0.0
    %1881 = vmatpush2.msra.mxu0 0.0
    %1882 = vmatprep.subr.mxu0 0.0
    %1883 = vmatpush2.msra.mxu0 0.0
    %1884 = vmatprep.subr.mxu0 0.0
    %1885 = vmatpush2.msra.mxu0 0.0
    %1886 = vmatprep.mubr.f32.mxu0 0.0
    %1887 = vmatmul.mubr.f32.gmra.mxu0 %v1584
    %v1888 = vpop.f32.mrf.mxu0
    %v1889 = vadd.f32 %v1819, %v1888
    %v1890 = vpop.f32.mrf.mxu0
    %1891 = vdwg.mxu0
    %1893 = vrot.lane.b32.xlu0 %v1751, 32
    %v1894 = vpop.permute.xlu0 %1893
    %v1895 = vsel %vm116, %v1894, 0
    %1897 = vmatprep.subr.mxu0 0.0
    %1898 = vmatpush1.msra.mxu0 0.0
    %1899 = vmatprep.subr.mxu0 0.0
    %1900 = vmatpush1.msra.mxu0 0.0
    %1901 = vmatprep.subr.mxu0 0.0
    %1902 = vmatpush1.msra.mxu0 0.0
    %1903 = vmatprep.subr.mxu0 0.0
    %1904 = vmatpush1.msra.mxu0 0.0
    %1905 = vmatprep.subr.mxu0 0.0
    %1906 = vmatpush1.msra.mxu0 0.0
    %1907 = vmatprep.subr.mxu0 0.0
    %1908 = vmatpush1.msra.mxu0 0.0
    %1909 = vmatprep.subr.mxu0 0.0
    %1910 = vmatpush1.msra.mxu0 0.0
    %1911 = vmatprep.subr.mxu0 0.0
    %1912 = vmatpush1.msra.mxu0 0.0
    %1913 = vmatprep.subr.mxu0 0.0
    %1914 = vmatpush1.msra.mxu0 0.0
    %1915 = vmatprep.subr.mxu0 0.0
    %1916 = vmatpush1.msra.mxu0 0.0
    %1917 = vmatprep.subr.mxu0 0.0
    %1918 = vmatpush1.msra.mxu0 0.0
    %1919 = vmatprep.subr.mxu0 0.0
    %1920 = vmatpush1.msra.mxu0 0.0
    %1921 = vmatprep.subr.mxu0 0.0
    %1922 = vmatpush1.msra.mxu0 %v1065
    %1923 = vmatprep.subr.mxu0 0.0
    %1924 = vmatpush1.msra.mxu0 %v1064
    %1925 = vmatprep.subr.mxu0 0.0
    %1926 = vmatpush1.msra.mxu0 %v1063
    %1927 = vmatprep.subr.mxu0 0.0
    %1928 = vmatpush1.msra.mxu0 %v1062
    %1929 = vmatprep.subr.mxu0 0.0
    %1930 = vmatpush2.msra.mxu0 0.0
    %1931 = vmatprep.subr.mxu0 0.0
    %1932 = vmatpush2.msra.mxu0 0.0
    %1933 = vmatprep.subr.mxu0 0.0
    %1934 = vmatpush2.msra.mxu0 0.0
    %1935 = vmatprep.subr.mxu0 0.0
    %1936 = vmatpush2.msra.mxu0 0.0
    %1937 = vmatprep.subr.mxu0 0.0
    %1938 = vmatpush2.msra.mxu0 0.0
    %1939 = vmatprep.subr.mxu0 0.0
    %1940 = vmatpush2.msra.mxu0 0.0
    %1941 = vmatprep.subr.mxu0 0.0
    %1942 = vmatpush2.msra.mxu0 0.0
    %1943 = vmatprep.subr.mxu0 0.0
    %1944 = vmatpush2.msra.mxu0 0.0
    %1945 = vmatprep.subr.mxu0 0.0
    %1946 = vmatpush2.msra.mxu0 0.0
    %1947 = vmatprep.subr.mxu0 0.0
    %1948 = vmatpush2.msra.mxu0 0.0
    %1949 = vmatprep.subr.mxu0 0.0
    %1950 = vmatpush2.msra.mxu0 0.0
    %1951 = vmatprep.subr.mxu0 0.0
    %1952 = vmatpush2.msra.mxu0 0.0
    %1953 = vmatprep.subr.mxu0 0.0
    %1954 = vmatpush2.msra.mxu0 0.0
    %1955 = vmatprep.subr.mxu0 0.0
    %1956 = vmatpush2.msra.mxu0 0.0
    %1957 = vmatprep.subr.mxu0 0.0
    %1958 = vmatpush2.msra.mxu0 0.0
    %1959 = vmatprep.subr.mxu0 0.0
    %1960 = vmatpush2.msra.mxu0 0.0
    %1961 = vmatprep.mubr.f32.mxu0 0.0
    %1962 = vmatmul.mubr.f32.gmra.mxu0 %v1895
    %v1963 = vpop.f32.mrf.mxu0
    %v1964 = vadd.f32 0.0, %v1963
    %v1965 = vpop.f32.mrf.mxu0
    %1966 = vdwg.mxu0
    %v1967 = vadd.f32 %v1889, %v1964
    %v1968 = vadd.f32 %v1967, %v1147
    %v1969 = vsel %vm1150, %v1968, -inf
    %1970 = vmax.xlane.f32.xlu0 %v1969
    %v1971 = vpop.xlane.xlu0 %1970
    %vm1972 = vcmp.eq.f32.partialorder %v1968, %v1971
    %v1973 = vsel %vm1972, %v301, 32
    %v1974 = vsel %vm1150, %v1973, 2147483647
    %v1975 = vand.u32 %v1974, 65535
    %v1976 = vshra.s32 %v1974, 16
    %v1977 = vcvt.s32.f32 %v1975
    %v1978 = vcvt.s32.f32 %v1976
    %1979 = vmin.xlane.f32.xlu0 %v1978
    %v1980 = vpop.xlane.xlu0 %1979
    %vm1981 = vcmp.eq.f32.partialorder %v1978, %v1980
    %v1982 = vsel %vm1981, %v1977, inf
    %1983 = vmin.xlane.f32.xlu0 %v1982
    %v1984 = vpop.xlane.xlu0 %1983
    %v1985 = vcvt.f32.s32 %v1984
    %v1986 = vcvt.f32.s32 %v1980
    %v1987 = vshll.u32 %v1986, 16
    %v1988 = vadd.s32 %v1987, %v1985
    %vm1989 = vcmp.eq.s32.totalorder %v301, %v1988
    %v1990 = vsel %vm1989, 1, 0
    %v1991 = vcvt.s32.f32 %v1990
    %s1992 = scalar_lea.vmem %s1, 4
    %v1993 = vld [vmem:[%s1992] sm:$0x3]
    %v1994 = vsub.f32 %v1968, %v1971
    %v1995 = vmul.f32 %v1994, 1.442695
    %v1996 = vpow.pop %v1995
    %v1997 = vsel %vm1150, %v1996, 0.0
    %1998 = vadd.xlane.f32.xlu0 %v1997
    %v1999 = vpop.xlane.xlu0 %1998
    %v2000 = vlog2.pop %v1999
    %v2001 = vmul.f32 %v2000, 0.6931472
    %v2002 = vadd.f32 %v1971, %v2001
    %v2003 = vmul.f32 %v1968, %v1993
    %v2004 = vsel %vm1150, %v2003, 0.0
    %2005 = vadd.xlane.f32.xlu0 %v2004
    %v2006 = vpop.xlane.xlu0 %2005
    %v2007 = vsub.f32 1.0, %v1993
    %v2008 = vsub.f32 %v2002, %v2006
    %v2009 = vmul.f32 %v2008, %v2007
    %v2010 = vsel %vm289, %v2009, 0.0
    %v2011 = vrot.slane %v2010, 4
    %v2012 = vadd.f32 %v2010, %v2011
    %v2013 = vrot.slane %v2012, 2
    %v2014 = vadd.f32 %v2012, %v2013
    %v2015 = vrot.slane %v2014, 1
    %v2016 = vadd.f32 %v2014, %v2015
    %v2017 = vadd.f32 %v1199, %v2016
    %v2018 = vsel %vm289, %v2007, 0.0
    %v2019 = vrot.slane %v2018, 4
    %v2020 = vadd.f32 %v2018, %v2019
    %v2021 = vrot.slane %v2020, 2
    %v2022 = vadd.f32 %v2020, %v2021
    %v2023 = vrot.slane %v2022, 1
    %v2024 = vadd.f32 %v2022, %v2023
    %v2025 = vadd.f32 %v1207, %v2024
    %s2026 = sld [smem:[#allocation4 + $0x2]]
    %p2027 = scmp.ne.s32.totalorder %s2026, 0
    %s2028 = scalar_select %p2027, 1.0, 0.0
    %v2029 = vstv %s2028
    %v2030 = vmul.f32 %v2029, %v1993
    %s2031 = ssub.f32 1.0, %s2028
    %v2032 = vstv %s2031
    %v2033 = vmul.f32 %v2032, %v1991
    %v2034 = vadd.f32 %v2030, %v2033
    %2035 = vmatprep.subr.mxu0 0.0
    %2036 = vmatpush1.msra.mxu0 0.0
    %2037 = vmatprep.subr.mxu0 0.0
    %2038 = vmatpush1.msra.mxu0 0.0
    %2039 = vmatprep.subr.mxu0 0.0
    %2040 = vmatpush1.msra.mxu0 0.0
    %2041 = vmatprep.subr.mxu0 0.0
    %2042 = vmatpush1.msra.mxu0 0.0
    %2043 = vmatprep.subr.mxu0 0.0
    %2044 = vmatpush1.msra.mxu0 0.0
    %2045 = vmatprep.subr.mxu0 0.0
    %2046 = vmatpush1.msra.mxu0 0.0
    %2047 = vmatprep.subr.mxu0 0.0
    %2048 = vmatpush1.msra.mxu0 0.0
    %2049 = vmatprep.subr.mxu0 0.0
    %2050 = vmatpush1.msra.mxu0 0.0
    %2051 = vmatprep.subr.mxu0 0.0
    %2052 = vmatpush1.msra.mxu0 0.0
    %2053 = vmatprep.subr.mxu0 0.0
    %2054 = vmatpush1.msra.mxu0 0.0
    %2055 = vmatprep.subr.mxu0 0.0
    %2056 = vmatpush1.msra.mxu0 0.0
    %2057 = vmatprep.subr.mxu0 0.0
    %2058 = vmatpush1.msra.mxu0 0.0
    %2059 = vmatprep.subr.mxu0 0.0
    %2060 = vmatpush1.msra.mxu0 %v305
    %2061 = vmatprep.subr.mxu0 0.0
    %2062 = vmatpush1.msra.mxu0 %v304
    %2063 = vmatprep.subr.mxu0 0.0
    %2064 = vmatpush1.msra.mxu0 %v303
    %2065 = vmatprep.subr.mxu0 0.0
    %2066 = vmatpush1.msra.mxu0 %v302
    %2067 = vmatprep.subr.mxu0 0.0
    %2068 = vmatpush2.msra.mxu0 0.0
    %2069 = vmatprep.subr.mxu0 0.0
    %2070 = vmatpush2.msra.mxu0 0.0
    %2071 = vmatprep.subr.mxu0 0.0
    %2072 = vmatpush2.msra.mxu0 0.0
    %2073 = vmatprep.subr.mxu0 0.0
    %2074 = vmatpush2.msra.mxu0 0.0
    %2075 = vmatprep.subr.mxu0 0.0
    %2076 = vmatpush2.msra.mxu0 0.0
    %2077 = vmatprep.subr.mxu0 0.0
    %2078 = vmatpush2.msra.mxu0 0.0
    %2079 = vmatprep.subr.mxu0 0.0
    %2080 = vmatpush2.msra.mxu0 0.0
    %2081 = vmatprep.subr.mxu0 0.0
    %2082 = vmatpush2.msra.mxu0 0.0
    %2083 = vmatprep.subr.mxu0 0.0
    %2084 = vmatpush2.msra.mxu0 0.0
    %2085 = vmatprep.subr.mxu0 0.0
    %2086 = vmatpush2.msra.mxu0 0.0
    %2087 = vmatprep.subr.mxu0 0.0
    %2088 = vmatpush2.msra.mxu0 0.0
    %2089 = vmatprep.subr.mxu0 0.0
    %2090 = vmatpush2.msra.mxu0 0.0
    %2091 = vmatprep.subr.mxu0 0.0
    %2092 = vmatpush2.msra.mxu0 0.0
    %2093 = vmatprep.subr.mxu0 0.0
    %2094 = vmatpush2.msra.mxu0 0.0
    %2095 = vmatprep.subr.mxu0 0.0
    %2096 = vmatpush2.msra.mxu0 0.0
    %2097 = vmatprep.subr.mxu0 0.0
    %2098 = vmatpush2.msra.mxu0 0.0
    %2099 = vmatprep.mubr.f32.mxu0 0.0
    %2100 = vmatmul.mubr.f32.gmra.mxu0 %v1895
    %v2101 = vpop.f32.mrf.mxu0
    %v2102 = vadd.f32 0.0, %v2101
    %v2103 = vpop.f32.mrf.mxu0
    %2104 = vdwg.mxu0
    %v2107 = vunpack.c.l.s4 1966171168
    %v2108 = vunpack.c.0.s8 %v2107
    %v2109 = vlaneseq
    %v2110 = vshrl.u32 %v2109, 7
    %v2111 = vsub.s32 %v2108, %v2110
    %v2112 = vrot.slane %v2102, %v2111
    %v2113 = vcombine.high %v2112, %v2112
    %v2115 = vunpack.c.l.s4 1966171168
    %v2116 = vunpack.c.0.s8 %v2115
    %v2117 = vlaneseq
    %v2118 = vshrl.u32 %v2117, 7
    %v2119 = vsub.s32 %v2116, %v2118
    %v2120 = vrot.slane %v2112, %v2119
    %v2122 = vunpack.c.l.s4 1966171168
    %v2123 = vunpack.c.0.s8 %v2122
    %v2124 = vlaneseq
    %v2125 = vshrl.u32 %v2124, 7
    %v2126 = vsub.s32 %v2123, %v2125
    %v2127 = vrot.slane %v2113, %v2126
    %v2128 = vlaneseq
    %v2129 = vshrl.u32 %v2128, 7
    %v2130 = vsub.s32 0, %v2129
    %v2131 = vrot.slane %v2120, %v2130
    %v2132 = vlaneseq
    %v2133 = vshrl.u32 %v2132, 7
    %v2134 = vsub.s32 0, %v2133
    %v2135 = vrot.slane %v2127, %v2134
    %v2138 = vadd.f32 %v379, %v2131
    %v2139 = vadd.f32 %v380, %v2131
    %v2140 = vadd.f32 %v381, %v2135
    %v2141 = vadd.f32 %v382, %v2135
    %v2142 = vtanh.pop %v2138
    %v2143 = vtanh.pop %v2139
    %v2144 = vtanh.pop %v2140
    %v2145 = vtanh.pop %v2141
    %v2146 = vmul.f32 %v2142, %v429
    %v2147 = vmul.f32 %v2143, %v429
    %v2148 = vmul.f32 %v2144, %v429
    %v2149 = vmul.f32 %v2145, %v429
    %v2150 = vsel %vm116, %v2146, 0.0
    %2151 = vadd.xlane.f32.xlu0 %v2150
    %v2152 = vpop.xlane.xlu0 %2151
    %v2153 = vsel %vm116, %v2147, 0.0
    %2154 = vadd.xlane.f32.xlu0 %v2153
    %v2155 = vpop.xlane.xlu0 %2154
    %v2156 = vsel %vm116, %v2148, 0.0
    %2157 = vadd.xlane.f32.xlu0 %v2156
    %v2158 = vpop.xlane.xlu0 %2157
    %v2159 = vsel %vm116, %v2149, 0.0
    %2160 = vadd.xlane.f32.xlu0 %v2159
    %v2161 = vpop.xlane.xlu0 %2160
    %v2162 = vadd.f32 %v2152, %v455
    %v2163 = vadd.f32 %v2155, %v459
    %v2164 = vadd.f32 %v2158, %v466
    %v2165 = vadd.f32 %v2161, %v470
    %2170 = vset.pattern.permute.xlu0 0
    %2171 = vperm.xlu0 %2170, %v2162
    %v2172 = vpop.permute.xlu0 %2171
    %2173 = vset.pattern.permute.xlu0 0
    %2174 = vperm.xlu0 %2173, %v2163
    %v2175 = vpop.permute.xlu0 %2174
    %2176 = vset.pattern.permute.xlu0 0
    %2177 = vperm.xlu0 %2176, %v2164
    %v2178 = vpop.permute.xlu0 %2177
    %2179 = vset.pattern.permute.xlu0 0
    %2180 = vperm.xlu0 %2179, %v2165
    %v2181 = vpop.permute.xlu0 %2180
    %v2182 = vlaneseq
    %v2183 = vshrl.u32 %v2182, 7
    %v2184 = vsub.s32 %v301, %v2183
    %v2185 = vrot.slane %v2172, %v2184
    %v2186 = vlaneseq
    %v2187 = vshrl.u32 %v2186, 7
    %v2188 = vsub.s32 %v499, %v2187
    %v2189 = vrot.slane %v2175, %v2188
    %v2190 = vsel %vm504, %v2189, %v2185
    %v2191 = vlaneseq
    %v2192 = vshrl.u32 %v2191, 7
    %v2193 = vsub.s32 %v301, %v2192
    %v2194 = vrot.slane %v2178, %v2193
    %v2195 = vlaneseq
    %v2196 = vshrl.u32 %v2195, 7
    %v2197 = vsub.s32 %v499, %v2196
    %v2198 = vrot.slane %v2181, %v2197
    %v2199 = vsel %vm504, %v2198, %v2194
    %v2200 = vsel %vm515, %v2199, %v2190
    %v2202 = vsel %vm518, %v2200, -inf
    %2203 = vmax.xlane.f32.xlu0 %v2202
    %v2204 = vpop.xlane.xlu0 %2203
    %v2206 = vlaneseq
    %v2207 = vshrl.u32 %v2206, 7
    %v2208 = vsub.s32 0, %v2207
    %v2209 = vrot.slane %v2204, %v2208
    %v2210 = vlaneseq
    %v2211 = vshrl.u32 %v2210, 7
    %v2212 = vsub.s32 1, %v2211
    %v2213 = vrot.slane %v2204, %v2212
    %v2216 = vsub.f32 %v2162, %v2209
    %v2217 = vsub.f32 %v2163, %v2209
    %v2218 = vsub.f32 %v2164, %v2213
    %v2219 = vsub.f32 %v2165, %v2213
    %v2220 = vmul.f32 %v2216, 1.442695
    %v2221 = vpow.pop %v2220
    %v2222 = vmul.f32 %v2217, 1.442695
    %v2223 = vpow.pop %v2222
    %v2224 = vmul.f32 %v2218, 1.442695
    %v2225 = vpow.pop %v2224
    %v2226 = vmul.f32 %v2219, 1.442695
    %v2227 = vpow.pop %v2226
    %2232 = vset.pattern.permute.xlu0 0
    %2233 = vperm.xlu0 %2232, %v2221
    %v2234 = vpop.permute.xlu0 %2233
    %2235 = vset.pattern.permute.xlu0 0
    %2236 = vperm.xlu0 %2235, %v2223
    %v2237 = vpop.permute.xlu0 %2236
    %2238 = vset.pattern.permute.xlu0 0
    %2239 = vperm.xlu0 %2238, %v2225
    %v2240 = vpop.permute.xlu0 %2239
    %2241 = vset.pattern.permute.xlu0 0
    %2242 = vperm.xlu0 %2241, %v2227
    %v2243 = vpop.permute.xlu0 %2242
    %v2244 = vlaneseq
    %v2245 = vshrl.u32 %v2244, 7
    %v2246 = vsub.s32 %v301, %v2245
    %v2247 = vrot.slane %v2234, %v2246
    %v2248 = vlaneseq
    %v2249 = vshrl.u32 %v2248, 7
    %v2250 = vsub.s32 %v499, %v2249
    %v2251 = vrot.slane %v2237, %v2250
    %v2252 = vsel %vm504, %v2251, %v2247
    %v2253 = vlaneseq
    %v2254 = vshrl.u32 %v2253, 7
    %v2255 = vsub.s32 %v301, %v2254
    %v2256 = vrot.slane %v2240, %v2255
    %v2257 = vlaneseq
    %v2258 = vshrl.u32 %v2257, 7
    %v2259 = vsub.s32 %v499, %v2258
    %v2260 = vrot.slane %v2243, %v2259
    %v2261 = vsel %vm504, %v2260, %v2256
    %v2262 = vsel %vm515, %v2261, %v2252
    %v2264 = vsel %vm518, %v2262, 0.0
    %2265 = vadd.xlane.f32.xlu0 %v2264
    %v2266 = vpop.xlane.xlu0 %2265
    %v2268 = vlaneseq
    %v2269 = vshrl.u32 %v2268, 7
    %v2270 = vsub.s32 0, %v2269
    %v2271 = vrot.slane %v2266, %v2270
    %v2272 = vlaneseq
    %v2273 = vshrl.u32 %v2272, 7
    %v2274 = vsub.s32 1, %v2273
    %v2275 = vrot.slane %v2266, %v2274
    %v2278 = vrcp.pop %v2271
    %v2279 = vmul.f32 %v2221, %v2278
    %v2280 = vmul.f32 %v2223, %v2278
    %v2281 = vrcp.pop %v2275
    %v2282 = vmul.f32 %v2225, %v2281
    %v2283 = vmul.f32 %v2227, %v2281
    %2285 = vset.pattern.permute.xlu0 0
    %2286 = vperm.xlu0 %2285, %v2279
    %v2287 = vpop.permute.xlu0 %2286
    %2290 = vset.pattern.permute.xlu0 0
    %2291 = vperm.xlu0 %2290, %v2280
    %v2292 = vpop.permute.xlu0 %2291
    %2295 = vset.pattern.permute.xlu0 0
    %2296 = vperm.xlu0 %2295, %v2282
    %v2297 = vpop.permute.xlu0 %2296
    %2300 = vset.pattern.permute.xlu0 0
    %2301 = vperm.xlu0 %2300, %v2283
    %v2302 = vpop.permute.xlu0 %2301
    %v2304 = vmul.f32 %v2287, %v601
    %v2305 = vmul.f32 %v2292, %v602
    %v2306 = vmul.f32 %v2297, %v603
    %v2307 = vmul.f32 %v2302, %v604
    %v2308 = vsel %vm116, %v2304, 0.0
    %v2309 = vsel %vm116, %v2305, 0.0
    %v2310 = vadd.f32 %v2308, %v2309
    %v2311 = vrot.slane %v2310, 4
    %v2312 = vadd.f32 %v2310, %v2311
    %v2313 = vrot.slane %v2312, 2
    %v2314 = vadd.f32 %v2312, %v2313
    %v2315 = vrot.slane %v2314, 1
    %v2316 = vadd.f32 %v2314, %v2315
    %v2317 = vsel %vm116, %v2306, 0.0
    %v2318 = vsel %vm116, %v2307, 0.0
    %v2319 = vadd.f32 %v2317, %v2318
    %v2320 = vrot.slane %v2319, 4
    %v2321 = vadd.f32 %v2319, %v2320
    %v2322 = vrot.slane %v2321, 2
    %v2323 = vadd.f32 %v2321, %v2322
    %v2324 = vrot.slane %v2323, 1
    %v2325 = vadd.f32 %v2323, %v2324
    %v2328 = vsel %vm515, %v2325, %v2316
    %v2329 = vsel %vm116, %v2328, 0
    %2331 = vmatprep.subr.mxu0 0.0
    %2332 = vmatpush1.msra.mxu0 0.0
    %2333 = vmatprep.subr.mxu0 0.0
    %2334 = vmatpush1.msra.mxu0 0.0
    %2335 = vmatprep.subr.mxu0 0.0
    %2336 = vmatpush1.msra.mxu0 0.0
    %2337 = vmatprep.subr.mxu0 0.0
    %2338 = vmatpush1.msra.mxu0 0.0
    %2339 = vmatprep.subr.mxu0 0.0
    %2340 = vmatpush1.msra.mxu0 0.0
    %2341 = vmatprep.subr.mxu0 0.0
    %2342 = vmatpush1.msra.mxu0 0.0
    %2343 = vmatprep.subr.mxu0 0.0
    %2344 = vmatpush1.msra.mxu0 0.0
    %2345 = vmatprep.subr.mxu0 0.0
    %2346 = vmatpush1.msra.mxu0 0.0
    %2347 = vmatprep.subr.mxu0 0.0
    %2348 = vmatpush1.msra.mxu0 0.0
    %2349 = vmatprep.subr.mxu0 0.0
    %2350 = vmatpush1.msra.mxu0 0.0
    %2351 = vmatprep.subr.mxu0 0.0
    %2352 = vmatpush1.msra.mxu0 0.0
    %2353 = vmatprep.subr.mxu0 0.0
    %2354 = vmatpush1.msra.mxu0 0.0
    %2355 = vmatprep.subr.mxu0 0.0
    %2356 = vmatpush1.msra.mxu0 %v654
    %2357 = vmatprep.subr.mxu0 0.0
    %2358 = vmatpush1.msra.mxu0 %v653
    %2359 = vmatprep.subr.mxu0 0.0
    %2360 = vmatpush1.msra.mxu0 %v652
    %2361 = vmatprep.subr.mxu0 0.0
    %2362 = vmatpush1.msra.mxu0 %v651
    %2363 = vmatprep.subr.mxu0 0.0
    %2364 = vmatpush2.msra.mxu0 0.0
    %2365 = vmatprep.subr.mxu0 0.0
    %2366 = vmatpush2.msra.mxu0 0.0
    %2367 = vmatprep.subr.mxu0 0.0
    %2368 = vmatpush2.msra.mxu0 0.0
    %2369 = vmatprep.subr.mxu0 0.0
    %2370 = vmatpush2.msra.mxu0 0.0
    %2371 = vmatprep.subr.mxu0 0.0
    %2372 = vmatpush2.msra.mxu0 0.0
    %2373 = vmatprep.subr.mxu0 0.0
    %2374 = vmatpush2.msra.mxu0 0.0
    %2375 = vmatprep.subr.mxu0 0.0
    %2376 = vmatpush2.msra.mxu0 0.0
    %2377 = vmatprep.subr.mxu0 0.0
    %2378 = vmatpush2.msra.mxu0 0.0
    %2379 = vmatprep.subr.mxu0 0.0
    %2380 = vmatpush2.msra.mxu0 0.0
    %2381 = vmatprep.subr.mxu0 0.0
    %2382 = vmatpush2.msra.mxu0 0.0
    %2383 = vmatprep.subr.mxu0 0.0
    %2384 = vmatpush2.msra.mxu0 0.0
    %2385 = vmatprep.subr.mxu0 0.0
    %2386 = vmatpush2.msra.mxu0 0.0
    %2387 = vmatprep.subr.mxu0 0.0
    %2388 = vmatpush2.msra.mxu0 0.0
    %2389 = vmatprep.subr.mxu0 0.0
    %2390 = vmatpush2.msra.mxu0 0.0
    %2391 = vmatprep.subr.mxu0 0.0
    %2392 = vmatpush2.msra.mxu0 0.0
    %2393 = vmatprep.subr.mxu0 0.0
    %2394 = vmatpush2.msra.mxu0 0.0
    %2395 = vmatprep.mubr.f32.mxu0 0.0
    %2396 = vmatmul.mubr.f32.gmra.mxu0 %v2329
    %v2397 = vpop.f32.mrf.mxu0
    %v2398 = vadd.f32 0.0, %v2397
    %v2399 = vpop.f32.mrf.mxu0
    %2400 = vdwg.mxu0
    %v2402 = vsel %vm116, %v2034, 0
    %2404 = vmatprep.subr.mxu0 0.0
    %2405 = vmatpush1.msra.mxu0 0.0
    %2406 = vmatprep.subr.mxu0 0.0
    %2407 = vmatpush1.msra.mxu0 0.0
    %2408 = vmatprep.subr.mxu0 0.0
    %2409 = vmatpush1.msra.mxu0 0.0
    %2410 = vmatprep.subr.mxu0 0.0
    %2411 = vmatpush1.msra.mxu0 0.0
    %2412 = vmatprep.subr.mxu0 0.0
    %2413 = vmatpush1.msra.mxu0 0.0
    %2414 = vmatprep.subr.mxu0 0.0
    %2415 = vmatpush1.msra.mxu0 0.0
    %2416 = vmatprep.subr.mxu0 0.0
    %2417 = vmatpush1.msra.mxu0 0.0
    %2418 = vmatprep.subr.mxu0 0.0
    %2419 = vmatpush1.msra.mxu0 0.0
    %2420 = vmatprep.subr.mxu0 0.0
    %2421 = vmatpush1.msra.mxu0 0.0
    %2422 = vmatprep.subr.mxu0 0.0
    %2423 = vmatpush1.msra.mxu0 0.0
    %2424 = vmatprep.subr.mxu0 0.0
    %2425 = vmatpush1.msra.mxu0 0.0
    %2426 = vmatprep.subr.mxu0 0.0
    %2427 = vmatpush1.msra.mxu0 0.0
    %2428 = vmatprep.subr.mxu0 0.0
    %2429 = vmatpush1.msra.mxu0 %v650
    %2430 = vmatprep.subr.mxu0 0.0
    %2431 = vmatpush1.msra.mxu0 %v649
    %2432 = vmatprep.subr.mxu0 0.0
    %2433 = vmatpush1.msra.mxu0 %v648
    %2434 = vmatprep.subr.mxu0 0.0
    %2435 = vmatpush1.msra.mxu0 %v647
    %2436 = vmatprep.subr.mxu0 0.0
    %2437 = vmatpush2.msra.mxu0 0.0
    %2438 = vmatprep.subr.mxu0 0.0
    %2439 = vmatpush2.msra.mxu0 0.0
    %2440 = vmatprep.subr.mxu0 0.0
    %2441 = vmatpush2.msra.mxu0 0.0
    %2442 = vmatprep.subr.mxu0 0.0
    %2443 = vmatpush2.msra.mxu0 0.0
    %2444 = vmatprep.subr.mxu0 0.0
    %2445 = vmatpush2.msra.mxu0 0.0
    %2446 = vmatprep.subr.mxu0 0.0
    %2447 = vmatpush2.msra.mxu0 0.0
    %2448 = vmatprep.subr.mxu0 0.0
    %2449 = vmatpush2.msra.mxu0 0.0
    %2450 = vmatprep.subr.mxu0 0.0
    %2451 = vmatpush2.msra.mxu0 0.0
    %2452 = vmatprep.subr.mxu0 0.0
    %2453 = vmatpush2.msra.mxu0 0.0
    %2454 = vmatprep.subr.mxu0 0.0
    %2455 = vmatpush2.msra.mxu0 0.0
    %2456 = vmatprep.subr.mxu0 0.0
    %2457 = vmatpush2.msra.mxu0 0.0
    %2458 = vmatprep.subr.mxu0 0.0
    %2459 = vmatpush2.msra.mxu0 0.0
    %2460 = vmatprep.subr.mxu0 0.0
    %2461 = vmatpush2.msra.mxu0 0.0
    %2462 = vmatprep.subr.mxu0 0.0
    %2463 = vmatpush2.msra.mxu0 0.0
    %2464 = vmatprep.subr.mxu0 0.0
    %2465 = vmatpush2.msra.mxu0 0.0
    %2466 = vmatprep.subr.mxu0 0.0
    %2467 = vmatpush2.msra.mxu0 0.0
    %2468 = vmatprep.mubr.f32.mxu0 0.0
    %2469 = vmatmul.mubr.f32.gmra.mxu0 %v2402
    %v2470 = vpop.f32.mrf.mxu0
    %v2471 = vadd.f32 %v2398, %v2470
    %v2472 = vpop.f32.mrf.mxu0
    %2473 = vdwg.mxu0
    %2474 = vmatprep.subr.mxu0 0.0
    %2475 = vmatpush1.msra.mxu0 0.0
    %2476 = vmatprep.subr.mxu0 0.0
    %2477 = vmatpush1.msra.mxu0 0.0
    %2478 = vmatprep.subr.mxu0 0.0
    %2479 = vmatpush1.msra.mxu0 0.0
    %2480 = vmatprep.subr.mxu0 0.0
    %2481 = vmatpush1.msra.mxu0 0.0
    %2482 = vmatprep.subr.mxu0 0.0
    %2483 = vmatpush1.msra.mxu0 0.0
    %2484 = vmatprep.subr.mxu0 0.0
    %2485 = vmatpush1.msra.mxu0 0.0
    %2486 = vmatprep.subr.mxu0 0.0
    %2487 = vmatpush1.msra.mxu0 0.0
    %2488 = vmatprep.subr.mxu0 0.0
    %2489 = vmatpush1.msra.mxu0 0.0
    %2490 = vmatprep.subr.mxu0 0.0
    %2491 = vmatpush1.msra.mxu0 0.0
    %2492 = vmatprep.subr.mxu0 0.0
    %2493 = vmatpush1.msra.mxu0 0.0
    %2494 = vmatprep.subr.mxu0 0.0
    %2495 = vmatpush1.msra.mxu0 0.0
    %2496 = vmatprep.subr.mxu0 0.0
    %2497 = vmatpush1.msra.mxu0 0.0
    %2498 = vmatprep.subr.mxu0 0.0
    %2499 = vmatpush1.msra.mxu0 %v806
    %2500 = vmatprep.subr.mxu0 0.0
    %2501 = vmatpush1.msra.mxu0 %v805
    %2502 = vmatprep.subr.mxu0 0.0
    %2503 = vmatpush1.msra.mxu0 %v804
    %2504 = vmatprep.subr.mxu0 0.0
    %2505 = vmatpush1.msra.mxu0 %v803
    %2506 = vmatprep.subr.mxu0 0.0
    %2507 = vmatpush2.msra.mxu0 0.0
    %2508 = vmatprep.subr.mxu0 0.0
    %2509 = vmatpush2.msra.mxu0 0.0
    %2510 = vmatprep.subr.mxu0 0.0
    %2511 = vmatpush2.msra.mxu0 0.0
    %2512 = vmatprep.subr.mxu0 0.0
    %2513 = vmatpush2.msra.mxu0 0.0
    %2514 = vmatprep.subr.mxu0 0.0
    %2515 = vmatpush2.msra.mxu0 0.0
    %2516 = vmatprep.subr.mxu0 0.0
    %2517 = vmatpush2.msra.mxu0 0.0
    %2518 = vmatprep.subr.mxu0 0.0
    %2519 = vmatpush2.msra.mxu0 0.0
    %2520 = vmatprep.subr.mxu0 0.0
    %2521 = vmatpush2.msra.mxu0 0.0
    %2522 = vmatprep.subr.mxu0 0.0
    %2523 = vmatpush2.msra.mxu0 0.0
    %2524 = vmatprep.subr.mxu0 0.0
    %2525 = vmatpush2.msra.mxu0 0.0
    %2526 = vmatprep.subr.mxu0 0.0
    %2527 = vmatpush2.msra.mxu0 0.0
    %2528 = vmatprep.subr.mxu0 0.0
    %2529 = vmatpush2.msra.mxu0 0.0
    %2530 = vmatprep.subr.mxu0 0.0
    %2531 = vmatpush2.msra.mxu0 0.0
    %2532 = vmatprep.subr.mxu0 0.0
    %2533 = vmatpush2.msra.mxu0 0.0
    %2534 = vmatprep.subr.mxu0 0.0
    %2535 = vmatpush2.msra.mxu0 0.0
    %2536 = vmatprep.subr.mxu0 0.0
    %2537 = vmatpush2.msra.mxu0 0.0
    %2538 = vmatprep.mubr.f32.mxu0 0.0
    %2539 = vmatmul.mubr.f32.gmra.mxu0 %v1895
    %v2540 = vpop.f32.mrf.mxu0
    %v2541 = vadd.f32 0.0, %v2540
    %v2542 = vpop.f32.mrf.mxu0
    %2543 = vdwg.mxu0
    %v2544 = vadd.f32 %v2471, %v2541
    %v2545 = vadd.f32 %v2544, %v883
    %v2546 = vxor.u32 %v2545, 2147483648
    %v2547 = vmul.f32 %v2546, 1.442695
    %v2548 = vpow.pop %v2547
    %v2549 = vadd.f32 %v2548, 1.0
    %v2550 = vrcp.pop %v2549
    %v2551 = vmul.f32 1.0, %v2550
    %v2552 = vtanh.pop %v2545
    %v2553 = vmul.f32 %v2551, %v1745
    %2555 = vrot.lane.b32.xlu0 %v2552, 64
    %v2556 = vpop.permute.xlu0 %2555
    %v2558 = vmul.f32 %v2551, %v2556
    %2560 = vrot.lane.b32.xlu0 %v2558, 32
    %v2561 = vpop.permute.xlu0 %2560
    %v2563 = vadd.f32 %v2553, %v2561
    %v2564 = vtanh.pop %v2563
    %2566 = vrot.lane.b32.xlu0 %v2564, 64
    %v2567 = vpop.permute.xlu0 %2566
    %v2569 = vmul.f32 %v2551, %v2567
    %2570 = vmatprep.subr.mxu0 0.0
    %2571 = vmatpush1.msra.mxu0 0.0
    %2572 = vmatprep.subr.mxu0 0.0
    %2573 = vmatpush1.msra.mxu0 0.0
    %2574 = vmatprep.subr.mxu0 0.0
    %2575 = vmatpush1.msra.mxu0 0.0
    %2576 = vmatprep.subr.mxu0 0.0
    %2577 = vmatpush1.msra.mxu0 0.0
    %2578 = vmatprep.subr.mxu0 0.0
    %2579 = vmatpush1.msra.mxu0 0.0
    %2580 = vmatprep.subr.mxu0 0.0
    %2581 = vmatpush1.msra.mxu0 0.0
    %2582 = vmatprep.subr.mxu0 0.0
    %2583 = vmatpush1.msra.mxu0 0.0
    %2584 = vmatprep.subr.mxu0 0.0
    %2585 = vmatpush1.msra.mxu0 0.0
    %2586 = vmatprep.subr.mxu0 0.0
    %2587 = vmatpush1.msra.mxu0 0.0
    %2588 = vmatprep.subr.mxu0 0.0
    %2589 = vmatpush1.msra.mxu0 0.0
    %2590 = vmatprep.subr.mxu0 0.0
    %2591 = vmatpush1.msra.mxu0 0.0
    %2592 = vmatprep.subr.mxu0 0.0
    %2593 = vmatpush1.msra.mxu0 0.0
    %2594 = vmatprep.subr.mxu0 0.0
    %2595 = vmatpush1.msra.mxu0 %v921
    %2596 = vmatprep.subr.mxu0 0.0
    %2597 = vmatpush1.msra.mxu0 %v920
    %2598 = vmatprep.subr.mxu0 0.0
    %2599 = vmatpush1.msra.mxu0 %v919
    %2600 = vmatprep.subr.mxu0 0.0
    %2601 = vmatpush1.msra.mxu0 %v918
    %2602 = vmatprep.subr.mxu0 0.0
    %2603 = vmatpush2.msra.mxu0 0.0
    %2604 = vmatprep.subr.mxu0 0.0
    %2605 = vmatpush2.msra.mxu0 0.0
    %2606 = vmatprep.subr.mxu0 0.0
    %2607 = vmatpush2.msra.mxu0 0.0
    %2608 = vmatprep.subr.mxu0 0.0
    %2609 = vmatpush2.msra.mxu0 0.0
    %2610 = vmatprep.subr.mxu0 0.0
    %2611 = vmatpush2.msra.mxu0 0.0
    %2612 = vmatprep.subr.mxu0 0.0
    %2613 = vmatpush2.msra.mxu0 0.0
    %2614 = vmatprep.subr.mxu0 0.0
    %2615 = vmatpush2.msra.mxu0 0.0
    %2616 = vmatprep.subr.mxu0 0.0
    %2617 = vmatpush2.msra.mxu0 0.0
    %2618 = vmatprep.subr.mxu0 0.0
    %2619 = vmatpush2.msra.mxu0 0.0
    %2620 = vmatprep.subr.mxu0 0.0
    %2621 = vmatpush2.msra.mxu0 0.0
    %2622 = vmatprep.subr.mxu0 0.0
    %2623 = vmatpush2.msra.mxu0 0.0
    %2624 = vmatprep.subr.mxu0 0.0
    %2625 = vmatpush2.msra.mxu0 0.0
    %2626 = vmatprep.subr.mxu0 0.0
    %2627 = vmatpush2.msra.mxu0 0.0
    %2628 = vmatprep.subr.mxu0 0.0
    %2629 = vmatpush2.msra.mxu0 0.0
    %2630 = vmatprep.subr.mxu0 0.0
    %2631 = vmatpush2.msra.mxu0 0.0
    %2632 = vmatprep.subr.mxu0 0.0
    %2633 = vmatpush2.msra.mxu0 0.0
    %2634 = vmatprep.mubr.f32.mxu0 0.0
    %2635 = vmatmul.mubr.f32.gmra.mxu0 %v2329
    %v2636 = vpop.f32.mrf.mxu0
    %v2637 = vadd.f32 0.0, %v2636
    %v2638 = vpop.f32.mrf.mxu0
    %2639 = vdwg.mxu0
    %2640 = vmatprep.subr.mxu0 0.0
    %2641 = vmatpush1.msra.mxu0 0.0
    %2642 = vmatprep.subr.mxu0 0.0
    %2643 = vmatpush1.msra.mxu0 0.0
    %2644 = vmatprep.subr.mxu0 0.0
    %2645 = vmatpush1.msra.mxu0 0.0
    %2646 = vmatprep.subr.mxu0 0.0
    %2647 = vmatpush1.msra.mxu0 0.0
    %2648 = vmatprep.subr.mxu0 0.0
    %2649 = vmatpush1.msra.mxu0 0.0
    %2650 = vmatprep.subr.mxu0 0.0
    %2651 = vmatpush1.msra.mxu0 0.0
    %2652 = vmatprep.subr.mxu0 0.0
    %2653 = vmatpush1.msra.mxu0 0.0
    %2654 = vmatprep.subr.mxu0 0.0
    %2655 = vmatpush1.msra.mxu0 0.0
    %2656 = vmatprep.subr.mxu0 0.0
    %2657 = vmatpush1.msra.mxu0 0.0
    %2658 = vmatprep.subr.mxu0 0.0
    %2659 = vmatpush1.msra.mxu0 0.0
    %2660 = vmatprep.subr.mxu0 0.0
    %2661 = vmatpush1.msra.mxu0 0.0
    %2662 = vmatprep.subr.mxu0 0.0
    %2663 = vmatpush1.msra.mxu0 0.0
    %2664 = vmatprep.subr.mxu0 0.0
    %2665 = vmatpush1.msra.mxu0 %v917
    %2666 = vmatprep.subr.mxu0 0.0
    %2667 = vmatpush1.msra.mxu0 %v916
    %2668 = vmatprep.subr.mxu0 0.0
    %2669 = vmatpush1.msra.mxu0 %v915
    %2670 = vmatprep.subr.mxu0 0.0
    %2671 = vmatpush1.msra.mxu0 %v914
    %2672 = vmatprep.subr.mxu0 0.0
    %2673 = vmatpush2.msra.mxu0 0.0
    %2674 = vmatprep.subr.mxu0 0.0
    %2675 = vmatpush2.msra.mxu0 0.0
    %2676 = vmatprep.subr.mxu0 0.0
    %2677 = vmatpush2.msra.mxu0 0.0
    %2678 = vmatprep.subr.mxu0 0.0
    %2679 = vmatpush2.msra.mxu0 0.0
    %2680 = vmatprep.subr.mxu0 0.0
    %2681 = vmatpush2.msra.mxu0 0.0
    %2682 = vmatprep.subr.mxu0 0.0
    %2683 = vmatpush2.msra.mxu0 0.0
    %2684 = vmatprep.subr.mxu0 0.0
    %2685 = vmatpush2.msra.mxu0 0.0
    %2686 = vmatprep.subr.mxu0 0.0
    %2687 = vmatpush2.msra.mxu0 0.0
    %2688 = vmatprep.subr.mxu0 0.0
    %2689 = vmatpush2.msra.mxu0 0.0
    %2690 = vmatprep.subr.mxu0 0.0
    %2691 = vmatpush2.msra.mxu0 0.0
    %2692 = vmatprep.subr.mxu0 0.0
    %2693 = vmatpush2.msra.mxu0 0.0
    %2694 = vmatprep.subr.mxu0 0.0
    %2695 = vmatpush2.msra.mxu0 0.0
    %2696 = vmatprep.subr.mxu0 0.0
    %2697 = vmatpush2.msra.mxu0 0.0
    %2698 = vmatprep.subr.mxu0 0.0
    %2699 = vmatpush2.msra.mxu0 0.0
    %2700 = vmatprep.subr.mxu0 0.0
    %2701 = vmatpush2.msra.mxu0 0.0
    %2702 = vmatprep.subr.mxu0 0.0
    %2703 = vmatpush2.msra.mxu0 0.0
    %2704 = vmatprep.mubr.f32.mxu0 0.0
    %2705 = vmatmul.mubr.f32.gmra.mxu0 %v2402
    %v2706 = vpop.f32.mrf.mxu0
    %v2707 = vadd.f32 %v2637, %v2706
    %v2708 = vpop.f32.mrf.mxu0
    %2709 = vdwg.mxu0
    %2711 = vrot.lane.b32.xlu0 %v2569, 32
    %v2712 = vpop.permute.xlu0 %2711
    %v2713 = vsel %vm116, %v2712, 0
    %2715 = vmatprep.subr.mxu0 0.0
    %2716 = vmatpush1.msra.mxu0 0.0
    %2717 = vmatprep.subr.mxu0 0.0
    %2718 = vmatpush1.msra.mxu0 0.0
    %2719 = vmatprep.subr.mxu0 0.0
    %2720 = vmatpush1.msra.mxu0 0.0
    %2721 = vmatprep.subr.mxu0 0.0
    %2722 = vmatpush1.msra.mxu0 0.0
    %2723 = vmatprep.subr.mxu0 0.0
    %2724 = vmatpush1.msra.mxu0 0.0
    %2725 = vmatprep.subr.mxu0 0.0
    %2726 = vmatpush1.msra.mxu0 0.0
    %2727 = vmatprep.subr.mxu0 0.0
    %2728 = vmatpush1.msra.mxu0 0.0
    %2729 = vmatprep.subr.mxu0 0.0
    %2730 = vmatpush1.msra.mxu0 0.0
    %2731 = vmatprep.subr.mxu0 0.0
    %2732 = vmatpush1.msra.mxu0 0.0
    %2733 = vmatprep.subr.mxu0 0.0
    %2734 = vmatpush1.msra.mxu0 0.0
    %2735 = vmatprep.subr.mxu0 0.0
    %2736 = vmatpush1.msra.mxu0 0.0
    %2737 = vmatprep.subr.mxu0 0.0
    %2738 = vmatpush1.msra.mxu0 0.0
    %2739 = vmatprep.subr.mxu0 0.0
    %2740 = vmatpush1.msra.mxu0 %v1065
    %2741 = vmatprep.subr.mxu0 0.0
    %2742 = vmatpush1.msra.mxu0 %v1064
    %2743 = vmatprep.subr.mxu0 0.0
    %2744 = vmatpush1.msra.mxu0 %v1063
    %2745 = vmatprep.subr.mxu0 0.0
    %2746 = vmatpush1.msra.mxu0 %v1062
    %2747 = vmatprep.subr.mxu0 0.0
    %2748 = vmatpush2.msra.mxu0 0.0
    %2749 = vmatprep.subr.mxu0 0.0
    %2750 = vmatpush2.msra.mxu0 0.0
    %2751 = vmatprep.subr.mxu0 0.0
    %2752 = vmatpush2.msra.mxu0 0.0
    %2753 = vmatprep.subr.mxu0 0.0
    %2754 = vmatpush2.msra.mxu0 0.0
    %2755 = vmatprep.subr.mxu0 0.0
    %2756 = vmatpush2.msra.mxu0 0.0
    %2757 = vmatprep.subr.mxu0 0.0
    %2758 = vmatpush2.msra.mxu0 0.0
    %2759 = vmatprep.subr.mxu0 0.0
    %2760 = vmatpush2.msra.mxu0 0.0
    %2761 = vmatprep.subr.mxu0 0.0
    %2762 = vmatpush2.msra.mxu0 0.0
    %2763 = vmatprep.subr.mxu0 0.0
    %2764 = vmatpush2.msra.mxu0 0.0
    %2765 = vmatprep.subr.mxu0 0.0
    %2766 = vmatpush2.msra.mxu0 0.0
    %2767 = vmatprep.subr.mxu0 0.0
    %2768 = vmatpush2.msra.mxu0 0.0
    %2769 = vmatprep.subr.mxu0 0.0
    %2770 = vmatpush2.msra.mxu0 0.0
    %2771 = vmatprep.subr.mxu0 0.0
    %2772 = vmatpush2.msra.mxu0 0.0
    %2773 = vmatprep.subr.mxu0 0.0
    %2774 = vmatpush2.msra.mxu0 0.0
    %2775 = vmatprep.subr.mxu0 0.0
    %2776 = vmatpush2.msra.mxu0 0.0
    %2777 = vmatprep.subr.mxu0 0.0
    %2778 = vmatpush2.msra.mxu0 0.0
    %2779 = vmatprep.mubr.f32.mxu0 0.0
    %2780 = vmatmul.mubr.f32.gmra.mxu0 %v2713
    %v2781 = vpop.f32.mrf.mxu0
    %v2782 = vadd.f32 0.0, %v2781
    %v2783 = vpop.f32.mrf.mxu0
    %2784 = vdwg.mxu0
    %v2785 = vadd.f32 %v2707, %v2782
    %v2786 = vadd.f32 %v2785, %v1147
    %v2787 = vsel %vm1150, %v2786, -inf
    %2788 = vmax.xlane.f32.xlu0 %v2787
    %v2789 = vpop.xlane.xlu0 %2788
    %vm2790 = vcmp.eq.f32.partialorder %v2786, %v2789
    %v2791 = vsel %vm2790, %v301, 32
    %v2792 = vsel %vm1150, %v2791, 2147483647
    %v2793 = vand.u32 %v2792, 65535
    %v2794 = vshra.s32 %v2792, 16
    %v2795 = vcvt.s32.f32 %v2793
    %v2796 = vcvt.s32.f32 %v2794
    %2797 = vmin.xlane.f32.xlu0 %v2796
    %v2798 = vpop.xlane.xlu0 %2797
    %vm2799 = vcmp.eq.f32.partialorder %v2796, %v2798
    %v2800 = vsel %vm2799, %v2795, inf
    %2801 = vmin.xlane.f32.xlu0 %v2800
    %v2802 = vpop.xlane.xlu0 %2801
    %v2803 = vcvt.f32.s32 %v2802
    %v2804 = vcvt.f32.s32 %v2798
    %v2805 = vshll.u32 %v2804, 16
    %v2806 = vadd.s32 %v2805, %v2803
    %vm2807 = vcmp.eq.s32.totalorder %v301, %v2806
    %v2808 = vsel %vm2807, 1, 0
    %v2809 = vcvt.s32.f32 %v2808
    %s2810 = scalar_lea.vmem %s1, 6
    %v2811 = vld [vmem:[%s2810] sm:$0x3]
    %v2812 = vsub.f32 %v2786, %v2789
    %v2813 = vmul.f32 %v2812, 1.442695
    %v2814 = vpow.pop %v2813
    %v2815 = vsel %vm1150, %v2814, 0.0
    %2816 = vadd.xlane.f32.xlu0 %v2815
    %v2817 = vpop.xlane.xlu0 %2816
    %v2818 = vlog2.pop %v2817
    %v2819 = vmul.f32 %v2818, 0.6931472
    %v2820 = vadd.f32 %v2789, %v2819
    %v2821 = vmul.f32 %v2786, %v2811
    %v2822 = vsel %vm1150, %v2821, 0.0
    %2823 = vadd.xlane.f32.xlu0 %v2822
    %v2824 = vpop.xlane.xlu0 %2823
    %v2825 = vsub.f32 1.0, %v2811
    %v2826 = vsub.f32 %v2820, %v2824
    %v2827 = vmul.f32 %v2826, %v2825
    %v2828 = vsel %vm289, %v2827, 0.0
    %v2829 = vrot.slane %v2828, 4
    %v2830 = vadd.f32 %v2828, %v2829
    %v2831 = vrot.slane %v2830, 2
    %v2832 = vadd.f32 %v2830, %v2831
    %v2833 = vrot.slane %v2832, 1
    %v2834 = vadd.f32 %v2832, %v2833
    %v2835 = vadd.f32 %v2017, %v2834
    %v2836 = vsel %vm289, %v2825, 0.0
    %v2837 = vrot.slane %v2836, 4
    %v2838 = vadd.f32 %v2836, %v2837
    %v2839 = vrot.slane %v2838, 2
    %v2840 = vadd.f32 %v2838, %v2839
    %v2841 = vrot.slane %v2840, 1
    %v2842 = vadd.f32 %v2840, %v2841
    %v2843 = vadd.f32 %v2025, %v2842
    %s2844 = sld [smem:[#allocation4 + $0x3]]
    %p2845 = scmp.ne.s32.totalorder %s2844, 0
    %s2846 = scalar_select %p2845, 1.0, 0.0
    %v2847 = vstv %s2846
    %v2848 = vmul.f32 %v2847, %v2811
    %s2849 = ssub.f32 1.0, %s2846
    %v2850 = vstv %s2849
    %v2851 = vmul.f32 %v2850, %v2809
    %v2852 = vadd.f32 %v2848, %v2851
    %2853 = vmatprep.subr.mxu0 0.0
    %2854 = vmatpush1.msra.mxu0 0.0
    %2855 = vmatprep.subr.mxu0 0.0
    %2856 = vmatpush1.msra.mxu0 0.0
    %2857 = vmatprep.subr.mxu0 0.0
    %2858 = vmatpush1.msra.mxu0 0.0
    %2859 = vmatprep.subr.mxu0 0.0
    %2860 = vmatpush1.msra.mxu0 0.0
    %2861 = vmatprep.subr.mxu0 0.0
    %2862 = vmatpush1.msra.mxu0 0.0
    %2863 = vmatprep.subr.mxu0 0.0
    %2864 = vmatpush1.msra.mxu0 0.0
    %2865 = vmatprep.subr.mxu0 0.0
    %2866 = vmatpush1.msra.mxu0 0.0
    %2867 = vmatprep.subr.mxu0 0.0
    %2868 = vmatpush1.msra.mxu0 0.0
    %2869 = vmatprep.subr.mxu0 0.0
    %2870 = vmatpush1.msra.mxu0 0.0
    %2871 = vmatprep.subr.mxu0 0.0
    %2872 = vmatpush1.msra.mxu0 0.0
    %2873 = vmatprep.subr.mxu0 0.0
    %2874 = vmatpush1.msra.mxu0 0.0
    %2875 = vmatprep.subr.mxu0 0.0
    %2876 = vmatpush1.msra.mxu0 0.0
    %2877 = vmatprep.subr.mxu0 0.0
    %2878 = vmatpush1.msra.mxu0 %v305
    %2879 = vmatprep.subr.mxu0 0.0
    %2880 = vmatpush1.msra.mxu0 %v304
    %2881 = vmatprep.subr.mxu0 0.0
    %2882 = vmatpush1.msra.mxu0 %v303
    %2883 = vmatprep.subr.mxu0 0.0
    %2884 = vmatpush1.msra.mxu0 %v302
    %2885 = vmatprep.subr.mxu0 0.0
    %2886 = vmatpush2.msra.mxu0 0.0
    %2887 = vmatprep.subr.mxu0 0.0
    %2888 = vmatpush2.msra.mxu0 0.0
    %2889 = vmatprep.subr.mxu0 0.0
    %2890 = vmatpush2.msra.mxu0 0.0
    %2891 = vmatprep.subr.mxu0 0.0
    %2892 = vmatpush2.msra.mxu0 0.0
    %2893 = vmatprep.subr.mxu0 0.0
    %2894 = vmatpush2.msra.mxu0 0.0
    %2895 = vmatprep.subr.mxu0 0.0
    %2896 = vmatpush2.msra.mxu0 0.0
    %2897 = vmatprep.subr.mxu0 0.0
    %2898 = vmatpush2.msra.mxu0 0.0
    %2899 = vmatprep.subr.mxu0 0.0
    %2900 = vmatpush2.msra.mxu0 0.0
    %2901 = vmatprep.subr.mxu0 0.0
    %2902 = vmatpush2.msra.mxu0 0.0
    %2903 = vmatprep.subr.mxu0 0.0
    %2904 = vmatpush2.msra.mxu0 0.0
    %2905 = vmatprep.subr.mxu0 0.0
    %2906 = vmatpush2.msra.mxu0 0.0
    %2907 = vmatprep.subr.mxu0 0.0
    %2908 = vmatpush2.msra.mxu0 0.0
    %2909 = vmatprep.subr.mxu0 0.0
    %2910 = vmatpush2.msra.mxu0 0.0
    %2911 = vmatprep.subr.mxu0 0.0
    %2912 = vmatpush2.msra.mxu0 0.0
    %2913 = vmatprep.subr.mxu0 0.0
    %2914 = vmatpush2.msra.mxu0 0.0
    %2915 = vmatprep.subr.mxu0 0.0
    %2916 = vmatpush2.msra.mxu0 0.0
    %2917 = vmatprep.mubr.f32.mxu0 0.0
    %2918 = vmatmul.mubr.f32.gmra.mxu0 %v2713
    %v2919 = vpop.f32.mrf.mxu0
    %v2920 = vadd.f32 0.0, %v2919
    %v2921 = vpop.f32.mrf.mxu0
    %2922 = vdwg.mxu0
    %v2925 = vunpack.c.l.s4 1966171168
    %v2926 = vunpack.c.0.s8 %v2925
    %v2927 = vlaneseq
    %v2928 = vshrl.u32 %v2927, 7
    %v2929 = vsub.s32 %v2926, %v2928
    %v2930 = vrot.slane %v2920, %v2929
    %v2931 = vcombine.high %v2930, %v2930
    %v2933 = vunpack.c.l.s4 1966171168
    %v2934 = vunpack.c.0.s8 %v2933
    %v2935 = vlaneseq
    %v2936 = vshrl.u32 %v2935, 7
    %v2937 = vsub.s32 %v2934, %v2936
    %v2938 = vrot.slane %v2930, %v2937
    %v2940 = vunpack.c.l.s4 1966171168
    %v2941 = vunpack.c.0.s8 %v2940
    %v2942 = vlaneseq
    %v2943 = vshrl.u32 %v2942, 7
    %v2944 = vsub.s32 %v2941, %v2943
    %v2945 = vrot.slane %v2931, %v2944
    %v2946 = vlaneseq
    %v2947 = vshrl.u32 %v2946, 7
    %v2948 = vsub.s32 0, %v2947
    %v2949 = vrot.slane %v2938, %v2948
    %v2950 = vlaneseq
    %v2951 = vshrl.u32 %v2950, 7
    %v2952 = vsub.s32 0, %v2951
    %v2953 = vrot.slane %v2945, %v2952
    %v2956 = vadd.f32 %v379, %v2949
    %v2957 = vadd.f32 %v380, %v2949
    %v2958 = vadd.f32 %v381, %v2953
    %v2959 = vadd.f32 %v382, %v2953
    %v2960 = vtanh.pop %v2956
    %v2961 = vtanh.pop %v2957
    %v2962 = vtanh.pop %v2958
    %v2963 = vtanh.pop %v2959
    %v2964 = vmul.f32 %v2960, %v429
    %v2965 = vmul.f32 %v2961, %v429
    %v2966 = vmul.f32 %v2962, %v429
    %v2967 = vmul.f32 %v2963, %v429
    %v2968 = vsel %vm116, %v2964, 0.0
    %2969 = vadd.xlane.f32.xlu0 %v2968
    %v2970 = vpop.xlane.xlu0 %2969
    %v2971 = vsel %vm116, %v2965, 0.0
    %2972 = vadd.xlane.f32.xlu0 %v2971
    %v2973 = vpop.xlane.xlu0 %2972
    %v2974 = vsel %vm116, %v2966, 0.0
    %2975 = vadd.xlane.f32.xlu0 %v2974
    %v2976 = vpop.xlane.xlu0 %2975
    %v2977 = vsel %vm116, %v2967, 0.0
    %2978 = vadd.xlane.f32.xlu0 %v2977
    %v2979 = vpop.xlane.xlu0 %2978
    %v2980 = vadd.f32 %v2970, %v455
    %v2981 = vadd.f32 %v2973, %v459
    %v2982 = vadd.f32 %v2976, %v466
    %v2983 = vadd.f32 %v2979, %v470
    %2988 = vset.pattern.permute.xlu0 0
    %2989 = vperm.xlu0 %2988, %v2980
    %v2990 = vpop.permute.xlu0 %2989
    %2991 = vset.pattern.permute.xlu0 0
    %2992 = vperm.xlu0 %2991, %v2981
    %v2993 = vpop.permute.xlu0 %2992
    %2994 = vset.pattern.permute.xlu0 0
    %2995 = vperm.xlu0 %2994, %v2982
    %v2996 = vpop.permute.xlu0 %2995
    %2997 = vset.pattern.permute.xlu0 0
    %2998 = vperm.xlu0 %2997, %v2983
    %v2999 = vpop.permute.xlu0 %2998
    %v3000 = vlaneseq
    %v3001 = vshrl.u32 %v3000, 7
    %v3002 = vsub.s32 %v301, %v3001
    %v3003 = vrot.slane %v2990, %v3002
    %v3004 = vlaneseq
    %v3005 = vshrl.u32 %v3004, 7
    %v3006 = vsub.s32 %v499, %v3005
    %v3007 = vrot.slane %v2993, %v3006
    %v3008 = vsel %vm504, %v3007, %v3003
    %v3009 = vlaneseq
    %v3010 = vshrl.u32 %v3009, 7
    %v3011 = vsub.s32 %v301, %v3010
    %v3012 = vrot.slane %v2996, %v3011
    %v3013 = vlaneseq
    %v3014 = vshrl.u32 %v3013, 7
    %v3015 = vsub.s32 %v499, %v3014
    %v3016 = vrot.slane %v2999, %v3015
    %v3017 = vsel %vm504, %v3016, %v3012
    %v3018 = vsel %vm515, %v3017, %v3008
    %v3020 = vsel %vm518, %v3018, -inf
    %3021 = vmax.xlane.f32.xlu0 %v3020
    %v3022 = vpop.xlane.xlu0 %3021
    %v3024 = vlaneseq
    %v3025 = vshrl.u32 %v3024, 7
    %v3026 = vsub.s32 0, %v3025
    %v3027 = vrot.slane %v3022, %v3026
    %v3028 = vlaneseq
    %v3029 = vshrl.u32 %v3028, 7
    %v3030 = vsub.s32 1, %v3029
    %v3031 = vrot.slane %v3022, %v3030
    %v3034 = vsub.f32 %v2980, %v3027
    %v3035 = vsub.f32 %v2981, %v3027
    %v3036 = vsub.f32 %v2982, %v3031
    %v3037 = vsub.f32 %v2983, %v3031
    %v3038 = vmul.f32 %v3034, 1.442695
    %v3039 = vpow.pop %v3038
    %v3040 = vmul.f32 %v3035, 1.442695
    %v3041 = vpow.pop %v3040
    %v3042 = vmul.f32 %v3036, 1.442695
    %v3043 = vpow.pop %v3042
    %v3044 = vmul.f32 %v3037, 1.442695
    %v3045 = vpow.pop %v3044
    %3050 = vset.pattern.permute.xlu0 0
    %3051 = vperm.xlu0 %3050, %v3039
    %v3052 = vpop.permute.xlu0 %3051
    %3053 = vset.pattern.permute.xlu0 0
    %3054 = vperm.xlu0 %3053, %v3041
    %v3055 = vpop.permute.xlu0 %3054
    %3056 = vset.pattern.permute.xlu0 0
    %3057 = vperm.xlu0 %3056, %v3043
    %v3058 = vpop.permute.xlu0 %3057
    %3059 = vset.pattern.permute.xlu0 0
    %3060 = vperm.xlu0 %3059, %v3045
    %v3061 = vpop.permute.xlu0 %3060
    %v3062 = vlaneseq
    %v3063 = vshrl.u32 %v3062, 7
    %v3064 = vsub.s32 %v301, %v3063
    %v3065 = vrot.slane %v3052, %v3064
    %v3066 = vlaneseq
    %v3067 = vshrl.u32 %v3066, 7
    %v3068 = vsub.s32 %v499, %v3067
    %v3069 = vrot.slane %v3055, %v3068
    %v3070 = vsel %vm504, %v3069, %v3065
    %v3071 = vlaneseq
    %v3072 = vshrl.u32 %v3071, 7
    %v3073 = vsub.s32 %v301, %v3072
    %v3074 = vrot.slane %v3058, %v3073
    %v3075 = vlaneseq
    %v3076 = vshrl.u32 %v3075, 7
    %v3077 = vsub.s32 %v499, %v3076
    %v3078 = vrot.slane %v3061, %v3077
    %v3079 = vsel %vm504, %v3078, %v3074
    %v3080 = vsel %vm515, %v3079, %v3070
    %v3082 = vsel %vm518, %v3080, 0.0
    %3083 = vadd.xlane.f32.xlu0 %v3082
    %v3084 = vpop.xlane.xlu0 %3083
    %v3086 = vlaneseq
    %v3087 = vshrl.u32 %v3086, 7
    %v3088 = vsub.s32 0, %v3087
    %v3089 = vrot.slane %v3084, %v3088
    %v3090 = vlaneseq
    %v3091 = vshrl.u32 %v3090, 7
    %v3092 = vsub.s32 1, %v3091
    %v3093 = vrot.slane %v3084, %v3092
    %v3096 = vrcp.pop %v3089
    %v3097 = vmul.f32 %v3039, %v3096
    %v3098 = vmul.f32 %v3041, %v3096
    %v3099 = vrcp.pop %v3093
    %v3100 = vmul.f32 %v3043, %v3099
    %v3101 = vmul.f32 %v3045, %v3099
    %3103 = vset.pattern.permute.xlu0 0
    %3104 = vperm.xlu0 %3103, %v3097
    %v3105 = vpop.permute.xlu0 %3104
    %3108 = vset.pattern.permute.xlu0 0
    %3109 = vperm.xlu0 %3108, %v3098
    %v3110 = vpop.permute.xlu0 %3109
    %3113 = vset.pattern.permute.xlu0 0
    %3114 = vperm.xlu0 %3113, %v3100
    %v3115 = vpop.permute.xlu0 %3114
    %3118 = vset.pattern.permute.xlu0 0
    %3119 = vperm.xlu0 %3118, %v3101
    %v3120 = vpop.permute.xlu0 %3119
    %v3122 = vmul.f32 %v3105, %v601
    %v3123 = vmul.f32 %v3110, %v602
    %v3124 = vmul.f32 %v3115, %v603
    %v3125 = vmul.f32 %v3120, %v604
    %v3126 = vsel %vm116, %v3122, 0.0
    %v3127 = vsel %vm116, %v3123, 0.0
    %v3128 = vadd.f32 %v3126, %v3127
    %v3129 = vrot.slane %v3128, 4
    %v3130 = vadd.f32 %v3128, %v3129
    %v3131 = vrot.slane %v3130, 2
    %v3132 = vadd.f32 %v3130, %v3131
    %v3133 = vrot.slane %v3132, 1
    %v3134 = vadd.f32 %v3132, %v3133
    %v3135 = vsel %vm116, %v3124, 0.0
    %v3136 = vsel %vm116, %v3125, 0.0
    %v3137 = vadd.f32 %v3135, %v3136
    %v3138 = vrot.slane %v3137, 4
    %v3139 = vadd.f32 %v3137, %v3138
    %v3140 = vrot.slane %v3139, 2
    %v3141 = vadd.f32 %v3139, %v3140
    %v3142 = vrot.slane %v3141, 1
    %v3143 = vadd.f32 %v3141, %v3142
    %v3146 = vsel %vm515, %v3143, %v3134
    %v3147 = vsel %vm116, %v3146, 0
    %3149 = vmatprep.subr.mxu0 0.0
    %3150 = vmatpush1.msra.mxu0 0.0
    %3151 = vmatprep.subr.mxu0 0.0
    %3152 = vmatpush1.msra.mxu0 0.0
    %3153 = vmatprep.subr.mxu0 0.0
    %3154 = vmatpush1.msra.mxu0 0.0
    %3155 = vmatprep.subr.mxu0 0.0
    %3156 = vmatpush1.msra.mxu0 0.0
    %3157 = vmatprep.subr.mxu0 0.0
    %3158 = vmatpush1.msra.mxu0 0.0
    %3159 = vmatprep.subr.mxu0 0.0
    %3160 = vmatpush1.msra.mxu0 0.0
    %3161 = vmatprep.subr.mxu0 0.0
    %3162 = vmatpush1.msra.mxu0 0.0
    %3163 = vmatprep.subr.mxu0 0.0
    %3164 = vmatpush1.msra.mxu0 0.0
    %3165 = vmatprep.subr.mxu0 0.0
    %3166 = vmatpush1.msra.mxu0 0.0
    %3167 = vmatprep.subr.mxu0 0.0
    %3168 = vmatpush1.msra.mxu0 0.0
    %3169 = vmatprep.subr.mxu0 0.0
    %3170 = vmatpush1.msra.mxu0 0.0
    %3171 = vmatprep.subr.mxu0 0.0
    %3172 = vmatpush1.msra.mxu0 0.0
    %3173 = vmatprep.subr.mxu0 0.0
    %3174 = vmatpush1.msra.mxu0 %v654
    %3175 = vmatprep.subr.mxu0 0.0
    %3176 = vmatpush1.msra.mxu0 %v653
    %3177 = vmatprep.subr.mxu0 0.0
    %3178 = vmatpush1.msra.mxu0 %v652
    %3179 = vmatprep.subr.mxu0 0.0
    %3180 = vmatpush1.msra.mxu0 %v651
    %3181 = vmatprep.subr.mxu0 0.0
    %3182 = vmatpush2.msra.mxu0 0.0
    %3183 = vmatprep.subr.mxu0 0.0
    %3184 = vmatpush2.msra.mxu0 0.0
    %3185 = vmatprep.subr.mxu0 0.0
    %3186 = vmatpush2.msra.mxu0 0.0
    %3187 = vmatprep.subr.mxu0 0.0
    %3188 = vmatpush2.msra.mxu0 0.0
    %3189 = vmatprep.subr.mxu0 0.0
    %3190 = vmatpush2.msra.mxu0 0.0
    %3191 = vmatprep.subr.mxu0 0.0
    %3192 = vmatpush2.msra.mxu0 0.0
    %3193 = vmatprep.subr.mxu0 0.0
    %3194 = vmatpush2.msra.mxu0 0.0
    %3195 = vmatprep.subr.mxu0 0.0
    %3196 = vmatpush2.msra.mxu0 0.0
    %3197 = vmatprep.subr.mxu0 0.0
    %3198 = vmatpush2.msra.mxu0 0.0
    %3199 = vmatprep.subr.mxu0 0.0
    %3200 = vmatpush2.msra.mxu0 0.0
    %3201 = vmatprep.subr.mxu0 0.0
    %3202 = vmatpush2.msra.mxu0 0.0
    %3203 = vmatprep.subr.mxu0 0.0
    %3204 = vmatpush2.msra.mxu0 0.0
    %3205 = vmatprep.subr.mxu0 0.0
    %3206 = vmatpush2.msra.mxu0 0.0
    %3207 = vmatprep.subr.mxu0 0.0
    %3208 = vmatpush2.msra.mxu0 0.0
    %3209 = vmatprep.subr.mxu0 0.0
    %3210 = vmatpush2.msra.mxu0 0.0
    %3211 = vmatprep.subr.mxu0 0.0
    %3212 = vmatpush2.msra.mxu0 0.0
    %3213 = vmatprep.mubr.f32.mxu0 0.0
    %3214 = vmatmul.mubr.f32.gmra.mxu0 %v3147
    %v3215 = vpop.f32.mrf.mxu0
    %v3216 = vadd.f32 0.0, %v3215
    %v3217 = vpop.f32.mrf.mxu0
    %3218 = vdwg.mxu0
    %v3220 = vsel %vm116, %v2852, 0
    %3222 = vmatprep.subr.mxu0 0.0
    %3223 = vmatpush1.msra.mxu0 0.0
    %3224 = vmatprep.subr.mxu0 0.0
    %3225 = vmatpush1.msra.mxu0 0.0
    %3226 = vmatprep.subr.mxu0 0.0
    %3227 = vmatpush1.msra.mxu0 0.0
    %3228 = vmatprep.subr.mxu0 0.0
    %3229 = vmatpush1.msra.mxu0 0.0
    %3230 = vmatprep.subr.mxu0 0.0
    %3231 = vmatpush1.msra.mxu0 0.0
    %3232 = vmatprep.subr.mxu0 0.0
    %3233 = vmatpush1.msra.mxu0 0.0
    %3234 = vmatprep.subr.mxu0 0.0
    %3235 = vmatpush1.msra.mxu0 0.0
    %3236 = vmatprep.subr.mxu0 0.0
    %3237 = vmatpush1.msra.mxu0 0.0
    %3238 = vmatprep.subr.mxu0 0.0
    %3239 = vmatpush1.msra.mxu0 0.0
    %3240 = vmatprep.subr.mxu0 0.0
    %3241 = vmatpush1.msra.mxu0 0.0
    %3242 = vmatprep.subr.mxu0 0.0
    %3243 = vmatpush1.msra.mxu0 0.0
    %3244 = vmatprep.subr.mxu0 0.0
    %3245 = vmatpush1.msra.mxu0 0.0
    %3246 = vmatprep.subr.mxu0 0.0
    %3247 = vmatpush1.msra.mxu0 %v650
    %3248 = vmatprep.subr.mxu0 0.0
    %3249 = vmatpush1.msra.mxu0 %v649
    %3250 = vmatprep.subr.mxu0 0.0
    %3251 = vmatpush1.msra.mxu0 %v648
    %3252 = vmatprep.subr.mxu0 0.0
    %3253 = vmatpush1.msra.mxu0 %v647
    %3254 = vmatprep.subr.mxu0 0.0
    %3255 = vmatpush2.msra.mxu0 0.0
    %3256 = vmatprep.subr.mxu0 0.0
    %3257 = vmatpush2.msra.mxu0 0.0
    %3258 = vmatprep.subr.mxu0 0.0
    %3259 = vmatpush2.msra.mxu0 0.0
    %3260 = vmatprep.subr.mxu0 0.0
    %3261 = vmatpush2.msra.mxu0 0.0
    %3262 = vmatprep.subr.mxu0 0.0
    %3263 = vmatpush2.msra.mxu0 0.0
    %3264 = vmatprep.subr.mxu0 0.0
    %3265 = vmatpush2.msra.mxu0 0.0
    %3266 = vmatprep.subr.mxu0 0.0
    %3267 = vmatpush2.msra.mxu0 0.0
    %3268 = vmatprep.subr.mxu0 0.0
    %3269 = vmatpush2.msra.mxu0 0.0
    %3270 = vmatprep.subr.mxu0 0.0
    %3271 = vmatpush2.msra.mxu0 0.0
    %3272 = vmatprep.subr.mxu0 0.0
    %3273 = vmatpush2.msra.mxu0 0.0
    %3274 = vmatprep.subr.mxu0 0.0
    %3275 = vmatpush2.msra.mxu0 0.0
    %3276 = vmatprep.subr.mxu0 0.0
    %3277 = vmatpush2.msra.mxu0 0.0
    %3278 = vmatprep.subr.mxu0 0.0
    %3279 = vmatpush2.msra.mxu0 0.0
    %3280 = vmatprep.subr.mxu0 0.0
    %3281 = vmatpush2.msra.mxu0 0.0
    %3282 = vmatprep.subr.mxu0 0.0
    %3283 = vmatpush2.msra.mxu0 0.0
    %3284 = vmatprep.subr.mxu0 0.0
    %3285 = vmatpush2.msra.mxu0 0.0
    %3286 = vmatprep.mubr.f32.mxu0 0.0
    %3287 = vmatmul.mubr.f32.gmra.mxu0 %v3220
    %v3288 = vpop.f32.mrf.mxu0
    %v3289 = vadd.f32 %v3216, %v3288
    %v3290 = vpop.f32.mrf.mxu0
    %3291 = vdwg.mxu0
    %3292 = vmatprep.subr.mxu0 0.0
    %3293 = vmatpush1.msra.mxu0 0.0
    %3294 = vmatprep.subr.mxu0 0.0
    %3295 = vmatpush1.msra.mxu0 0.0
    %3296 = vmatprep.subr.mxu0 0.0
    %3297 = vmatpush1.msra.mxu0 0.0
    %3298 = vmatprep.subr.mxu0 0.0
    %3299 = vmatpush1.msra.mxu0 0.0
    %3300 = vmatprep.subr.mxu0 0.0
    %3301 = vmatpush1.msra.mxu0 0.0
    %3302 = vmatprep.subr.mxu0 0.0
    %3303 = vmatpush1.msra.mxu0 0.0
    %3304 = vmatprep.subr.mxu0 0.0
    %3305 = vmatpush1.msra.mxu0 0.0
    %3306 = vmatprep.subr.mxu0 0.0
    %3307 = vmatpush1.msra.mxu0 0.0
    %3308 = vmatprep.subr.mxu0 0.0
    %3309 = vmatpush1.msra.mxu0 0.0
    %3310 = vmatprep.subr.mxu0 0.0
    %3311 = vmatpush1.msra.mxu0 0.0
    %3312 = vmatprep.subr.mxu0 0.0
    %3313 = vmatpush1.msra.mxu0 0.0
    %3314 = vmatprep.subr.mxu0 0.0
    %3315 = vmatpush1.msra.mxu0 0.0
    %3316 = vmatprep.subr.mxu0 0.0
    %3317 = vmatpush1.msra.mxu0 %v806
    %3318 = vmatprep.subr.mxu0 0.0
    %3319 = vmatpush1.msra.mxu0 %v805
    %3320 = vmatprep.subr.mxu0 0.0
    %3321 = vmatpush1.msra.mxu0 %v804
    %3322 = vmatprep.subr.mxu0 0.0
    %3323 = vmatpush1.msra.mxu0 %v803
    %3324 = vmatprep.subr.mxu0 0.0
    %3325 = vmatpush2.msra.mxu0 0.0
    %3326 = vmatprep.subr.mxu0 0.0
    %3327 = vmatpush2.msra.mxu0 0.0
    %3328 = vmatprep.subr.mxu0 0.0
    %3329 = vmatpush2.msra.mxu0 0.0
    %3330 = vmatprep.subr.mxu0 0.0
    %3331 = vmatpush2.msra.mxu0 0.0
    %3332 = vmatprep.subr.mxu0 0.0
    %3333 = vmatpush2.msra.mxu0 0.0
    %3334 = vmatprep.subr.mxu0 0.0
    %3335 = vmatpush2.msra.mxu0 0.0
    %3336 = vmatprep.subr.mxu0 0.0
    %3337 = vmatpush2.msra.mxu0 0.0
    %3338 = vmatprep.subr.mxu0 0.0
    %3339 = vmatpush2.msra.mxu0 0.0
    %3340 = vmatprep.subr.mxu0 0.0
    %3341 = vmatpush2.msra.mxu0 0.0
    %3342 = vmatprep.subr.mxu0 0.0
    %3343 = vmatpush2.msra.mxu0 0.0
    %3344 = vmatprep.subr.mxu0 0.0
    %3345 = vmatpush2.msra.mxu0 0.0
    %3346 = vmatprep.subr.mxu0 0.0
    %3347 = vmatpush2.msra.mxu0 0.0
    %3348 = vmatprep.subr.mxu0 0.0
    %3349 = vmatpush2.msra.mxu0 0.0
    %3350 = vmatprep.subr.mxu0 0.0
    %3351 = vmatpush2.msra.mxu0 0.0
    %3352 = vmatprep.subr.mxu0 0.0
    %3353 = vmatpush2.msra.mxu0 0.0
    %3354 = vmatprep.subr.mxu0 0.0
    %3355 = vmatpush2.msra.mxu0 0.0
    %3356 = vmatprep.mubr.f32.mxu0 0.0
    %3357 = vmatmul.mubr.f32.gmra.mxu0 %v2713
    %v3358 = vpop.f32.mrf.mxu0
    %v3359 = vadd.f32 0.0, %v3358
    %v3360 = vpop.f32.mrf.mxu0
    %3361 = vdwg.mxu0
    %v3362 = vadd.f32 %v3289, %v3359
    %v3363 = vadd.f32 %v3362, %v883
    %v3364 = vxor.u32 %v3363, 2147483648
    %v3365 = vmul.f32 %v3364, 1.442695
    %v3366 = vpow.pop %v3365
    %v3367 = vadd.f32 %v3366, 1.0
    %v3368 = vrcp.pop %v3367
    %v3369 = vmul.f32 1.0, %v3368
    %v3370 = vtanh.pop %v3363
    %v3371 = vmul.f32 %v3369, %v2563
    %3373 = vrot.lane.b32.xlu0 %v3370, 64
    %v3374 = vpop.permute.xlu0 %3373
    %v3376 = vmul.f32 %v3369, %v3374
    %3378 = vrot.lane.b32.xlu0 %v3376, 32
    %v3379 = vpop.permute.xlu0 %3378
    %v3381 = vadd.f32 %v3371, %v3379
    %v3382 = vtanh.pop %v3381
    %3384 = vrot.lane.b32.xlu0 %v3382, 64
    %v3385 = vpop.permute.xlu0 %3384
    %v3387 = vmul.f32 %v3369, %v3385
    %3388 = vmatprep.subr.mxu0 0.0
    %3389 = vmatpush1.msra.mxu0 0.0
    %3390 = vmatprep.subr.mxu0 0.0
    %3391 = vmatpush1.msra.mxu0 0.0
    %3392 = vmatprep.subr.mxu0 0.0
    %3393 = vmatpush1.msra.mxu0 0.0
    %3394 = vmatprep.subr.mxu0 0.0
    %3395 = vmatpush1.msra.mxu0 0.0
    %3396 = vmatprep.subr.mxu0 0.0
    %3397 = vmatpush1.msra.mxu0 0.0
    %3398 = vmatprep.subr.mxu0 0.0
    %3399 = vmatpush1.msra.mxu0 0.0
    %3400 = vmatprep.subr.mxu0 0.0
    %3401 = vmatpush1.msra.mxu0 0.0
    %3402 = vmatprep.subr.mxu0 0.0
    %3403 = vmatpush1.msra.mxu0 0.0
    %3404 = vmatprep.subr.mxu0 0.0
    %3405 = vmatpush1.msra.mxu0 0.0
    %3406 = vmatprep.subr.mxu0 0.0
    %3407 = vmatpush1.msra.mxu0 0.0
    %3408 = vmatprep.subr.mxu0 0.0
    %3409 = vmatpush1.msra.mxu0 0.0
    %3410 = vmatprep.subr.mxu0 0.0
    %3411 = vmatpush1.msra.mxu0 0.0
    %3412 = vmatprep.subr.mxu0 0.0
    %3413 = vmatpush1.msra.mxu0 %v921
    %3414 = vmatprep.subr.mxu0 0.0
    %3415 = vmatpush1.msra.mxu0 %v920
    %3416 = vmatprep.subr.mxu0 0.0
    %3417 = vmatpush1.msra.mxu0 %v919
    %3418 = vmatprep.subr.mxu0 0.0
    %3419 = vmatpush1.msra.mxu0 %v918
    %3420 = vmatprep.subr.mxu0 0.0
    %3421 = vmatpush2.msra.mxu0 0.0
    %3422 = vmatprep.subr.mxu0 0.0
    %3423 = vmatpush2.msra.mxu0 0.0
    %3424 = vmatprep.subr.mxu0 0.0
    %3425 = vmatpush2.msra.mxu0 0.0
    %3426 = vmatprep.subr.mxu0 0.0
    %3427 = vmatpush2.msra.mxu0 0.0
    %3428 = vmatprep.subr.mxu0 0.0
    %3429 = vmatpush2.msra.mxu0 0.0
    %3430 = vmatprep.subr.mxu0 0.0
    %3431 = vmatpush2.msra.mxu0 0.0
    %3432 = vmatprep.subr.mxu0 0.0
    %3433 = vmatpush2.msra.mxu0 0.0
    %3434 = vmatprep.subr.mxu0 0.0
    %3435 = vmatpush2.msra.mxu0 0.0
    %3436 = vmatprep.subr.mxu0 0.0
    %3437 = vmatpush2.msra.mxu0 0.0
    %3438 = vmatprep.subr.mxu0 0.0
    %3439 = vmatpush2.msra.mxu0 0.0
    %3440 = vmatprep.subr.mxu0 0.0
    %3441 = vmatpush2.msra.mxu0 0.0
    %3442 = vmatprep.subr.mxu0 0.0
    %3443 = vmatpush2.msra.mxu0 0.0
    %3444 = vmatprep.subr.mxu0 0.0
    %3445 = vmatpush2.msra.mxu0 0.0
    %3446 = vmatprep.subr.mxu0 0.0
    %3447 = vmatpush2.msra.mxu0 0.0
    %3448 = vmatprep.subr.mxu0 0.0
    %3449 = vmatpush2.msra.mxu0 0.0
    %3450 = vmatprep.subr.mxu0 0.0
    %3451 = vmatpush2.msra.mxu0 0.0
    %3452 = vmatprep.mubr.f32.mxu0 0.0
    %3453 = vmatmul.mubr.f32.gmra.mxu0 %v3147
    %v3454 = vpop.f32.mrf.mxu0
    %v3455 = vadd.f32 0.0, %v3454
    %v3456 = vpop.f32.mrf.mxu0
    %3457 = vdwg.mxu0
    %3458 = vmatprep.subr.mxu0 0.0
    %3459 = vmatpush1.msra.mxu0 0.0
    %3460 = vmatprep.subr.mxu0 0.0
    %3461 = vmatpush1.msra.mxu0 0.0
    %3462 = vmatprep.subr.mxu0 0.0
    %3463 = vmatpush1.msra.mxu0 0.0
    %3464 = vmatprep.subr.mxu0 0.0
    %3465 = vmatpush1.msra.mxu0 0.0
    %3466 = vmatprep.subr.mxu0 0.0
    %3467 = vmatpush1.msra.mxu0 0.0
    %3468 = vmatprep.subr.mxu0 0.0
    %3469 = vmatpush1.msra.mxu0 0.0
    %3470 = vmatprep.subr.mxu0 0.0
    %3471 = vmatpush1.msra.mxu0 0.0
    %3472 = vmatprep.subr.mxu0 0.0
    %3473 = vmatpush1.msra.mxu0 0.0
    %3474 = vmatprep.subr.mxu0 0.0
    %3475 = vmatpush1.msra.mxu0 0.0
    %3476 = vmatprep.subr.mxu0 0.0
    %3477 = vmatpush1.msra.mxu0 0.0
    %3478 = vmatprep.subr.mxu0 0.0
    %3479 = vmatpush1.msra.mxu0 0.0
    %3480 = vmatprep.subr.mxu0 0.0
    %3481 = vmatpush1.msra.mxu0 0.0
    %3482 = vmatprep.subr.mxu0 0.0
    %3483 = vmatpush1.msra.mxu0 %v917
    %3484 = vmatprep.subr.mxu0 0.0
    %3485 = vmatpush1.msra.mxu0 %v916
    %3486 = vmatprep.subr.mxu0 0.0
    %3487 = vmatpush1.msra.mxu0 %v915
    %3488 = vmatprep.subr.mxu0 0.0
    %3489 = vmatpush1.msra.mxu0 %v914
    %3490 = vmatprep.subr.mxu0 0.0
    %3491 = vmatpush2.msra.mxu0 0.0
    %3492 = vmatprep.subr.mxu0 0.0
    %3493 = vmatpush2.msra.mxu0 0.0
    %3494 = vmatprep.subr.mxu0 0.0
    %3495 = vmatpush2.msra.mxu0 0.0
    %3496 = vmatprep.subr.mxu0 0.0
    %3497 = vmatpush2.msra.mxu0 0.0
    %3498 = vmatprep.subr.mxu0 0.0
    %3499 = vmatpush2.msra.mxu0 0.0
    %3500 = vmatprep.subr.mxu0 0.0
    %3501 = vmatpush2.msra.mxu0 0.0
    %3502 = vmatprep.subr.mxu0 0.0
    %3503 = vmatpush2.msra.mxu0 0.0
    %3504 = vmatprep.subr.mxu0 0.0
    %3505 = vmatpush2.msra.mxu0 0.0
    %3506 = vmatprep.subr.mxu0 0.0
    %3507 = vmatpush2.msra.mxu0 0.0
    %3508 = vmatprep.subr.mxu0 0.0
    %3509 = vmatpush2.msra.mxu0 0.0
    %3510 = vmatprep.subr.mxu0 0.0
    %3511 = vmatpush2.msra.mxu0 0.0
    %3512 = vmatprep.subr.mxu0 0.0
    %3513 = vmatpush2.msra.mxu0 0.0
    %3514 = vmatprep.subr.mxu0 0.0
    %3515 = vmatpush2.msra.mxu0 0.0
    %3516 = vmatprep.subr.mxu0 0.0
    %3517 = vmatpush2.msra.mxu0 0.0
    %3518 = vmatprep.subr.mxu0 0.0
    %3519 = vmatpush2.msra.mxu0 0.0
    %3520 = vmatprep.subr.mxu0 0.0
    %3521 = vmatpush2.msra.mxu0 0.0
    %3522 = vmatprep.mubr.f32.mxu0 0.0
    %3523 = vmatmul.mubr.f32.gmra.mxu0 %v3220
    %v3524 = vpop.f32.mrf.mxu0
    %v3525 = vadd.f32 %v3455, %v3524
    %v3526 = vpop.f32.mrf.mxu0
    %3527 = vdwg.mxu0
    %3529 = vrot.lane.b32.xlu0 %v3387, 32
    %v3530 = vpop.permute.xlu0 %3529
    %v3531 = vsel %vm116, %v3530, 0
    %3533 = vmatprep.subr.mxu0 0.0
    %3534 = vmatpush1.msra.mxu0 0.0
    %3535 = vmatprep.subr.mxu0 0.0
    %3536 = vmatpush1.msra.mxu0 0.0
    %3537 = vmatprep.subr.mxu0 0.0
    %3538 = vmatpush1.msra.mxu0 0.0
    %3539 = vmatprep.subr.mxu0 0.0
    %3540 = vmatpush1.msra.mxu0 0.0
    %3541 = vmatprep.subr.mxu0 0.0
    %3542 = vmatpush1.msra.mxu0 0.0
    %3543 = vmatprep.subr.mxu0 0.0
    %3544 = vmatpush1.msra.mxu0 0.0
    %3545 = vmatprep.subr.mxu0 0.0
    %3546 = vmatpush1.msra.mxu0 0.0
    %3547 = vmatprep.subr.mxu0 0.0
    %3548 = vmatpush1.msra.mxu0 0.0
    %3549 = vmatprep.subr.mxu0 0.0
    %3550 = vmatpush1.msra.mxu0 0.0
    %3551 = vmatprep.subr.mxu0 0.0
    %3552 = vmatpush1.msra.mxu0 0.0
    %3553 = vmatprep.subr.mxu0 0.0
    %3554 = vmatpush1.msra.mxu0 0.0
    %3555 = vmatprep.subr.mxu0 0.0
    %3556 = vmatpush1.msra.mxu0 0.0
    %3557 = vmatprep.subr.mxu0 0.0
    %3558 = vmatpush1.msra.mxu0 %v1065
    %3559 = vmatprep.subr.mxu0 0.0
    %3560 = vmatpush1.msra.mxu0 %v1064
    %3561 = vmatprep.subr.mxu0 0.0
    %3562 = vmatpush1.msra.mxu0 %v1063
    %3563 = vmatprep.subr.mxu0 0.0
    %3564 = vmatpush1.msra.mxu0 %v1062
    %3565 = vmatprep.subr.mxu0 0.0
    %3566 = vmatpush2.msra.mxu0 0.0
    %3567 = vmatprep.subr.mxu0 0.0
    %3568 = vmatpush2.msra.mxu0 0.0
    %3569 = vmatprep.subr.mxu0 0.0
    %3570 = vmatpush2.msra.mxu0 0.0
    %3571 = vmatprep.subr.mxu0 0.0
    %3572 = vmatpush2.msra.mxu0 0.0
    %3573 = vmatprep.subr.mxu0 0.0
    %3574 = vmatpush2.msra.mxu0 0.0
    %3575 = vmatprep.subr.mxu0 0.0
    %3576 = vmatpush2.msra.mxu0 0.0
    %3577 = vmatprep.subr.mxu0 0.0
    %3578 = vmatpush2.msra.mxu0 0.0
    %3579 = vmatprep.subr.mxu0 0.0
    %3580 = vmatpush2.msra.mxu0 0.0
    %3581 = vmatprep.subr.mxu0 0.0
    %3582 = vmatpush2.msra.mxu0 0.0
    %3583 = vmatprep.subr.mxu0 0.0
    %3584 = vmatpush2.msra.mxu0 0.0
    %3585 = vmatprep.subr.mxu0 0.0
    %3586 = vmatpush2.msra.mxu0 0.0
    %3587 = vmatprep.subr.mxu0 0.0
    %3588 = vmatpush2.msra.mxu0 0.0
    %3589 = vmatprep.subr.mxu0 0.0
    %3590 = vmatpush2.msra.mxu0 0.0
    %3591 = vmatprep.subr.mxu0 0.0
    %3592 = vmatpush2.msra.mxu0 0.0
    %3593 = vmatprep.subr.mxu0 0.0
    %3594 = vmatpush2.msra.mxu0 0.0
    %3595 = vmatprep.subr.mxu0 0.0
    %3596 = vmatpush2.msra.mxu0 0.0
    %3597 = vmatprep.mubr.f32.mxu0 0.0
    %3598 = vmatmul.mubr.f32.gmra.mxu0 %v3531
    %v3599 = vpop.f32.mrf.mxu0
    %v3600 = vadd.f32 0.0, %v3599
    %v3601 = vpop.f32.mrf.mxu0
    %3602 = vdwg.mxu0
    %v3603 = vadd.f32 %v3525, %v3600
    %v3604 = vadd.f32 %v3603, %v1147
    %v3605 = vsel %vm1150, %v3604, -inf
    %3606 = vmax.xlane.f32.xlu0 %v3605
    %v3607 = vpop.xlane.xlu0 %3606
    %vm3608 = vcmp.eq.f32.partialorder %v3604, %v3607
    %v3609 = vsel %vm3608, %v301, 32
    %v3610 = vsel %vm1150, %v3609, 2147483647
    %v3611 = vand.u32 %v3610, 65535
    %v3612 = vshra.s32 %v3610, 16
    %v3613 = vcvt.s32.f32 %v3611
    %v3614 = vcvt.s32.f32 %v3612
    %3615 = vmin.xlane.f32.xlu0 %v3614
    %v3616 = vpop.xlane.xlu0 %3615
    %vm3617 = vcmp.eq.f32.partialorder %v3614, %v3616
    %v3618 = vsel %vm3617, %v3613, inf
    %3619 = vmin.xlane.f32.xlu0 %v3618
    %v3620 = vpop.xlane.xlu0 %3619
    %v3621 = vcvt.f32.s32 %v3620
    %v3622 = vcvt.f32.s32 %v3616
    %v3623 = vshll.u32 %v3622, 16
    %v3624 = vadd.s32 %v3623, %v3621
    %vm3625 = vcmp.eq.s32.totalorder %v301, %v3624
    %v3626 = vsel %vm3625, 1, 0
    %v3627 = vcvt.s32.f32 %v3626
    %s3628 = scalar_lea.vmem %s1, 8
    %v3629 = vld [vmem:[%s3628] sm:$0x3]
    %v3630 = vsub.f32 %v3604, %v3607
    %v3631 = vmul.f32 %v3630, 1.442695
    %v3632 = vpow.pop %v3631
    %v3633 = vsel %vm1150, %v3632, 0.0
    %3634 = vadd.xlane.f32.xlu0 %v3633
    %v3635 = vpop.xlane.xlu0 %3634
    %v3636 = vlog2.pop %v3635
    %v3637 = vmul.f32 %v3636, 0.6931472
    %v3638 = vadd.f32 %v3607, %v3637
    %v3639 = vmul.f32 %v3604, %v3629
    %v3640 = vsel %vm1150, %v3639, 0.0
    %3641 = vadd.xlane.f32.xlu0 %v3640
    %v3642 = vpop.xlane.xlu0 %3641
    %v3643 = vsub.f32 1.0, %v3629
    %v3644 = vsub.f32 %v3638, %v3642
    %v3645 = vmul.f32 %v3644, %v3643
    %v3646 = vsel %vm289, %v3645, 0.0
    %v3647 = vrot.slane %v3646, 4
    %v3648 = vadd.f32 %v3646, %v3647
    %v3649 = vrot.slane %v3648, 2
    %v3650 = vadd.f32 %v3648, %v3649
    %v3651 = vrot.slane %v3650, 1
    %v3652 = vadd.f32 %v3650, %v3651
    %v3653 = vadd.f32 %v2835, %v3652
    %v3654 = vsel %vm289, %v3643, 0.0
    %v3655 = vrot.slane %v3654, 4
    %v3656 = vadd.f32 %v3654, %v3655
    %v3657 = vrot.slane %v3656, 2
    %v3658 = vadd.f32 %v3656, %v3657
    %v3659 = vrot.slane %v3658, 1
    %v3660 = vadd.f32 %v3658, %v3659
    %v3661 = vadd.f32 %v2843, %v3660
    %s3662 = sld [smem:[#allocation4 + $0x4]]
    %p3663 = scmp.ne.s32.totalorder %s3662, 0
    %s3664 = scalar_select %p3663, 1.0, 0.0
    %v3665 = vstv %s3664
    %v3666 = vmul.f32 %v3665, %v3629
    %s3667 = ssub.f32 1.0, %s3664
    %v3668 = vstv %s3667
    %v3669 = vmul.f32 %v3668, %v3627
    %v3670 = vadd.f32 %v3666, %v3669
    %3671 = vmatprep.subr.mxu0 0.0
    %3672 = vmatpush1.msra.mxu0 0.0
    %3673 = vmatprep.subr.mxu0 0.0
    %3674 = vmatpush1.msra.mxu0 0.0
    %3675 = vmatprep.subr.mxu0 0.0
    %3676 = vmatpush1.msra.mxu0 0.0
    %3677 = vmatprep.subr.mxu0 0.0
    %3678 = vmatpush1.msra.mxu0 0.0
    %3679 = vmatprep.subr.mxu0 0.0
    %3680 = vmatpush1.msra.mxu0 0.0
    %3681 = vmatprep.subr.mxu0 0.0
    %3682 = vmatpush1.msra.mxu0 0.0
    %3683 = vmatprep.subr.mxu0 0.0
    %3684 = vmatpush1.msra.mxu0 0.0
    %3685 = vmatprep.subr.mxu0 0.0
    %3686 = vmatpush1.msra.mxu0 0.0
    %3687 = vmatprep.subr.mxu0 0.0
    %3688 = vmatpush1.msra.mxu0 0.0
    %3689 = vmatprep.subr.mxu0 0.0
    %3690 = vmatpush1.msra.mxu0 0.0
    %3691 = vmatprep.subr.mxu0 0.0
    %3692 = vmatpush1.msra.mxu0 0.0
    %3693 = vmatprep.subr.mxu0 0.0
    %3694 = vmatpush1.msra.mxu0 0.0
    %3695 = vmatprep.subr.mxu0 0.0
    %3696 = vmatpush1.msra.mxu0 %v305
    %3697 = vmatprep.subr.mxu0 0.0
    %3698 = vmatpush1.msra.mxu0 %v304
    %3699 = vmatprep.subr.mxu0 0.0
    %3700 = vmatpush1.msra.mxu0 %v303
    %3701 = vmatprep.subr.mxu0 0.0
    %3702 = vmatpush1.msra.mxu0 %v302
    %3703 = vmatprep.subr.mxu0 0.0
    %3704 = vmatpush2.msra.mxu0 0.0
    %3705 = vmatprep.subr.mxu0 0.0
    %3706 = vmatpush2.msra.mxu0 0.0
    %3707 = vmatprep.subr.mxu0 0.0
    %3708 = vmatpush2.msra.mxu0 0.0
    %3709 = vmatprep.subr.mxu0 0.0
    %3710 = vmatpush2.msra.mxu0 0.0
    %3711 = vmatprep.subr.mxu0 0.0
    %3712 = vmatpush2.msra.mxu0 0.0
    %3713 = vmatprep.subr.mxu0 0.0
    %3714 = vmatpush2.msra.mxu0 0.0
    %3715 = vmatprep.subr.mxu0 0.0
    %3716 = vmatpush2.msra.mxu0 0.0
    %3717 = vmatprep.subr.mxu0 0.0
    %3718 = vmatpush2.msra.mxu0 0.0
    %3719 = vmatprep.subr.mxu0 0.0
    %3720 = vmatpush2.msra.mxu0 0.0
    %3721 = vmatprep.subr.mxu0 0.0
    %3722 = vmatpush2.msra.mxu0 0.0
    %3723 = vmatprep.subr.mxu0 0.0
    %3724 = vmatpush2.msra.mxu0 0.0
    %3725 = vmatprep.subr.mxu0 0.0
    %3726 = vmatpush2.msra.mxu0 0.0
    %3727 = vmatprep.subr.mxu0 0.0
    %3728 = vmatpush2.msra.mxu0 0.0
    %3729 = vmatprep.subr.mxu0 0.0
    %3730 = vmatpush2.msra.mxu0 0.0
    %3731 = vmatprep.subr.mxu0 0.0
    %3732 = vmatpush2.msra.mxu0 0.0
    %3733 = vmatprep.subr.mxu0 0.0
    %3734 = vmatpush2.msra.mxu0 0.0
    %3735 = vmatprep.mubr.f32.mxu0 0.0
    %3736 = vmatmul.mubr.f32.gmra.mxu0 %v3531
    %v3737 = vpop.f32.mrf.mxu0
    %v3738 = vadd.f32 0.0, %v3737
    %v3739 = vpop.f32.mrf.mxu0
    %3740 = vdwg.mxu0
    %v3743 = vunpack.c.l.s4 1966171168
    %v3744 = vunpack.c.0.s8 %v3743
    %v3745 = vlaneseq
    %v3746 = vshrl.u32 %v3745, 7
    %v3747 = vsub.s32 %v3744, %v3746
    %v3748 = vrot.slane %v3738, %v3747
    %v3749 = vcombine.high %v3748, %v3748
    %v3751 = vunpack.c.l.s4 1966171168
    %v3752 = vunpack.c.0.s8 %v3751
    %v3753 = vlaneseq
    %v3754 = vshrl.u32 %v3753, 7
    %v3755 = vsub.s32 %v3752, %v3754
    %v3756 = vrot.slane %v3748, %v3755
    %v3758 = vunpack.c.l.s4 1966171168
    %v3759 = vunpack.c.0.s8 %v3758
    %v3760 = vlaneseq
    %v3761 = vshrl.u32 %v3760, 7
    %v3762 = vsub.s32 %v3759, %v3761
    %v3763 = vrot.slane %v3749, %v3762
    %v3764 = vlaneseq
    %v3765 = vshrl.u32 %v3764, 7
    %v3766 = vsub.s32 0, %v3765
    %v3767 = vrot.slane %v3756, %v3766
    %v3768 = vlaneseq
    %v3769 = vshrl.u32 %v3768, 7
    %v3770 = vsub.s32 0, %v3769
    %v3771 = vrot.slane %v3763, %v3770
    %v3774 = vadd.f32 %v379, %v3767
    %v3775 = vadd.f32 %v380, %v3767
    %v3776 = vadd.f32 %v381, %v3771
    %v3777 = vadd.f32 %v382, %v3771
    %v3778 = vtanh.pop %v3774
    %v3779 = vtanh.pop %v3775
    %v3780 = vtanh.pop %v3776
    %v3781 = vtanh.pop %v3777
    %v3782 = vmul.f32 %v3778, %v429
    %v3783 = vmul.f32 %v3779, %v429
    %v3784 = vmul.f32 %v3780, %v429
    %v3785 = vmul.f32 %v3781, %v429
    %v3786 = vsel %vm116, %v3782, 0.0
    %3787 = vadd.xlane.f32.xlu0 %v3786
    %v3788 = vpop.xlane.xlu0 %3787
    %v3789 = vsel %vm116, %v3783, 0.0
    %3790 = vadd.xlane.f32.xlu0 %v3789
    %v3791 = vpop.xlane.xlu0 %3790
    %v3792 = vsel %vm116, %v3784, 0.0
    %3793 = vadd.xlane.f32.xlu0 %v3792
    %v3794 = vpop.xlane.xlu0 %3793
    %v3795 = vsel %vm116, %v3785, 0.0
    %3796 = vadd.xlane.f32.xlu0 %v3795
    %v3797 = vpop.xlane.xlu0 %3796
    %v3798 = vadd.f32 %v3788, %v455
    %v3799 = vadd.f32 %v3791, %v459
    %v3800 = vadd.f32 %v3794, %v466
    %v3801 = vadd.f32 %v3797, %v470
    %3806 = vset.pattern.permute.xlu0 0
    %3807 = vperm.xlu0 %3806, %v3798
    %v3808 = vpop.permute.xlu0 %3807
    %3809 = vset.pattern.permute.xlu0 0
    %3810 = vperm.xlu0 %3809, %v3799
    %v3811 = vpop.permute.xlu0 %3810
    %3812 = vset.pattern.permute.xlu0 0
    %3813 = vperm.xlu0 %3812, %v3800
    %v3814 = vpop.permute.xlu0 %3813
    %3815 = vset.pattern.permute.xlu0 0
    %3816 = vperm.xlu0 %3815, %v3801
    %v3817 = vpop.permute.xlu0 %3816
    %v3818 = vlaneseq
    %v3819 = vshrl.u32 %v3818, 7
    %v3820 = vsub.s32 %v301, %v3819
    %v3821 = vrot.slane %v3808, %v3820
    %v3822 = vlaneseq
    %v3823 = vshrl.u32 %v3822, 7
    %v3824 = vsub.s32 %v499, %v3823
    %v3825 = vrot.slane %v3811, %v3824
    %v3826 = vsel %vm504, %v3825, %v3821
    %v3827 = vlaneseq
    %v3828 = vshrl.u32 %v3827, 7
    %v3829 = vsub.s32 %v301, %v3828
    %v3830 = vrot.slane %v3814, %v3829
    %v3831 = vlaneseq
    %v3832 = vshrl.u32 %v3831, 7
    %v3833 = vsub.s32 %v499, %v3832
    %v3834 = vrot.slane %v3817, %v3833
    %v3835 = vsel %vm504, %v3834, %v3830
    %v3836 = vsel %vm515, %v3835, %v3826
    %v3838 = vsel %vm518, %v3836, -inf
    %3839 = vmax.xlane.f32.xlu0 %v3838
    %v3840 = vpop.xlane.xlu0 %3839
    %v3842 = vlaneseq
    %v3843 = vshrl.u32 %v3842, 7
    %v3844 = vsub.s32 0, %v3843
    %v3845 = vrot.slane %v3840, %v3844
    %v3846 = vlaneseq
    %v3847 = vshrl.u32 %v3846, 7
    %v3848 = vsub.s32 1, %v3847
    %v3849 = vrot.slane %v3840, %v3848
    %v3852 = vsub.f32 %v3798, %v3845
    %v3853 = vsub.f32 %v3799, %v3845
    %v3854 = vsub.f32 %v3800, %v3849
    %v3855 = vsub.f32 %v3801, %v3849
    %v3856 = vmul.f32 %v3852, 1.442695
    %v3857 = vpow.pop %v3856
    %v3858 = vmul.f32 %v3853, 1.442695
    %v3859 = vpow.pop %v3858
    %v3860 = vmul.f32 %v3854, 1.442695
    %v3861 = vpow.pop %v3860
    %v3862 = vmul.f32 %v3855, 1.442695
    %v3863 = vpow.pop %v3862
    %3868 = vset.pattern.permute.xlu0 0
    %3869 = vperm.xlu0 %3868, %v3857
    %v3870 = vpop.permute.xlu0 %3869
    %3871 = vset.pattern.permute.xlu0 0
    %3872 = vperm.xlu0 %3871, %v3859
    %v3873 = vpop.permute.xlu0 %3872
    %3874 = vset.pattern.permute.xlu0 0
    %3875 = vperm.xlu0 %3874, %v3861
    %v3876 = vpop.permute.xlu0 %3875
    %3877 = vset.pattern.permute.xlu0 0
    %3878 = vperm.xlu0 %3877, %v3863
    %v3879 = vpop.permute.xlu0 %3878
    %v3880 = vlaneseq
    %v3881 = vshrl.u32 %v3880, 7
    %v3882 = vsub.s32 %v301, %v3881
    %v3883 = vrot.slane %v3870, %v3882
    %v3884 = vlaneseq
    %v3885 = vshrl.u32 %v3884, 7
    %v3886 = vsub.s32 %v499, %v3885
    %v3887 = vrot.slane %v3873, %v3886
    %v3888 = vsel %vm504, %v3887, %v3883
    %v3889 = vlaneseq
    %v3890 = vshrl.u32 %v3889, 7
    %v3891 = vsub.s32 %v301, %v3890
    %v3892 = vrot.slane %v3876, %v3891
    %v3893 = vlaneseq
    %v3894 = vshrl.u32 %v3893, 7
    %v3895 = vsub.s32 %v499, %v3894
    %v3896 = vrot.slane %v3879, %v3895
    %v3897 = vsel %vm504, %v3896, %v3892
    %v3898 = vsel %vm515, %v3897, %v3888
    %v3900 = vsel %vm518, %v3898, 0.0
    %3901 = vadd.xlane.f32.xlu0 %v3900
    %v3902 = vpop.xlane.xlu0 %3901
    %v3904 = vlaneseq
    %v3905 = vshrl.u32 %v3904, 7
    %v3906 = vsub.s32 0, %v3905
    %v3907 = vrot.slane %v3902, %v3906
    %v3908 = vlaneseq
    %v3909 = vshrl.u32 %v3908, 7
    %v3910 = vsub.s32 1, %v3909
    %v3911 = vrot.slane %v3902, %v3910
    %v3914 = vrcp.pop %v3907
    %v3915 = vmul.f32 %v3857, %v3914
    %v3916 = vmul.f32 %v3859, %v3914
    %v3917 = vrcp.pop %v3911
    %v3918 = vmul.f32 %v3861, %v3917
    %v3919 = vmul.f32 %v3863, %v3917
    %3921 = vset.pattern.permute.xlu0 0
    %3922 = vperm.xlu0 %3921, %v3915
    %v3923 = vpop.permute.xlu0 %3922
    %3926 = vset.pattern.permute.xlu0 0
    %3927 = vperm.xlu0 %3926, %v3916
    %v3928 = vpop.permute.xlu0 %3927
    %3931 = vset.pattern.permute.xlu0 0
    %3932 = vperm.xlu0 %3931, %v3918
    %v3933 = vpop.permute.xlu0 %3932
    %3936 = vset.pattern.permute.xlu0 0
    %3937 = vperm.xlu0 %3936, %v3919
    %v3938 = vpop.permute.xlu0 %3937
    %v3940 = vmul.f32 %v3923, %v601
    %v3941 = vmul.f32 %v3928, %v602
    %v3942 = vmul.f32 %v3933, %v603
    %v3943 = vmul.f32 %v3938, %v604
    %v3944 = vsel %vm116, %v3940, 0.0
    %v3945 = vsel %vm116, %v3941, 0.0
    %v3946 = vadd.f32 %v3944, %v3945
    %v3947 = vrot.slane %v3946, 4
    %v3948 = vadd.f32 %v3946, %v3947
    %v3949 = vrot.slane %v3948, 2
    %v3950 = vadd.f32 %v3948, %v3949
    %v3951 = vrot.slane %v3950, 1
    %v3952 = vadd.f32 %v3950, %v3951
    %v3953 = vsel %vm116, %v3942, 0.0
    %v3954 = vsel %vm116, %v3943, 0.0
    %v3955 = vadd.f32 %v3953, %v3954
    %v3956 = vrot.slane %v3955, 4
    %v3957 = vadd.f32 %v3955, %v3956
    %v3958 = vrot.slane %v3957, 2
    %v3959 = vadd.f32 %v3957, %v3958
    %v3960 = vrot.slane %v3959, 1
    %v3961 = vadd.f32 %v3959, %v3960
    %v3964 = vsel %vm515, %v3961, %v3952
    %v3965 = vsel %vm116, %v3964, 0
    %3967 = vmatprep.subr.mxu0 0.0
    %3968 = vmatpush1.msra.mxu0 0.0
    %3969 = vmatprep.subr.mxu0 0.0
    %3970 = vmatpush1.msra.mxu0 0.0
    %3971 = vmatprep.subr.mxu0 0.0
    %3972 = vmatpush1.msra.mxu0 0.0
    %3973 = vmatprep.subr.mxu0 0.0
    %3974 = vmatpush1.msra.mxu0 0.0
    %3975 = vmatprep.subr.mxu0 0.0
    %3976 = vmatpush1.msra.mxu0 0.0
    %3977 = vmatprep.subr.mxu0 0.0
    %3978 = vmatpush1.msra.mxu0 0.0
    %3979 = vmatprep.subr.mxu0 0.0
    %3980 = vmatpush1.msra.mxu0 0.0
    %3981 = vmatprep.subr.mxu0 0.0
    %3982 = vmatpush1.msra.mxu0 0.0
    %3983 = vmatprep.subr.mxu0 0.0
    %3984 = vmatpush1.msra.mxu0 0.0
    %3985 = vmatprep.subr.mxu0 0.0
    %3986 = vmatpush1.msra.mxu0 0.0
    %3987 = vmatprep.subr.mxu0 0.0
    %3988 = vmatpush1.msra.mxu0 0.0
    %3989 = vmatprep.subr.mxu0 0.0
    %3990 = vmatpush1.msra.mxu0 0.0
    %3991 = vmatprep.subr.mxu0 0.0
    %3992 = vmatpush1.msra.mxu0 %v654
    %3993 = vmatprep.subr.mxu0 0.0
    %3994 = vmatpush1.msra.mxu0 %v653
    %3995 = vmatprep.subr.mxu0 0.0
    %3996 = vmatpush1.msra.mxu0 %v652
    %3997 = vmatprep.subr.mxu0 0.0
    %3998 = vmatpush1.msra.mxu0 %v651
    %3999 = vmatprep.subr.mxu0 0.0
    %4000 = vmatpush2.msra.mxu0 0.0
    %4001 = vmatprep.subr.mxu0 0.0
    %4002 = vmatpush2.msra.mxu0 0.0
    %4003 = vmatprep.subr.mxu0 0.0
    %4004 = vmatpush2.msra.mxu0 0.0
    %4005 = vmatprep.subr.mxu0 0.0
    %4006 = vmatpush2.msra.mxu0 0.0
    %4007 = vmatprep.subr.mxu0 0.0
    %4008 = vmatpush2.msra.mxu0 0.0
    %4009 = vmatprep.subr.mxu0 0.0
    %4010 = vmatpush2.msra.mxu0 0.0
    %4011 = vmatprep.subr.mxu0 0.0
    %4012 = vmatpush2.msra.mxu0 0.0
    %4013 = vmatprep.subr.mxu0 0.0
    %4014 = vmatpush2.msra.mxu0 0.0
    %4015 = vmatprep.subr.mxu0 0.0
    %4016 = vmatpush2.msra.mxu0 0.0
    %4017 = vmatprep.subr.mxu0 0.0
    %4018 = vmatpush2.msra.mxu0 0.0
    %4019 = vmatprep.subr.mxu0 0.0
    %4020 = vmatpush2.msra.mxu0 0.0
    %4021 = vmatprep.subr.mxu0 0.0
    %4022 = vmatpush2.msra.mxu0 0.0
    %4023 = vmatprep.subr.mxu0 0.0
    %4024 = vmatpush2.msra.mxu0 0.0
    %4025 = vmatprep.subr.mxu0 0.0
    %4026 = vmatpush2.msra.mxu0 0.0
    %4027 = vmatprep.subr.mxu0 0.0
    %4028 = vmatpush2.msra.mxu0 0.0
    %4029 = vmatprep.subr.mxu0 0.0
    %4030 = vmatpush2.msra.mxu0 0.0
    %4031 = vmatprep.mubr.f32.mxu0 0.0
    %4032 = vmatmul.mubr.f32.gmra.mxu0 %v3965
    %v4033 = vpop.f32.mrf.mxu0
    %v4034 = vadd.f32 0.0, %v4033
    %v4035 = vpop.f32.mrf.mxu0
    %4036 = vdwg.mxu0
    %v4038 = vsel %vm116, %v3670, 0
    %4040 = vmatprep.subr.mxu0 0.0
    %4041 = vmatpush1.msra.mxu0 0.0
    %4042 = vmatprep.subr.mxu0 0.0
    %4043 = vmatpush1.msra.mxu0 0.0
    %4044 = vmatprep.subr.mxu0 0.0
    %4045 = vmatpush1.msra.mxu0 0.0
    %4046 = vmatprep.subr.mxu0 0.0
    %4047 = vmatpush1.msra.mxu0 0.0
    %4048 = vmatprep.subr.mxu0 0.0
    %4049 = vmatpush1.msra.mxu0 0.0
    %4050 = vmatprep.subr.mxu0 0.0
    %4051 = vmatpush1.msra.mxu0 0.0
    %4052 = vmatprep.subr.mxu0 0.0
    %4053 = vmatpush1.msra.mxu0 0.0
    %4054 = vmatprep.subr.mxu0 0.0
    %4055 = vmatpush1.msra.mxu0 0.0
    %4056 = vmatprep.subr.mxu0 0.0
    %4057 = vmatpush1.msra.mxu0 0.0
    %4058 = vmatprep.subr.mxu0 0.0
    %4059 = vmatpush1.msra.mxu0 0.0
    %4060 = vmatprep.subr.mxu0 0.0
    %4061 = vmatpush1.msra.mxu0 0.0
    %4062 = vmatprep.subr.mxu0 0.0
    %4063 = vmatpush1.msra.mxu0 0.0
    %4064 = vmatprep.subr.mxu0 0.0
    %4065 = vmatpush1.msra.mxu0 %v650
    %4066 = vmatprep.subr.mxu0 0.0
    %4067 = vmatpush1.msra.mxu0 %v649
    %4068 = vmatprep.subr.mxu0 0.0
    %4069 = vmatpush1.msra.mxu0 %v648
    %4070 = vmatprep.subr.mxu0 0.0
    %4071 = vmatpush1.msra.mxu0 %v647
    %4072 = vmatprep.subr.mxu0 0.0
    %4073 = vmatpush2.msra.mxu0 0.0
    %4074 = vmatprep.subr.mxu0 0.0
    %4075 = vmatpush2.msra.mxu0 0.0
    %4076 = vmatprep.subr.mxu0 0.0
    %4077 = vmatpush2.msra.mxu0 0.0
    %4078 = vmatprep.subr.mxu0 0.0
    %4079 = vmatpush2.msra.mxu0 0.0
    %4080 = vmatprep.subr.mxu0 0.0
    %4081 = vmatpush2.msra.mxu0 0.0
    %4082 = vmatprep.subr.mxu0 0.0
    %4083 = vmatpush2.msra.mxu0 0.0
    %4084 = vmatprep.subr.mxu0 0.0
    %4085 = vmatpush2.msra.mxu0 0.0
    %4086 = vmatprep.subr.mxu0 0.0
    %4087 = vmatpush2.msra.mxu0 0.0
    %4088 = vmatprep.subr.mxu0 0.0
    %4089 = vmatpush2.msra.mxu0 0.0
    %4090 = vmatprep.subr.mxu0 0.0
    %4091 = vmatpush2.msra.mxu0 0.0
    %4092 = vmatprep.subr.mxu0 0.0
    %4093 = vmatpush2.msra.mxu0 0.0
    %4094 = vmatprep.subr.mxu0 0.0
    %4095 = vmatpush2.msra.mxu0 0.0
    %4096 = vmatprep.subr.mxu0 0.0
    %4097 = vmatpush2.msra.mxu0 0.0
    %4098 = vmatprep.subr.mxu0 0.0
    %4099 = vmatpush2.msra.mxu0 0.0
    %4100 = vmatprep.subr.mxu0 0.0
    %4101 = vmatpush2.msra.mxu0 0.0
    %4102 = vmatprep.subr.mxu0 0.0
    %4103 = vmatpush2.msra.mxu0 0.0
    %4104 = vmatprep.mubr.f32.mxu0 0.0
    %4105 = vmatmul.mubr.f32.gmra.mxu0 %v4038
    %v4106 = vpop.f32.mrf.mxu0
    %v4107 = vadd.f32 %v4034, %v4106
    %v4108 = vpop.f32.mrf.mxu0
    %4109 = vdwg.mxu0
    %4110 = vmatprep.subr.mxu0 0.0
    %4111 = vmatpush1.msra.mxu0 0.0
    %4112 = vmatprep.subr.mxu0 0.0
    %4113 = vmatpush1.msra.mxu0 0.0
    %4114 = vmatprep.subr.mxu0 0.0
    %4115 = vmatpush1.msra.mxu0 0.0
    %4116 = vmatprep.subr.mxu0 0.0
    %4117 = vmatpush1.msra.mxu0 0.0
    %4118 = vmatprep.subr.mxu0 0.0
    %4119 = vmatpush1.msra.mxu0 0.0
    %4120 = vmatprep.subr.mxu0 0.0
    %4121 = vmatpush1.msra.mxu0 0.0
    %4122 = vmatprep.subr.mxu0 0.0
    %4123 = vmatpush1.msra.mxu0 0.0
    %4124 = vmatprep.subr.mxu0 0.0
    %4125 = vmatpush1.msra.mxu0 0.0
    %4126 = vmatprep.subr.mxu0 0.0
    %4127 = vmatpush1.msra.mxu0 0.0
    %4128 = vmatprep.subr.mxu0 0.0
    %4129 = vmatpush1.msra.mxu0 0.0
    %4130 = vmatprep.subr.mxu0 0.0
    %4131 = vmatpush1.msra.mxu0 0.0
    %4132 = vmatprep.subr.mxu0 0.0
    %4133 = vmatpush1.msra.mxu0 0.0
    %4134 = vmatprep.subr.mxu0 0.0
    %4135 = vmatpush1.msra.mxu0 %v806
    %4136 = vmatprep.subr.mxu0 0.0
    %4137 = vmatpush1.msra.mxu0 %v805
    %4138 = vmatprep.subr.mxu0 0.0
    %4139 = vmatpush1.msra.mxu0 %v804
    %4140 = vmatprep.subr.mxu0 0.0
    %4141 = vmatpush1.msra.mxu0 %v803
    %4142 = vmatprep.subr.mxu0 0.0
    %4143 = vmatpush2.msra.mxu0 0.0
    %4144 = vmatprep.subr.mxu0 0.0
    %4145 = vmatpush2.msra.mxu0 0.0
    %4146 = vmatprep.subr.mxu0 0.0
    %4147 = vmatpush2.msra.mxu0 0.0
    %4148 = vmatprep.subr.mxu0 0.0
    %4149 = vmatpush2.msra.mxu0 0.0
    %4150 = vmatprep.subr.mxu0 0.0
    %4151 = vmatpush2.msra.mxu0 0.0
    %4152 = vmatprep.subr.mxu0 0.0
    %4153 = vmatpush2.msra.mxu0 0.0
    %4154 = vmatprep.subr.mxu0 0.0
    %4155 = vmatpush2.msra.mxu0 0.0
    %4156 = vmatprep.subr.mxu0 0.0
    %4157 = vmatpush2.msra.mxu0 0.0
    %4158 = vmatprep.subr.mxu0 0.0
    %4159 = vmatpush2.msra.mxu0 0.0
    %4160 = vmatprep.subr.mxu0 0.0
    %4161 = vmatpush2.msra.mxu0 0.0
    %4162 = vmatprep.subr.mxu0 0.0
    %4163 = vmatpush2.msra.mxu0 0.0
    %4164 = vmatprep.subr.mxu0 0.0
    %4165 = vmatpush2.msra.mxu0 0.0
    %4166 = vmatprep.subr.mxu0 0.0
    %4167 = vmatpush2.msra.mxu0 0.0
    %4168 = vmatprep.subr.mxu0 0.0
    %4169 = vmatpush2.msra.mxu0 0.0
    %4170 = vmatprep.subr.mxu0 0.0
    %4171 = vmatpush2.msra.mxu0 0.0
    %4172 = vmatprep.subr.mxu0 0.0
    %4173 = vmatpush2.msra.mxu0 0.0
    %4174 = vmatprep.mubr.f32.mxu0 0.0
    %4175 = vmatmul.mubr.f32.gmra.mxu0 %v3531
    %v4176 = vpop.f32.mrf.mxu0
    %v4177 = vadd.f32 0.0, %v4176
    %v4178 = vpop.f32.mrf.mxu0
    %4179 = vdwg.mxu0
    %v4180 = vadd.f32 %v4107, %v4177
    %v4181 = vadd.f32 %v4180, %v883
    %v4182 = vxor.u32 %v4181, 2147483648
    %v4183 = vmul.f32 %v4182, 1.442695
    %v4184 = vpow.pop %v4183
    %v4185 = vadd.f32 %v4184, 1.0
    %v4186 = vrcp.pop %v4185
    %v4187 = vmul.f32 1.0, %v4186
    %v4188 = vtanh.pop %v4181
    %v4189 = vmul.f32 %v4187, %v3381
    %4191 = vrot.lane.b32.xlu0 %v4188, 64
    %v4192 = vpop.permute.xlu0 %4191
    %v4194 = vmul.f32 %v4187, %v4192
    %4196 = vrot.lane.b32.xlu0 %v4194, 32
    %v4197 = vpop.permute.xlu0 %4196
    %v4199 = vadd.f32 %v4189, %v4197
    %v4200 = vtanh.pop %v4199
    %4202 = vrot.lane.b32.xlu0 %v4200, 64
    %v4203 = vpop.permute.xlu0 %4202
    %v4205 = vmul.f32 %v4187, %v4203
    %4206 = vmatprep.subr.mxu0 0.0
    %4207 = vmatpush1.msra.mxu0 0.0
    %4208 = vmatprep.subr.mxu0 0.0
    %4209 = vmatpush1.msra.mxu0 0.0
    %4210 = vmatprep.subr.mxu0 0.0
    %4211 = vmatpush1.msra.mxu0 0.0
    %4212 = vmatprep.subr.mxu0 0.0
    %4213 = vmatpush1.msra.mxu0 0.0
    %4214 = vmatprep.subr.mxu0 0.0
    %4215 = vmatpush1.msra.mxu0 0.0
    %4216 = vmatprep.subr.mxu0 0.0
    %4217 = vmatpush1.msra.mxu0 0.0
    %4218 = vmatprep.subr.mxu0 0.0
    %4219 = vmatpush1.msra.mxu0 0.0
    %4220 = vmatprep.subr.mxu0 0.0
    %4221 = vmatpush1.msra.mxu0 0.0
    %4222 = vmatprep.subr.mxu0 0.0
    %4223 = vmatpush1.msra.mxu0 0.0
    %4224 = vmatprep.subr.mxu0 0.0
    %4225 = vmatpush1.msra.mxu0 0.0
    %4226 = vmatprep.subr.mxu0 0.0
    %4227 = vmatpush1.msra.mxu0 0.0
    %4228 = vmatprep.subr.mxu0 0.0
    %4229 = vmatpush1.msra.mxu0 0.0
    %4230 = vmatprep.subr.mxu0 0.0
    %4231 = vmatpush1.msra.mxu0 %v921
    %4232 = vmatprep.subr.mxu0 0.0
    %4233 = vmatpush1.msra.mxu0 %v920
    %4234 = vmatprep.subr.mxu0 0.0
    %4235 = vmatpush1.msra.mxu0 %v919
    %4236 = vmatprep.subr.mxu0 0.0
    %4237 = vmatpush1.msra.mxu0 %v918
    %4238 = vmatprep.subr.mxu0 0.0
    %4239 = vmatpush2.msra.mxu0 0.0
    %4240 = vmatprep.subr.mxu0 0.0
    %4241 = vmatpush2.msra.mxu0 0.0
    %4242 = vmatprep.subr.mxu0 0.0
    %4243 = vmatpush2.msra.mxu0 0.0
    %4244 = vmatprep.subr.mxu0 0.0
    %4245 = vmatpush2.msra.mxu0 0.0
    %4246 = vmatprep.subr.mxu0 0.0
    %4247 = vmatpush2.msra.mxu0 0.0
    %4248 = vmatprep.subr.mxu0 0.0
    %4249 = vmatpush2.msra.mxu0 0.0
    %4250 = vmatprep.subr.mxu0 0.0
    %4251 = vmatpush2.msra.mxu0 0.0
    %4252 = vmatprep.subr.mxu0 0.0
    %4253 = vmatpush2.msra.mxu0 0.0
    %4254 = vmatprep.subr.mxu0 0.0
    %4255 = vmatpush2.msra.mxu0 0.0
    %4256 = vmatprep.subr.mxu0 0.0
    %4257 = vmatpush2.msra.mxu0 0.0
    %4258 = vmatprep.subr.mxu0 0.0
    %4259 = vmatpush2.msra.mxu0 0.0
    %4260 = vmatprep.subr.mxu0 0.0
    %4261 = vmatpush2.msra.mxu0 0.0
    %4262 = vmatprep.subr.mxu0 0.0
    %4263 = vmatpush2.msra.mxu0 0.0
    %4264 = vmatprep.subr.mxu0 0.0
    %4265 = vmatpush2.msra.mxu0 0.0
    %4266 = vmatprep.subr.mxu0 0.0
    %4267 = vmatpush2.msra.mxu0 0.0
    %4268 = vmatprep.subr.mxu0 0.0
    %4269 = vmatpush2.msra.mxu0 0.0
    %4270 = vmatprep.mubr.f32.mxu0 0.0
    %4271 = vmatmul.mubr.f32.gmra.mxu0 %v3965
    %v4272 = vpop.f32.mrf.mxu0
    %v4273 = vadd.f32 0.0, %v4272
    %v4274 = vpop.f32.mrf.mxu0
    %4275 = vdwg.mxu0
    %4276 = vmatprep.subr.mxu0 0.0
    %4277 = vmatpush1.msra.mxu0 0.0
    %4278 = vmatprep.subr.mxu0 0.0
    %4279 = vmatpush1.msra.mxu0 0.0
    %4280 = vmatprep.subr.mxu0 0.0
    %4281 = vmatpush1.msra.mxu0 0.0
    %4282 = vmatprep.subr.mxu0 0.0
    %4283 = vmatpush1.msra.mxu0 0.0
    %4284 = vmatprep.subr.mxu0 0.0
    %4285 = vmatpush1.msra.mxu0 0.0
    %4286 = vmatprep.subr.mxu0 0.0
    %4287 = vmatpush1.msra.mxu0 0.0
    %4288 = vmatprep.subr.mxu0 0.0
    %4289 = vmatpush1.msra.mxu0 0.0
    %4290 = vmatprep.subr.mxu0 0.0
    %4291 = vmatpush1.msra.mxu0 0.0
    %4292 = vmatprep.subr.mxu0 0.0
    %4293 = vmatpush1.msra.mxu0 0.0
    %4294 = vmatprep.subr.mxu0 0.0
    %4295 = vmatpush1.msra.mxu0 0.0
    %4296 = vmatprep.subr.mxu0 0.0
    %4297 = vmatpush1.msra.mxu0 0.0
    %4298 = vmatprep.subr.mxu0 0.0
    %4299 = vmatpush1.msra.mxu0 0.0
    %4300 = vmatprep.subr.mxu0 0.0
    %4301 = vmatpush1.msra.mxu0 %v917
    %4302 = vmatprep.subr.mxu0 0.0
    %4303 = vmatpush1.msra.mxu0 %v916
    %4304 = vmatprep.subr.mxu0 0.0
    %4305 = vmatpush1.msra.mxu0 %v915
    %4306 = vmatprep.subr.mxu0 0.0
    %4307 = vmatpush1.msra.mxu0 %v914
    %4308 = vmatprep.subr.mxu0 0.0
    %4309 = vmatpush2.msra.mxu0 0.0
    %4310 = vmatprep.subr.mxu0 0.0
    %4311 = vmatpush2.msra.mxu0 0.0
    %4312 = vmatprep.subr.mxu0 0.0
    %4313 = vmatpush2.msra.mxu0 0.0
    %4314 = vmatprep.subr.mxu0 0.0
    %4315 = vmatpush2.msra.mxu0 0.0
    %4316 = vmatprep.subr.mxu0 0.0
    %4317 = vmatpush2.msra.mxu0 0.0
    %4318 = vmatprep.subr.mxu0 0.0
    %4319 = vmatpush2.msra.mxu0 0.0
    %4320 = vmatprep.subr.mxu0 0.0
    %4321 = vmatpush2.msra.mxu0 0.0
    %4322 = vmatprep.subr.mxu0 0.0
    %4323 = vmatpush2.msra.mxu0 0.0
    %4324 = vmatprep.subr.mxu0 0.0
    %4325 = vmatpush2.msra.mxu0 0.0
    %4326 = vmatprep.subr.mxu0 0.0
    %4327 = vmatpush2.msra.mxu0 0.0
    %4328 = vmatprep.subr.mxu0 0.0
    %4329 = vmatpush2.msra.mxu0 0.0
    %4330 = vmatprep.subr.mxu0 0.0
    %4331 = vmatpush2.msra.mxu0 0.0
    %4332 = vmatprep.subr.mxu0 0.0
    %4333 = vmatpush2.msra.mxu0 0.0
    %4334 = vmatprep.subr.mxu0 0.0
    %4335 = vmatpush2.msra.mxu0 0.0
    %4336 = vmatprep.subr.mxu0 0.0
    %4337 = vmatpush2.msra.mxu0 0.0
    %4338 = vmatprep.subr.mxu0 0.0
    %4339 = vmatpush2.msra.mxu0 0.0
    %4340 = vmatprep.mubr.f32.mxu0 0.0
    %4341 = vmatmul.mubr.f32.gmra.mxu0 %v4038
    %v4342 = vpop.f32.mrf.mxu0
    %v4343 = vadd.f32 %v4273, %v4342
    %v4344 = vpop.f32.mrf.mxu0
    %4345 = vdwg.mxu0
    %4347 = vrot.lane.b32.xlu0 %v4205, 32
    %v4348 = vpop.permute.xlu0 %4347
    %v4349 = vsel %vm116, %v4348, 0
    %4351 = vmatprep.subr.mxu0 0.0
    %4352 = vmatpush1.msra.mxu0 0.0
    %4353 = vmatprep.subr.mxu0 0.0
    %4354 = vmatpush1.msra.mxu0 0.0
    %4355 = vmatprep.subr.mxu0 0.0
    %4356 = vmatpush1.msra.mxu0 0.0
    %4357 = vmatprep.subr.mxu0 0.0
    %4358 = vmatpush1.msra.mxu0 0.0
    %4359 = vmatprep.subr.mxu0 0.0
    %4360 = vmatpush1.msra.mxu0 0.0
    %4361 = vmatprep.subr.mxu0 0.0
    %4362 = vmatpush1.msra.mxu0 0.0
    %4363 = vmatprep.subr.mxu0 0.0
    %4364 = vmatpush1.msra.mxu0 0.0
    %4365 = vmatprep.subr.mxu0 0.0
    %4366 = vmatpush1.msra.mxu0 0.0
    %4367 = vmatprep.subr.mxu0 0.0
    %4368 = vmatpush1.msra.mxu0 0.0
    %4369 = vmatprep.subr.mxu0 0.0
    %4370 = vmatpush1.msra.mxu0 0.0
    %4371 = vmatprep.subr.mxu0 0.0
    %4372 = vmatpush1.msra.mxu0 0.0
    %4373 = vmatprep.subr.mxu0 0.0
    %4374 = vmatpush1.msra.mxu0 0.0
    %4375 = vmatprep.subr.mxu0 0.0
    %4376 = vmatpush1.msra.mxu0 %v1065
    %4377 = vmatprep.subr.mxu0 0.0
    %4378 = vmatpush1.msra.mxu0 %v1064
    %4379 = vmatprep.subr.mxu0 0.0
    %4380 = vmatpush1.msra.mxu0 %v1063
    %4381 = vmatprep.subr.mxu0 0.0
    %4382 = vmatpush1.msra.mxu0 %v1062
    %4383 = vmatprep.subr.mxu0 0.0
    %4384 = vmatpush2.msra.mxu0 0.0
    %4385 = vmatprep.subr.mxu0 0.0
    %4386 = vmatpush2.msra.mxu0 0.0
    %4387 = vmatprep.subr.mxu0 0.0
    %4388 = vmatpush2.msra.mxu0 0.0
    %4389 = vmatprep.subr.mxu0 0.0
    %4390 = vmatpush2.msra.mxu0 0.0
    %4391 = vmatprep.subr.mxu0 0.0
    %4392 = vmatpush2.msra.mxu0 0.0
    %4393 = vmatprep.subr.mxu0 0.0
    %4394 = vmatpush2.msra.mxu0 0.0
    %4395 = vmatprep.subr.mxu0 0.0
    %4396 = vmatpush2.msra.mxu0 0.0
    %4397 = vmatprep.subr.mxu0 0.0
    %4398 = vmatpush2.msra.mxu0 0.0
    %4399 = vmatprep.subr.mxu0 0.0
    %4400 = vmatpush2.msra.mxu0 0.0
    %4401 = vmatprep.subr.mxu0 0.0
    %4402 = vmatpush2.msra.mxu0 0.0
    %4403 = vmatprep.subr.mxu0 0.0
    %4404 = vmatpush2.msra.mxu0 0.0
    %4405 = vmatprep.subr.mxu0 0.0
    %4406 = vmatpush2.msra.mxu0 0.0
    %4407 = vmatprep.subr.mxu0 0.0
    %4408 = vmatpush2.msra.mxu0 0.0
    %4409 = vmatprep.subr.mxu0 0.0
    %4410 = vmatpush2.msra.mxu0 0.0
    %4411 = vmatprep.subr.mxu0 0.0
    %4412 = vmatpush2.msra.mxu0 0.0
    %4413 = vmatprep.subr.mxu0 0.0
    %4414 = vmatpush2.msra.mxu0 0.0
    %4415 = vmatprep.mubr.f32.mxu0 0.0
    %4416 = vmatmul.mubr.f32.gmra.mxu0 %v4349
    %v4417 = vpop.f32.mrf.mxu0
    %v4418 = vadd.f32 0.0, %v4417
    %v4419 = vpop.f32.mrf.mxu0
    %4420 = vdwg.mxu0
    %v4421 = vadd.f32 %v4343, %v4418
    %v4422 = vadd.f32 %v4421, %v1147
    %v4423 = vsel %vm1150, %v4422, -inf
    %4424 = vmax.xlane.f32.xlu0 %v4423
    %v4425 = vpop.xlane.xlu0 %4424
    %vm4426 = vcmp.eq.f32.partialorder %v4422, %v4425
    %v4427 = vsel %vm4426, %v301, 32
    %v4428 = vsel %vm1150, %v4427, 2147483647
    %v4429 = vand.u32 %v4428, 65535
    %v4430 = vshra.s32 %v4428, 16
    %v4431 = vcvt.s32.f32 %v4429
    %v4432 = vcvt.s32.f32 %v4430
    %4433 = vmin.xlane.f32.xlu0 %v4432
    %v4434 = vpop.xlane.xlu0 %4433
    %vm4435 = vcmp.eq.f32.partialorder %v4432, %v4434
    %v4436 = vsel %vm4435, %v4431, inf
    %4437 = vmin.xlane.f32.xlu0 %v4436
    %v4438 = vpop.xlane.xlu0 %4437
    %v4439 = vcvt.f32.s32 %v4438
    %v4440 = vcvt.f32.s32 %v4434
    %v4441 = vshll.u32 %v4440, 16
    %v4442 = vadd.s32 %v4441, %v4439
    %vm4443 = vcmp.eq.s32.totalorder %v301, %v4442
    %v4444 = vsel %vm4443, 1, 0
    %v4445 = vcvt.s32.f32 %v4444
    %s4446 = scalar_lea.vmem %s1, 10
    %v4447 = vld [vmem:[%s4446] sm:$0x3]
    %v4448 = vsub.f32 %v4422, %v4425
    %v4449 = vmul.f32 %v4448, 1.442695
    %v4450 = vpow.pop %v4449
    %v4451 = vsel %vm1150, %v4450, 0.0
    %4452 = vadd.xlane.f32.xlu0 %v4451
    %v4453 = vpop.xlane.xlu0 %4452
    %v4454 = vlog2.pop %v4453
    %v4455 = vmul.f32 %v4454, 0.6931472
    %v4456 = vadd.f32 %v4425, %v4455
    %v4457 = vmul.f32 %v4422, %v4447
    %v4458 = vsel %vm1150, %v4457, 0.0
    %4459 = vadd.xlane.f32.xlu0 %v4458
    %v4460 = vpop.xlane.xlu0 %4459
    %v4461 = vsub.f32 1.0, %v4447
    %v4462 = vsub.f32 %v4456, %v4460
    %v4463 = vmul.f32 %v4462, %v4461
    %v4464 = vsel %vm289, %v4463, 0.0
    %v4465 = vrot.slane %v4464, 4
    %v4466 = vadd.f32 %v4464, %v4465
    %v4467 = vrot.slane %v4466, 2
    %v4468 = vadd.f32 %v4466, %v4467
    %v4469 = vrot.slane %v4468, 1
    %v4470 = vadd.f32 %v4468, %v4469
    %v4471 = vadd.f32 %v3653, %v4470
    %v4472 = vsel %vm289, %v4461, 0.0
    %v4473 = vrot.slane %v4472, 4
    %v4474 = vadd.f32 %v4472, %v4473
    %v4475 = vrot.slane %v4474, 2
    %v4476 = vadd.f32 %v4474, %v4475
    %v4477 = vrot.slane %v4476, 1
    %v4478 = vadd.f32 %v4476, %v4477
    %v4479 = vadd.f32 %v3661, %v4478
    %s4480 = sld [smem:[#allocation4 + $0x5]]
    %p4481 = scmp.ne.s32.totalorder %s4480, 0
    %s4482 = scalar_select %p4481, 1.0, 0.0
    %v4483 = vstv %s4482
    %v4484 = vmul.f32 %v4483, %v4447
    %s4485 = ssub.f32 1.0, %s4482
    %v4486 = vstv %s4485
    %v4487 = vmul.f32 %v4486, %v4445
    %v4488 = vadd.f32 %v4484, %v4487
    %4489 = vmatprep.subr.mxu0 0.0
    %4490 = vmatpush1.msra.mxu0 0.0
    %4491 = vmatprep.subr.mxu0 0.0
    %4492 = vmatpush1.msra.mxu0 0.0
    %4493 = vmatprep.subr.mxu0 0.0
    %4494 = vmatpush1.msra.mxu0 0.0
    %4495 = vmatprep.subr.mxu0 0.0
    %4496 = vmatpush1.msra.mxu0 0.0
    %4497 = vmatprep.subr.mxu0 0.0
    %4498 = vmatpush1.msra.mxu0 0.0
    %4499 = vmatprep.subr.mxu0 0.0
    %4500 = vmatpush1.msra.mxu0 0.0
    %4501 = vmatprep.subr.mxu0 0.0
    %4502 = vmatpush1.msra.mxu0 0.0
    %4503 = vmatprep.subr.mxu0 0.0
    %4504 = vmatpush1.msra.mxu0 0.0
    %4505 = vmatprep.subr.mxu0 0.0
    %4506 = vmatpush1.msra.mxu0 0.0
    %4507 = vmatprep.subr.mxu0 0.0
    %4508 = vmatpush1.msra.mxu0 0.0
    %4509 = vmatprep.subr.mxu0 0.0
    %4510 = vmatpush1.msra.mxu0 0.0
    %4511 = vmatprep.subr.mxu0 0.0
    %4512 = vmatpush1.msra.mxu0 0.0
    %4513 = vmatprep.subr.mxu0 0.0
    %4514 = vmatpush1.msra.mxu0 %v305
    %4515 = vmatprep.subr.mxu0 0.0
    %4516 = vmatpush1.msra.mxu0 %v304
    %4517 = vmatprep.subr.mxu0 0.0
    %4518 = vmatpush1.msra.mxu0 %v303
    %4519 = vmatprep.subr.mxu0 0.0
    %4520 = vmatpush1.msra.mxu0 %v302
    %4521 = vmatprep.subr.mxu0 0.0
    %4522 = vmatpush2.msra.mxu0 0.0
    %4523 = vmatprep.subr.mxu0 0.0
    %4524 = vmatpush2.msra.mxu0 0.0
    %4525 = vmatprep.subr.mxu0 0.0
    %4526 = vmatpush2.msra.mxu0 0.0
    %4527 = vmatprep.subr.mxu0 0.0
    %4528 = vmatpush2.msra.mxu0 0.0
    %4529 = vmatprep.subr.mxu0 0.0
    %4530 = vmatpush2.msra.mxu0 0.0
    %4531 = vmatprep.subr.mxu0 0.0
    %4532 = vmatpush2.msra.mxu0 0.0
    %4533 = vmatprep.subr.mxu0 0.0
    %4534 = vmatpush2.msra.mxu0 0.0
    %4535 = vmatprep.subr.mxu0 0.0
    %4536 = vmatpush2.msra.mxu0 0.0
    %4537 = vmatprep.subr.mxu0 0.0
    %4538 = vmatpush2.msra.mxu0 0.0
    %4539 = vmatprep.subr.mxu0 0.0
    %4540 = vmatpush2.msra.mxu0 0.0
    %4541 = vmatprep.subr.mxu0 0.0
    %4542 = vmatpush2.msra.mxu0 0.0
    %4543 = vmatprep.subr.mxu0 0.0
    %4544 = vmatpush2.msra.mxu0 0.0
    %4545 = vmatprep.subr.mxu0 0.0
    %4546 = vmatpush2.msra.mxu0 0.0
    %4547 = vmatprep.subr.mxu0 0.0
    %4548 = vmatpush2.msra.mxu0 0.0
    %4549 = vmatprep.subr.mxu0 0.0
    %4550 = vmatpush2.msra.mxu0 0.0
    %4551 = vmatprep.subr.mxu0 0.0
    %4552 = vmatpush2.msra.mxu0 0.0
    %4553 = vmatprep.mubr.f32.mxu0 0.0
    %4554 = vmatmul.mubr.f32.gmra.mxu0 %v4349
    %v4555 = vpop.f32.mrf.mxu0
    %v4556 = vadd.f32 0.0, %v4555
    %v4557 = vpop.f32.mrf.mxu0
    %4558 = vdwg.mxu0
    %v4561 = vunpack.c.l.s4 1966171168
    %v4562 = vunpack.c.0.s8 %v4561
    %v4563 = vlaneseq
    %v4564 = vshrl.u32 %v4563, 7
    %v4565 = vsub.s32 %v4562, %v4564
    %v4566 = vrot.slane %v4556, %v4565
    %v4567 = vcombine.high %v4566, %v4566
    %v4569 = vunpack.c.l.s4 1966171168
    %v4570 = vunpack.c.0.s8 %v4569
    %v4571 = vlaneseq
    %v4572 = vshrl.u32 %v4571, 7
    %v4573 = vsub.s32 %v4570, %v4572
    %v4574 = vrot.slane %v4566, %v4573
    %v4576 = vunpack.c.l.s4 1966171168
    %v4577 = vunpack.c.0.s8 %v4576
    %v4578 = vlaneseq
    %v4579 = vshrl.u32 %v4578, 7
    %v4580 = vsub.s32 %v4577, %v4579
    %v4581 = vrot.slane %v4567, %v4580
    %v4582 = vlaneseq
    %v4583 = vshrl.u32 %v4582, 7
    %v4584 = vsub.s32 0, %v4583
    %v4585 = vrot.slane %v4574, %v4584
    %v4586 = vlaneseq
    %v4587 = vshrl.u32 %v4586, 7
    %v4588 = vsub.s32 0, %v4587
    %v4589 = vrot.slane %v4581, %v4588
    %v4592 = vadd.f32 %v379, %v4585
    %v4593 = vadd.f32 %v380, %v4585
    %v4594 = vadd.f32 %v381, %v4589
    %v4595 = vadd.f32 %v382, %v4589
    %v4596 = vtanh.pop %v4592
    %v4597 = vtanh.pop %v4593
    %v4598 = vtanh.pop %v4594
    %v4599 = vtanh.pop %v4595
    %v4600 = vmul.f32 %v4596, %v429
    %v4601 = vmul.f32 %v4597, %v429
    %v4602 = vmul.f32 %v4598, %v429
    %v4603 = vmul.f32 %v4599, %v429
    %v4604 = vsel %vm116, %v4600, 0.0
    %4605 = vadd.xlane.f32.xlu0 %v4604
    %v4606 = vpop.xlane.xlu0 %4605
    %v4607 = vsel %vm116, %v4601, 0.0
    %4608 = vadd.xlane.f32.xlu0 %v4607
    %v4609 = vpop.xlane.xlu0 %4608
    %v4610 = vsel %vm116, %v4602, 0.0
    %4611 = vadd.xlane.f32.xlu0 %v4610
    %v4612 = vpop.xlane.xlu0 %4611
    %v4613 = vsel %vm116, %v4603, 0.0
    %4614 = vadd.xlane.f32.xlu0 %v4613
    %v4615 = vpop.xlane.xlu0 %4614
    %v4616 = vadd.f32 %v4606, %v455
    %v4617 = vadd.f32 %v4609, %v459
    %v4618 = vadd.f32 %v4612, %v466
    %v4619 = vadd.f32 %v4615, %v470
    %4624 = vset.pattern.permute.xlu0 0
    %4625 = vperm.xlu0 %4624, %v4616
    %v4626 = vpop.permute.xlu0 %4625
    %4627 = vset.pattern.permute.xlu0 0
    %4628 = vperm.xlu0 %4627, %v4617
    %v4629 = vpop.permute.xlu0 %4628
    %4630 = vset.pattern.permute.xlu0 0
    %4631 = vperm.xlu0 %4630, %v4618
    %v4632 = vpop.permute.xlu0 %4631
    %4633 = vset.pattern.permute.xlu0 0
    %4634 = vperm.xlu0 %4633, %v4619
    %v4635 = vpop.permute.xlu0 %4634
    %v4636 = vlaneseq
    %v4637 = vshrl.u32 %v4636, 7
    %v4638 = vsub.s32 %v301, %v4637
    %v4639 = vrot.slane %v4626, %v4638
    %v4640 = vlaneseq
    %v4641 = vshrl.u32 %v4640, 7
    %v4642 = vsub.s32 %v499, %v4641
    %v4643 = vrot.slane %v4629, %v4642
    %v4644 = vsel %vm504, %v4643, %v4639
    %v4645 = vlaneseq
    %v4646 = vshrl.u32 %v4645, 7
    %v4647 = vsub.s32 %v301, %v4646
    %v4648 = vrot.slane %v4632, %v4647
    %v4649 = vlaneseq
    %v4650 = vshrl.u32 %v4649, 7
    %v4651 = vsub.s32 %v499, %v4650
    %v4652 = vrot.slane %v4635, %v4651
    %v4653 = vsel %vm504, %v4652, %v4648
    %v4654 = vsel %vm515, %v4653, %v4644
    %v4656 = vsel %vm518, %v4654, -inf
    %4657 = vmax.xlane.f32.xlu0 %v4656
    %v4658 = vpop.xlane.xlu0 %4657
    %v4660 = vlaneseq
    %v4661 = vshrl.u32 %v4660, 7
    %v4662 = vsub.s32 0, %v4661
    %v4663 = vrot.slane %v4658, %v4662
    %v4664 = vlaneseq
    %v4665 = vshrl.u32 %v4664, 7
    %v4666 = vsub.s32 1, %v4665
    %v4667 = vrot.slane %v4658, %v4666
    %v4670 = vsub.f32 %v4616, %v4663
    %v4671 = vsub.f32 %v4617, %v4663
    %v4672 = vsub.f32 %v4618, %v4667
    %v4673 = vsub.f32 %v4619, %v4667
    %v4674 = vmul.f32 %v4670, 1.442695
    %v4675 = vpow.pop %v4674
    %v4676 = vmul.f32 %v4671, 1.442695
    %v4677 = vpow.pop %v4676
    %v4678 = vmul.f32 %v4672, 1.442695
    %v4679 = vpow.pop %v4678
    %v4680 = vmul.f32 %v4673, 1.442695
    %v4681 = vpow.pop %v4680
    %4686 = vset.pattern.permute.xlu0 0
    %4687 = vperm.xlu0 %4686, %v4675
    %v4688 = vpop.permute.xlu0 %4687
    %4689 = vset.pattern.permute.xlu0 0
    %4690 = vperm.xlu0 %4689, %v4677
    %v4691 = vpop.permute.xlu0 %4690
    %4692 = vset.pattern.permute.xlu0 0
    %4693 = vperm.xlu0 %4692, %v4679
    %v4694 = vpop.permute.xlu0 %4693
    %4695 = vset.pattern.permute.xlu0 0
    %4696 = vperm.xlu0 %4695, %v4681
    %v4697 = vpop.permute.xlu0 %4696
    %v4698 = vlaneseq
    %v4699 = vshrl.u32 %v4698, 7
    %v4700 = vsub.s32 %v301, %v4699
    %v4701 = vrot.slane %v4688, %v4700
    %v4702 = vlaneseq
    %v4703 = vshrl.u32 %v4702, 7
    %v4704 = vsub.s32 %v499, %v4703
    %v4705 = vrot.slane %v4691, %v4704
    %v4706 = vsel %vm504, %v4705, %v4701
    %v4707 = vlaneseq
    %v4708 = vshrl.u32 %v4707, 7
    %v4709 = vsub.s32 %v301, %v4708
    %v4710 = vrot.slane %v4694, %v4709
    %v4711 = vlaneseq
    %v4712 = vshrl.u32 %v4711, 7
    %v4713 = vsub.s32 %v499, %v4712
    %v4714 = vrot.slane %v4697, %v4713
    %v4715 = vsel %vm504, %v4714, %v4710
    %v4716 = vsel %vm515, %v4715, %v4706
    %v4718 = vsel %vm518, %v4716, 0.0
    %4719 = vadd.xlane.f32.xlu0 %v4718
    %v4720 = vpop.xlane.xlu0 %4719
    %v4722 = vlaneseq
    %v4723 = vshrl.u32 %v4722, 7
    %v4724 = vsub.s32 0, %v4723
    %v4725 = vrot.slane %v4720, %v4724
    %v4726 = vlaneseq
    %v4727 = vshrl.u32 %v4726, 7
    %v4728 = vsub.s32 1, %v4727
    %v4729 = vrot.slane %v4720, %v4728
    %v4732 = vrcp.pop %v4725
    %v4733 = vmul.f32 %v4675, %v4732
    %v4734 = vmul.f32 %v4677, %v4732
    %v4735 = vrcp.pop %v4729
    %v4736 = vmul.f32 %v4679, %v4735
    %v4737 = vmul.f32 %v4681, %v4735
    %4739 = vset.pattern.permute.xlu0 0
    %4740 = vperm.xlu0 %4739, %v4733
    %v4741 = vpop.permute.xlu0 %4740
    %4744 = vset.pattern.permute.xlu0 0
    %4745 = vperm.xlu0 %4744, %v4734
    %v4746 = vpop.permute.xlu0 %4745
    %4749 = vset.pattern.permute.xlu0 0
    %4750 = vperm.xlu0 %4749, %v4736
    %v4751 = vpop.permute.xlu0 %4750
    %4754 = vset.pattern.permute.xlu0 0
    %4755 = vperm.xlu0 %4754, %v4737
    %v4756 = vpop.permute.xlu0 %4755
    %v4758 = vmul.f32 %v4741, %v601
    %v4759 = vmul.f32 %v4746, %v602
    %v4760 = vmul.f32 %v4751, %v603
    %v4761 = vmul.f32 %v4756, %v604
    %v4762 = vsel %vm116, %v4758, 0.0
    %v4763 = vsel %vm116, %v4759, 0.0
    %v4764 = vadd.f32 %v4762, %v4763
    %v4765 = vrot.slane %v4764, 4
    %v4766 = vadd.f32 %v4764, %v4765
    %v4767 = vrot.slane %v4766, 2
    %v4768 = vadd.f32 %v4766, %v4767
    %v4769 = vrot.slane %v4768, 1
    %v4770 = vadd.f32 %v4768, %v4769
    %v4771 = vsel %vm116, %v4760, 0.0
    %v4772 = vsel %vm116, %v4761, 0.0
    %v4773 = vadd.f32 %v4771, %v4772
    %v4774 = vrot.slane %v4773, 4
    %v4775 = vadd.f32 %v4773, %v4774
    %v4776 = vrot.slane %v4775, 2
    %v4777 = vadd.f32 %v4775, %v4776
    %v4778 = vrot.slane %v4777, 1
    %v4779 = vadd.f32 %v4777, %v4778
    %v4782 = vsel %vm515, %v4779, %v4770
    %v4783 = vsel %vm116, %v4782, 0
    %4785 = vmatprep.subr.mxu0 0.0
    %4786 = vmatpush1.msra.mxu0 0.0
    %4787 = vmatprep.subr.mxu0 0.0
    %4788 = vmatpush1.msra.mxu0 0.0
    %4789 = vmatprep.subr.mxu0 0.0
    %4790 = vmatpush1.msra.mxu0 0.0
    %4791 = vmatprep.subr.mxu0 0.0
    %4792 = vmatpush1.msra.mxu0 0.0
    %4793 = vmatprep.subr.mxu0 0.0
    %4794 = vmatpush1.msra.mxu0 0.0
    %4795 = vmatprep.subr.mxu0 0.0
    %4796 = vmatpush1.msra.mxu0 0.0
    %4797 = vmatprep.subr.mxu0 0.0
    %4798 = vmatpush1.msra.mxu0 0.0
    %4799 = vmatprep.subr.mxu0 0.0
    %4800 = vmatpush1.msra.mxu0 0.0
    %4801 = vmatprep.subr.mxu0 0.0
    %4802 = vmatpush1.msra.mxu0 0.0
    %4803 = vmatprep.subr.mxu0 0.0
    %4804 = vmatpush1.msra.mxu0 0.0
    %4805 = vmatprep.subr.mxu0 0.0
    %4806 = vmatpush1.msra.mxu0 0.0
    %4807 = vmatprep.subr.mxu0 0.0
    %4808 = vmatpush1.msra.mxu0 0.0
    %4809 = vmatprep.subr.mxu0 0.0
    %4810 = vmatpush1.msra.mxu0 %v654
    %4811 = vmatprep.subr.mxu0 0.0
    %4812 = vmatpush1.msra.mxu0 %v653
    %4813 = vmatprep.subr.mxu0 0.0
    %4814 = vmatpush1.msra.mxu0 %v652
    %4815 = vmatprep.subr.mxu0 0.0
    %4816 = vmatpush1.msra.mxu0 %v651
    %4817 = vmatprep.subr.mxu0 0.0
    %4818 = vmatpush2.msra.mxu0 0.0
    %4819 = vmatprep.subr.mxu0 0.0
    %4820 = vmatpush2.msra.mxu0 0.0
    %4821 = vmatprep.subr.mxu0 0.0
    %4822 = vmatpush2.msra.mxu0 0.0
    %4823 = vmatprep.subr.mxu0 0.0
    %4824 = vmatpush2.msra.mxu0 0.0
    %4825 = vmatprep.subr.mxu0 0.0
    %4826 = vmatpush2.msra.mxu0 0.0
    %4827 = vmatprep.subr.mxu0 0.0
    %4828 = vmatpush2.msra.mxu0 0.0
    %4829 = vmatprep.subr.mxu0 0.0
    %4830 = vmatpush2.msra.mxu0 0.0
    %4831 = vmatprep.subr.mxu0 0.0
    %4832 = vmatpush2.msra.mxu0 0.0
    %4833 = vmatprep.subr.mxu0 0.0
    %4834 = vmatpush2.msra.mxu0 0.0
    %4835 = vmatprep.subr.mxu0 0.0
    %4836 = vmatpush2.msra.mxu0 0.0
    %4837 = vmatprep.subr.mxu0 0.0
    %4838 = vmatpush2.msra.mxu0 0.0
    %4839 = vmatprep.subr.mxu0 0.0
    %4840 = vmatpush2.msra.mxu0 0.0
    %4841 = vmatprep.subr.mxu0 0.0
    %4842 = vmatpush2.msra.mxu0 0.0
    %4843 = vmatprep.subr.mxu0 0.0
    %4844 = vmatpush2.msra.mxu0 0.0
    %4845 = vmatprep.subr.mxu0 0.0
    %4846 = vmatpush2.msra.mxu0 0.0
    %4847 = vmatprep.subr.mxu0 0.0
    %4848 = vmatpush2.msra.mxu0 0.0
    %4849 = vmatprep.mubr.f32.mxu0 0.0
    %4850 = vmatmul.mubr.f32.gmra.mxu0 %v4783
    %v4851 = vpop.f32.mrf.mxu0
    %v4852 = vadd.f32 0.0, %v4851
    %v4853 = vpop.f32.mrf.mxu0
    %4854 = vdwg.mxu0
    %v4856 = vsel %vm116, %v4488, 0
    %4858 = vmatprep.subr.mxu0 0.0
    %4859 = vmatpush1.msra.mxu0 0.0
    %4860 = vmatprep.subr.mxu0 0.0
    %4861 = vmatpush1.msra.mxu0 0.0
    %4862 = vmatprep.subr.mxu0 0.0
    %4863 = vmatpush1.msra.mxu0 0.0
    %4864 = vmatprep.subr.mxu0 0.0
    %4865 = vmatpush1.msra.mxu0 0.0
    %4866 = vmatprep.subr.mxu0 0.0
    %4867 = vmatpush1.msra.mxu0 0.0
    %4868 = vmatprep.subr.mxu0 0.0
    %4869 = vmatpush1.msra.mxu0 0.0
    %4870 = vmatprep.subr.mxu0 0.0
    %4871 = vmatpush1.msra.mxu0 0.0
    %4872 = vmatprep.subr.mxu0 0.0
    %4873 = vmatpush1.msra.mxu0 0.0
    %4874 = vmatprep.subr.mxu0 0.0
    %4875 = vmatpush1.msra.mxu0 0.0
    %4876 = vmatprep.subr.mxu0 0.0
    %4877 = vmatpush1.msra.mxu0 0.0
    %4878 = vmatprep.subr.mxu0 0.0
    %4879 = vmatpush1.msra.mxu0 0.0
    %4880 = vmatprep.subr.mxu0 0.0
    %4881 = vmatpush1.msra.mxu0 0.0
    %4882 = vmatprep.subr.mxu0 0.0
    %4883 = vmatpush1.msra.mxu0 %v650
    %4884 = vmatprep.subr.mxu0 0.0
    %4885 = vmatpush1.msra.mxu0 %v649
    %4886 = vmatprep.subr.mxu0 0.0
    %4887 = vmatpush1.msra.mxu0 %v648
    %4888 = vmatprep.subr.mxu0 0.0
    %4889 = vmatpush1.msra.mxu0 %v647
    %4890 = vmatprep.subr.mxu0 0.0
    %4891 = vmatpush2.msra.mxu0 0.0
    %4892 = vmatprep.subr.mxu0 0.0
    %4893 = vmatpush2.msra.mxu0 0.0
    %4894 = vmatprep.subr.mxu0 0.0
    %4895 = vmatpush2.msra.mxu0 0.0
    %4896 = vmatprep.subr.mxu0 0.0
    %4897 = vmatpush2.msra.mxu0 0.0
    %4898 = vmatprep.subr.mxu0 0.0
    %4899 = vmatpush2.msra.mxu0 0.0
    %4900 = vmatprep.subr.mxu0 0.0
    %4901 = vmatpush2.msra.mxu0 0.0
    %4902 = vmatprep.subr.mxu0 0.0
    %4903 = vmatpush2.msra.mxu0 0.0
    %4904 = vmatprep.subr.mxu0 0.0
    %4905 = vmatpush2.msra.mxu0 0.0
    %4906 = vmatprep.subr.mxu0 0.0
    %4907 = vmatpush2.msra.mxu0 0.0
    %4908 = vmatprep.subr.mxu0 0.0
    %4909 = vmatpush2.msra.mxu0 0.0
    %4910 = vmatprep.subr.mxu0 0.0
    %4911 = vmatpush2.msra.mxu0 0.0
    %4912 = vmatprep.subr.mxu0 0.0
    %4913 = vmatpush2.msra.mxu0 0.0
    %4914 = vmatprep.subr.mxu0 0.0
    %4915 = vmatpush2.msra.mxu0 0.0
    %4916 = vmatprep.subr.mxu0 0.0
    %4917 = vmatpush2.msra.mxu0 0.0
    %4918 = vmatprep.subr.mxu0 0.0
    %4919 = vmatpush2.msra.mxu0 0.0
    %4920 = vmatprep.subr.mxu0 0.0
    %4921 = vmatpush2.msra.mxu0 0.0
    %4922 = vmatprep.mubr.f32.mxu0 0.0
    %4923 = vmatmul.mubr.f32.gmra.mxu0 %v4856
    %v4924 = vpop.f32.mrf.mxu0
    %v4925 = vadd.f32 %v4852, %v4924
    %v4926 = vpop.f32.mrf.mxu0
    %4927 = vdwg.mxu0
    %4928 = vmatprep.subr.mxu0 0.0
    %4929 = vmatpush1.msra.mxu0 0.0
    %4930 = vmatprep.subr.mxu0 0.0
    %4931 = vmatpush1.msra.mxu0 0.0
    %4932 = vmatprep.subr.mxu0 0.0
    %4933 = vmatpush1.msra.mxu0 0.0
    %4934 = vmatprep.subr.mxu0 0.0
    %4935 = vmatpush1.msra.mxu0 0.0
    %4936 = vmatprep.subr.mxu0 0.0
    %4937 = vmatpush1.msra.mxu0 0.0
    %4938 = vmatprep.subr.mxu0 0.0
    %4939 = vmatpush1.msra.mxu0 0.0
    %4940 = vmatprep.subr.mxu0 0.0
    %4941 = vmatpush1.msra.mxu0 0.0
    %4942 = vmatprep.subr.mxu0 0.0
    %4943 = vmatpush1.msra.mxu0 0.0
    %4944 = vmatprep.subr.mxu0 0.0
    %4945 = vmatpush1.msra.mxu0 0.0
    %4946 = vmatprep.subr.mxu0 0.0
    %4947 = vmatpush1.msra.mxu0 0.0
    %4948 = vmatprep.subr.mxu0 0.0
    %4949 = vmatpush1.msra.mxu0 0.0
    %4950 = vmatprep.subr.mxu0 0.0
    %4951 = vmatpush1.msra.mxu0 0.0
    %4952 = vmatprep.subr.mxu0 0.0
    %4953 = vmatpush1.msra.mxu0 %v806
    %4954 = vmatprep.subr.mxu0 0.0
    %4955 = vmatpush1.msra.mxu0 %v805
    %4956 = vmatprep.subr.mxu0 0.0
    %4957 = vmatpush1.msra.mxu0 %v804
    %4958 = vmatprep.subr.mxu0 0.0
    %4959 = vmatpush1.msra.mxu0 %v803
    %4960 = vmatprep.subr.mxu0 0.0
    %4961 = vmatpush2.msra.mxu0 0.0
    %4962 = vmatprep.subr.mxu0 0.0
    %4963 = vmatpush2.msra.mxu0 0.0
    %4964 = vmatprep.subr.mxu0 0.0
    %4965 = vmatpush2.msra.mxu0 0.0
    %4966 = vmatprep.subr.mxu0 0.0
    %4967 = vmatpush2.msra.mxu0 0.0
    %4968 = vmatprep.subr.mxu0 0.0
    %4969 = vmatpush2.msra.mxu0 0.0
    %4970 = vmatprep.subr.mxu0 0.0
    %4971 = vmatpush2.msra.mxu0 0.0
    %4972 = vmatprep.subr.mxu0 0.0
    %4973 = vmatpush2.msra.mxu0 0.0
    %4974 = vmatprep.subr.mxu0 0.0
    %4975 = vmatpush2.msra.mxu0 0.0
    %4976 = vmatprep.subr.mxu0 0.0
    %4977 = vmatpush2.msra.mxu0 0.0
    %4978 = vmatprep.subr.mxu0 0.0
    %4979 = vmatpush2.msra.mxu0 0.0
    %4980 = vmatprep.subr.mxu0 0.0
    %4981 = vmatpush2.msra.mxu0 0.0
    %4982 = vmatprep.subr.mxu0 0.0
    %4983 = vmatpush2.msra.mxu0 0.0
    %4984 = vmatprep.subr.mxu0 0.0
    %4985 = vmatpush2.msra.mxu0 0.0
    %4986 = vmatprep.subr.mxu0 0.0
    %4987 = vmatpush2.msra.mxu0 0.0
    %4988 = vmatprep.subr.mxu0 0.0
    %4989 = vmatpush2.msra.mxu0 0.0
    %4990 = vmatprep.subr.mxu0 0.0
    %4991 = vmatpush2.msra.mxu0 0.0
    %4992 = vmatprep.mubr.f32.mxu0 0.0
    %4993 = vmatmul.mubr.f32.gmra.mxu0 %v4349
    %v4994 = vpop.f32.mrf.mxu0
    %v4995 = vadd.f32 0.0, %v4994
    %v4996 = vpop.f32.mrf.mxu0
    %4997 = vdwg.mxu0
    %v4998 = vadd.f32 %v4925, %v4995
    %v4999 = vadd.f32 %v4998, %v883
    %v5000 = vxor.u32 %v4999, 2147483648
    %v5001 = vmul.f32 %v5000, 1.442695
    %v5002 = vpow.pop %v5001
    %v5003 = vadd.f32 %v5002, 1.0
    %v5004 = vrcp.pop %v5003
    %v5005 = vmul.f32 1.0, %v5004
    %v5006 = vtanh.pop %v4999
    %v5007 = vmul.f32 %v5005, %v4199
    %5009 = vrot.lane.b32.xlu0 %v5006, 64
    %v5010 = vpop.permute.xlu0 %5009
    %v5012 = vmul.f32 %v5005, %v5010
    %5014 = vrot.lane.b32.xlu0 %v5012, 32
    %v5015 = vpop.permute.xlu0 %5014
    %v5017 = vadd.f32 %v5007, %v5015
    %v5018 = vtanh.pop %v5017
    %5020 = vrot.lane.b32.xlu0 %v5018, 64
    %v5021 = vpop.permute.xlu0 %5020
    %v5023 = vmul.f32 %v5005, %v5021
    %5024 = vmatprep.subr.mxu0 0.0
    %5025 = vmatpush1.msra.mxu0 0.0
    %5026 = vmatprep.subr.mxu0 0.0
    %5027 = vmatpush1.msra.mxu0 0.0
    %5028 = vmatprep.subr.mxu0 0.0
    %5029 = vmatpush1.msra.mxu0 0.0
    %5030 = vmatprep.subr.mxu0 0.0
    %5031 = vmatpush1.msra.mxu0 0.0
    %5032 = vmatprep.subr.mxu0 0.0
    %5033 = vmatpush1.msra.mxu0 0.0
    %5034 = vmatprep.subr.mxu0 0.0
    %5035 = vmatpush1.msra.mxu0 0.0
    %5036 = vmatprep.subr.mxu0 0.0
    %5037 = vmatpush1.msra.mxu0 0.0
    %5038 = vmatprep.subr.mxu0 0.0
    %5039 = vmatpush1.msra.mxu0 0.0
    %5040 = vmatprep.subr.mxu0 0.0
    %5041 = vmatpush1.msra.mxu0 0.0
    %5042 = vmatprep.subr.mxu0 0.0
    %5043 = vmatpush1.msra.mxu0 0.0
    %5044 = vmatprep.subr.mxu0 0.0
    %5045 = vmatpush1.msra.mxu0 0.0
    %5046 = vmatprep.subr.mxu0 0.0
    %5047 = vmatpush1.msra.mxu0 0.0
    %5048 = vmatprep.subr.mxu0 0.0
    %5049 = vmatpush1.msra.mxu0 %v921
    %5050 = vmatprep.subr.mxu0 0.0
    %5051 = vmatpush1.msra.mxu0 %v920
    %5052 = vmatprep.subr.mxu0 0.0
    %5053 = vmatpush1.msra.mxu0 %v919
    %5054 = vmatprep.subr.mxu0 0.0
    %5055 = vmatpush1.msra.mxu0 %v918
    %5056 = vmatprep.subr.mxu0 0.0
    %5057 = vmatpush2.msra.mxu0 0.0
    %5058 = vmatprep.subr.mxu0 0.0
    %5059 = vmatpush2.msra.mxu0 0.0
    %5060 = vmatprep.subr.mxu0 0.0
    %5061 = vmatpush2.msra.mxu0 0.0
    %5062 = vmatprep.subr.mxu0 0.0
    %5063 = vmatpush2.msra.mxu0 0.0
    %5064 = vmatprep.subr.mxu0 0.0
    %5065 = vmatpush2.msra.mxu0 0.0
    %5066 = vmatprep.subr.mxu0 0.0
    %5067 = vmatpush2.msra.mxu0 0.0
    %5068 = vmatprep.subr.mxu0 0.0
    %5069 = vmatpush2.msra.mxu0 0.0
    %5070 = vmatprep.subr.mxu0 0.0
    %5071 = vmatpush2.msra.mxu0 0.0
    %5072 = vmatprep.subr.mxu0 0.0
    %5073 = vmatpush2.msra.mxu0 0.0
    %5074 = vmatprep.subr.mxu0 0.0
    %5075 = vmatpush2.msra.mxu0 0.0
    %5076 = vmatprep.subr.mxu0 0.0
    %5077 = vmatpush2.msra.mxu0 0.0
    %5078 = vmatprep.subr.mxu0 0.0
    %5079 = vmatpush2.msra.mxu0 0.0
    %5080 = vmatprep.subr.mxu0 0.0
    %5081 = vmatpush2.msra.mxu0 0.0
    %5082 = vmatprep.subr.mxu0 0.0
    %5083 = vmatpush2.msra.mxu0 0.0
    %5084 = vmatprep.subr.mxu0 0.0
    %5085 = vmatpush2.msra.mxu0 0.0
    %5086 = vmatprep.subr.mxu0 0.0
    %5087 = vmatpush2.msra.mxu0 0.0
    %5088 = vmatprep.mubr.f32.mxu0 0.0
    %5089 = vmatmul.mubr.f32.gmra.mxu0 %v4783
    %v5090 = vpop.f32.mrf.mxu0
    %v5091 = vadd.f32 0.0, %v5090
    %v5092 = vpop.f32.mrf.mxu0
    %5093 = vdwg.mxu0
    %5094 = vmatprep.subr.mxu0 0.0
    %5095 = vmatpush1.msra.mxu0 0.0
    %5096 = vmatprep.subr.mxu0 0.0
    %5097 = vmatpush1.msra.mxu0 0.0
    %5098 = vmatprep.subr.mxu0 0.0
    %5099 = vmatpush1.msra.mxu0 0.0
    %5100 = vmatprep.subr.mxu0 0.0
    %5101 = vmatpush1.msra.mxu0 0.0
    %5102 = vmatprep.subr.mxu0 0.0
    %5103 = vmatpush1.msra.mxu0 0.0
    %5104 = vmatprep.subr.mxu0 0.0
    %5105 = vmatpush1.msra.mxu0 0.0
    %5106 = vmatprep.subr.mxu0 0.0
    %5107 = vmatpush1.msra.mxu0 0.0
    %5108 = vmatprep.subr.mxu0 0.0
    %5109 = vmatpush1.msra.mxu0 0.0
    %5110 = vmatprep.subr.mxu0 0.0
    %5111 = vmatpush1.msra.mxu0 0.0
    %5112 = vmatprep.subr.mxu0 0.0
    %5113 = vmatpush1.msra.mxu0 0.0
    %5114 = vmatprep.subr.mxu0 0.0
    %5115 = vmatpush1.msra.mxu0 0.0
    %5116 = vmatprep.subr.mxu0 0.0
    %5117 = vmatpush1.msra.mxu0 0.0
    %5118 = vmatprep.subr.mxu0 0.0
    %5119 = vmatpush1.msra.mxu0 %v917
    %5120 = vmatprep.subr.mxu0 0.0
    %5121 = vmatpush1.msra.mxu0 %v916
    %5122 = vmatprep.subr.mxu0 0.0
    %5123 = vmatpush1.msra.mxu0 %v915
    %5124 = vmatprep.subr.mxu0 0.0
    %5125 = vmatpush1.msra.mxu0 %v914
    %5126 = vmatprep.subr.mxu0 0.0
    %5127 = vmatpush2.msra.mxu0 0.0
    %5128 = vmatprep.subr.mxu0 0.0
    %5129 = vmatpush2.msra.mxu0 0.0
    %5130 = vmatprep.subr.mxu0 0.0
    %5131 = vmatpush2.msra.mxu0 0.0
    %5132 = vmatprep.subr.mxu0 0.0
    %5133 = vmatpush2.msra.mxu0 0.0
    %5134 = vmatprep.subr.mxu0 0.0
    %5135 = vmatpush2.msra.mxu0 0.0
    %5136 = vmatprep.subr.mxu0 0.0
    %5137 = vmatpush2.msra.mxu0 0.0
    %5138 = vmatprep.subr.mxu0 0.0
    %5139 = vmatpush2.msra.mxu0 0.0
    %5140 = vmatprep.subr.mxu0 0.0
    %5141 = vmatpush2.msra.mxu0 0.0
    %5142 = vmatprep.subr.mxu0 0.0
    %5143 = vmatpush2.msra.mxu0 0.0
    %5144 = vmatprep.subr.mxu0 0.0
    %5145 = vmatpush2.msra.mxu0 0.0
    %5146 = vmatprep.subr.mxu0 0.0
    %5147 = vmatpush2.msra.mxu0 0.0
    %5148 = vmatprep.subr.mxu0 0.0
    %5149 = vmatpush2.msra.mxu0 0.0
    %5150 = vmatprep.subr.mxu0 0.0
    %5151 = vmatpush2.msra.mxu0 0.0
    %5152 = vmatprep.subr.mxu0 0.0
    %5153 = vmatpush2.msra.mxu0 0.0
    %5154 = vmatprep.subr.mxu0 0.0
    %5155 = vmatpush2.msra.mxu0 0.0
    %5156 = vmatprep.subr.mxu0 0.0
    %5157 = vmatpush2.msra.mxu0 0.0
    %5158 = vmatprep.mubr.f32.mxu0 0.0
    %5159 = vmatmul.mubr.f32.gmra.mxu0 %v4856
    %v5160 = vpop.f32.mrf.mxu0
    %v5161 = vadd.f32 %v5091, %v5160
    %v5162 = vpop.f32.mrf.mxu0
    %5163 = vdwg.mxu0
    %5165 = vrot.lane.b32.xlu0 %v5023, 32
    %v5166 = vpop.permute.xlu0 %5165
    %v5167 = vsel %vm116, %v5166, 0
    %5169 = vmatprep.subr.mxu0 0.0
    %5170 = vmatpush1.msra.mxu0 0.0
    %5171 = vmatprep.subr.mxu0 0.0
    %5172 = vmatpush1.msra.mxu0 0.0
    %5173 = vmatprep.subr.mxu0 0.0
    %5174 = vmatpush1.msra.mxu0 0.0
    %5175 = vmatprep.subr.mxu0 0.0
    %5176 = vmatpush1.msra.mxu0 0.0
    %5177 = vmatprep.subr.mxu0 0.0
    %5178 = vmatpush1.msra.mxu0 0.0
    %5179 = vmatprep.subr.mxu0 0.0
    %5180 = vmatpush1.msra.mxu0 0.0
    %5181 = vmatprep.subr.mxu0 0.0
    %5182 = vmatpush1.msra.mxu0 0.0
    %5183 = vmatprep.subr.mxu0 0.0
    %5184 = vmatpush1.msra.mxu0 0.0
    %5185 = vmatprep.subr.mxu0 0.0
    %5186 = vmatpush1.msra.mxu0 0.0
    %5187 = vmatprep.subr.mxu0 0.0
    %5188 = vmatpush1.msra.mxu0 0.0
    %5189 = vmatprep.subr.mxu0 0.0
    %5190 = vmatpush1.msra.mxu0 0.0
    %5191 = vmatprep.subr.mxu0 0.0
    %5192 = vmatpush1.msra.mxu0 0.0
    %5193 = vmatprep.subr.mxu0 0.0
    %5194 = vmatpush1.msra.mxu0 %v1065
    %5195 = vmatprep.subr.mxu0 0.0
    %5196 = vmatpush1.msra.mxu0 %v1064
    %5197 = vmatprep.subr.mxu0 0.0
    %5198 = vmatpush1.msra.mxu0 %v1063
    %5199 = vmatprep.subr.mxu0 0.0
    %5200 = vmatpush1.msra.mxu0 %v1062
    %5201 = vmatprep.subr.mxu0 0.0
    %5202 = vmatpush2.msra.mxu0 0.0
    %5203 = vmatprep.subr.mxu0 0.0
    %5204 = vmatpush2.msra.mxu0 0.0
    %5205 = vmatprep.subr.mxu0 0.0
    %5206 = vmatpush2.msra.mxu0 0.0
    %5207 = vmatprep.subr.mxu0 0.0
    %5208 = vmatpush2.msra.mxu0 0.0
    %5209 = vmatprep.subr.mxu0 0.0
    %5210 = vmatpush2.msra.mxu0 0.0
    %5211 = vmatprep.subr.mxu0 0.0
    %5212 = vmatpush2.msra.mxu0 0.0
    %5213 = vmatprep.subr.mxu0 0.0
    %5214 = vmatpush2.msra.mxu0 0.0
    %5215 = vmatprep.subr.mxu0 0.0
    %5216 = vmatpush2.msra.mxu0 0.0
    %5217 = vmatprep.subr.mxu0 0.0
    %5218 = vmatpush2.msra.mxu0 0.0
    %5219 = vmatprep.subr.mxu0 0.0
    %5220 = vmatpush2.msra.mxu0 0.0
    %5221 = vmatprep.subr.mxu0 0.0
    %5222 = vmatpush2.msra.mxu0 0.0
    %5223 = vmatprep.subr.mxu0 0.0
    %5224 = vmatpush2.msra.mxu0 0.0
    %5225 = vmatprep.subr.mxu0 0.0
    %5226 = vmatpush2.msra.mxu0 0.0
    %5227 = vmatprep.subr.mxu0 0.0
    %5228 = vmatpush2.msra.mxu0 0.0
    %5229 = vmatprep.subr.mxu0 0.0
    %5230 = vmatpush2.msra.mxu0 0.0
    %5231 = vmatprep.subr.mxu0 0.0
    %5232 = vmatpush2.msra.mxu0 0.0
    %5233 = vmatprep.mubr.f32.mxu0 0.0
    %5234 = vmatmul.mubr.f32.gmra.mxu0 %v5167
    %v5235 = vpop.f32.mrf.mxu0
    %v5236 = vadd.f32 0.0, %v5235
    %v5237 = vpop.f32.mrf.mxu0
    %5238 = vdwg.mxu0
    %v5239 = vadd.f32 %v5161, %v5236
    %v5240 = vadd.f32 %v5239, %v1147
    %v5241 = vsel %vm1150, %v5240, -inf
    %5242 = vmax.xlane.f32.xlu0 %v5241
    %v5243 = vpop.xlane.xlu0 %5242
    %vm5244 = vcmp.eq.f32.partialorder %v5240, %v5243
    %v5245 = vsel %vm5244, %v301, 32
    %v5246 = vsel %vm1150, %v5245, 2147483647
    %v5247 = vand.u32 %v5246, 65535
    %v5248 = vshra.s32 %v5246, 16
    %v5249 = vcvt.s32.f32 %v5247
    %v5250 = vcvt.s32.f32 %v5248
    %5251 = vmin.xlane.f32.xlu0 %v5250
    %v5252 = vpop.xlane.xlu0 %5251
    %vm5253 = vcmp.eq.f32.partialorder %v5250, %v5252
    %v5254 = vsel %vm5253, %v5249, inf
    %5255 = vmin.xlane.f32.xlu0 %v5254
    %v5256 = vpop.xlane.xlu0 %5255
    %v5257 = vcvt.f32.s32 %v5256
    %v5258 = vcvt.f32.s32 %v5252
    %v5259 = vshll.u32 %v5258, 16
    %v5260 = vadd.s32 %v5259, %v5257
    %vm5261 = vcmp.eq.s32.totalorder %v301, %v5260
    %v5262 = vsel %vm5261, 1, 0
    %v5263 = vcvt.s32.f32 %v5262
    %s5264 = scalar_lea.vmem %s1, 12
    %v5265 = vld [vmem:[%s5264] sm:$0x3]
    %v5266 = vsub.f32 %v5240, %v5243
    %v5267 = vmul.f32 %v5266, 1.442695
    %v5268 = vpow.pop %v5267
    %v5269 = vsel %vm1150, %v5268, 0.0
    %5270 = vadd.xlane.f32.xlu0 %v5269
    %v5271 = vpop.xlane.xlu0 %5270
    %v5272 = vlog2.pop %v5271
    %v5273 = vmul.f32 %v5272, 0.6931472
    %v5274 = vadd.f32 %v5243, %v5273
    %v5275 = vmul.f32 %v5240, %v5265
    %v5276 = vsel %vm1150, %v5275, 0.0
    %5277 = vadd.xlane.f32.xlu0 %v5276
    %v5278 = vpop.xlane.xlu0 %5277
    %v5279 = vsub.f32 1.0, %v5265
    %v5280 = vsub.f32 %v5274, %v5278
    %v5281 = vmul.f32 %v5280, %v5279
    %v5282 = vsel %vm289, %v5281, 0.0
    %v5283 = vrot.slane %v5282, 4
    %v5284 = vadd.f32 %v5282, %v5283
    %v5285 = vrot.slane %v5284, 2
    %v5286 = vadd.f32 %v5284, %v5285
    %v5287 = vrot.slane %v5286, 1
    %v5288 = vadd.f32 %v5286, %v5287
    %v5289 = vadd.f32 %v4471, %v5288
    %v5290 = vsel %vm289, %v5279, 0.0
    %v5291 = vrot.slane %v5290, 4
    %v5292 = vadd.f32 %v5290, %v5291
    %v5293 = vrot.slane %v5292, 2
    %v5294 = vadd.f32 %v5292, %v5293
    %v5295 = vrot.slane %v5294, 1
    %v5296 = vadd.f32 %v5294, %v5295
    %v5297 = vadd.f32 %v4479, %v5296
    %s5298 = sld [smem:[#allocation4 + $0x6]]
    %p5299 = scmp.ne.s32.totalorder %s5298, 0
    %s5300 = scalar_select %p5299, 1.0, 0.0
    %v5301 = vstv %s5300
    %v5302 = vmul.f32 %v5301, %v5265
    %s5303 = ssub.f32 1.0, %s5300
    %v5304 = vstv %s5303
    %v5305 = vmul.f32 %v5304, %v5263
    %v5306 = vadd.f32 %v5302, %v5305
    %5307 = vmatprep.subr.mxu0 0.0
    %5308 = vmatpush1.msra.mxu0 0.0
    %5309 = vmatprep.subr.mxu0 0.0
    %5310 = vmatpush1.msra.mxu0 0.0
    %5311 = vmatprep.subr.mxu0 0.0
    %5312 = vmatpush1.msra.mxu0 0.0
    %5313 = vmatprep.subr.mxu0 0.0
    %5314 = vmatpush1.msra.mxu0 0.0
    %5315 = vmatprep.subr.mxu0 0.0
    %5316 = vmatpush1.msra.mxu0 0.0
    %5317 = vmatprep.subr.mxu0 0.0
    %5318 = vmatpush1.msra.mxu0 0.0
    %5319 = vmatprep.subr.mxu0 0.0
    %5320 = vmatpush1.msra.mxu0 0.0
    %5321 = vmatprep.subr.mxu0 0.0
    %5322 = vmatpush1.msra.mxu0 0.0
    %5323 = vmatprep.subr.mxu0 0.0
    %5324 = vmatpush1.msra.mxu0 0.0
    %5325 = vmatprep.subr.mxu0 0.0
    %5326 = vmatpush1.msra.mxu0 0.0
    %5327 = vmatprep.subr.mxu0 0.0
    %5328 = vmatpush1.msra.mxu0 0.0
    %5329 = vmatprep.subr.mxu0 0.0
    %5330 = vmatpush1.msra.mxu0 0.0
    %5331 = vmatprep.subr.mxu0 0.0
    %5332 = vmatpush1.msra.mxu0 %v305
    %5333 = vmatprep.subr.mxu0 0.0
    %5334 = vmatpush1.msra.mxu0 %v304
    %5335 = vmatprep.subr.mxu0 0.0
    %5336 = vmatpush1.msra.mxu0 %v303
    %5337 = vmatprep.subr.mxu0 0.0
    %5338 = vmatpush1.msra.mxu0 %v302
    %5339 = vmatprep.subr.mxu0 0.0
    %5340 = vmatpush2.msra.mxu0 0.0
    %5341 = vmatprep.subr.mxu0 0.0
    %5342 = vmatpush2.msra.mxu0 0.0
    %5343 = vmatprep.subr.mxu0 0.0
    %5344 = vmatpush2.msra.mxu0 0.0
    %5345 = vmatprep.subr.mxu0 0.0
    %5346 = vmatpush2.msra.mxu0 0.0
    %5347 = vmatprep.subr.mxu0 0.0
    %5348 = vmatpush2.msra.mxu0 0.0
    %5349 = vmatprep.subr.mxu0 0.0
    %5350 = vmatpush2.msra.mxu0 0.0
    %5351 = vmatprep.subr.mxu0 0.0
    %5352 = vmatpush2.msra.mxu0 0.0
    %5353 = vmatprep.subr.mxu0 0.0
    %5354 = vmatpush2.msra.mxu0 0.0
    %5355 = vmatprep.subr.mxu0 0.0
    %5356 = vmatpush2.msra.mxu0 0.0
    %5357 = vmatprep.subr.mxu0 0.0
    %5358 = vmatpush2.msra.mxu0 0.0
    %5359 = vmatprep.subr.mxu0 0.0
    %5360 = vmatpush2.msra.mxu0 0.0
    %5361 = vmatprep.subr.mxu0 0.0
    %5362 = vmatpush2.msra.mxu0 0.0
    %5363 = vmatprep.subr.mxu0 0.0
    %5364 = vmatpush2.msra.mxu0 0.0
    %5365 = vmatprep.subr.mxu0 0.0
    %5366 = vmatpush2.msra.mxu0 0.0
    %5367 = vmatprep.subr.mxu0 0.0
    %5368 = vmatpush2.msra.mxu0 0.0
    %5369 = vmatprep.subr.mxu0 0.0
    %5370 = vmatpush2.msra.mxu0 0.0
    %5371 = vmatprep.mubr.f32.mxu0 0.0
    %5372 = vmatmul.mubr.f32.gmra.mxu0 %v5167
    %v5373 = vpop.f32.mrf.mxu0
    %v5374 = vadd.f32 0.0, %v5373
    %v5375 = vpop.f32.mrf.mxu0
    %5376 = vdwg.mxu0
    %v5379 = vunpack.c.l.s4 1966171168
    %v5380 = vunpack.c.0.s8 %v5379
    %v5381 = vlaneseq
    %v5382 = vshrl.u32 %v5381, 7
    %v5383 = vsub.s32 %v5380, %v5382
    %v5384 = vrot.slane %v5374, %v5383
    %v5385 = vcombine.high %v5384, %v5384
    %v5387 = vunpack.c.l.s4 1966171168
    %v5388 = vunpack.c.0.s8 %v5387
    %v5389 = vlaneseq
    %v5390 = vshrl.u32 %v5389, 7
    %v5391 = vsub.s32 %v5388, %v5390
    %v5392 = vrot.slane %v5384, %v5391
    %v5394 = vunpack.c.l.s4 1966171168
    %v5395 = vunpack.c.0.s8 %v5394
    %v5396 = vlaneseq
    %v5397 = vshrl.u32 %v5396, 7
    %v5398 = vsub.s32 %v5395, %v5397
    %v5399 = vrot.slane %v5385, %v5398
    %v5400 = vlaneseq
    %v5401 = vshrl.u32 %v5400, 7
    %v5402 = vsub.s32 0, %v5401
    %v5403 = vrot.slane %v5392, %v5402
    %v5404 = vlaneseq
    %v5405 = vshrl.u32 %v5404, 7
    %v5406 = vsub.s32 0, %v5405
    %v5407 = vrot.slane %v5399, %v5406
    %v5410 = vadd.f32 %v379, %v5403
    %v5411 = vadd.f32 %v380, %v5403
    %v5412 = vadd.f32 %v381, %v5407
    %v5413 = vadd.f32 %v382, %v5407
    %v5414 = vtanh.pop %v5410
    %v5415 = vtanh.pop %v5411
    %v5416 = vtanh.pop %v5412
    %v5417 = vtanh.pop %v5413
    %v5418 = vmul.f32 %v5414, %v429
    %v5419 = vmul.f32 %v5415, %v429
    %v5420 = vmul.f32 %v5416, %v429
    %v5421 = vmul.f32 %v5417, %v429
    %v5422 = vsel %vm116, %v5418, 0.0
    %5423 = vadd.xlane.f32.xlu0 %v5422
    %v5424 = vpop.xlane.xlu0 %5423
    %v5425 = vsel %vm116, %v5419, 0.0
    %5426 = vadd.xlane.f32.xlu0 %v5425
    %v5427 = vpop.xlane.xlu0 %5426
    %v5428 = vsel %vm116, %v5420, 0.0
    %5429 = vadd.xlane.f32.xlu0 %v5428
    %v5430 = vpop.xlane.xlu0 %5429
    %v5431 = vsel %vm116, %v5421, 0.0
    %5432 = vadd.xlane.f32.xlu0 %v5431
    %v5433 = vpop.xlane.xlu0 %5432
    %v5434 = vadd.f32 %v5424, %v455
    %v5435 = vadd.f32 %v5427, %v459
    %v5436 = vadd.f32 %v5430, %v466
    %v5437 = vadd.f32 %v5433, %v470
    %5442 = vset.pattern.permute.xlu0 0
    %5443 = vperm.xlu0 %5442, %v5434
    %v5444 = vpop.permute.xlu0 %5443
    %5445 = vset.pattern.permute.xlu0 0
    %5446 = vperm.xlu0 %5445, %v5435
    %v5447 = vpop.permute.xlu0 %5446
    %5448 = vset.pattern.permute.xlu0 0
    %5449 = vperm.xlu0 %5448, %v5436
    %v5450 = vpop.permute.xlu0 %5449
    %5451 = vset.pattern.permute.xlu0 0
    %5452 = vperm.xlu0 %5451, %v5437
    %v5453 = vpop.permute.xlu0 %5452
    %v5454 = vlaneseq
    %v5455 = vshrl.u32 %v5454, 7
    %v5456 = vsub.s32 %v301, %v5455
    %v5457 = vrot.slane %v5444, %v5456
    %v5458 = vlaneseq
    %v5459 = vshrl.u32 %v5458, 7
    %v5460 = vsub.s32 %v499, %v5459
    %v5461 = vrot.slane %v5447, %v5460
    %v5462 = vsel %vm504, %v5461, %v5457
    %v5463 = vlaneseq
    %v5464 = vshrl.u32 %v5463, 7
    %v5465 = vsub.s32 %v301, %v5464
    %v5466 = vrot.slane %v5450, %v5465
    %v5467 = vlaneseq
    %v5468 = vshrl.u32 %v5467, 7
    %v5469 = vsub.s32 %v499, %v5468
    %v5470 = vrot.slane %v5453, %v5469
    %v5471 = vsel %vm504, %v5470, %v5466
    %v5472 = vsel %vm515, %v5471, %v5462
    %v5474 = vsel %vm518, %v5472, -inf
    %5475 = vmax.xlane.f32.xlu0 %v5474
    %v5476 = vpop.xlane.xlu0 %5475
    %v5478 = vlaneseq
    %v5479 = vshrl.u32 %v5478, 7
    %v5480 = vsub.s32 0, %v5479
    %v5481 = vrot.slane %v5476, %v5480
    %v5482 = vlaneseq
    %v5483 = vshrl.u32 %v5482, 7
    %v5484 = vsub.s32 1, %v5483
    %v5485 = vrot.slane %v5476, %v5484
    %v5488 = vsub.f32 %v5434, %v5481
    %v5489 = vsub.f32 %v5435, %v5481
    %v5490 = vsub.f32 %v5436, %v5485
    %v5491 = vsub.f32 %v5437, %v5485
    %v5492 = vmul.f32 %v5488, 1.442695
    %v5493 = vpow.pop %v5492
    %v5494 = vmul.f32 %v5489, 1.442695
    %v5495 = vpow.pop %v5494
    %v5496 = vmul.f32 %v5490, 1.442695
    %v5497 = vpow.pop %v5496
    %v5498 = vmul.f32 %v5491, 1.442695
    %v5499 = vpow.pop %v5498
    %5504 = vset.pattern.permute.xlu0 0
    %5505 = vperm.xlu0 %5504, %v5493
    %v5506 = vpop.permute.xlu0 %5505
    %5507 = vset.pattern.permute.xlu0 0
    %5508 = vperm.xlu0 %5507, %v5495
    %v5509 = vpop.permute.xlu0 %5508
    %5510 = vset.pattern.permute.xlu0 0
    %5511 = vperm.xlu0 %5510, %v5497
    %v5512 = vpop.permute.xlu0 %5511
    %5513 = vset.pattern.permute.xlu0 0
    %5514 = vperm.xlu0 %5513, %v5499
    %v5515 = vpop.permute.xlu0 %5514
    %v5516 = vlaneseq
    %v5517 = vshrl.u32 %v5516, 7
    %v5518 = vsub.s32 %v301, %v5517
    %v5519 = vrot.slane %v5506, %v5518
    %v5520 = vlaneseq
    %v5521 = vshrl.u32 %v5520, 7
    %v5522 = vsub.s32 %v499, %v5521
    %v5523 = vrot.slane %v5509, %v5522
    %v5524 = vsel %vm504, %v5523, %v5519
    %v5525 = vlaneseq
    %v5526 = vshrl.u32 %v5525, 7
    %v5527 = vsub.s32 %v301, %v5526
    %v5528 = vrot.slane %v5512, %v5527
    %v5529 = vlaneseq
    %v5530 = vshrl.u32 %v5529, 7
    %v5531 = vsub.s32 %v499, %v5530
    %v5532 = vrot.slane %v5515, %v5531
    %v5533 = vsel %vm504, %v5532, %v5528
    %v5534 = vsel %vm515, %v5533, %v5524
    %v5536 = vsel %vm518, %v5534, 0.0
    %5537 = vadd.xlane.f32.xlu0 %v5536
    %v5538 = vpop.xlane.xlu0 %5537
    %v5540 = vlaneseq
    %v5541 = vshrl.u32 %v5540, 7
    %v5542 = vsub.s32 0, %v5541
    %v5543 = vrot.slane %v5538, %v5542
    %v5544 = vlaneseq
    %v5545 = vshrl.u32 %v5544, 7
    %v5546 = vsub.s32 1, %v5545
    %v5547 = vrot.slane %v5538, %v5546
    %v5550 = vrcp.pop %v5543
    %v5551 = vmul.f32 %v5493, %v5550
    %v5552 = vmul.f32 %v5495, %v5550
    %v5553 = vrcp.pop %v5547
    %v5554 = vmul.f32 %v5497, %v5553
    %v5555 = vmul.f32 %v5499, %v5553
    %5557 = vset.pattern.permute.xlu0 0
    %5558 = vperm.xlu0 %5557, %v5551
    %v5559 = vpop.permute.xlu0 %5558
    %5562 = vset.pattern.permute.xlu0 0
    %5563 = vperm.xlu0 %5562, %v5552
    %v5564 = vpop.permute.xlu0 %5563
    %5567 = vset.pattern.permute.xlu0 0
    %5568 = vperm.xlu0 %5567, %v5554
    %v5569 = vpop.permute.xlu0 %5568
    %5572 = vset.pattern.permute.xlu0 0
    %5573 = vperm.xlu0 %5572, %v5555
    %v5574 = vpop.permute.xlu0 %5573
    %v5576 = vmul.f32 %v5559, %v601
    %v5577 = vmul.f32 %v5564, %v602
    %v5578 = vmul.f32 %v5569, %v603
    %v5579 = vmul.f32 %v5574, %v604
    %v5580 = vsel %vm116, %v5576, 0.0
    %v5581 = vsel %vm116, %v5577, 0.0
    %v5582 = vadd.f32 %v5580, %v5581
    %v5583 = vrot.slane %v5582, 4
    %v5584 = vadd.f32 %v5582, %v5583
    %v5585 = vrot.slane %v5584, 2
    %v5586 = vadd.f32 %v5584, %v5585
    %v5587 = vrot.slane %v5586, 1
    %v5588 = vadd.f32 %v5586, %v5587
    %v5589 = vsel %vm116, %v5578, 0.0
    %v5590 = vsel %vm116, %v5579, 0.0
    %v5591 = vadd.f32 %v5589, %v5590
    %v5592 = vrot.slane %v5591, 4
    %v5593 = vadd.f32 %v5591, %v5592
    %v5594 = vrot.slane %v5593, 2
    %v5595 = vadd.f32 %v5593, %v5594
    %v5596 = vrot.slane %v5595, 1
    %v5597 = vadd.f32 %v5595, %v5596
    %v5600 = vsel %vm515, %v5597, %v5588
    %v5601 = vsel %vm116, %v5600, 0
    %5603 = vmatprep.subr.mxu0 0.0
    %5604 = vmatpush1.msra.mxu0 0.0
    %5605 = vmatprep.subr.mxu0 0.0
    %5606 = vmatpush1.msra.mxu0 0.0
    %5607 = vmatprep.subr.mxu0 0.0
    %5608 = vmatpush1.msra.mxu0 0.0
    %5609 = vmatprep.subr.mxu0 0.0
    %5610 = vmatpush1.msra.mxu0 0.0
    %5611 = vmatprep.subr.mxu0 0.0
    %5612 = vmatpush1.msra.mxu0 0.0
    %5613 = vmatprep.subr.mxu0 0.0
    %5614 = vmatpush1.msra.mxu0 0.0
    %5615 = vmatprep.subr.mxu0 0.0
    %5616 = vmatpush1.msra.mxu0 0.0
    %5617 = vmatprep.subr.mxu0 0.0
    %5618 = vmatpush1.msra.mxu0 0.0
    %5619 = vmatprep.subr.mxu0 0.0
    %5620 = vmatpush1.msra.mxu0 0.0
    %5621 = vmatprep.subr.mxu0 0.0
    %5622 = vmatpush1.msra.mxu0 0.0
    %5623 = vmatprep.subr.mxu0 0.0
    %5624 = vmatpush1.msra.mxu0 0.0
    %5625 = vmatprep.subr.mxu0 0.0
    %5626 = vmatpush1.msra.mxu0 0.0
    %5627 = vmatprep.subr.mxu0 0.0
    %5628 = vmatpush1.msra.mxu0 %v654
    %5629 = vmatprep.subr.mxu0 0.0
    %5630 = vmatpush1.msra.mxu0 %v653
    %5631 = vmatprep.subr.mxu0 0.0
    %5632 = vmatpush1.msra.mxu0 %v652
    %5633 = vmatprep.subr.mxu0 0.0
    %5634 = vmatpush1.msra.mxu0 %v651
    %5635 = vmatprep.subr.mxu0 0.0
    %5636 = vmatpush2.msra.mxu0 0.0
    %5637 = vmatprep.subr.mxu0 0.0
    %5638 = vmatpush2.msra.mxu0 0.0
    %5639 = vmatprep.subr.mxu0 0.0
    %5640 = vmatpush2.msra.mxu0 0.0
    %5641 = vmatprep.subr.mxu0 0.0
    %5642 = vmatpush2.msra.mxu0 0.0
    %5643 = vmatprep.subr.mxu0 0.0
    %5644 = vmatpush2.msra.mxu0 0.0
    %5645 = vmatprep.subr.mxu0 0.0
    %5646 = vmatpush2.msra.mxu0 0.0
    %5647 = vmatprep.subr.mxu0 0.0
    %5648 = vmatpush2.msra.mxu0 0.0
    %5649 = vmatprep.subr.mxu0 0.0
    %5650 = vmatpush2.msra.mxu0 0.0
    %5651 = vmatprep.subr.mxu0 0.0
    %5652 = vmatpush2.msra.mxu0 0.0
    %5653 = vmatprep.subr.mxu0 0.0
    %5654 = vmatpush2.msra.mxu0 0.0
    %5655 = vmatprep.subr.mxu0 0.0
    %5656 = vmatpush2.msra.mxu0 0.0
    %5657 = vmatprep.subr.mxu0 0.0
    %5658 = vmatpush2.msra.mxu0 0.0
    %5659 = vmatprep.subr.mxu0 0.0
    %5660 = vmatpush2.msra.mxu0 0.0
    %5661 = vmatprep.subr.mxu0 0.0
    %5662 = vmatpush2.msra.mxu0 0.0
    %5663 = vmatprep.subr.mxu0 0.0
    %5664 = vmatpush2.msra.mxu0 0.0
    %5665 = vmatprep.subr.mxu0 0.0
    %5666 = vmatpush2.msra.mxu0 0.0
    %5667 = vmatprep.mubr.f32.mxu0 0.0
    %5668 = vmatmul.mubr.f32.gmra.mxu0 %v5601
    %v5669 = vpop.f32.mrf.mxu0
    %v5670 = vadd.f32 0.0, %v5669
    %v5671 = vpop.f32.mrf.mxu0
    %5672 = vdwg.mxu0
    %v5674 = vsel %vm116, %v5306, 0
    %5676 = vmatprep.subr.mxu0 0.0
    %5677 = vmatpush1.msra.mxu0 0.0
    %5678 = vmatprep.subr.mxu0 0.0
    %5679 = vmatpush1.msra.mxu0 0.0
    %5680 = vmatprep.subr.mxu0 0.0
    %5681 = vmatpush1.msra.mxu0 0.0
    %5682 = vmatprep.subr.mxu0 0.0
    %5683 = vmatpush1.msra.mxu0 0.0
    %5684 = vmatprep.subr.mxu0 0.0
    %5685 = vmatpush1.msra.mxu0 0.0
    %5686 = vmatprep.subr.mxu0 0.0
    %5687 = vmatpush1.msra.mxu0 0.0
    %5688 = vmatprep.subr.mxu0 0.0
    %5689 = vmatpush1.msra.mxu0 0.0
    %5690 = vmatprep.subr.mxu0 0.0
    %5691 = vmatpush1.msra.mxu0 0.0
    %5692 = vmatprep.subr.mxu0 0.0
    %5693 = vmatpush1.msra.mxu0 0.0
    %5694 = vmatprep.subr.mxu0 0.0
    %5695 = vmatpush1.msra.mxu0 0.0
    %5696 = vmatprep.subr.mxu0 0.0
    %5697 = vmatpush1.msra.mxu0 0.0
    %5698 = vmatprep.subr.mxu0 0.0
    %5699 = vmatpush1.msra.mxu0 0.0
    %5700 = vmatprep.subr.mxu0 0.0
    %5701 = vmatpush1.msra.mxu0 %v650
    %5702 = vmatprep.subr.mxu0 0.0
    %5703 = vmatpush1.msra.mxu0 %v649
    %5704 = vmatprep.subr.mxu0 0.0
    %5705 = vmatpush1.msra.mxu0 %v648
    %5706 = vmatprep.subr.mxu0 0.0
    %5707 = vmatpush1.msra.mxu0 %v647
    %5708 = vmatprep.subr.mxu0 0.0
    %5709 = vmatpush2.msra.mxu0 0.0
    %5710 = vmatprep.subr.mxu0 0.0
    %5711 = vmatpush2.msra.mxu0 0.0
    %5712 = vmatprep.subr.mxu0 0.0
    %5713 = vmatpush2.msra.mxu0 0.0
    %5714 = vmatprep.subr.mxu0 0.0
    %5715 = vmatpush2.msra.mxu0 0.0
    %5716 = vmatprep.subr.mxu0 0.0
    %5717 = vmatpush2.msra.mxu0 0.0
    %5718 = vmatprep.subr.mxu0 0.0
    %5719 = vmatpush2.msra.mxu0 0.0
    %5720 = vmatprep.subr.mxu0 0.0
    %5721 = vmatpush2.msra.mxu0 0.0
    %5722 = vmatprep.subr.mxu0 0.0
    %5723 = vmatpush2.msra.mxu0 0.0
    %5724 = vmatprep.subr.mxu0 0.0
    %5725 = vmatpush2.msra.mxu0 0.0
    %5726 = vmatprep.subr.mxu0 0.0
    %5727 = vmatpush2.msra.mxu0 0.0
    %5728 = vmatprep.subr.mxu0 0.0
    %5729 = vmatpush2.msra.mxu0 0.0
    %5730 = vmatprep.subr.mxu0 0.0
    %5731 = vmatpush2.msra.mxu0 0.0
    %5732 = vmatprep.subr.mxu0 0.0
    %5733 = vmatpush2.msra.mxu0 0.0
    %5734 = vmatprep.subr.mxu0 0.0
    %5735 = vmatpush2.msra.mxu0 0.0
    %5736 = vmatprep.subr.mxu0 0.0
    %5737 = vmatpush2.msra.mxu0 0.0
    %5738 = vmatprep.subr.mxu0 0.0
    %5739 = vmatpush2.msra.mxu0 0.0
    %5740 = vmatprep.mubr.f32.mxu0 0.0
    %5741 = vmatmul.mubr.f32.gmra.mxu0 %v5674
    %v5742 = vpop.f32.mrf.mxu0
    %v5743 = vadd.f32 %v5670, %v5742
    %v5744 = vpop.f32.mrf.mxu0
    %5745 = vdwg.mxu0
    %5746 = vmatprep.subr.mxu0 0.0
    %5747 = vmatpush1.msra.mxu0 0.0
    %5748 = vmatprep.subr.mxu0 0.0
    %5749 = vmatpush1.msra.mxu0 0.0
    %5750 = vmatprep.subr.mxu0 0.0
    %5751 = vmatpush1.msra.mxu0 0.0
    %5752 = vmatprep.subr.mxu0 0.0
    %5753 = vmatpush1.msra.mxu0 0.0
    %5754 = vmatprep.subr.mxu0 0.0
    %5755 = vmatpush1.msra.mxu0 0.0
    %5756 = vmatprep.subr.mxu0 0.0
    %5757 = vmatpush1.msra.mxu0 0.0
    %5758 = vmatprep.subr.mxu0 0.0
    %5759 = vmatpush1.msra.mxu0 0.0
    %5760 = vmatprep.subr.mxu0 0.0
    %5761 = vmatpush1.msra.mxu0 0.0
    %5762 = vmatprep.subr.mxu0 0.0
    %5763 = vmatpush1.msra.mxu0 0.0
    %5764 = vmatprep.subr.mxu0 0.0
    %5765 = vmatpush1.msra.mxu0 0.0
    %5766 = vmatprep.subr.mxu0 0.0
    %5767 = vmatpush1.msra.mxu0 0.0
    %5768 = vmatprep.subr.mxu0 0.0
    %5769 = vmatpush1.msra.mxu0 0.0
    %5770 = vmatprep.subr.mxu0 0.0
    %5771 = vmatpush1.msra.mxu0 %v806
    %5772 = vmatprep.subr.mxu0 0.0
    %5773 = vmatpush1.msra.mxu0 %v805
    %5774 = vmatprep.subr.mxu0 0.0
    %5775 = vmatpush1.msra.mxu0 %v804
    %5776 = vmatprep.subr.mxu0 0.0
    %5777 = vmatpush1.msra.mxu0 %v803
    %5778 = vmatprep.subr.mxu0 0.0
    %5779 = vmatpush2.msra.mxu0 0.0
    %5780 = vmatprep.subr.mxu0 0.0
    %5781 = vmatpush2.msra.mxu0 0.0
    %5782 = vmatprep.subr.mxu0 0.0
    %5783 = vmatpush2.msra.mxu0 0.0
    %5784 = vmatprep.subr.mxu0 0.0
    %5785 = vmatpush2.msra.mxu0 0.0
    %5786 = vmatprep.subr.mxu0 0.0
    %5787 = vmatpush2.msra.mxu0 0.0
    %5788 = vmatprep.subr.mxu0 0.0
    %5789 = vmatpush2.msra.mxu0 0.0
    %5790 = vmatprep.subr.mxu0 0.0
    %5791 = vmatpush2.msra.mxu0 0.0
    %5792 = vmatprep.subr.mxu0 0.0
    %5793 = vmatpush2.msra.mxu0 0.0
    %5794 = vmatprep.subr.mxu0 0.0
    %5795 = vmatpush2.msra.mxu0 0.0
    %5796 = vmatprep.subr.mxu0 0.0
    %5797 = vmatpush2.msra.mxu0 0.0
    %5798 = vmatprep.subr.mxu0 0.0
    %5799 = vmatpush2.msra.mxu0 0.0
    %5800 = vmatprep.subr.mxu0 0.0
    %5801 = vmatpush2.msra.mxu0 0.0
    %5802 = vmatprep.subr.mxu0 0.0
    %5803 = vmatpush2.msra.mxu0 0.0
    %5804 = vmatprep.subr.mxu0 0.0
    %5805 = vmatpush2.msra.mxu0 0.0
    %5806 = vmatprep.subr.mxu0 0.0
    %5807 = vmatpush2.msra.mxu0 0.0
    %5808 = vmatprep.subr.mxu0 0.0
    %5809 = vmatpush2.msra.mxu0 0.0
    %5810 = vmatprep.mubr.f32.mxu0 0.0
    %5811 = vmatmul.mubr.f32.gmra.mxu0 %v5167
    %v5812 = vpop.f32.mrf.mxu0
    %v5813 = vadd.f32 0.0, %v5812
    %v5814 = vpop.f32.mrf.mxu0
    %5815 = vdwg.mxu0
    %v5816 = vadd.f32 %v5743, %v5813
    %v5817 = vadd.f32 %v5816, %v883
    %v5818 = vxor.u32 %v5817, 2147483648
    %v5819 = vmul.f32 %v5818, 1.442695
    %v5820 = vpow.pop %v5819
    %v5821 = vadd.f32 %v5820, 1.0
    %v5822 = vrcp.pop %v5821
    %v5823 = vmul.f32 1.0, %v5822
    %v5824 = vtanh.pop %v5817
    %v5825 = vmul.f32 %v5823, %v5017
    %5827 = vrot.lane.b32.xlu0 %v5824, 64
    %v5828 = vpop.permute.xlu0 %5827
    %v5830 = vmul.f32 %v5823, %v5828
    %5832 = vrot.lane.b32.xlu0 %v5830, 32
    %v5833 = vpop.permute.xlu0 %5832
    %v5835 = vadd.f32 %v5825, %v5833
    %v5836 = vtanh.pop %v5835
    %5838 = vrot.lane.b32.xlu0 %v5836, 64
    %v5839 = vpop.permute.xlu0 %5838
    %v5841 = vmul.f32 %v5823, %v5839
    %5842 = vmatprep.subr.mxu0 0.0
    %5843 = vmatpush1.msra.mxu0 0.0
    %5844 = vmatprep.subr.mxu0 0.0
    %5845 = vmatpush1.msra.mxu0 0.0
    %5846 = vmatprep.subr.mxu0 0.0
    %5847 = vmatpush1.msra.mxu0 0.0
    %5848 = vmatprep.subr.mxu0 0.0
    %5849 = vmatpush1.msra.mxu0 0.0
    %5850 = vmatprep.subr.mxu0 0.0
    %5851 = vmatpush1.msra.mxu0 0.0
    %5852 = vmatprep.subr.mxu0 0.0
    %5853 = vmatpush1.msra.mxu0 0.0
    %5854 = vmatprep.subr.mxu0 0.0
    %5855 = vmatpush1.msra.mxu0 0.0
    %5856 = vmatprep.subr.mxu0 0.0
    %5857 = vmatpush1.msra.mxu0 0.0
    %5858 = vmatprep.subr.mxu0 0.0
    %5859 = vmatpush1.msra.mxu0 0.0
    %5860 = vmatprep.subr.mxu0 0.0
    %5861 = vmatpush1.msra.mxu0 0.0
    %5862 = vmatprep.subr.mxu0 0.0
    %5863 = vmatpush1.msra.mxu0 0.0
    %5864 = vmatprep.subr.mxu0 0.0
    %5865 = vmatpush1.msra.mxu0 0.0
    %5866 = vmatprep.subr.mxu0 0.0
    %5867 = vmatpush1.msra.mxu0 %v921
    %5868 = vmatprep.subr.mxu0 0.0
    %5869 = vmatpush1.msra.mxu0 %v920
    %5870 = vmatprep.subr.mxu0 0.0
    %5871 = vmatpush1.msra.mxu0 %v919
    %5872 = vmatprep.subr.mxu0 0.0
    %5873 = vmatpush1.msra.mxu0 %v918
    %5874 = vmatprep.subr.mxu0 0.0
    %5875 = vmatpush2.msra.mxu0 0.0
    %5876 = vmatprep.subr.mxu0 0.0
    %5877 = vmatpush2.msra.mxu0 0.0
    %5878 = vmatprep.subr.mxu0 0.0
    %5879 = vmatpush2.msra.mxu0 0.0
    %5880 = vmatprep.subr.mxu0 0.0
    %5881 = vmatpush2.msra.mxu0 0.0
    %5882 = vmatprep.subr.mxu0 0.0
    %5883 = vmatpush2.msra.mxu0 0.0
    %5884 = vmatprep.subr.mxu0 0.0
    %5885 = vmatpush2.msra.mxu0 0.0
    %5886 = vmatprep.subr.mxu0 0.0
    %5887 = vmatpush2.msra.mxu0 0.0
    %5888 = vmatprep.subr.mxu0 0.0
    %5889 = vmatpush2.msra.mxu0 0.0
    %5890 = vmatprep.subr.mxu0 0.0
    %5891 = vmatpush2.msra.mxu0 0.0
    %5892 = vmatprep.subr.mxu0 0.0
    %5893 = vmatpush2.msra.mxu0 0.0
    %5894 = vmatprep.subr.mxu0 0.0
    %5895 = vmatpush2.msra.mxu0 0.0
    %5896 = vmatprep.subr.mxu0 0.0
    %5897 = vmatpush2.msra.mxu0 0.0
    %5898 = vmatprep.subr.mxu0 0.0
    %5899 = vmatpush2.msra.mxu0 0.0
    %5900 = vmatprep.subr.mxu0 0.0
    %5901 = vmatpush2.msra.mxu0 0.0
    %5902 = vmatprep.subr.mxu0 0.0
    %5903 = vmatpush2.msra.mxu0 0.0
    %5904 = vmatprep.subr.mxu0 0.0
    %5905 = vmatpush2.msra.mxu0 0.0
    %5906 = vmatprep.mubr.f32.mxu0 0.0
    %5907 = vmatmul.mubr.f32.gmra.mxu0 %v5601
    %v5908 = vpop.f32.mrf.mxu0
    %v5909 = vadd.f32 0.0, %v5908
    %v5910 = vpop.f32.mrf.mxu0
    %5911 = vdwg.mxu0
    %5912 = vmatprep.subr.mxu0 0.0
    %5913 = vmatpush1.msra.mxu0 0.0
    %5914 = vmatprep.subr.mxu0 0.0
    %5915 = vmatpush1.msra.mxu0 0.0
    %5916 = vmatprep.subr.mxu0 0.0
    %5917 = vmatpush1.msra.mxu0 0.0
    %5918 = vmatprep.subr.mxu0 0.0
    %5919 = vmatpush1.msra.mxu0 0.0
    %5920 = vmatprep.subr.mxu0 0.0
    %5921 = vmatpush1.msra.mxu0 0.0
    %5922 = vmatprep.subr.mxu0 0.0
    %5923 = vmatpush1.msra.mxu0 0.0
    %5924 = vmatprep.subr.mxu0 0.0
    %5925 = vmatpush1.msra.mxu0 0.0
    %5926 = vmatprep.subr.mxu0 0.0
    %5927 = vmatpush1.msra.mxu0 0.0
    %5928 = vmatprep.subr.mxu0 0.0
    %5929 = vmatpush1.msra.mxu0 0.0
    %5930 = vmatprep.subr.mxu0 0.0
    %5931 = vmatpush1.msra.mxu0 0.0
    %5932 = vmatprep.subr.mxu0 0.0
    %5933 = vmatpush1.msra.mxu0 0.0
    %5934 = vmatprep.subr.mxu0 0.0
    %5935 = vmatpush1.msra.mxu0 0.0
    %5936 = vmatprep.subr.mxu0 0.0
    %5937 = vmatpush1.msra.mxu0 %v917
    %5938 = vmatprep.subr.mxu0 0.0
    %5939 = vmatpush1.msra.mxu0 %v916
    %5940 = vmatprep.subr.mxu0 0.0
    %5941 = vmatpush1.msra.mxu0 %v915
    %5942 = vmatprep.subr.mxu0 0.0
    %5943 = vmatpush1.msra.mxu0 %v914
    %5944 = vmatprep.subr.mxu0 0.0
    %5945 = vmatpush2.msra.mxu0 0.0
    %5946 = vmatprep.subr.mxu0 0.0
    %5947 = vmatpush2.msra.mxu0 0.0
    %5948 = vmatprep.subr.mxu0 0.0
    %5949 = vmatpush2.msra.mxu0 0.0
    %5950 = vmatprep.subr.mxu0 0.0
    %5951 = vmatpush2.msra.mxu0 0.0
    %5952 = vmatprep.subr.mxu0 0.0
    %5953 = vmatpush2.msra.mxu0 0.0
    %5954 = vmatprep.subr.mxu0 0.0
    %5955 = vmatpush2.msra.mxu0 0.0
    %5956 = vmatprep.subr.mxu0 0.0
    %5957 = vmatpush2.msra.mxu0 0.0
    %5958 = vmatprep.subr.mxu0 0.0
    %5959 = vmatpush2.msra.mxu0 0.0
    %5960 = vmatprep.subr.mxu0 0.0
    %5961 = vmatpush2.msra.mxu0 0.0
    %5962 = vmatprep.subr.mxu0 0.0
    %5963 = vmatpush2.msra.mxu0 0.0
    %5964 = vmatprep.subr.mxu0 0.0
    %5965 = vmatpush2.msra.mxu0 0.0
    %5966 = vmatprep.subr.mxu0 0.0
    %5967 = vmatpush2.msra.mxu0 0.0
    %5968 = vmatprep.subr.mxu0 0.0
    %5969 = vmatpush2.msra.mxu0 0.0
    %5970 = vmatprep.subr.mxu0 0.0
    %5971 = vmatpush2.msra.mxu0 0.0
    %5972 = vmatprep.subr.mxu0 0.0
    %5973 = vmatpush2.msra.mxu0 0.0
    %5974 = vmatprep.subr.mxu0 0.0
    %5975 = vmatpush2.msra.mxu0 0.0
    %5976 = vmatprep.mubr.f32.mxu0 0.0
    %5977 = vmatmul.mubr.f32.gmra.mxu0 %v5674
    %v5978 = vpop.f32.mrf.mxu0
    %v5979 = vadd.f32 %v5909, %v5978
    %v5980 = vpop.f32.mrf.mxu0
    %5981 = vdwg.mxu0
    %5983 = vrot.lane.b32.xlu0 %v5841, 32
    %v5984 = vpop.permute.xlu0 %5983
    %v5985 = vsel %vm116, %v5984, 0
    %5987 = vmatprep.subr.mxu0 0.0
    %5988 = vmatpush1.msra.mxu0 0.0
    %5989 = vmatprep.subr.mxu0 0.0
    %5990 = vmatpush1.msra.mxu0 0.0
    %5991 = vmatprep.subr.mxu0 0.0
    %5992 = vmatpush1.msra.mxu0 0.0
    %5993 = vmatprep.subr.mxu0 0.0
    %5994 = vmatpush1.msra.mxu0 0.0
    %5995 = vmatprep.subr.mxu0 0.0
    %5996 = vmatpush1.msra.mxu0 0.0
    %5997 = vmatprep.subr.mxu0 0.0
    %5998 = vmatpush1.msra.mxu0 0.0
    %5999 = vmatprep.subr.mxu0 0.0
    %6000 = vmatpush1.msra.mxu0 0.0
    %6001 = vmatprep.subr.mxu0 0.0
    %6002 = vmatpush1.msra.mxu0 0.0
    %6003 = vmatprep.subr.mxu0 0.0
    %6004 = vmatpush1.msra.mxu0 0.0
    %6005 = vmatprep.subr.mxu0 0.0
    %6006 = vmatpush1.msra.mxu0 0.0
    %6007 = vmatprep.subr.mxu0 0.0
    %6008 = vmatpush1.msra.mxu0 0.0
    %6009 = vmatprep.subr.mxu0 0.0
    %6010 = vmatpush1.msra.mxu0 0.0
    %6011 = vmatprep.subr.mxu0 0.0
    %6012 = vmatpush1.msra.mxu0 %v1065
    %6013 = vmatprep.subr.mxu0 0.0
    %6014 = vmatpush1.msra.mxu0 %v1064
    %6015 = vmatprep.subr.mxu0 0.0
    %6016 = vmatpush1.msra.mxu0 %v1063
    %6017 = vmatprep.subr.mxu0 0.0
    %6018 = vmatpush1.msra.mxu0 %v1062
    %6019 = vmatprep.subr.mxu0 0.0
    %6020 = vmatpush2.msra.mxu0 0.0
    %6021 = vmatprep.subr.mxu0 0.0
    %6022 = vmatpush2.msra.mxu0 0.0
    %6023 = vmatprep.subr.mxu0 0.0
    %6024 = vmatpush2.msra.mxu0 0.0
    %6025 = vmatprep.subr.mxu0 0.0
    %6026 = vmatpush2.msra.mxu0 0.0
    %6027 = vmatprep.subr.mxu0 0.0
    %6028 = vmatpush2.msra.mxu0 0.0
    %6029 = vmatprep.subr.mxu0 0.0
    %6030 = vmatpush2.msra.mxu0 0.0
    %6031 = vmatprep.subr.mxu0 0.0
    %6032 = vmatpush2.msra.mxu0 0.0
    %6033 = vmatprep.subr.mxu0 0.0
    %6034 = vmatpush2.msra.mxu0 0.0
    %6035 = vmatprep.subr.mxu0 0.0
    %6036 = vmatpush2.msra.mxu0 0.0
    %6037 = vmatprep.subr.mxu0 0.0
    %6038 = vmatpush2.msra.mxu0 0.0
    %6039 = vmatprep.subr.mxu0 0.0
    %6040 = vmatpush2.msra.mxu0 0.0
    %6041 = vmatprep.subr.mxu0 0.0
    %6042 = vmatpush2.msra.mxu0 0.0
    %6043 = vmatprep.subr.mxu0 0.0
    %6044 = vmatpush2.msra.mxu0 0.0
    %6045 = vmatprep.subr.mxu0 0.0
    %6046 = vmatpush2.msra.mxu0 0.0
    %6047 = vmatprep.subr.mxu0 0.0
    %6048 = vmatpush2.msra.mxu0 0.0
    %6049 = vmatprep.subr.mxu0 0.0
    %6050 = vmatpush2.msra.mxu0 0.0
    %6051 = vmatprep.mubr.f32.mxu0 0.0
    %6052 = vmatmul.mubr.f32.gmra.mxu0 %v5985
    %v6053 = vpop.f32.mrf.mxu0
    %v6054 = vadd.f32 0.0, %v6053
    %v6055 = vpop.f32.mrf.mxu0
    %6056 = vdwg.mxu0
    %v6057 = vadd.f32 %v5979, %v6054
    %v6058 = vadd.f32 %v6057, %v1147
    %v6059 = vsel %vm1150, %v6058, -inf
    %6060 = vmax.xlane.f32.xlu0 %v6059
    %v6061 = vpop.xlane.xlu0 %6060
    %s6062 = scalar_lea.vmem %s1, 14
    %v6063 = vld [vmem:[%s6062] sm:$0x3]
    %v6064 = vsub.f32 %v6058, %v6061
    %v6065 = vmul.f32 %v6064, 1.442695
    %v6066 = vpow.pop %v6065
    %v6067 = vsel %vm1150, %v6066, 0.0
    %6068 = vadd.xlane.f32.xlu0 %v6067
    %v6069 = vpop.xlane.xlu0 %6068
    %v6070 = vlog2.pop %v6069
    %v6071 = vmul.f32 %v6070, 0.6931472
    %v6072 = vadd.f32 %v6061, %v6071
    %v6073 = vmul.f32 %v6058, %v6063
    %v6074 = vsel %vm1150, %v6073, 0.0
    %6075 = vadd.xlane.f32.xlu0 %v6074
    %v6076 = vpop.xlane.xlu0 %6075
    %v6077 = vsub.f32 1.0, %v6063
    %v6078 = vsub.f32 %v6072, %v6076
    %v6079 = vmul.f32 %v6078, %v6077
    %v6080 = vsel %vm289, %v6079, 0.0
    %v6081 = vrot.slane %v6080, 4
    %v6082 = vadd.f32 %v6080, %v6081
    %v6083 = vrot.slane %v6082, 2
    %v6084 = vadd.f32 %v6082, %v6083
    %v6085 = vrot.slane %v6084, 1
    %v6086 = vadd.f32 %v6084, %v6085
    %v6087 = vadd.f32 %v5289, %v6086
    %v6088 = vsel %vm289, %v6077, 0.0
    %v6089 = vrot.slane %v6088, 4
    %v6090 = vadd.f32 %v6088, %v6089
    %v6091 = vrot.slane %v6090, 2
    %v6092 = vadd.f32 %v6090, %v6091
    %v6093 = vrot.slane %v6092, 1
    %v6094 = vadd.f32 %v6092, %v6093
    %v6095 = vadd.f32 %v5297, %v6094
    %v6096 = vrcp.pop %v6095
    %v6097 = vmul.f32 %v6087, %v6096
    %vm6098 = vcmask 0
    %6099 = vst.msk [vmem:[#allocation13] sm:$0x1] %vm6098, %v6097
    // Predicated region
    $region82: #{seq2seq_forward.1} parent=1 // pred_check
      _
    $region83: #{seq2seq_forward.1} parent=1 // pred_check_branch
      %6101 = sbr.rel (0) target = $region85
    $region84: #{seq2seq_forward.1} parent=1 // pred_region
      %s6103 = ssub.s32 16, 16
      %6104 = vsyncadd [#allocation7], %s6103
      %s6106 = sshll.u32 [#allocation13], 4
      %s6107 = int_to_ptr.vmem [resolvable:$true] %s6106
      %6109 = dma.vmem_to_hbm [thread:$0]  %s6107, 16, %s17, [#allocation7]
    $region85: #{seq2seq_forward.1} parent=1 // pred_fallthru
      _
    // Predicated region
    $region86: #{seq2seq_forward.1} parent=1 // pred_check
      _
    $region87: #{seq2seq_forward.1} parent=1 // pred_check_branch
      %6111 = sbr.rel (0) target = $region89
    $region88: #{seq2seq_forward.1} parent=1 // pred_region
      %6112 = dma.done [#allocation7], 16
    $region89: #{seq2seq_forward.1} parent=1 // pred_fallthru
      _
    %6113 = vsyncpa [#allocation6], 1
    %6114 = vsyncpa [#allocation9], 1
    %6115 = vsyncpa [#allocation12], 1
    %6116 = vsyncpa [#allocation7], 1

</llo_original>
